<compile_context>
chip_gen: v7x
topology: tpu7x:2x2x1
jax: 0.10.0
libtpu: 0.0.40
codegen_flags: <defaults>
</compile_context>

<pallas_src>
import functools

import jax
import jax.numpy as jnp
from jax import lax
from jax.experimental import pallas as pl
from jax.experimental.pallas import tpu as pltpu

NEG_SLOPE = 0.01                 # F.leaky_relu default
BN_EPS = 1e-5                    # nn.BatchNorm1d default
VMEM_LIMIT = 48 * 1024 * 1024    # sized for v7x (64 MiB physical VMEM); fine on v5e/v6e


def _round_up(x, m):
    return (x + m - 1) // m * m


def _sigmoid(z):
    # Numerically stable sigmoid on the EUP (tanh); no exp/divide, no inf.
    return 0.5 * (jnp.tanh(0.5 * z) + 1.0)


# ----------------------------------------------------------------------------
# Kernel 1: hoisted input projection  gx = X @ W_ih0^T + b0  over all T*B rows
# ----------------------------------------------------------------------------
def proj_kernel(x_ref, w_ref, b_ref, out_ref):
    out_ref[...] = (
        jnp.dot(x_ref[...], w_ref[...], preferred_element_type=jnp.float32)
        + b_ref[...])


def input_projection(x_flat, w_ih0_t, b0, *, tm):
    Mp, Dp = x_flat.shape
    G = w_ih0_t.shape[1]                       # 4*Hp
    return pl.pallas_call(
        proj_kernel,
        out_shape=jax.ShapeDtypeStruct((Mp, G), jnp.float32),
        grid_spec=pltpu.PrefetchScalarGridSpec(
            num_scalar_prefetch=0,
            grid=(Mp // tm,),
            in_specs=[
                pl.BlockSpec((tm, Dp), lambda i: (i, 0)),   # x tile (M-tiled)
                pl.BlockSpec((Dp, G), lambda i: (0, 0)),    # weight, resident
                pl.BlockSpec((1, G), lambda i: (0, 0)),     # bias, resident
            ],
            out_specs=pl.BlockSpec((tm, G), lambda i: (i, 0)),
        ),
        compiler_params=pltpu.CompilerParams(
            dimension_semantics=("parallel",),
            vmem_limit_bytes=VMEM_LIMIT),
    )(x_flat, w_ih0_t, b0)


# ----------------------------------------------------------------------------
# Kernel 2: fused multi-layer LSTM recurrence (gridded over time chunks) + head
# ----------------------------------------------------------------------------
def _make_step(l, num_layers, Hp, gx0_ref, ys_sc, whh_l, wih_l, bias_l):
    def step(t, carry):
        h, c = carry
        hh = jnp.dot(h.astype(jnp.bfloat16), whh_l,
                     preferred_element_type=jnp.float32)
        if l == 0:
            gates = gx0_ref[t] + hh                 # bias already folded in gx
        else:
            gates = (jnp.dot(ys_sc[t].astype(jnp.bfloat16), wih_l,
                             preferred_element_type=jnp.float32)
                     + hh + bias_l)
        # gate slices are full 128-lane blocks (Hp is a multiple of 128)
        i_g = _sigmoid(gates[:, 0 * Hp:1 * Hp])
        f_g = _sigmoid(gates[:, 1 * Hp:2 * Hp])
        g_g = jnp.tanh(gates[:, 2 * Hp:3 * Hp])
        o_g = _sigmoid(gates[:, 3 * Hp:4 * Hp])
        c_new = f_g * c + i_g * g_g
        h_new = o_g * jnp.tanh(c_new)
        if l < num_layers - 1:                      # next layer's input
            ys_sc[t] = h_new
        return h_new, c_new
    return step


def make_lstm_stack_head_kernel(L, B, H, Hp, Bp, t_chunk):
    G = 4 * Hp

    def kernel(gx0_ref, wih_ref, whh_ref, bup_ref, h0_ref, c0_ref,
               w1_ref, b1_ref, g1_ref, be1_ref,
               w2_ref, b2_ref, g2_ref, be2_ref,
               w3_ref, b3_ref, g3_ref, be3_ref,
               w4_ref, b4_ref,
               hs_ref, probs_ref,
               h_sc, c_sc, ys_sc):
        ct = pl.program_id(0)

        @pl.when(ct == 0)
        def _init():
            h_sc[...] = h0_ref[...]
            c_sc[...] = c0_ref[...]

        for l in range(L):
            whh_l = whh_ref[l]                               # (Hp, 4Hp) bf16
            if l > 0:
                wih_l = wih_ref[l]                           # (Hp, 4Hp) bf16
                bias_l = jnp.broadcast_to(bup_ref[l], (Bp, G))   # hoisted
            else:
                wih_l = None
                bias_l = None
            step = _make_step(l, L, Hp, gx0_ref, ys_sc, whh_l, wih_l, bias_l)
            h_f, c_f = lax.fori_loop(0, t_chunk, step,
                                     (h_sc[l], c_sc[l]), unroll=True)
            h_sc[l] = h_f
            c_sc[l] = c_f

        @pl.when(ct == pl.num_programs(0) - 1)
        def _finalize():
            hs_ref[...] = h_sc[...]

            def bn_train(x, g_ref, be_ref):
                mean = jnp.mean(x, axis=0, keepdims=True)
                var = jnp.mean(jnp.square(x - mean), axis=0, keepdims=True)
                return (x - mean) * lax.rsqrt(var + BN_EPS) * g_ref[...] + be_ref[...]

            def lrelu(x):
                return jnp.where(x >= 0, x, NEG_SLOPE * x)

            def linear(x, w_ref, b_ref):
                return (jnp.dot(x, w_ref[...],
                                preferred_element_type=jnp.float32)
                        + b_ref[...])

            x = h_sc[0][:B, :H]                              # un-padded h_s[0]
            x = lrelu(bn_train(linear(x, w1_ref, b1_ref), g1_ref, be1_ref))
            x = lrelu(bn_train(linear(x, w2_ref, b2_ref), g2_ref, be2_ref))
            x = lrelu(bn_train(linear(x, w3_ref, b3_ref), g3_ref, be3_ref))
            logits = linear(x, w4_ref, b4_ref)
            m = jnp.max(logits, axis=-1, keepdims=True)
            e = jnp.exp(logits - m)
            probs_ref[...] = e / jnp.sum(e, axis=-1, keepdims=True)

    return kernel


def lstm_stack_head(gx0, wih_up, whh, bup, h0p, c0p, head_args, *,
                    L, B, H, Hp, Bp, T, t_chunk, n_classes):
    G = 4 * Hp
    n_chunks = T // t_chunk
    kernel = make_lstm_stack_head_kernel(L, B, H, Hp, Bp, t_chunk)

    def resident(shape):
        # Whole array, same block every grid step (no re-DMA across chunks).
        return pl.BlockSpec(shape, lambda ct, _n=len(shape): (0,) * _n)

    in_specs = [
        pl.BlockSpec((t_chunk, Bp, G), lambda ct: (ct, 0, 0)),   # gx chunk
        resident((L, Hp, G)),                                    # W_ih (l>=1)
        resident((L, Hp, G)),                                    # W_hh
        resident((L, 1, G)),                                     # bias (l>=1)
        resident((L, Bp, Hp)),                                   # h0
        resident((L, Bp, Hp)),                                   # c0
    ] + [resident(a.shape) for a in head_args]

    out_shapes = (
        jax.ShapeDtypeStruct((L, Bp, Hp), jnp.float32),          # h_s (padded)
        jax.ShapeDtypeStruct((B, n_classes), jnp.float32),       # probs
    )
    out_specs = (resident((L, Bp, Hp)), resident((B, n_classes)))

    scratch = [
        pltpu.VMEM((L, Bp, Hp), jnp.float32),      # h carried across chunks
        pltpu.VMEM((L, Bp, Hp), jnp.float32),      # c carried across chunks
        pltpu.VMEM((t_chunk, Bp, Hp), jnp.float32),  # inter-layer activations
    ]
    return pl.pallas_call(
        kernel,
        out_shape=out_shapes,
        grid_spec=pltpu.PrefetchScalarGridSpec(
            num_scalar_prefetch=0,
            grid=(n_chunks,),
            in_specs=in_specs,
            out_specs=out_specs,
            scratch_shapes=scratch,
        ),
        compiler_params=pltpu.CompilerParams(
            dimension_semantics=("arbitrary",),      # sequential recurrence
            vmem_limit_bytes=VMEM_LIMIT),
    )(gx0, wih_up, whh, bup, h0p, c0p, *head_args)


# ----------------------------------------------------------------------------
# One-time parameter preparation (transpose / pad / cast OUTSIDE the hot path)
# ----------------------------------------------------------------------------
def prepare_params(params, *, n_classes, hidden_size, num_layers,
                   input_size=1000):
    H, L = hidden_size, num_layers
    Hp = _round_up(H, 128)                  # lane-aligned hidden
    Dp = _round_up(input_size, 128)         # 1000 -> 1024
    G = 4 * Hp

    def pad_gate_matrix(w, d_in, d_in_p):
        # (4H, d_in) torch layout -> (d_in_p, 4*Hp) transposed, gate-blocked,
        # zero padded so padded lanes of h/c stay exactly zero.
        wt = jnp.transpose(w).reshape(d_in, 4, H)
        out = jnp.zeros((d_in_p, 4, Hp), jnp.float32).at[:d_in, :, :H].set(wt)
        return out.reshape(d_in_p, G).astype(jnp.bfloat16)

    def pad_gate_bias(b_ih, b_hh):
        b = (b_ih + b_hh).reshape(4, H)
        out = jnp.zeros((4, Hp), jnp.float32).at[:, :H].set(b)
        return out.reshape(1, G)

    lstm0 = params["lstm"][0]
    prepped = {
        "H": H, "Hp": Hp, "Dp": Dp, "L": L, "n_classes": n_classes,
        "w_ih0_t": pad_gate_matrix(lstm0["w_ih"], input_size, Dp),
        "b0": pad_gate_bias(lstm0["b_ih"], lstm0["b_hh"]),
    }
    wih_up = jnp.zeros((L, Hp, G), jnp.bfloat16)
    whh = jnp.zeros((L, Hp, G), jnp.bfloat16)
    bup = jnp.zeros((L, 1, G), jnp.float32)
    for l in range(L):
        p = params["lstm"][l]
        whh = whh.at[l].set(pad_gate_matrix(p["w_hh"], H, Hp))
        if l > 0:
            wih_up = wih_up.at[l].set(pad_gate_matrix(p["w_ih"], H, Hp))
            bup = bup.at[l].set(pad_gate_bias(p["b_ih"], p["b_hh"]))
    prepped["wih_up"], prepped["whh"], prepped["bup"] = wih_up, whh, bup

    def wt(w):   # (out, in) -> (in, out)
        return jnp.transpose(w).astype(jnp.float32)

    def row(v):
        return v.reshape(1, -1).astype(jnp.float32)

    head = []
    for i in range(1, 4):
        head += [wt(params[f"fc{i}_w"]), row(params[f"fc{i}_b"]),
                 row(params[f"bn{i}_g"]), row(params[f"bn{i}_b"])]
    head += [wt(params["fc4_w"]), row(params["fc4_b"])]
    prepped["head"] = tuple(head)
    return prepped


# ----------------------------------------------------------------------------
# Full forward
# ----------------------------------------------------------------------------
def rnn_forward(features, h_state, prepped):
    """features: (B, T, 1000) batch-first; h_state = (h0, c0), each (L, B, H)."""
    h0, c0 = h_state
    B, T, D = features.shape
    L = h0.shape[0]
    H, Hp, Dp = prepped["H"], prepped["Hp"], prepped["Dp"]
    n_classes = prepped["n_classes"]
    Bp = _round_up(B, 8)
    G = 4 * Hp

    # ---- hoisted input projection: one bf16 MXU GEMM over all T*B rows ----
    x_tbd = jnp.transpose(features, (1, 0, 2)).astype(jnp.bfloat16)  # (T,B,D)
    x_pad = jnp.zeros((T, Bp, Dp), jnp.bfloat16).at[:, :B, :D].set(x_tbd)
    M = T * Bp
    tm = 256 if M >= 256 else M                      # M-tile (MXU-shaped when big)
    Mp = _round_up(M, tm)
    x_flat = x_pad.reshape(M, Dp)
    if Mp > M:
        x_flat = jnp.concatenate(
            [x_flat, jnp.zeros((Mp - M, Dp), jnp.bfloat16)], axis=0)
    gx_full = input_projection(x_flat, prepped["w_ih0_t"], prepped["b0"], tm=tm)
    gx0 = gx_full[:M].reshape(T, Bp, G)              # (T, Bp, 4Hp) f32, bias folded

    # ---- padded initial state ----
    h0p = jnp.zeros((L, Bp, Hp), jnp.float32).at[:, :B, :H].set(h0)
    c0p = jnp.zeros((L, Bp, Hp), jnp.float32).at[:, :B, :H].set(c0)

    # ---- time-chunk size for the gridded recurrence ----
    t_chunk = T
    for cand in (64, 32, 16, 8):
        if T >= cand and T % cand == 0:
            t_chunk = cand
            break

    hs_pad, probs = lstm_stack_head(
        gx0, prepped["wih_up"], prepped["whh"], prepped["bup"],
        h0p, c0p, prepped["head"],
        L=L, B=B, H=H, Hp=Hp, Bp=Bp, T=T, t_chunk=t_chunk,
        n_classes=n_classes)

    h_s = hs_pad[:, :B, :H]                          # (L, B, H)
    return probs, h_s


# ----------------------------------------------------------------------------
# Parameter init (torch-like layout), then prepared once
# ----------------------------------------------------------------------------
def init_params(key, n_classes, hidden_size, num_layers, input_size=1000):
    H = hidden_size
    dims = [H, H // 2, H // 4, H // 8, n_classes]
    params = {"lstm": []}
    k = key

    def nxt():
        nonlocal k
        k, sub = jax.random.split(k)
        return sub

    for l in range(num_layers):
        d_in = input_size if l == 0 else H
        s = 1.0 / jnp.sqrt(H)
        params["lstm"].append({
            "w_ih": jax.random.uniform(nxt(), (4 * H, d_in), jnp.float32, -s, s),
            "w_hh": jax.random.uniform(nxt(), (4 * H, H), jnp.float32, -s, s),
            "b_ih": jax.random.uniform(nxt(), (4 * H,), jnp.float32, -s, s),
            "b_hh": jax.random.uniform(nxt(), (4 * H,), jnp.float32, -s, s),
        })

    for i in range(1, 5):
        d_in, d_out = dims[i - 1], dims[i]
        s = 1.0 / jnp.sqrt(d_in)
        params[f"fc{i}_w"] = jax.random.uniform(nxt(), (d_out, d_in), jnp.float32, -s, s)
        params[f"fc{i}_b"] = jax.random.uniform(nxt(), (d_out,), jnp.float32, -s, s)
        if i <= 3:
            params[f"bn{i}_g"] = jnp.ones((d_out,), jnp.float32)
            params[f"bn{i}_b"] = jnp.zeros((d_out,), jnp.float32)
    return params


if __name__ == "__main__":
    B, T, INPUT = 2, 8, 1000
    H, L, NCLS = 32, 2, 10

    key = jax.random.PRNGKey(0)
    k_par, k_x, k_h, k_c = jax.random.split(key, 4)

    params = init_params(k_par, n_classes=NCLS, hidden_size=H, num_layers=L,
                         input_size=INPUT)
    # one-time weight prep (pre-transpose / pad / cast) outside the hot path
    prepped = prepare_params(params, n_classes=NCLS, hidden_size=H,
                             num_layers=L, input_size=INPUT)

    features = jax.random.normal(k_x, (B, T, INPUT), jnp.float32)
    h0 = jax.random.normal(k_h, (L, B, H), jnp.float32)
    c0 = jax.random.normal(k_c, (L, B, H), jnp.float32)

    fwd = jax.jit(functools.partial(rnn_forward, prepped=prepped))
    probs, h_s = fwd(features, (h0, c0))
    probs, h_s = jax.block_until_ready((probs, h_s))

    assert probs.shape == (B, NCLS)
    assert h_s.shape == (L, B, H)
    # softmax rows must sum to 1
    assert bool(jnp.all(jnp.abs(jnp.sum(probs, axis=-1) - 1.0) < 1e-4))
    print("KERNEL_OK")
</pallas_src>

<mosaic_0001>
module attributes {stable_mosaic.version = 11 : i64} {
  func.func @proj_kernel(%arg0: i32, %arg1: memref<64x1024xbf16, #tpu.memory_space<vmem>>, %arg2: memref<1024x512xbf16, #tpu.memory_space<vmem>>, %arg3: memref<1x512xf32, #tpu.memory_space<vmem>>, %arg4: memref<64x512xf32, #tpu.memory_space<vmem>>) attributes {dimension_semantics = [#tpu.dimension_semantics<parallel>], iteration_bounds = array<i64: 1>, scalar_prefetch = 0 : i64, scratch_operands = 0 : i64, tpu.core_type = #tpu.core_type<tc>, window_params = [{transform_indices = @transform_0, window_bounds = array<i64: 64, 1024>}, {pipeline_mode = #tpu.pipeline_mode<synchronous>, transform_indices = @transform_1, window_bounds = array<i64: 1024, 512>}, {pipeline_mode = #tpu.pipeline_mode<synchronous>, transform_indices = @transform_2, window_bounds = array<i64: 1, 512>}, {transform_indices = @transform_3, window_bounds = array<i64: 64, 512>}]} {
    %c0 = arith.constant 0 : index
    %c0_0 = arith.constant 0 : index
    %0 = vector.load %arg1[%c0, %c0_0] : memref<64x1024xbf16, #tpu.memory_space<vmem>>, vector<64x1024xbf16>
    %c0_1 = arith.constant 0 : index
    %c0_2 = arith.constant 0 : index
    %1 = vector.load %arg2[%c0_1, %c0_2] : memref<1024x512xbf16, #tpu.memory_space<vmem>>, vector<1024x512xbf16>
    %cst = arith.constant dense<0.000000e+00> : vector<64x512xf32>
    %2 = tpu.matmul %0, %1, %cst {dimension_numbers = #tpu.dot_dimension_numbers<[1], [0], [0], [1], [0, 0, 1, 1], [], []>} : vector<64x1024xbf16>, vector<1024x512xbf16>, vector<64x512xf32> -> vector<64x512xf32>
    %c0_3 = arith.constant 0 : index
    %c0_4 = arith.constant 0 : index
    %3 = vector.load %arg3[%c0_3, %c0_4] : memref<1x512xf32, #tpu.memory_space<vmem>>, vector<1x512xf32>
    %4 = vector.broadcast %3 : vector<1x512xf32> to vector<64x512xf32>
    %5 = arith.addf %2, %4 : vector<64x512xf32>
    %c0_5 = arith.constant 0 : index
    %c0_6 = arith.constant 0 : index
    %6 = vector.load %arg4[%c0_5, %c0_6] : memref<64x512xf32, #tpu.memory_space<vmem>>, vector<64x512xf32>
    tpu.vector_store %arg4[%c0_5, %c0_6], %5 {strides = array<i32>} : memref<64x512xf32, #tpu.memory_space<vmem>>, vector<64x512xf32>,
    return
  }
  func.func @transform_0(%arg0: i32) -> (i32, i32) {
    %c0_i32 = arith.constant 0 : i32
    %c0_i32_0 = arith.constant 0 : i32
    return %arg0, %c0_i32 : i32, i32
  }
  func.func @transform_1(%arg0: i32) -> (i32, i32) {
    %c0_i32 = arith.constant 0 : i32
    %c0_i32_0 = arith.constant 0 : i32
    %c0_i32_1 = arith.constant 0 : i32
    return %c0_i32, %c0_i32_0 : i32, i32
  }
  func.func @transform_2(%arg0: i32) -> (i32, i32) {
    %c0_i32 = arith.constant 0 : i32
    %c0_i32_0 = arith.constant 0 : i32
    %c0_i32_1 = arith.constant 0 : i32
    return %c0_i32, %c0_i32_0 : i32, i32
  }
  func.func @transform_3(%arg0: i32) -> (i32, i32) {
    %c0_i32 = arith.constant 0 : i32
    %c0_i32_0 = arith.constant 0 : i32
    return %arg0, %c0_i32 : i32, i32
  }
}

module attributes {stable_mosaic.version = 11 : i64} {
  func.func @kernel(%arg0: i32, %arg1: memref<8x8x512xf32, #tpu.memory_space<vmem>>, %arg2: memref<2x128x512xbf16, #tpu.memory_space<vmem>>, %arg3: memref<2x128x512xbf16, #tpu.memory_space<vmem>>, %arg4: memref<2x1x512xf32, #tpu.memory_space<vmem>>, %arg5: memref<2x8x128xf32, #tpu.memory_space<vmem>>, %arg6: memref<2x8x128xf32, #tpu.memory_space<vmem>>, %arg7: memref<32x16xf32, #tpu.memory_space<vmem>>, %arg8: memref<1x16xf32, #tpu.memory_space<vmem>>, %arg9: memref<1x16xf32, #tpu.memory_space<vmem>>, %arg10: memref<1x16xf32, #tpu.memory_space<vmem>>, %arg11: memref<16x8xf32, #tpu.memory_space<vmem>>, %arg12: memref<1x8xf32, #tpu.memory_space<vmem>>, %arg13: memref<1x8xf32, #tpu.memory_space<vmem>>, %arg14: memref<1x8xf32, #tpu.memory_space<vmem>>, %arg15: memref<8x4xf32, #tpu.memory_space<vmem>>, %arg16: memref<1x4xf32, #tpu.memory_space<vmem>>, %arg17: memref<1x4xf32, #tpu.memory_space<vmem>>, %arg18: memref<1x4xf32, #tpu.memory_space<vmem>>, %arg19: memref<4x10xf32, #tpu.memory_space<vmem>>, %arg20: memref<1x10xf32, #tpu.memory_space<vmem>>, %arg21: memref<2x8x128xf32, #tpu.memory_space<vmem>>, %arg22: memref<2x10xf32, #tpu.memory_space<vmem>>, %arg23: memref<2x8x128xf32, #tpu.memory_space<vmem>>, %arg24: memref<2x8x128xf32, #tpu.memory_space<vmem>>, %arg25: memref<8x8x128xf32, #tpu.memory_space<vmem>>) attributes {dimension_semantics = [#tpu.dimension_semantics<arbitrary>], iteration_bounds = array<i64: 1>, scalar_prefetch = 0 : i64, scratch_operands = 3 : i64, tpu.core_type = #tpu.core_type<tc>, window_params = [{transform_indices = @transform_0, window_bounds = array<i64: 8, 8, 512>}, {pipeline_mode = #tpu.pipeline_mode<synchronous>, transform_indices = @transform_1, window_bounds = array<i64: 2, 128, 512>}, {pipeline_mode = #tpu.pipeline_mode<synchronous>, transform_indices = @transform_2, window_bounds = array<i64: 2, 128, 512>}, {pipeline_mode = #tpu.pipeline_mode<synchronous>, transform_indices = @transform_3, window_bounds = array<i64: 2, 1, 512>}, {pipeline_mode = #tpu.pipeline_mode<synchronous>, transform_indices = @transform_4, window_bounds = array<i64: 2, 8, 128>}, {pipeline_mode = #tpu.pipeline_mode<synchronous>, transform_indices = @transform_5, window_bounds = array<i64: 2, 8, 128>}, {pipeline_mode = #tpu.pipeline_mode<synchronous>, transform_indices = @transform_6, window_bounds = array<i64: 32, 16>}, {pipeline_mode = #tpu.pipeline_mode<synchronous>, transform_indices = @transform_7, window_bounds = array<i64: 1, 16>}, {pipeline_mode = #tpu.pipeline_mode<synchronous>, transform_indices = @transform_8, window_bounds = array<i64: 1, 16>}, {pipeline_mode = #tpu.pipeline_mode<synchronous>, transform_indices = @transform_9, window_bounds = array<i64: 1, 16>}, {pipeline_mode = #tpu.pipeline_mode<synchronous>, transform_indices = @transform_10, window_bounds = array<i64: 16, 8>}, {pipeline_mode = #tpu.pipeline_mode<synchronous>, transform_indices = @transform_11, window_bounds = array<i64: 1, 8>}, {pipeline_mode = #tpu.pipeline_mode<synchronous>, transform_indices = @transform_12, window_bounds = array<i64: 1, 8>}, {pipeline_mode = #tpu.pipeline_mode<synchronous>, transform_indices = @transform_13, window_bounds = array<i64: 1, 8>}, {pipeline_mode = #tpu.pipeline_mode<synchronous>, transform_indices = @transform_14, window_bounds = array<i64: 8, 4>}, {pipeline_mode = #tpu.pipeline_mode<synchronous>, transform_indices = @transform_15, window_bounds = array<i64: 1, 4>}, {pipeline_mode = #tpu.pipeline_mode<synchronous>, transform_indices = @transform_16, window_bounds = array<i64: 1, 4>}, {pipeline_mode = #tpu.pipeline_mode<synchronous>, transform_indices = @transform_17, window_bounds = array<i64: 1, 4>}, {pipeline_mode = #tpu.pipeline_mode<synchronous>, transform_indices = @transform_18, window_bounds = array<i64: 4, 10>}, {pipeline_mode = #tpu.pipeline_mode<synchronous>, transform_indices = @transform_19, window_bounds = array<i64: 1, 10>}, {pipeline_mode = #tpu.pipeline_mode<synchronous>, transform_indices = @transform_20, window_bounds = array<i64: 2, 8, 128>}, {pipeline_mode = #tpu.pipeline_mode<synchronous>, transform_indices = @transform_21, window_bounds = array<i64: 2, 10>}]} {
    %c0_i32 = arith.constant 0 : i32
    %0 = arith.cmpi eq, %arg0, %c0_i32 : i32
    %1 = arith.extui %0 : i1 to i32
    %c0_i32_0 = arith.constant 0 : i32
    %2 = arith.cmpi ne, %1, %c0_i32_0 : i32
    scf.if %2 {
      %c0_262 = arith.constant 0 : index
      %c0_263 = arith.constant 0 : index
      %c0_264 = arith.constant 0 : index
      %684 = vector.load %arg5[%c0_262, %c0_263, %c0_264] : memref<2x8x128xf32, #tpu.memory_space<vmem>>, vector<2x8x128xf32>
      %c0_265 = arith.constant 0 : index
      %c0_266 = arith.constant 0 : index
      %c0_267 = arith.constant 0 : index
      %685 = vector.load %arg23[%c0_265, %c0_266, %c0_267] : memref<2x8x128xf32, #tpu.memory_space<vmem>>, vector<2x8x128xf32>
      tpu.vector_store %arg23[%c0_265, %c0_266, %c0_267], %684 {strides = array<i32>} : memref<2x8x128xf32, #tpu.memory_space<vmem>>, vector<2x8x128xf32>,
      %c0_268 = arith.constant 0 : index
      %c0_269 = arith.constant 0 : index
      %c0_270 = arith.constant 0 : index
      %686 = vector.load %arg6[%c0_268, %c0_269, %c0_270] : memref<2x8x128xf32, #tpu.memory_space<vmem>>, vector<2x8x128xf32>
      %c0_271 = arith.constant 0 : index
      %c0_272 = arith.constant 0 : index
      %c0_273 = arith.constant 0 : index
      %687 = vector.load %arg24[%c0_271, %c0_272, %c0_273] : memref<2x8x128xf32, #tpu.memory_space<vmem>>, vector<2x8x128xf32>
      tpu.vector_store %arg24[%c0_271, %c0_272, %c0_273], %686 {strides = array<i32>} : memref<2x8x128xf32, #tpu.memory_space<vmem>>, vector<2x8x128xf32>,
    } else {
    }
    %c0 = arith.constant 0 : index
    %c0_1 = arith.constant 0 : index
    %c0_2 = arith.constant 0 : index
    %3 = vector.load %arg3[%c0, %c0_1, %c0_2] : memref<2x128x512xbf16, #tpu.memory_space<vmem>>, vector<1x128x512xbf16>
    %4 = vector.shape_cast %3 : vector<1x128x512xbf16> to vector<128x512xbf16>
    %c0_3 = arith.constant 0 : index
    %c0_4 = arith.constant 0 : index
    %c0_5 = arith.constant 0 : index
    %5 = vector.load %arg23[%c0_3, %c0_4, %c0_5] : memref<2x8x128xf32, #tpu.memory_space<vmem>>, vector<1x8x128xf32>
    %6 = vector.shape_cast %5 : vector<1x8x128xf32> to vector<8x128xf32>
    %c0_6 = arith.constant 0 : index
    %c0_7 = arith.constant 0 : index
    %c0_8 = arith.constant 0 : index
    %7 = vector.load %arg24[%c0_6, %c0_7, %c0_8] : memref<2x8x128xf32, #tpu.memory_space<vmem>>, vector<1x8x128xf32>
    %8 = vector.shape_cast %7 : vector<1x8x128xf32> to vector<8x128xf32>
    %c0_i32_9 = arith.constant 0 : i32
    %9 = arith.truncf %6 : vector<8x128xf32> to vector<8x128xbf16>
    %cst = arith.constant dense<0.000000e+00> : vector<8x512xf32>
    %10 = tpu.matmul %9, %4, %cst {dimension_numbers = #tpu.dot_dimension_numbers<[1], [0], [0], [1], [0, 0, 1, 1], [], []>} : vector<8x128xbf16>, vector<128x512xbf16>, vector<8x512xf32> -> vector<8x512xf32>
    %11 = arith.index_cast %c0_i32_9 : i32 to index
    %c0_10 = arith.constant 0 : index
    %c0_11 = arith.constant 0 : index
    %12 = vector.load %arg1[%11, %c0_10, %c0_11] : memref<8x8x512xf32, #tpu.memory_space<vmem>>, vector<1x8x512xf32>
    %13 = vector.shape_cast %12 : vector<1x8x512xf32> to vector<8x512xf32>
    %14 = arith.addf %13, %10 : vector<8x512xf32>
    %15 = vector.extract_strided_slice %14 {offsets = [0, 0], sizes = [8, 128], strides = [1, 1]} : vector<8x512xf32> to vector<8x128xf32>
    %cst_12 = arith.constant 5.000000e-01 : f32
    %16 = vector.broadcast %cst_12 : f32 to vector<8x128xf32>
    %17 = arith.mulf %16, %15 : vector<8x128xf32>
    %18 = math.tanh %17 : vector<8x128xf32>
    %cst_13 = arith.constant 1.000000e+00 : f32
    %19 = vector.broadcast %cst_13 : f32 to vector<8x128xf32>
    %20 = arith.addf %18, %19 : vector<8x128xf32>
    %cst_14 = arith.constant 5.000000e-01 : f32
    %21 = vector.broadcast %cst_14 : f32 to vector<8x128xf32>
    %22 = arith.mulf %21, %20 : vector<8x128xf32>
    %23 = vector.extract_strided_slice %14 {offsets = [0, 128], sizes = [8, 128], strides = [1, 1]} : vector<8x512xf32> to vector<8x128xf32>
    %cst_15 = arith.constant 5.000000e-01 : f32
    %24 = vector.broadcast %cst_15 : f32 to vector<8x128xf32>
    %25 = arith.mulf %24, %23 : vector<8x128xf32>
    %26 = math.tanh %25 : vector<8x128xf32>
    %cst_16 = arith.constant 1.000000e+00 : f32
    %27 = vector.broadcast %cst_16 : f32 to vector<8x128xf32>
    %28 = arith.addf %26, %27 : vector<8x128xf32>
    %cst_17 = arith.constant 5.000000e-01 : f32
    %29 = vector.broadcast %cst_17 : f32 to vector<8x128xf32>
    %30 = arith.mulf %29, %28 : vector<8x128xf32>
    %31 = vector.extract_strided_slice %14 {offsets = [0, 256], sizes = [8, 128], strides = [1, 1]} : vector<8x512xf32> to vector<8x128xf32>
    %32 = math.tanh %31 : vector<8x128xf32>
    %33 = vector.extract_strided_slice %14 {offsets = [0, 384], sizes = [8, 128], strides = [1, 1]} : vector<8x512xf32> to vector<8x128xf32>
    %cst_18 = arith.constant 5.000000e-01 : f32
    %34 = vector.broadcast %cst_18 : f32 to vector<8x128xf32>
    %35 = arith.mulf %34, %33 : vector<8x128xf32>
    %36 = math.tanh %35 : vector<8x128xf32>
    %cst_19 = arith.constant 1.000000e+00 : f32
    %37 = vector.broadcast %cst_19 : f32 to vector<8x128xf32>
    %38 = arith.addf %36, %37 : vector<8x128xf32>
    %cst_20 = arith.constant 5.000000e-01 : f32
    %39 = vector.broadcast %cst_20 : f32 to vector<8x128xf32>
    %40 = arith.mulf %39, %38 : vector<8x128xf32>
    %41 = arith.mulf %30, %8 : vector<8x128xf32>
    %42 = arith.mulf %22, %32 : vector<8x128xf32>
    %43 = arith.addf %41, %42 : vector<8x128xf32>
    %44 = math.tanh %43 : vector<8x128xf32>
    %45 = arith.mulf %40, %44 : vector<8x128xf32>
    %46 = arith.index_cast %c0_i32_9 : i32 to index
    %c0_21 = arith.constant 0 : index
    %c0_22 = arith.constant 0 : index
    %47 = vector.load %arg25[%46, %c0_21, %c0_22] : memref<8x8x128xf32, #tpu.memory_space<vmem>>, vector<1x8x128xf32>
    %48 = vector.shape_cast %47 : vector<1x8x128xf32> to vector<8x128xf32>
    %49 = vector.shape_cast %45 : vector<8x128xf32> to vector<1x8x128xf32>
    tpu.vector_store %arg25[%46, %c0_21, %c0_22], %49 {strides = array<i32>} : memref<8x8x128xf32, #tpu.memory_space<vmem>>, vector<1x8x128xf32>,
    %c1_i32 = arith.constant 1 : i32
    %50 = arith.truncf %45 : vector<8x128xf32> to vector<8x128xbf16>
    %cst_23 = arith.constant dense<0.000000e+00> : vector<8x512xf32>
    %51 = tpu.matmul %50, %4, %cst_23 {dimension_numbers = #tpu.dot_dimension_numbers<[1], [0], [0], [1], [0, 0, 1, 1], [], []>} : vector<8x128xbf16>, vector<128x512xbf16>, vector<8x512xf32> -> vector<8x512xf32>
    %52 = arith.index_cast %c1_i32 : i32 to index
    %c0_24 = arith.constant 0 : index
    %c0_25 = arith.constant 0 : index
    %53 = vector.load %arg1[%52, %c0_24, %c0_25] : memref<8x8x512xf32, #tpu.memory_space<vmem>>, vector<1x8x512xf32>
    %54 = vector.shape_cast %53 : vector<1x8x512xf32> to vector<8x512xf32>
    %55 = arith.addf %54, %51 : vector<8x512xf32>
    %56 = vector.extract_strided_slice %55 {offsets = [0, 0], sizes = [8, 128], strides = [1, 1]} : vector<8x512xf32> to vector<8x128xf32>
    %cst_26 = arith.constant 5.000000e-01 : f32
    %57 = vector.broadcast %cst_26 : f32 to vector<8x128xf32>
    %58 = arith.mulf %57, %56 : vector<8x128xf32>
    %59 = math.tanh %58 : vector<8x128xf32>
    %cst_27 = arith.constant 1.000000e+00 : f32
    %60 = vector.broadcast %cst_27 : f32 to vector<8x128xf32>
    %61 = arith.addf %59, %60 : vector<8x128xf32>
    %cst_28 = arith.constant 5.000000e-01 : f32
    %62 = vector.broadcast %cst_28 : f32 to vector<8x128xf32>
    %63 = arith.mulf %62, %61 : vector<8x128xf32>
    %64 = vector.extract_strided_slice %55 {offsets = [0, 128], sizes = [8, 128], strides = [1, 1]} : vector<8x512xf32> to vector<8x128xf32>
    %cst_29 = arith.constant 5.000000e-01 : f32
    %65 = vector.broadcast %cst_29 : f32 to vector<8x128xf32>
    %66 = arith.mulf %65, %64 : vector<8x128xf32>
    %67 = math.tanh %66 : vector<8x128xf32>
    %cst_30 = arith.constant 1.000000e+00 : f32
    %68 = vector.broadcast %cst_30 : f32 to vector<8x128xf32>
    %69 = arith.addf %67, %68 : vector<8x128xf32>
    %cst_31 = arith.constant 5.000000e-01 : f32
    %70 = vector.broadcast %cst_31 : f32 to vector<8x128xf32>
    %71 = arith.mulf %70, %69 : vector<8x128xf32>
    %72 = vector.extract_strided_slice %55 {offsets = [0, 256], sizes = [8, 128], strides = [1, 1]} : vector<8x512xf32> to vector<8x128xf32>
    %73 = math.tanh %72 : vector<8x128xf32>
    %74 = vector.extract_strided_slice %55 {offsets = [0, 384], sizes = [8, 128], strides = [1, 1]} : vector<8x512xf32> to vector<8x128xf32>
    %cst_32 = arith.constant 5.000000e-01 : f32
    %75 = vector.broadcast %cst_32 : f32 to vector<8x128xf32>
    %76 = arith.mulf %75, %74 : vector<8x128xf32>
    %77 = math.tanh %76 : vector<8x128xf32>
    %cst_33 = arith.constant 1.000000e+00 : f32
    %78 = vector.broadcast %cst_33 : f32 to vector<8x128xf32>
    %79 = arith.addf %77, %78 : vector<8x128xf32>
    %cst_34 = arith.constant 5.000000e-01 : f32
    %80 = vector.broadcast %cst_34 : f32 to vector<8x128xf32>
    %81 = arith.mulf %80, %79 : vector<8x128xf32>
    %82 = arith.mulf %71, %43 : vector<8x128xf32>
    %83 = arith.mulf %63, %73 : vector<8x128xf32>
    %84 = arith.addf %82, %83 : vector<8x128xf32>
    %85 = math.tanh %84 : vector<8x128xf32>
    %86 = arith.mulf %81, %85 : vector<8x128xf32>
    %87 = arith.index_cast %c1_i32 : i32 to index
    %c0_35 = arith.constant 0 : index
    %c0_36 = arith.constant 0 : index
    %88 = vector.load %arg25[%87, %c0_35, %c0_36] : memref<8x8x128xf32, #tpu.memory_space<vmem>>, vector<1x8x128xf32>
    %89 = vector.shape_cast %88 : vector<1x8x128xf32> to vector<8x128xf32>
    %90 = vector.shape_cast %86 : vector<8x128xf32> to vector<1x8x128xf32>
    tpu.vector_store %arg25[%87, %c0_35, %c0_36], %90 {strides = array<i32>} : memref<8x8x128xf32, #tpu.memory_space<vmem>>, vector<1x8x128xf32>,
    %c2_i32 = arith.constant 2 : i32
    %91 = arith.truncf %86 : vector<8x128xf32> to vector<8x128xbf16>
    %cst_37 = arith.constant dense<0.000000e+00> : vector<8x512xf32>
    %92 = tpu.matmul %91, %4, %cst_37 {dimension_numbers = #tpu.dot_dimension_numbers<[1], [0], [0], [1], [0, 0, 1, 1], [], []>} : vector<8x128xbf16>, vector<128x512xbf16>, vector<8x512xf32> -> vector<8x512xf32>
    %93 = arith.index_cast %c2_i32 : i32 to index
    %c0_38 = arith.constant 0 : index
    %c0_39 = arith.constant 0 : index
    %94 = vector.load %arg1[%93, %c0_38, %c0_39] : memref<8x8x512xf32, #tpu.memory_space<vmem>>, vector<1x8x512xf32>
    %95 = vector.shape_cast %94 : vector<1x8x512xf32> to vector<8x512xf32>
    %96 = arith.addf %95, %92 : vector<8x512xf32>
    %97 = vector.extract_strided_slice %96 {offsets = [0, 0], sizes = [8, 128], strides = [1, 1]} : vector<8x512xf32> to vector<8x128xf32>
    %cst_40 = arith.constant 5.000000e-01 : f32
    %98 = vector.broadcast %cst_40 : f32 to vector<8x128xf32>
    %99 = arith.mulf %98, %97 : vector<8x128xf32>
    %100 = math.tanh %99 : vector<8x128xf32>
    %cst_41 = arith.constant 1.000000e+00 : f32
    %101 = vector.broadcast %cst_41 : f32 to vector<8x128xf32>
    %102 = arith.addf %100, %101 : vector<8x128xf32>
    %cst_42 = arith.constant 5.000000e-01 : f32
    %103 = vector.broadcast %cst_42 : f32 to vector<8x128xf32>
    %104 = arith.mulf %103, %102 : vector<8x128xf32>
    %105 = vector.extract_strided_slice %96 {offsets = [0, 128], sizes = [8, 128], strides = [1, 1]} : vector<8x512xf32> to vector<8x128xf32>
    %cst_43 = arith.constant 5.000000e-01 : f32
    %106 = vector.broadcast %cst_43 : f32 to vector<8x128xf32>
    %107 = arith.mulf %106, %105 : vector<8x128xf32>
    %108 = math.tanh %107 : vector<8x128xf32>
    %cst_44 = arith.constant 1.000000e+00 : f32
    %109 = vector.broadcast %cst_44 : f32 to vector<8x128xf32>
    %110 = arith.addf %108, %109 : vector<8x128xf32>
    %cst_45 = arith.constant 5.000000e-01 : f32
    %111 = vector.broadcast %cst_45 : f32 to vector<8x128xf32>
    %112 = arith.mulf %111, %110 : vector<8x128xf32>
    %113 = vector.extract_strided_slice %96 {offsets = [0, 256], sizes = [8, 128], strides = [1, 1]} : vector<8x512xf32> to vector<8x128xf32>
    %114 = math.tanh %113 : vector<8x128xf32>
    %115 = vector.extract_strided_slice %96 {offsets = [0, 384], sizes = [8, 128], strides = [1, 1]} : vector<8x512xf32> to vector<8x128xf32>
    %cst_46 = arith.constant 5.000000e-01 : f32
    %116 = vector.broadcast %cst_46 : f32 to vector<8x128xf32>
    %117 = arith.mulf %116, %115 : vector<8x128xf32>
    %118 = math.tanh %117 : vector<8x128xf32>
    %cst_47 = arith.constant 1.000000e+00 : f32
    %119 = vector.broadcast %cst_47 : f32 to vector<8x128xf32>
    %120 = arith.addf %118, %119 : vector<8x128xf32>
    %cst_48 = arith.constant 5.000000e-01 : f32
    %121 = vector.broadcast %cst_48 : f32 to vector<8x128xf32>
    %122 = arith.mulf %121, %120 : vector<8x128xf32>
    %123 = arith.mulf %112, %84 : vector<8x128xf32>
    %124 = arith.mulf %104, %114 : vector<8x128xf32>
    %125 = arith.addf %123, %124 : vector<8x128xf32>
    %126 = math.tanh %125 : vector<8x128xf32>
    %127 = arith.mulf %122, %126 : vector<8x128xf32>
    %128 = arith.index_cast %c2_i32 : i32 to index
    %c0_49 = arith.constant 0 : index
    %c0_50 = arith.constant 0 : index
    %129 = vector.load %arg25[%128, %c0_49, %c0_50] : memref<8x8x128xf32, #tpu.memory_space<vmem>>, vector<1x8x128xf32>
    %130 = vector.shape_cast %129 : vector<1x8x128xf32> to vector<8x128xf32>
    %131 = vector.shape_cast %127 : vector<8x128xf32> to vector<1x8x128xf32>
    tpu.vector_store %arg25[%128, %c0_49, %c0_50], %131 {strides = array<i32>} : memref<8x8x128xf32, #tpu.memory_space<vmem>>, vector<1x8x128xf32>,
    %c3_i32 = arith.constant 3 : i32
    %132 = arith.truncf %127 : vector<8x128xf32> to vector<8x128xbf16>
    %cst_51 = arith.constant dense<0.000000e+00> : vector<8x512xf32>
    %133 = tpu.matmul %132, %4, %cst_51 {dimension_numbers = #tpu.dot_dimension_numbers<[1], [0], [0], [1], [0, 0, 1, 1], [], []>} : vector<8x128xbf16>, vector<128x512xbf16>, vector<8x512xf32> -> vector<8x512xf32>
    %134 = arith.index_cast %c3_i32 : i32 to index
    %c0_52 = arith.constant 0 : index
    %c0_53 = arith.constant 0 : index
    %135 = vector.load %arg1[%134, %c0_52, %c0_53] : memref<8x8x512xf32, #tpu.memory_space<vmem>>, vector<1x8x512xf32>
    %136 = vector.shape_cast %135 : vector<1x8x512xf32> to vector<8x512xf32>
    %137 = arith.addf %136, %133 : vector<8x512xf32>
    %138 = vector.extract_strided_slice %137 {offsets = [0, 0], sizes = [8, 128], strides = [1, 1]} : vector<8x512xf32> to vector<8x128xf32>
    %cst_54 = arith.constant 5.000000e-01 : f32
    %139 = vector.broadcast %cst_54 : f32 to vector<8x128xf32>
    %140 = arith.mulf %139, %138 : vector<8x128xf32>
    %141 = math.tanh %140 : vector<8x128xf32>
    %cst_55 = arith.constant 1.000000e+00 : f32
    %142 = vector.broadcast %cst_55 : f32 to vector<8x128xf32>
    %143 = arith.addf %141, %142 : vector<8x128xf32>
    %cst_56 = arith.constant 5.000000e-01 : f32
    %144 = vector.broadcast %cst_56 : f32 to vector<8x128xf32>
    %145 = arith.mulf %144, %143 : vector<8x128xf32>
    %146 = vector.extract_strided_slice %137 {offsets = [0, 128], sizes = [8, 128], strides = [1, 1]} : vector<8x512xf32> to vector<8x128xf32>
    %cst_57 = arith.constant 5.000000e-01 : f32
    %147 = vector.broadcast %cst_57 : f32 to vector<8x128xf32>
    %148 = arith.mulf %147, %146 : vector<8x128xf32>
    %149 = math.tanh %148 : vector<8x128xf32>
    %cst_58 = arith.constant 1.000000e+00 : f32
    %150 = vector.broadcast %cst_58 : f32 to vector<8x128xf32>
    %151 = arith.addf %149, %150 : vector<8x128xf32>
    %cst_59 = arith.constant 5.000000e-01 : f32
    %152 = vector.broadcast %cst_59 : f32 to vector<8x128xf32>
    %153 = arith.mulf %152, %151 : vector<8x128xf32>
    %154 = vector.extract_strided_slice %137 {offsets = [0, 256], sizes = [8, 128], strides = [1, 1]} : vector<8x512xf32> to vector<8x128xf32>
    %155 = math.tanh %154 : vector<8x128xf32>
    %156 = vector.extract_strided_slice %137 {offsets = [0, 384], sizes = [8, 128], strides = [1, 1]} : vector<8x512xf32> to vector<8x128xf32>
    %cst_60 = arith.constant 5.000000e-01 : f32
    %157 = vector.broadcast %cst_60 : f32 to vector<8x128xf32>
    %158 = arith.mulf %157, %156 : vector<8x128xf32>
    %159 = math.tanh %158 : vector<8x128xf32>
    %cst_61 = arith.constant 1.000000e+00 : f32
    %160 = vector.broadcast %cst_61 : f32 to vector<8x128xf32>
    %161 = arith.addf %159, %160 : vector<8x128xf32>
    %cst_62 = arith.constant 5.000000e-01 : f32
    %162 = vector.broadcast %cst_62 : f32 to vector<8x128xf32>
    %163 = arith.mulf %162, %161 : vector<8x128xf32>
    %164 = arith.mulf %153, %125 : vector<8x128xf32>
    %165 = arith.mulf %145, %155 : vector<8x128xf32>
    %166 = arith.addf %164, %165 : vector<8x128xf32>
    %167 = math.tanh %166 : vector<8x128xf32>
    %168 = arith.mulf %163, %167 : vector<8x128xf32>
    %169 = arith.index_cast %c3_i32 : i32 to index
    %c0_63 = arith.constant 0 : index
    %c0_64 = arith.constant 0 : index
    %170 = vector.load %arg25[%169, %c0_63, %c0_64] : memref<8x8x128xf32, #tpu.memory_space<vmem>>, vector<1x8x128xf32>
    %171 = vector.shape_cast %170 : vector<1x8x128xf32> to vector<8x128xf32>
    %172 = vector.shape_cast %168 : vector<8x128xf32> to vector<1x8x128xf32>
    tpu.vector_store %arg25[%169, %c0_63, %c0_64], %172 {strides = array<i32>} : memref<8x8x128xf32, #tpu.memory_space<vmem>>, vector<1x8x128xf32>,
    %c4_i32 = arith.constant 4 : i32
    %173 = arith.truncf %168 : vector<8x128xf32> to vector<8x128xbf16>
    %cst_65 = arith.constant dense<0.000000e+00> : vector<8x512xf32>
    %174 = tpu.matmul %173, %4, %cst_65 {dimension_numbers = #tpu.dot_dimension_numbers<[1], [0], [0], [1], [0, 0, 1, 1], [], []>} : vector<8x128xbf16>, vector<128x512xbf16>, vector<8x512xf32> -> vector<8x512xf32>
    %175 = arith.index_cast %c4_i32 : i32 to index
    %c0_66 = arith.constant 0 : index
    %c0_67 = arith.constant 0 : index
    %176 = vector.load %arg1[%175, %c0_66, %c0_67] : memref<8x8x512xf32, #tpu.memory_space<vmem>>, vector<1x8x512xf32>
    %177 = vector.shape_cast %176 : vector<1x8x512xf32> to vector<8x512xf32>
    %178 = arith.addf %177, %174 : vector<8x512xf32>
    %179 = vector.extract_strided_slice %178 {offsets = [0, 0], sizes = [8, 128], strides = [1, 1]} : vector<8x512xf32> to vector<8x128xf32>
    %cst_68 = arith.constant 5.000000e-01 : f32
    %180 = vector.broadcast %cst_68 : f32 to vector<8x128xf32>
    %181 = arith.mulf %180, %179 : vector<8x128xf32>
    %182 = math.tanh %181 : vector<8x128xf32>
    %cst_69 = arith.constant 1.000000e+00 : f32
    %183 = vector.broadcast %cst_69 : f32 to vector<8x128xf32>
    %184 = arith.addf %182, %183 : vector<8x128xf32>
    %cst_70 = arith.constant 5.000000e-01 : f32
    %185 = vector.broadcast %cst_70 : f32 to vector<8x128xf32>
    %186 = arith.mulf %185, %184 : vector<8x128xf32>
    %187 = vector.extract_strided_slice %178 {offsets = [0, 128], sizes = [8, 128], strides = [1, 1]} : vector<8x512xf32> to vector<8x128xf32>
    %cst_71 = arith.constant 5.000000e-01 : f32
    %188 = vector.broadcast %cst_71 : f32 to vector<8x128xf32>
    %189 = arith.mulf %188, %187 : vector<8x128xf32>
    %190 = math.tanh %189 : vector<8x128xf32>
    %cst_72 = arith.constant 1.000000e+00 : f32
    %191 = vector.broadcast %cst_72 : f32 to vector<8x128xf32>
    %192 = arith.addf %190, %191 : vector<8x128xf32>
    %cst_73 = arith.constant 5.000000e-01 : f32
    %193 = vector.broadcast %cst_73 : f32 to vector<8x128xf32>
    %194 = arith.mulf %193, %192 : vector<8x128xf32>
    %195 = vector.extract_strided_slice %178 {offsets = [0, 256], sizes = [8, 128], strides = [1, 1]} : vector<8x512xf32> to vector<8x128xf32>
    %196 = math.tanh %195 : vector<8x128xf32>
    %197 = vector.extract_strided_slice %178 {offsets = [0, 384], sizes = [8, 128], strides = [1, 1]} : vector<8x512xf32> to vector<8x128xf32>
    %cst_74 = arith.constant 5.000000e-01 : f32
    %198 = vector.broadcast %cst_74 : f32 to vector<8x128xf32>
    %199 = arith.mulf %198, %197 : vector<8x128xf32>
    %200 = math.tanh %199 : vector<8x128xf32>
    %cst_75 = arith.constant 1.000000e+00 : f32
    %201 = vector.broadcast %cst_75 : f32 to vector<8x128xf32>
    %202 = arith.addf %200, %201 : vector<8x128xf32>
    %cst_76 = arith.constant 5.000000e-01 : f32
    %203 = vector.broadcast %cst_76 : f32 to vector<8x128xf32>
    %204 = arith.mulf %203, %202 : vector<8x128xf32>
    %205 = arith.mulf %194, %166 : vector<8x128xf32>
    %206 = arith.mulf %186, %196 : vector<8x128xf32>
    %207 = arith.addf %205, %206 : vector<8x128xf32>
    %208 = math.tanh %207 : vector<8x128xf32>
    %209 = arith.mulf %204, %208 : vector<8x128xf32>
    %210 = arith.index_cast %c4_i32 : i32 to index
    %c0_77 = arith.constant 0 : index
    %c0_78 = arith.constant 0 : index
    %211 = vector.load %arg25[%210, %c0_77, %c0_78] : memref<8x8x128xf32, #tpu.memory_space<vmem>>, vector<1x8x128xf32>
    %212 = vector.shape_cast %211 : vector<1x8x128xf32> to vector<8x128xf32>
    %213 = vector.shape_cast %209 : vector<8x128xf32> to vector<1x8x128xf32>
    tpu.vector_store %arg25[%210, %c0_77, %c0_78], %213 {strides = array<i32>} : memref<8x8x128xf32, #tpu.memory_space<vmem>>, vector<1x8x128xf32>,
    %c5_i32 = arith.constant 5 : i32
    %214 = arith.truncf %209 : vector<8x128xf32> to vector<8x128xbf16>
    %cst_79 = arith.constant dense<0.000000e+00> : vector<8x512xf32>
    %215 = tpu.matmul %214, %4, %cst_79 {dimension_numbers = #tpu.dot_dimension_numbers<[1], [0], [0], [1], [0, 0, 1, 1], [], []>} : vector<8x128xbf16>, vector<128x512xbf16>, vector<8x512xf32> -> vector<8x512xf32>
    %216 = arith.index_cast %c5_i32 : i32 to index
    %c0_80 = arith.constant 0 : index
    %c0_81 = arith.constant 0 : index
    %217 = vector.load %arg1[%216, %c0_80, %c0_81] : memref<8x8x512xf32, #tpu.memory_space<vmem>>, vector<1x8x512xf32>
    %218 = vector.shape_cast %217 : vector<1x8x512xf32> to vector<8x512xf32>
    %219 = arith.addf %218, %215 : vector<8x512xf32>
    %220 = vector.extract_strided_slice %219 {offsets = [0, 0], sizes = [8, 128], strides = [1, 1]} : vector<8x512xf32> to vector<8x128xf32>
    %cst_82 = arith.constant 5.000000e-01 : f32
    %221 = vector.broadcast %cst_82 : f32 to vector<8x128xf32>
    %222 = arith.mulf %221, %220 : vector<8x128xf32>
    %223 = math.tanh %222 : vector<8x128xf32>
    %cst_83 = arith.constant 1.000000e+00 : f32
    %224 = vector.broadcast %cst_83 : f32 to vector<8x128xf32>
    %225 = arith.addf %223, %224 : vector<8x128xf32>
    %cst_84 = arith.constant 5.000000e-01 : f32
    %226 = vector.broadcast %cst_84 : f32 to vector<8x128xf32>
    %227 = arith.mulf %226, %225 : vector<8x128xf32>
    %228 = vector.extract_strided_slice %219 {offsets = [0, 128], sizes = [8, 128], strides = [1, 1]} : vector<8x512xf32> to vector<8x128xf32>
    %cst_85 = arith.constant 5.000000e-01 : f32
    %229 = vector.broadcast %cst_85 : f32 to vector<8x128xf32>
    %230 = arith.mulf %229, %228 : vector<8x128xf32>
    %231 = math.tanh %230 : vector<8x128xf32>
    %cst_86 = arith.constant 1.000000e+00 : f32
    %232 = vector.broadcast %cst_86 : f32 to vector<8x128xf32>
    %233 = arith.addf %231, %232 : vector<8x128xf32>
    %cst_87 = arith.constant 5.000000e-01 : f32
    %234 = vector.broadcast %cst_87 : f32 to vector<8x128xf32>
    %235 = arith.mulf %234, %233 : vector<8x128xf32>
    %236 = vector.extract_strided_slice %219 {offsets = [0, 256], sizes = [8, 128], strides = [1, 1]} : vector<8x512xf32> to vector<8x128xf32>
    %237 = math.tanh %236 : vector<8x128xf32>
    %238 = vector.extract_strided_slice %219 {offsets = [0, 384], sizes = [8, 128], strides = [1, 1]} : vector<8x512xf32> to vector<8x128xf32>
    %cst_88 = arith.constant 5.000000e-01 : f32
    %239 = vector.broadcast %cst_88 : f32 to vector<8x128xf32>
    %240 = arith.mulf %239, %238 : vector<8x128xf32>
    %241 = math.tanh %240 : vector<8x128xf32>
    %cst_89 = arith.constant 1.000000e+00 : f32
    %242 = vector.broadcast %cst_89 : f32 to vector<8x128xf32>
    %243 = arith.addf %241, %242 : vector<8x128xf32>
    %cst_90 = arith.constant 5.000000e-01 : f32
    %244 = vector.broadcast %cst_90 : f32 to vector<8x128xf32>
    %245 = arith.mulf %244, %243 : vector<8x128xf32>
    %246 = arith.mulf %235, %207 : vector<8x128xf32>
    %247 = arith.mulf %227, %237 : vector<8x128xf32>
    %248 = arith.addf %246, %247 : vector<8x128xf32>
    %249 = math.tanh %248 : vector<8x128xf32>
    %250 = arith.mulf %245, %249 : vector<8x128xf32>
    %251 = arith.index_cast %c5_i32 : i32 to index
    %c0_91 = arith.constant 0 : index
    %c0_92 = arith.constant 0 : index
    %252 = vector.load %arg25[%251, %c0_91, %c0_92] : memref<8x8x128xf32, #tpu.memory_space<vmem>>, vector<1x8x128xf32>
    %253 = vector.shape_cast %252 : vector<1x8x128xf32> to vector<8x128xf32>
    %254 = vector.shape_cast %250 : vector<8x128xf32> to vector<1x8x128xf32>
    tpu.vector_store %arg25[%251, %c0_91, %c0_92], %254 {strides = array<i32>} : memref<8x8x128xf32, #tpu.memory_space<vmem>>, vector<1x8x128xf32>,
    %c6_i32 = arith.constant 6 : i32
    %255 = arith.truncf %250 : vector<8x128xf32> to vector<8x128xbf16>
    %cst_93 = arith.constant dense<0.000000e+00> : vector<8x512xf32>
    %256 = tpu.matmul %255, %4, %cst_93 {dimension_numbers = #tpu.dot_dimension_numbers<[1], [0], [0], [1], [0, 0, 1, 1], [], []>} : vector<8x128xbf16>, vector<128x512xbf16>, vector<8x512xf32> -> vector<8x512xf32>
    %257 = arith.index_cast %c6_i32 : i32 to index
    %c0_94 = arith.constant 0 : index
    %c0_95 = arith.constant 0 : index
    %258 = vector.load %arg1[%257, %c0_94, %c0_95] : memref<8x8x512xf32, #tpu.memory_space<vmem>>, vector<1x8x512xf32>
    %259 = vector.shape_cast %258 : vector<1x8x512xf32> to vector<8x512xf32>
    %260 = arith.addf %259, %256 : vector<8x512xf32>
    %261 = vector.extract_strided_slice %260 {offsets = [0, 0], sizes = [8, 128], strides = [1, 1]} : vector<8x512xf32> to vector<8x128xf32>
    %cst_96 = arith.constant 5.000000e-01 : f32
    %262 = vector.broadcast %cst_96 : f32 to vector<8x128xf32>
    %263 = arith.mulf %262, %261 : vector<8x128xf32>
    %264 = math.tanh %263 : vector<8x128xf32>
    %cst_97 = arith.constant 1.000000e+00 : f32
    %265 = vector.broadcast %cst_97 : f32 to vector<8x128xf32>
    %266 = arith.addf %264, %265 : vector<8x128xf32>
    %cst_98 = arith.constant 5.000000e-01 : f32
    %267 = vector.broadcast %cst_98 : f32 to vector<8x128xf32>
    %268 = arith.mulf %267, %266 : vector<8x128xf32>
    %269 = vector.extract_strided_slice %260 {offsets = [0, 128], sizes = [8, 128], strides = [1, 1]} : vector<8x512xf32> to vector<8x128xf32>
    %cst_99 = arith.constant 5.000000e-01 : f32
    %270 = vector.broadcast %cst_99 : f32 to vector<8x128xf32>
    %271 = arith.mulf %270, %269 : vector<8x128xf32>
    %272 = math.tanh %271 : vector<8x128xf32>
    %cst_100 = arith.constant 1.000000e+00 : f32
    %273 = vector.broadcast %cst_100 : f32 to vector<8x128xf32>
    %274 = arith.addf %272, %273 : vector<8x128xf32>
    %cst_101 = arith.constant 5.000000e-01 : f32
    %275 = vector.broadcast %cst_101 : f32 to vector<8x128xf32>
    %276 = arith.mulf %275, %274 : vector<8x128xf32>
    %277 = vector.extract_strided_slice %260 {offsets = [0, 256], sizes = [8, 128], strides = [1, 1]} : vector<8x512xf32> to vector<8x128xf32>
    %278 = math.tanh %277 : vector<8x128xf32>
    %279 = vector.extract_strided_slice %260 {offsets = [0, 384], sizes = [8, 128], strides = [1, 1]} : vector<8x512xf32> to vector<8x128xf32>
    %cst_102 = arith.constant 5.000000e-01 : f32
    %280 = vector.broadcast %cst_102 : f32 to vector<8x128xf32>
    %281 = arith.mulf %280, %279 : vector<8x128xf32>
    %282 = math.tanh %281 : vector<8x128xf32>
    %cst_103 = arith.constant 1.000000e+00 : f32
    %283 = vector.broadcast %cst_103 : f32 to vector<8x128xf32>
    %284 = arith.addf %282, %283 : vector<8x128xf32>
    %cst_104 = arith.constant 5.000000e-01 : f32
    %285 = vector.broadcast %cst_104 : f32 to vector<8x128xf32>
    %286 = arith.mulf %285, %284 : vector<8x128xf32>
    %287 = arith.mulf %276, %248 : vector<8x128xf32>
    %288 = arith.mulf %268, %278 : vector<8x128xf32>
    %289 = arith.addf %287, %288 : vector<8x128xf32>
    %290 = math.tanh %289 : vector<8x128xf32>
    %291 = arith.mulf %286, %290 : vector<8x128xf32>
    %292 = arith.index_cast %c6_i32 : i32 to index
    %c0_105 = arith.constant 0 : index
    %c0_106 = arith.constant 0 : index
    %293 = vector.load %arg25[%292, %c0_105, %c0_106] : memref<8x8x128xf32, #tpu.memory_space<vmem>>, vector<1x8x128xf32>
    %294 = vector.shape_cast %293 : vector<1x8x128xf32> to vector<8x128xf32>
    %295 = vector.shape_cast %291 : vector<8x128xf32> to vector<1x8x128xf32>
    tpu.vector_store %arg25[%292, %c0_105, %c0_106], %295 {strides = array<i32>} : memref<8x8x128xf32, #tpu.memory_space<vmem>>, vector<1x8x128xf32>,
    %c7_i32 = arith.constant 7 : i32
    %296 = arith.truncf %291 : vector<8x128xf32> to vector<8x128xbf16>
    %cst_107 = arith.constant dense<0.000000e+00> : vector<8x512xf32>
    %297 = tpu.matmul %296, %4, %cst_107 {dimension_numbers = #tpu.dot_dimension_numbers<[1], [0], [0], [1], [0, 0, 1, 1], [], []>} : vector<8x128xbf16>, vector<128x512xbf16>, vector<8x512xf32> -> vector<8x512xf32>
    %298 = arith.index_cast %c7_i32 : i32 to index
    %c0_108 = arith.constant 0 : index
    %c0_109 = arith.constant 0 : index
    %299 = vector.load %arg1[%298, %c0_108, %c0_109] : memref<8x8x512xf32, #tpu.memory_space<vmem>>, vector<1x8x512xf32>
    %300 = vector.shape_cast %299 : vector<1x8x512xf32> to vector<8x512xf32>
    %301 = arith.addf %300, %297 : vector<8x512xf32>
    %302 = vector.extract_strided_slice %301 {offsets = [0, 0], sizes = [8, 128], strides = [1, 1]} : vector<8x512xf32> to vector<8x128xf32>
    %cst_110 = arith.constant 5.000000e-01 : f32
    %303 = vector.broadcast %cst_110 : f32 to vector<8x128xf32>
    %304 = arith.mulf %303, %302 : vector<8x128xf32>
    %305 = math.tanh %304 : vector<8x128xf32>
    %cst_111 = arith.constant 1.000000e+00 : f32
    %306 = vector.broadcast %cst_111 : f32 to vector<8x128xf32>
    %307 = arith.addf %305, %306 : vector<8x128xf32>
    %cst_112 = arith.constant 5.000000e-01 : f32
    %308 = vector.broadcast %cst_112 : f32 to vector<8x128xf32>
    %309 = arith.mulf %308, %307 : vector<8x128xf32>
    %310 = vector.extract_strided_slice %301 {offsets = [0, 128], sizes = [8, 128], strides = [1, 1]} : vector<8x512xf32> to vector<8x128xf32>
    %cst_113 = arith.constant 5.000000e-01 : f32
    %311 = vector.broadcast %cst_113 : f32 to vector<8x128xf32>
    %312 = arith.mulf %311, %310 : vector<8x128xf32>
    %313 = math.tanh %312 : vector<8x128xf32>
    %cst_114 = arith.constant 1.000000e+00 : f32
    %314 = vector.broadcast %cst_114 : f32 to vector<8x128xf32>
    %315 = arith.addf %313, %314 : vector<8x128xf32>
    %cst_115 = arith.constant 5.000000e-01 : f32
    %316 = vector.broadcast %cst_115 : f32 to vector<8x128xf32>
    %317 = arith.mulf %316, %315 : vector<8x128xf32>
    %318 = vector.extract_strided_slice %301 {offsets = [0, 256], sizes = [8, 128], strides = [1, 1]} : vector<8x512xf32> to vector<8x128xf32>
    %319 = math.tanh %318 : vector<8x128xf32>
    %320 = vector.extract_strided_slice %301 {offsets = [0, 384], sizes = [8, 128], strides = [1, 1]} : vector<8x512xf32> to vector<8x128xf32>
    %cst_116 = arith.constant 5.000000e-01 : f32
    %321 = vector.broadcast %cst_116 : f32 to vector<8x128xf32>
    %322 = arith.mulf %321, %320 : vector<8x128xf32>
    %323 = math.tanh %322 : vector<8x128xf32>
    %cst_117 = arith.constant 1.000000e+00 : f32
    %324 = vector.broadcast %cst_117 : f32 to vector<8x128xf32>
    %325 = arith.addf %323, %324 : vector<8x128xf32>
    %cst_118 = arith.constant 5.000000e-01 : f32
    %326 = vector.broadcast %cst_118 : f32 to vector<8x128xf32>
    %327 = arith.mulf %326, %325 : vector<8x128xf32>
    %328 = arith.mulf %317, %289 : vector<8x128xf32>
    %329 = arith.mulf %309, %319 : vector<8x128xf32>
    %330 = arith.addf %328, %329 : vector<8x128xf32>
    %331 = math.tanh %330 : vector<8x128xf32>
    %332 = arith.mulf %327, %331 : vector<8x128xf32>
    %333 = arith.index_cast %c7_i32 : i32 to index
    %c0_119 = arith.constant 0 : index
    %c0_120 = arith.constant 0 : index
    %334 = vector.load %arg25[%333, %c0_119, %c0_120] : memref<8x8x128xf32, #tpu.memory_space<vmem>>, vector<1x8x128xf32>
    %335 = vector.shape_cast %334 : vector<1x8x128xf32> to vector<8x128xf32>
    %336 = vector.shape_cast %332 : vector<8x128xf32> to vector<1x8x128xf32>
    tpu.vector_store %arg25[%333, %c0_119, %c0_120], %336 {strides = array<i32>} : memref<8x8x128xf32, #tpu.memory_space<vmem>>, vector<1x8x128xf32>,
    %c8_i32 = arith.constant 8 : i32
    %c0_121 = arith.constant 0 : index
    %c0_122 = arith.constant 0 : index
    %c0_123 = arith.constant 0 : index
    %337 = vector.load %arg23[%c0_121, %c0_122, %c0_123] : memref<2x8x128xf32, #tpu.memory_space<vmem>>, vector<1x8x128xf32>
    %338 = vector.shape_cast %337 : vector<1x8x128xf32> to vector<8x128xf32>
    %339 = vector.shape_cast %332 : vector<8x128xf32> to vector<1x8x128xf32>
    tpu.vector_store %arg23[%c0_121, %c0_122, %c0_123], %339 {strides = array<i32>} : memref<2x8x128xf32, #tpu.memory_space<vmem>>, vector<1x8x128xf32>,
    %c0_124 = arith.constant 0 : index
    %c0_125 = arith.constant 0 : index
    %c0_126 = arith.constant 0 : index
    %340 = vector.load %arg24[%c0_124, %c0_125, %c0_126] : memref<2x8x128xf32, #tpu.memory_space<vmem>>, vector<1x8x128xf32>
    %341 = vector.shape_cast %340 : vector<1x8x128xf32> to vector<8x128xf32>
    %342 = vector.shape_cast %330 : vector<8x128xf32> to vector<1x8x128xf32>
    tpu.vector_store %arg24[%c0_124, %c0_125, %c0_126], %342 {strides = array<i32>} : memref<2x8x128xf32, #tpu.memory_space<vmem>>, vector<1x8x128xf32>,
    %c1 = arith.constant 1 : index
    %c0_127 = arith.constant 0 : index
    %c0_128 = arith.constant 0 : index
    %343 = vector.load %arg3[%c1, %c0_127, %c0_128] : memref<2x128x512xbf16, #tpu.memory_space<vmem>>, vector<1x128x512xbf16>
    %344 = vector.shape_cast %343 : vector<1x128x512xbf16> to vector<128x512xbf16>
    %c1_129 = arith.constant 1 : index
    %c0_130 = arith.constant 0 : index
    %c0_131 = arith.constant 0 : index
    %345 = vector.load %arg2[%c1_129, %c0_130, %c0_131] : memref<2x128x512xbf16, #tpu.memory_space<vmem>>, vector<1x128x512xbf16>
    %346 = vector.shape_cast %345 : vector<1x128x512xbf16> to vector<128x512xbf16>
    %c1_132 = arith.constant 1 : index
    %c0_133 = arith.constant 0 : index
    %c0_134 = arith.constant 0 : index
    %347 = vector.load %arg4[%c1_132, %c0_133, %c0_134] : memref<2x1x512xf32, #tpu.memory_space<vmem>>, vector<1x1x512xf32>
    %348 = vector.shape_cast %347 : vector<1x1x512xf32> to vector<1x512xf32>
    %349 = vector.shape_cast %348 : vector<1x512xf32> to vector<1x512xf32>
    %350 = vector.broadcast %349 : vector<1x512xf32> to vector<8x512xf32>
    %c1_135 = arith.constant 1 : index
    %c0_136 = arith.constant 0 : index
    %c0_137 = arith.constant 0 : index
    %351 = vector.load %arg23[%c1_135, %c0_136, %c0_137] : memref<2x8x128xf32, #tpu.memory_space<vmem>>, vector<1x8x128xf32>
    %352 = vector.shape_cast %351 : vector<1x8x128xf32> to vector<8x128xf32>
    %c1_138 = arith.constant 1 : index
    %c0_139 = arith.constant 0 : index
    %c0_140 = arith.constant 0 : index
    %353 = vector.load %arg24[%c1_138, %c0_139, %c0_140] : memref<2x8x128xf32, #tpu.memory_space<vmem>>, vector<1x8x128xf32>
    %354 = vector.shape_cast %353 : vector<1x8x128xf32> to vector<8x128xf32>
    %c0_i32_141 = arith.constant 0 : i32
    %355 = arith.truncf %352 : vector<8x128xf32> to vector<8x128xbf16>
    %cst_142 = arith.constant dense<0.000000e+00> : vector<8x512xf32>
    %356 = tpu.matmul %355, %344, %cst_142 {dimension_numbers = #tpu.dot_dimension_numbers<[1], [0], [0], [1], [0, 0, 1, 1], [], []>} : vector<8x128xbf16>, vector<128x512xbf16>, vector<8x512xf32> -> vector<8x512xf32>
    %357 = arith.index_cast %c0_i32_141 : i32 to index
    %c0_143 = arith.constant 0 : index
    %c0_144 = arith.constant 0 : index
    %358 = vector.load %arg25[%357, %c0_143, %c0_144] : memref<8x8x128xf32, #tpu.memory_space<vmem>>, vector<1x8x128xf32>
    %359 = vector.shape_cast %358 : vector<1x8x128xf32> to vector<8x128xf32>
    %360 = arith.truncf %359 : vector<8x128xf32> to vector<8x128xbf16>
    %cst_145 = arith.constant dense<0.000000e+00> : vector<8x512xf32>
    %361 = tpu.matmul %360, %346, %cst_145 {dimension_numbers = #tpu.dot_dimension_numbers<[1], [0], [0], [1], [0, 0, 1, 1], [], []>} : vector<8x128xbf16>, vector<128x512xbf16>, vector<8x512xf32> -> vector<8x512xf32>
    %362 = arith.addf %361, %356 : vector<8x512xf32>
    %363 = arith.addf %362, %350 : vector<8x512xf32>
    %364 = vector.extract_strided_slice %363 {offsets = [0, 0], sizes = [8, 128], strides = [1, 1]} : vector<8x512xf32> to vector<8x128xf32>
    %cst_146 = arith.constant 5.000000e-01 : f32
    %365 = vector.broadcast %cst_146 : f32 to vector<8x128xf32>
    %366 = arith.mulf %365, %364 : vector<8x128xf32>
    %367 = math.tanh %366 : vector<8x128xf32>
    %cst_147 = arith.constant 1.000000e+00 : f32
    %368 = vector.broadcast %cst_147 : f32 to vector<8x128xf32>
    %369 = arith.addf %367, %368 : vector<8x128xf32>
    %cst_148 = arith.constant 5.000000e-01 : f32
    %370 = vector.broadcast %cst_148 : f32 to vector<8x128xf32>
    %371 = arith.mulf %370, %369 : vector<8x128xf32>
    %372 = vector.extract_strided_slice %363 {offsets = [0, 128], sizes = [8, 128], strides = [1, 1]} : vector<8x512xf32> to vector<8x128xf32>
    %cst_149 = arith.constant 5.000000e-01 : f32
    %373 = vector.broadcast %cst_149 : f32 to vector<8x128xf32>
    %374 = arith.mulf %373, %372 : vector<8x128xf32>
    %375 = math.tanh %374 : vector<8x128xf32>
    %cst_150 = arith.constant 1.000000e+00 : f32
    %376 = vector.broadcast %cst_150 : f32 to vector<8x128xf32>
    %377 = arith.addf %375, %376 : vector<8x128xf32>
    %cst_151 = arith.constant 5.000000e-01 : f32
    %378 = vector.broadcast %cst_151 : f32 to vector<8x128xf32>
    %379 = arith.mulf %378, %377 : vector<8x128xf32>
    %380 = vector.extract_strided_slice %363 {offsets = [0, 256], sizes = [8, 128], strides = [1, 1]} : vector<8x512xf32> to vector<8x128xf32>
    %381 = math.tanh %380 : vector<8x128xf32>
    %382 = vector.extract_strided_slice %363 {offsets = [0, 384], sizes = [8, 128], strides = [1, 1]} : vector<8x512xf32> to vector<8x128xf32>
    %cst_152 = arith.constant 5.000000e-01 : f32
    %383 = vector.broadcast %cst_152 : f32 to vector<8x128xf32>
    %384 = arith.mulf %383, %382 : vector<8x128xf32>
    %385 = math.tanh %384 : vector<8x128xf32>
    %cst_153 = arith.constant 1.000000e+00 : f32
    %386 = vector.broadcast %cst_153 : f32 to vector<8x128xf32>
    %387 = arith.addf %385, %386 : vector<8x128xf32>
    %cst_154 = arith.constant 5.000000e-01 : f32
    %388 = vector.broadcast %cst_154 : f32 to vector<8x128xf32>
    %389 = arith.mulf %388, %387 : vector<8x128xf32>
    %390 = arith.mulf %379, %354 : vector<8x128xf32>
    %391 = arith.mulf %371, %381 : vector<8x128xf32>
    %392 = arith.addf %390, %391 : vector<8x128xf32>
    %393 = math.tanh %392 : vector<8x128xf32>
    %394 = arith.mulf %389, %393 : vector<8x128xf32>
    %c1_i32_155 = arith.constant 1 : i32
    %395 = arith.truncf %394 : vector<8x128xf32> to vector<8x128xbf16>
    %cst_156 = arith.constant dense<0.000000e+00> : vector<8x512xf32>
    %396 = tpu.matmul %395, %344, %cst_156 {dimension_numbers = #tpu.dot_dimension_numbers<[1], [0], [0], [1], [0, 0, 1, 1], [], []>} : vector<8x128xbf16>, vector<128x512xbf16>, vector<8x512xf32> -> vector<8x512xf32>
    %397 = arith.index_cast %c1_i32_155 : i32 to index
    %c0_157 = arith.constant 0 : index
    %c0_158 = arith.constant 0 : index
    %398 = vector.load %arg25[%397, %c0_157, %c0_158] : memref<8x8x128xf32, #tpu.memory_space<vmem>>, vector<1x8x128xf32>
    %399 = vector.shape_cast %398 : vector<1x8x128xf32> to vector<8x128xf32>
    %400 = arith.truncf %399 : vector<8x128xf32> to vector<8x128xbf16>
    %cst_159 = arith.constant dense<0.000000e+00> : vector<8x512xf32>
    %401 = tpu.matmul %400, %346, %cst_159 {dimension_numbers = #tpu.dot_dimension_numbers<[1], [0], [0], [1], [0, 0, 1, 1], [], []>} : vector<8x128xbf16>, vector<128x512xbf16>, vector<8x512xf32> -> vector<8x512xf32>
    %402 = arith.addf %401, %396 : vector<8x512xf32>
    %403 = arith.addf %402, %350 : vector<8x512xf32>
    %404 = vector.extract_strided_slice %403 {offsets = [0, 0], sizes = [8, 128], strides = [1, 1]} : vector<8x512xf32> to vector<8x128xf32>
    %cst_160 = arith.constant 5.000000e-01 : f32
    %405 = vector.broadcast %cst_160 : f32 to vector<8x128xf32>
    %406 = arith.mulf %405, %404 : vector<8x128xf32>
    %407 = math.tanh %406 : vector<8x128xf32>
    %cst_161 = arith.constant 1.000000e+00 : f32
    %408 = vector.broadcast %cst_161 : f32 to vector<8x128xf32>
    %409 = arith.addf %407, %408 : vector<8x128xf32>
    %cst_162 = arith.constant 5.000000e-01 : f32
    %410 = vector.broadcast %cst_162 : f32 to vector<8x128xf32>
    %411 = arith.mulf %410, %409 : vector<8x128xf32>
    %412 = vector.extract_strided_slice %403 {offsets = [0, 128], sizes = [8, 128], strides = [1, 1]} : vector<8x512xf32> to vector<8x128xf32>
    %cst_163 = arith.constant 5.000000e-01 : f32
    %413 = vector.broadcast %cst_163 : f32 to vector<8x128xf32>
    %414 = arith.mulf %413, %412 : vector<8x128xf32>
    %415 = math.tanh %414 : vector<8x128xf32>
    %cst_164 = arith.constant 1.000000e+00 : f32
    %416 = vector.broadcast %cst_164 : f32 to vector<8x128xf32>
    %417 = arith.addf %415, %416 : vector<8x128xf32>
    %cst_165 = arith.constant 5.000000e-01 : f32
    %418 = vector.broadcast %cst_165 : f32 to vector<8x128xf32>
    %419 = arith.mulf %418, %417 : vector<8x128xf32>
    %420 = vector.extract_strided_slice %403 {offsets = [0, 256], sizes = [8, 128], strides = [1, 1]} : vector<8x512xf32> to vector<8x128xf32>
    %421 = math.tanh %420 : vector<8x128xf32>
    %422 = vector.extract_strided_slice %403 {offsets = [0, 384], sizes = [8, 128], strides = [1, 1]} : vector<8x512xf32> to vector<8x128xf32>
    %cst_166 = arith.constant 5.000000e-01 : f32
    %423 = vector.broadcast %cst_166 : f32 to vector<8x128xf32>
    %424 = arith.mulf %423, %422 : vector<8x128xf32>
    %425 = math.tanh %424 : vector<8x128xf32>
    %cst_167 = arith.constant 1.000000e+00 : f32
    %426 = vector.broadcast %cst_167 : f32 to vector<8x128xf32>
    %427 = arith.addf %425, %426 : vector<8x128xf32>
    %cst_168 = arith.constant 5.000000e-01 : f32
    %428 = vector.broadcast %cst_168 : f32 to vector<8x128xf32>
    %429 = arith.mulf %428, %427 : vector<8x128xf32>
    %430 = arith.mulf %419, %392 : vector<8x128xf32>
    %431 = arith.mulf %411, %421 : vector<8x128xf32>
    %432 = arith.addf %430, %431 : vector<8x128xf32>
    %433 = math.tanh %432 : vector<8x128xf32>
    %434 = arith.mulf %429, %433 : vector<8x128xf32>
    %c2_i32_169 = arith.constant 2 : i32
    %435 = arith.truncf %434 : vector<8x128xf32> to vector<8x128xbf16>
    %cst_170 = arith.constant dense<0.000000e+00> : vector<8x512xf32>
    %436 = tpu.matmul %435, %344, %cst_170 {dimension_numbers = #tpu.dot_dimension_numbers<[1], [0], [0], [1], [0, 0, 1, 1], [], []>} : vector<8x128xbf16>, vector<128x512xbf16>, vector<8x512xf32> -> vector<8x512xf32>
    %437 = arith.index_cast %c2_i32_169 : i32 to index
    %c0_171 = arith.constant 0 : index
    %c0_172 = arith.constant 0 : index
    %438 = vector.load %arg25[%437, %c0_171, %c0_172] : memref<8x8x128xf32, #tpu.memory_space<vmem>>, vector<1x8x128xf32>
    %439 = vector.shape_cast %438 : vector<1x8x128xf32> to vector<8x128xf32>
    %440 = arith.truncf %439 : vector<8x128xf32> to vector<8x128xbf16>
    %cst_173 = arith.constant dense<0.000000e+00> : vector<8x512xf32>
    %441 = tpu.matmul %440, %346, %cst_173 {dimension_numbers = #tpu.dot_dimension_numbers<[1], [0], [0], [1], [0, 0, 1, 1], [], []>} : vector<8x128xbf16>, vector<128x512xbf16>, vector<8x512xf32> -> vector<8x512xf32>
    %442 = arith.addf %441, %436 : vector<8x512xf32>
    %443 = arith.addf %442, %350 : vector<8x512xf32>
    %444 = vector.extract_strided_slice %443 {offsets = [0, 0], sizes = [8, 128], strides = [1, 1]} : vector<8x512xf32> to vector<8x128xf32>
    %cst_174 = arith.constant 5.000000e-01 : f32
    %445 = vector.broadcast %cst_174 : f32 to vector<8x128xf32>
    %446 = arith.mulf %445, %444 : vector<8x128xf32>
    %447 = math.tanh %446 : vector<8x128xf32>
    %cst_175 = arith.constant 1.000000e+00 : f32
    %448 = vector.broadcast %cst_175 : f32 to vector<8x128xf32>
    %449 = arith.addf %447, %448 : vector<8x128xf32>
    %cst_176 = arith.constant 5.000000e-01 : f32
    %450 = vector.broadcast %cst_176 : f32 to vector<8x128xf32>
    %451 = arith.mulf %450, %449 : vector<8x128xf32>
    %452 = vector.extract_strided_slice %443 {offsets = [0, 128], sizes = [8, 128], strides = [1, 1]} : vector<8x512xf32> to vector<8x128xf32>
    %cst_177 = arith.constant 5.000000e-01 : f32
    %453 = vector.broadcast %cst_177 : f32 to vector<8x128xf32>
    %454 = arith.mulf %453, %452 : vector<8x128xf32>
    %455 = math.tanh %454 : vector<8x128xf32>
    %cst_178 = arith.constant 1.000000e+00 : f32
    %456 = vector.broadcast %cst_178 : f32 to vector<8x128xf32>
    %457 = arith.addf %455, %456 : vector<8x128xf32>
    %cst_179 = arith.constant 5.000000e-01 : f32
    %458 = vector.broadcast %cst_179 : f32 to vector<8x128xf32>
    %459 = arith.mulf %458, %457 : vector<8x128xf32>
    %460 = vector.extract_strided_slice %443 {offsets = [0, 256], sizes = [8, 128], strides = [1, 1]} : vector<8x512xf32> to vector<8x128xf32>
    %461 = math.tanh %460 : vector<8x128xf32>
    %462 = vector.extract_strided_slice %443 {offsets = [0, 384], sizes = [8, 128], strides = [1, 1]} : vector<8x512xf32> to vector<8x128xf32>
    %cst_180 = arith.constant 5.000000e-01 : f32
    %463 = vector.broadcast %cst_180 : f32 to vector<8x128xf32>
    %464 = arith.mulf %463, %462 : vector<8x128xf32>
    %465 = math.tanh %464 : vector<8x128xf32>
    %cst_181 = arith.constant 1.000000e+00 : f32
    %466 = vector.broadcast %cst_181 : f32 to vector<8x128xf32>
    %467 = arith.addf %465, %466 : vector<8x128xf32>
    %cst_182 = arith.constant 5.000000e-01 : f32
    %468 = vector.broadcast %cst_182 : f32 to vector<8x128xf32>
    %469 = arith.mulf %468, %467 : vector<8x128xf32>
    %470 = arith.mulf %459, %432 : vector<8x128xf32>
    %471 = arith.mulf %451, %461 : vector<8x128xf32>
    %472 = arith.addf %470, %471 : vector<8x128xf32>
    %473 = math.tanh %472 : vector<8x128xf32>
    %474 = arith.mulf %469, %473 : vector<8x128xf32>
    %c3_i32_183 = arith.constant 3 : i32
    %475 = arith.truncf %474 : vector<8x128xf32> to vector<8x128xbf16>
    %cst_184 = arith.constant dense<0.000000e+00> : vector<8x512xf32>
    %476 = tpu.matmul %475, %344, %cst_184 {dimension_numbers = #tpu.dot_dimension_numbers<[1], [0], [0], [1], [0, 0, 1, 1], [], []>} : vector<8x128xbf16>, vector<128x512xbf16>, vector<8x512xf32> -> vector<8x512xf32>
    %477 = arith.index_cast %c3_i32_183 : i32 to index
    %c0_185 = arith.constant 0 : index
    %c0_186 = arith.constant 0 : index
    %478 = vector.load %arg25[%477, %c0_185, %c0_186] : memref<8x8x128xf32, #tpu.memory_space<vmem>>, vector<1x8x128xf32>
    %479 = vector.shape_cast %478 : vector<1x8x128xf32> to vector<8x128xf32>
    %480 = arith.truncf %479 : vector<8x128xf32> to vector<8x128xbf16>
    %cst_187 = arith.constant dense<0.000000e+00> : vector<8x512xf32>
    %481 = tpu.matmul %480, %346, %cst_187 {dimension_numbers = #tpu.dot_dimension_numbers<[1], [0], [0], [1], [0, 0, 1, 1], [], []>} : vector<8x128xbf16>, vector<128x512xbf16>, vector<8x512xf32> -> vector<8x512xf32>
    %482 = arith.addf %481, %476 : vector<8x512xf32>
    %483 = arith.addf %482, %350 : vector<8x512xf32>
    %484 = vector.extract_strided_slice %483 {offsets = [0, 0], sizes = [8, 128], strides = [1, 1]} : vector<8x512xf32> to vector<8x128xf32>
    %cst_188 = arith.constant 5.000000e-01 : f32
    %485 = vector.broadcast %cst_188 : f32 to vector<8x128xf32>
    %486 = arith.mulf %485, %484 : vector<8x128xf32>
    %487 = math.tanh %486 : vector<8x128xf32>
    %cst_189 = arith.constant 1.000000e+00 : f32
    %488 = vector.broadcast %cst_189 : f32 to vector<8x128xf32>
    %489 = arith.addf %487, %488 : vector<8x128xf32>
    %cst_190 = arith.constant 5.000000e-01 : f32
    %490 = vector.broadcast %cst_190 : f32 to vector<8x128xf32>
    %491 = arith.mulf %490, %489 : vector<8x128xf32>
    %492 = vector.extract_strided_slice %483 {offsets = [0, 128], sizes = [8, 128], strides = [1, 1]} : vector<8x512xf32> to vector<8x128xf32>
    %cst_191 = arith.constant 5.000000e-01 : f32
    %493 = vector.broadcast %cst_191 : f32 to vector<8x128xf32>
    %494 = arith.mulf %493, %492 : vector<8x128xf32>
    %495 = math.tanh %494 : vector<8x128xf32>
    %cst_192 = arith.constant 1.000000e+00 : f32
    %496 = vector.broadcast %cst_192 : f32 to vector<8x128xf32>
    %497 = arith.addf %495, %496 : vector<8x128xf32>
    %cst_193 = arith.constant 5.000000e-01 : f32
    %498 = vector.broadcast %cst_193 : f32 to vector<8x128xf32>
    %499 = arith.mulf %498, %497 : vector<8x128xf32>
    %500 = vector.extract_strided_slice %483 {offsets = [0, 256], sizes = [8, 128], strides = [1, 1]} : vector<8x512xf32> to vector<8x128xf32>
    %501 = math.tanh %500 : vector<8x128xf32>
    %502 = vector.extract_strided_slice %483 {offsets = [0, 384], sizes = [8, 128], strides = [1, 1]} : vector<8x512xf32> to vector<8x128xf32>
    %cst_194 = arith.constant 5.000000e-01 : f32
    %503 = vector.broadcast %cst_194 : f32 to vector<8x128xf32>
    %504 = arith.mulf %503, %502 : vector<8x128xf32>
    %505 = math.tanh %504 : vector<8x128xf32>
    %cst_195 = arith.constant 1.000000e+00 : f32
    %506 = vector.broadcast %cst_195 : f32 to vector<8x128xf32>
    %507 = arith.addf %505, %506 : vector<8x128xf32>
    %cst_196 = arith.constant 5.000000e-01 : f32
    %508 = vector.broadcast %cst_196 : f32 to vector<8x128xf32>
    %509 = arith.mulf %508, %507 : vector<8x128xf32>
    %510 = arith.mulf %499, %472 : vector<8x128xf32>
    %511 = arith.mulf %491, %501 : vector<8x128xf32>
    %512 = arith.addf %510, %511 : vector<8x128xf32>
    %513 = math.tanh %512 : vector<8x128xf32>
    %514 = arith.mulf %509, %513 : vector<8x128xf32>
    %c4_i32_197 = arith.constant 4 : i32
    %515 = arith.truncf %514 : vector<8x128xf32> to vector<8x128xbf16>
    %cst_198 = arith.constant dense<0.000000e+00> : vector<8x512xf32>
    %516 = tpu.matmul %515, %344, %cst_198 {dimension_numbers = #tpu.dot_dimension_numbers<[1], [0], [0], [1], [0, 0, 1, 1], [], []>} : vector<8x128xbf16>, vector<128x512xbf16>, vector<8x512xf32> -> vector<8x512xf32>
    %517 = arith.index_cast %c4_i32_197 : i32 to index
    %c0_199 = arith.constant 0 : index
    %c0_200 = arith.constant 0 : index
    %518 = vector.load %arg25[%517, %c0_199, %c0_200] : memref<8x8x128xf32, #tpu.memory_space<vmem>>, vector<1x8x128xf32>
    %519 = vector.shape_cast %518 : vector<1x8x128xf32> to vector<8x128xf32>
    %520 = arith.truncf %519 : vector<8x128xf32> to vector<8x128xbf16>
    %cst_201 = arith.constant dense<0.000000e+00> : vector<8x512xf32>
    %521 = tpu.matmul %520, %346, %cst_201 {dimension_numbers = #tpu.dot_dimension_numbers<[1], [0], [0], [1], [0, 0, 1, 1], [], []>} : vector<8x128xbf16>, vector<128x512xbf16>, vector<8x512xf32> -> vector<8x512xf32>
    %522 = arith.addf %521, %516 : vector<8x512xf32>
    %523 = arith.addf %522, %350 : vector<8x512xf32>
    %524 = vector.extract_strided_slice %523 {offsets = [0, 0], sizes = [8, 128], strides = [1, 1]} : vector<8x512xf32> to vector<8x128xf32>
    %cst_202 = arith.constant 5.000000e-01 : f32
    %525 = vector.broadcast %cst_202 : f32 to vector<8x128xf32>
    %526 = arith.mulf %525, %524 : vector<8x128xf32>
    %527 = math.tanh %526 : vector<8x128xf32>
    %cst_203 = arith.constant 1.000000e+00 : f32
    %528 = vector.broadcast %cst_203 : f32 to vector<8x128xf32>
    %529 = arith.addf %527, %528 : vector<8x128xf32>
    %cst_204 = arith.constant 5.000000e-01 : f32
    %530 = vector.broadcast %cst_204 : f32 to vector<8x128xf32>
    %531 = arith.mulf %530, %529 : vector<8x128xf32>
    %532 = vector.extract_strided_slice %523 {offsets = [0, 128], sizes = [8, 128], strides = [1, 1]} : vector<8x512xf32> to vector<8x128xf32>
    %cst_205 = arith.constant 5.000000e-01 : f32
    %533 = vector.broadcast %cst_205 : f32 to vector<8x128xf32>
    %534 = arith.mulf %533, %532 : vector<8x128xf32>
    %535 = math.tanh %534 : vector<8x128xf32>
    %cst_206 = arith.constant 1.000000e+00 : f32
    %536 = vector.broadcast %cst_206 : f32 to vector<8x128xf32>
    %537 = arith.addf %535, %536 : vector<8x128xf32>
    %cst_207 = arith.constant 5.000000e-01 : f32
    %538 = vector.broadcast %cst_207 : f32 to vector<8x128xf32>
    %539 = arith.mulf %538, %537 : vector<8x128xf32>
    %540 = vector.extract_strided_slice %523 {offsets = [0, 256], sizes = [8, 128], strides = [1, 1]} : vector<8x512xf32> to vector<8x128xf32>
    %541 = math.tanh %540 : vector<8x128xf32>
    %542 = vector.extract_strided_slice %523 {offsets = [0, 384], sizes = [8, 128], strides = [1, 1]} : vector<8x512xf32> to vector<8x128xf32>
    %cst_208 = arith.constant 5.000000e-01 : f32
    %543 = vector.broadcast %cst_208 : f32 to vector<8x128xf32>
    %544 = arith.mulf %543, %542 : vector<8x128xf32>
    %545 = math.tanh %544 : vector<8x128xf32>
    %cst_209 = arith.constant 1.000000e+00 : f32
    %546 = vector.broadcast %cst_209 : f32 to vector<8x128xf32>
    %547 = arith.addf %545, %546 : vector<8x128xf32>
    %cst_210 = arith.constant 5.000000e-01 : f32
    %548 = vector.broadcast %cst_210 : f32 to vector<8x128xf32>
    %549 = arith.mulf %548, %547 : vector<8x128xf32>
    %550 = arith.mulf %539, %512 : vector<8x128xf32>
    %551 = arith.mulf %531, %541 : vector<8x128xf32>
    %552 = arith.addf %550, %551 : vector<8x128xf32>
    %553 = math.tanh %552 : vector<8x128xf32>
    %554 = arith.mulf %549, %553 : vector<8x128xf32>
    %c5_i32_211 = arith.constant 5 : i32
    %555 = arith.truncf %554 : vector<8x128xf32> to vector<8x128xbf16>
    %cst_212 = arith.constant dense<0.000000e+00> : vector<8x512xf32>
    %556 = tpu.matmul %555, %344, %cst_212 {dimension_numbers = #tpu.dot_dimension_numbers<[1], [0], [0], [1], [0, 0, 1, 1], [], []>} : vector<8x128xbf16>, vector<128x512xbf16>, vector<8x512xf32> -> vector<8x512xf32>
    %557 = arith.index_cast %c5_i32_211 : i32 to index
    %c0_213 = arith.constant 0 : index
    %c0_214 = arith.constant 0 : index
    %558 = vector.load %arg25[%557, %c0_213, %c0_214] : memref<8x8x128xf32, #tpu.memory_space<vmem>>, vector<1x8x128xf32>
    %559 = vector.shape_cast %558 : vector<1x8x128xf32> to vector<8x128xf32>
    %560 = arith.truncf %559 : vector<8x128xf32> to vector<8x128xbf16>
    %cst_215 = arith.constant dense<0.000000e+00> : vector<8x512xf32>
    %561 = tpu.matmul %560, %346, %cst_215 {dimension_numbers = #tpu.dot_dimension_numbers<[1], [0], [0], [1], [0, 0, 1, 1], [], []>} : vector<8x128xbf16>, vector<128x512xbf16>, vector<8x512xf32> -> vector<8x512xf32>
    %562 = arith.addf %561, %556 : vector<8x512xf32>
    %563 = arith.addf %562, %350 : vector<8x512xf32>
    %564 = vector.extract_strided_slice %563 {offsets = [0, 0], sizes = [8, 128], strides = [1, 1]} : vector<8x512xf32> to vector<8x128xf32>
    %cst_216 = arith.constant 5.000000e-01 : f32
    %565 = vector.broadcast %cst_216 : f32 to vector<8x128xf32>
    %566 = arith.mulf %565, %564 : vector<8x128xf32>
    %567 = math.tanh %566 : vector<8x128xf32>
    %cst_217 = arith.constant 1.000000e+00 : f32
    %568 = vector.broadcast %cst_217 : f32 to vector<8x128xf32>
    %569 = arith.addf %567, %568 : vector<8x128xf32>
    %cst_218 = arith.constant 5.000000e-01 : f32
    %570 = vector.broadcast %cst_218 : f32 to vector<8x128xf32>
    %571 = arith.mulf %570, %569 : vector<8x128xf32>
    %572 = vector.extract_strided_slice %563 {offsets = [0, 128], sizes = [8, 128], strides = [1, 1]} : vector<8x512xf32> to vector<8x128xf32>
    %cst_219 = arith.constant 5.000000e-01 : f32
    %573 = vector.broadcast %cst_219 : f32 to vector<8x128xf32>
    %574 = arith.mulf %573, %572 : vector<8x128xf32>
    %575 = math.tanh %574 : vector<8x128xf32>
    %cst_220 = arith.constant 1.000000e+00 : f32
    %576 = vector.broadcast %cst_220 : f32 to vector<8x128xf32>
    %577 = arith.addf %575, %576 : vector<8x128xf32>
    %cst_221 = arith.constant 5.000000e-01 : f32
    %578 = vector.broadcast %cst_221 : f32 to vector<8x128xf32>
    %579 = arith.mulf %578, %577 : vector<8x128xf32>
    %580 = vector.extract_strided_slice %563 {offsets = [0, 256], sizes = [8, 128], strides = [1, 1]} : vector<8x512xf32> to vector<8x128xf32>
    %581 = math.tanh %580 : vector<8x128xf32>
    %582 = vector.extract_strided_slice %563 {offsets = [0, 384], sizes = [8, 128], strides = [1, 1]} : vector<8x512xf32> to vector<8x128xf32>
    %cst_222 = arith.constant 5.000000e-01 : f32
    %583 = vector.broadcast %cst_222 : f32 to vector<8x128xf32>
    %584 = arith.mulf %583, %582 : vector<8x128xf32>
    %585 = math.tanh %584 : vector<8x128xf32>
    %cst_223 = arith.constant 1.000000e+00 : f32
    %586 = vector.broadcast %cst_223 : f32 to vector<8x128xf32>
    %587 = arith.addf %585, %586 : vector<8x128xf32>
    %cst_224 = arith.constant 5.000000e-01 : f32
    %588 = vector.broadcast %cst_224 : f32 to vector<8x128xf32>
    %589 = arith.mulf %588, %587 : vector<8x128xf32>
    %590 = arith.mulf %579, %552 : vector<8x128xf32>
    %591 = arith.mulf %571, %581 : vector<8x128xf32>
    %592 = arith.addf %590, %591 : vector<8x128xf32>
    %593 = math.tanh %592 : vector<8x128xf32>
    %594 = arith.mulf %589, %593 : vector<8x128xf32>
    %c6_i32_225 = arith.constant 6 : i32
    %595 = arith.truncf %594 : vector<8x128xf32> to vector<8x128xbf16>
    %cst_226 = arith.constant dense<0.000000e+00> : vector<8x512xf32>
    %596 = tpu.matmul %595, %344, %cst_226 {dimension_numbers = #tpu.dot_dimension_numbers<[1], [0], [0], [1], [0, 0, 1, 1], [], []>} : vector<8x128xbf16>, vector<128x512xbf16>, vector<8x512xf32> -> vector<8x512xf32>
    %597 = arith.index_cast %c6_i32_225 : i32 to index
    %c0_227 = arith.constant 0 : index
    %c0_228 = arith.constant 0 : index
    %598 = vector.load %arg25[%597, %c0_227, %c0_228] : memref<8x8x128xf32, #tpu.memory_space<vmem>>, vector<1x8x128xf32>
    %599 = vector.shape_cast %598 : vector<1x8x128xf32> to vector<8x128xf32>
    %600 = arith.truncf %599 : vector<8x128xf32> to vector<8x128xbf16>
    %cst_229 = arith.constant dense<0.000000e+00> : vector<8x512xf32>
    %601 = tpu.matmul %600, %346, %cst_229 {dimension_numbers = #tpu.dot_dimension_numbers<[1], [0], [0], [1], [0, 0, 1, 1], [], []>} : vector<8x128xbf16>, vector<128x512xbf16>, vector<8x512xf32> -> vector<8x512xf32>
    %602 = arith.addf %601, %596 : vector<8x512xf32>
    %603 = arith.addf %602, %350 : vector<8x512xf32>
    %604 = vector.extract_strided_slice %603 {offsets = [0, 0], sizes = [8, 128], strides = [1, 1]} : vector<8x512xf32> to vector<8x128xf32>
    %cst_230 = arith.constant 5.000000e-01 : f32
    %605 = vector.broadcast %cst_230 : f32 to vector<8x128xf32>
    %606 = arith.mulf %605, %604 : vector<8x128xf32>
    %607 = math.tanh %606 : vector<8x128xf32>
    %cst_231 = arith.constant 1.000000e+00 : f32
    %608 = vector.broadcast %cst_231 : f32 to vector<8x128xf32>
    %609 = arith.addf %607, %608 : vector<8x128xf32>
    %cst_232 = arith.constant 5.000000e-01 : f32
    %610 = vector.broadcast %cst_232 : f32 to vector<8x128xf32>
    %611 = arith.mulf %610, %609 : vector<8x128xf32>
    %612 = vector.extract_strided_slice %603 {offsets = [0, 128], sizes = [8, 128], strides = [1, 1]} : vector<8x512xf32> to vector<8x128xf32>
    %cst_233 = arith.constant 5.000000e-01 : f32
    %613 = vector.broadcast %cst_233 : f32 to vector<8x128xf32>
    %614 = arith.mulf %613, %612 : vector<8x128xf32>
    %615 = math.tanh %614 : vector<8x128xf32>
    %cst_234 = arith.constant 1.000000e+00 : f32
    %616 = vector.broadcast %cst_234 : f32 to vector<8x128xf32>
    %617 = arith.addf %615, %616 : vector<8x128xf32>
    %cst_235 = arith.constant 5.000000e-01 : f32
    %618 = vector.broadcast %cst_235 : f32 to vector<8x128xf32>
    %619 = arith.mulf %618, %617 : vector<8x128xf32>
    %620 = vector.extract_strided_slice %603 {offsets = [0, 256], sizes = [8, 128], strides = [1, 1]} : vector<8x512xf32> to vector<8x128xf32>
    %621 = math.tanh %620 : vector<8x128xf32>
    %622 = vector.extract_strided_slice %603 {offsets = [0, 384], sizes = [8, 128], strides = [1, 1]} : vector<8x512xf32> to vector<8x128xf32>
    %cst_236 = arith.constant 5.000000e-01 : f32
    %623 = vector.broadcast %cst_236 : f32 to vector<8x128xf32>
    %624 = arith.mulf %623, %622 : vector<8x128xf32>
    %625 = math.tanh %624 : vector<8x128xf32>
    %cst_237 = arith.constant 1.000000e+00 : f32
    %626 = vector.broadcast %cst_237 : f32 to vector<8x128xf32>
    %627 = arith.addf %625, %626 : vector<8x128xf32>
    %cst_238 = arith.constant 5.000000e-01 : f32
    %628 = vector.broadcast %cst_238 : f32 to vector<8x128xf32>
    %629 = arith.mulf %628, %627 : vector<8x128xf32>
    %630 = arith.mulf %619, %592 : vector<8x128xf32>
    %631 = arith.mulf %611, %621 : vector<8x128xf32>
    %632 = arith.addf %630, %631 : vector<8x128xf32>
    %633 = math.tanh %632 : vector<8x128xf32>
    %634 = arith.mulf %629, %633 : vector<8x128xf32>
    %c7_i32_239 = arith.constant 7 : i32
    %635 = arith.truncf %634 : vector<8x128xf32> to vector<8x128xbf16>
    %cst_240 = arith.constant dense<0.000000e+00> : vector<8x512xf32>
    %636 = tpu.matmul %635, %344, %cst_240 {dimension_numbers = #tpu.dot_dimension_numbers<[1], [0], [0], [1], [0, 0, 1, 1], [], []>} : vector<8x128xbf16>, vector<128x512xbf16>, vector<8x512xf32> -> vector<8x512xf32>
    %637 = arith.index_cast %c7_i32_239 : i32 to index
    %c0_241 = arith.constant 0 : index
    %c0_242 = arith.constant 0 : index
    %638 = vector.load %arg25[%637, %c0_241, %c0_242] : memref<8x8x128xf32, #tpu.memory_space<vmem>>, vector<1x8x128xf32>
    %639 = vector.shape_cast %638 : vector<1x8x128xf32> to vector<8x128xf32>
    %640 = arith.truncf %639 : vector<8x128xf32> to vector<8x128xbf16>
    %cst_243 = arith.constant dense<0.000000e+00> : vector<8x512xf32>
    %641 = tpu.matmul %640, %346, %cst_243 {dimension_numbers = #tpu.dot_dimension_numbers<[1], [0], [0], [1], [0, 0, 1, 1], [], []>} : vector<8x128xbf16>, vector<128x512xbf16>, vector<8x512xf32> -> vector<8x512xf32>
    %642 = arith.addf %641, %636 : vector<8x512xf32>
    %643 = arith.addf %642, %350 : vector<8x512xf32>
    %644 = vector.extract_strided_slice %643 {offsets = [0, 0], sizes = [8, 128], strides = [1, 1]} : vector<8x512xf32> to vector<8x128xf32>
    %cst_244 = arith.constant 5.000000e-01 : f32
    %645 = vector.broadcast %cst_244 : f32 to vector<8x128xf32>
    %646 = arith.mulf %645, %644 : vector<8x128xf32>
    %647 = math.tanh %646 : vector<8x128xf32>
    %cst_245 = arith.constant 1.000000e+00 : f32
    %648 = vector.broadcast %cst_245 : f32 to vector<8x128xf32>
    %649 = arith.addf %647, %648 : vector<8x128xf32>
    %cst_246 = arith.constant 5.000000e-01 : f32
    %650 = vector.broadcast %cst_246 : f32 to vector<8x128xf32>
    %651 = arith.mulf %650, %649 : vector<8x128xf32>
    %652 = vector.extract_strided_slice %643 {offsets = [0, 128], sizes = [8, 128], strides = [1, 1]} : vector<8x512xf32> to vector<8x128xf32>
    %cst_247 = arith.constant 5.000000e-01 : f32
    %653 = vector.broadcast %cst_247 : f32 to vector<8x128xf32>
    %654 = arith.mulf %653, %652 : vector<8x128xf32>
    %655 = math.tanh %654 : vector<8x128xf32>
    %cst_248 = arith.constant 1.000000e+00 : f32
    %656 = vector.broadcast %cst_248 : f32 to vector<8x128xf32>
    %657 = arith.addf %655, %656 : vector<8x128xf32>
    %cst_249 = arith.constant 5.000000e-01 : f32
    %658 = vector.broadcast %cst_249 : f32 to vector<8x128xf32>
    %659 = arith.mulf %658, %657 : vector<8x128xf32>
    %660 = vector.extract_strided_slice %643 {offsets = [0, 256], sizes = [8, 128], strides = [1, 1]} : vector<8x512xf32> to vector<8x128xf32>
    %661 = math.tanh %660 : vector<8x128xf32>
    %662 = vector.extract_strided_slice %643 {offsets = [0, 384], sizes = [8, 128], strides = [1, 1]} : vector<8x512xf32> to vector<8x128xf32>
    %cst_250 = arith.constant 5.000000e-01 : f32
    %663 = vector.broadcast %cst_250 : f32 to vector<8x128xf32>
    %664 = arith.mulf %663, %662 : vector<8x128xf32>
    %665 = math.tanh %664 : vector<8x128xf32>
    %cst_251 = arith.constant 1.000000e+00 : f32
    %666 = vector.broadcast %cst_251 : f32 to vector<8x128xf32>
    %667 = arith.addf %665, %666 : vector<8x128xf32>
    %cst_252 = arith.constant 5.000000e-01 : f32
    %668 = vector.broadcast %cst_252 : f32 to vector<8x128xf32>
    %669 = arith.mulf %668, %667 : vector<8x128xf32>
    %670 = arith.mulf %659, %632 : vector<8x128xf32>
    %671 = arith.mulf %651, %661 : vector<8x128xf32>
    %672 = arith.addf %670, %671 : vector<8x128xf32>
    %673 = math.tanh %672 : vector<8x128xf32>
    %674 = arith.mulf %669, %673 : vector<8x128xf32>
    %c8_i32_253 = arith.constant 8 : i32
    %c1_254 = arith.constant 1 : index
    %c0_255 = arith.constant 0 : index
    %c0_256 = arith.constant 0 : index
    %675 = vector.load %arg23[%c1_254, %c0_255, %c0_256] : memref<2x8x128xf32, #tpu.memory_space<vmem>>, vector<1x8x128xf32>
    %676 = vector.shape_cast %675 : vector<1x8x128xf32> to vector<8x128xf32>
    %677 = vector.shape_cast %674 : vector<8x128xf32> to vector<1x8x128xf32>
    tpu.vector_store %arg23[%c1_254, %c0_255, %c0_256], %677 {strides = array<i32>} : memref<2x8x128xf32, #tpu.memory_space<vmem>>, vector<1x8x128xf32>,
    %c1_257 = arith.constant 1 : index
    %c0_258 = arith.constant 0 : index
    %c0_259 = arith.constant 0 : index
    %678 = vector.load %arg24[%c1_257, %c0_258, %c0_259] : memref<2x8x128xf32, #tpu.memory_space<vmem>>, vector<1x8x128xf32>
    %679 = vector.shape_cast %678 : vector<1x8x128xf32> to vector<8x128xf32>
    %680 = vector.shape_cast %672 : vector<8x128xf32> to vector<1x8x128xf32>
    tpu.vector_store %arg24[%c1_257, %c0_258, %c0_259], %680 {strides = array<i32>} : memref<2x8x128xf32, #tpu.memory_space<vmem>>, vector<1x8x128xf32>,
    %c0_i32_260 = arith.constant 0 : i32
    %681 = arith.cmpi eq, %arg0, %c0_i32_260 : i32
    %682 = arith.extui %681 : i1 to i32
    %c0_i32_261 = arith.constant 0 : i32
    %683 = arith.cmpi ne, %682, %c0_i32_261 : i32
    scf.if %683 {
      %c0_262 = arith.constant 0 : index
      %c0_263 = arith.constant 0 : index
      %c0_264 = arith.constant 0 : index
      %684 = vector.load %arg23[%c0_262, %c0_263, %c0_264] : memref<2x8x128xf32, #tpu.memory_space<vmem>>, vector<2x8x128xf32>
      %c0_265 = arith.constant 0 : index
      %c0_266 = arith.constant 0 : index
      %c0_267 = arith.constant 0 : index
      %685 = vector.load %arg21[%c0_265, %c0_266, %c0_267] : memref<2x8x128xf32, #tpu.memory_space<vmem>>, vector<2x8x128xf32>
      tpu.vector_store %arg21[%c0_265, %c0_266, %c0_267], %684 {strides = array<i32>} : memref<2x8x128xf32, #tpu.memory_space<vmem>>, vector<2x8x128xf32>,
      %c0_268 = arith.constant 0 : index
      %c0_269 = arith.constant 0 : index
      %c0_270 = arith.constant 0 : index
      %686 = vector.load %arg23[%c0_268, %c0_269, %c0_270] : memref<2x8x128xf32, #tpu.memory_space<vmem>>, vector<1x8x128xf32>
      %687 = vector.shape_cast %686 : vector<1x8x128xf32> to vector<8x128xf32>
      %688 = vector.extract_strided_slice %687 {offsets = [0, 0], sizes = [2, 32], strides = [1, 1]} : vector<8x128xf32> to vector<2x32xf32>
      %c0_271 = arith.constant 0 : index
      %c0_272 = arith.constant 0 : index
      %689 = vector.load %arg7[%c0_271, %c0_272] : memref<32x16xf32, #tpu.memory_space<vmem>>, vector<32x16xf32>
      %cst_273 = arith.constant dense<0.000000e+00> : vector<2x16xf32>
      %690 = tpu.matmul %688, %689, %cst_273 {dimension_numbers = #tpu.dot_dimension_numbers<[1], [0], [0], [1], [0, 0, 1, 1], [], []>} : vector<2x32xf32>, vector<32x16xf32>, vector<2x16xf32> -> vector<2x16xf32>
      %c0_274 = arith.constant 0 : index
      %c0_275 = arith.constant 0 : index
      %691 = vector.load %arg8[%c0_274, %c0_275] : memref<1x16xf32, #tpu.memory_space<vmem>>, vector<1x16xf32>
      %692 = vector.broadcast %691 : vector<1x16xf32> to vector<2x16xf32>
      %693 = arith.addf %690, %692 : vector<2x16xf32>
      %cst_276 = arith.constant dense<0.000000e+00> : vector<16xf32>
      %694 = vector.multi_reduction <add>, %693, %cst_276 [0] : vector<2x16xf32> to vector<16xf32>
      %695 = vector.shape_cast %694 : vector<16xf32> to vector<1x16xf32>
      %cst_277 = arith.constant 2.000000e+00 : f32
      %696 = vector.broadcast %cst_277 : f32 to vector<1x16xf32>
      %697 = arith.divf %695, %696 : vector<1x16xf32>
      %698 = vector.broadcast %697 : vector<1x16xf32> to vector<2x16xf32>
      %699 = arith.subf %693, %698 : vector<2x16xf32>
      %700 = arith.mulf %699, %699 : vector<2x16xf32>
      %cst_278 = arith.constant dense<0.000000e+00> : vector<16xf32>
      %701 = vector.multi_reduction <add>, %700, %cst_278 [0] : vector<2x16xf32> to vector<16xf32>
      %702 = vector.shape_cast %701 : vector<16xf32> to vector<1x16xf32>
      %cst_279 = arith.constant 2.000000e+00 : f32
      %703 = vector.broadcast %cst_279 : f32 to vector<1x16xf32>
      %704 = arith.divf %702, %703 : vector<1x16xf32>
      %705 = vector.broadcast %697 : vector<1x16xf32> to vector<2x16xf32>
      %706 = arith.subf %693, %705 : vector<2x16xf32>
      %cst_280 = arith.constant 9.99999974E-6 : f32
      %707 = vector.broadcast %cst_280 : f32 to vector<1x16xf32>
      %708 = arith.addf %704, %707 : vector<1x16xf32>
      %709 = math.rsqrt %708 : vector<1x16xf32>
      %710 = vector.broadcast %709 : vector<1x16xf32> to vector<2x16xf32>
      %711 = arith.mulf %706, %710 : vector<2x16xf32>
      %c0_281 = arith.constant 0 : index
      %c0_282 = arith.constant 0 : index
      %712 = vector.load %arg9[%c0_281, %c0_282] : memref<1x16xf32, #tpu.memory_space<vmem>>, vector<1x16xf32>
      %713 = vector.broadcast %712 : vector<1x16xf32> to vector<2x16xf32>
      %714 = arith.mulf %711, %713 : vector<2x16xf32>
      %c0_283 = arith.constant 0 : index
      %c0_284 = arith.constant 0 : index
      %715 = vector.load %arg10[%c0_283, %c0_284] : memref<1x16xf32, #tpu.memory_space<vmem>>, vector<1x16xf32>
      %716 = vector.broadcast %715 : vector<1x16xf32> to vector<2x16xf32>
      %717 = arith.addf %714, %716 : vector<2x16xf32>
      %cst_285 = arith.constant 0.000000e+00 : f32
      %718 = vector.broadcast %cst_285 : f32 to vector<2x16xf32>
      %719 = arith.cmpf oge, %717, %718 : vector<2x16xf32>
      %cst_286 = arith.constant 0.00999999977 : f32
      %720 = vector.broadcast %cst_286 : f32 to vector<2x16xf32>
      %721 = arith.mulf %720, %717 : vector<2x16xf32>
      %722 = arith.select %719, %717, %721 : vector<2x16xi1>, vector<2x16xf32>
      %c0_287 = arith.constant 0 : index
      %c0_288 = arith.constant 0 : index
      %723 = vector.load %arg11[%c0_287, %c0_288] : memref<16x8xf32, #tpu.memory_space<vmem>>, vector<16x8xf32>
      %cst_289 = arith.constant dense<0.000000e+00> : vector<2x8xf32>
      %724 = tpu.matmul %722, %723, %cst_289 {dimension_numbers = #tpu.dot_dimension_numbers<[1], [0], [0], [1], [0, 0, 1, 1], [], []>} : vector<2x16xf32>, vector<16x8xf32>, vector<2x8xf32> -> vector<2x8xf32>
      %c0_290 = arith.constant 0 : index
      %c0_291 = arith.constant 0 : index
      %725 = vector.load %arg12[%c0_290, %c0_291] : memref<1x8xf32, #tpu.memory_space<vmem>>, vector<1x8xf32>
      %726 = vector.broadcast %725 : vector<1x8xf32> to vector<2x8xf32>
      %727 = arith.addf %724, %726 : vector<2x8xf32>
      %cst_292 = arith.constant dense<0.000000e+00> : vector<8xf32>
      %728 = vector.multi_reduction <add>, %727, %cst_292 [0] : vector<2x8xf32> to vector<8xf32>
      %729 = vector.shape_cast %728 : vector<8xf32> to vector<1x8xf32>
      %cst_293 = arith.constant 2.000000e+00 : f32
      %730 = vector.broadcast %cst_293 : f32 to vector<1x8xf32>
      %731 = arith.divf %729, %730 : vector<1x8xf32>
      %732 = vector.broadcast %731 : vector<1x8xf32> to vector<2x8xf32>
      %733 = arith.subf %727, %732 : vector<2x8xf32>
      %734 = arith.mulf %733, %733 : vector<2x8xf32>
      %cst_294 = arith.constant dense<0.000000e+00> : vector<8xf32>
      %735 = vector.multi_reduction <add>, %734, %cst_294 [0] : vector<2x8xf32> to vector<8xf32>
      %736 = vector.shape_cast %735 : vector<8xf32> to vector<1x8xf32>
      %cst_295 = arith.constant 2.000000e+00 : f32
      %737 = vector.broadcast %cst_295 : f32 to vector<1x8xf32>
      %738 = arith.divf %736, %737 : vector<1x8xf32>
      %739 = vector.broadcast %731 : vector<1x8xf32> to vector<2x8xf32>
      %740 = arith.subf %727, %739 : vector<2x8xf32>
      %cst_296 = arith.constant 9.99999974E-6 : f32
      %741 = vector.broadcast %cst_296 : f32 to vector<1x8xf32>
      %742 = arith.addf %738, %741 : vector<1x8xf32>
      %743 = math.rsqrt %742 : vector<1x8xf32>
      %744 = vector.broadcast %743 : vector<1x8xf32> to vector<2x8xf32>
      %745 = arith.mulf %740, %744 : vector<2x8xf32>
      %c0_297 = arith.constant 0 : index
      %c0_298 = arith.constant 0 : index
      %746 = vector.load %arg13[%c0_297, %c0_298] : memref<1x8xf32, #tpu.memory_space<vmem>>, vector<1x8xf32>
      %747 = vector.broadcast %746 : vector<1x8xf32> to vector<2x8xf32>
      %748 = arith.mulf %745, %747 : vector<2x8xf32>
      %c0_299 = arith.constant 0 : index
      %c0_300 = arith.constant 0 : index
      %749 = vector.load %arg14[%c0_299, %c0_300] : memref<1x8xf32, #tpu.memory_space<vmem>>, vector<1x8xf32>
      %750 = vector.broadcast %749 : vector<1x8xf32> to vector<2x8xf32>
      %751 = arith.addf %748, %750 : vector<2x8xf32>
      %cst_301 = arith.constant 0.000000e+00 : f32
      %752 = vector.broadcast %cst_301 : f32 to vector<2x8xf32>
      %753 = arith.cmpf oge, %751, %752 : vector<2x8xf32>
      %cst_302 = arith.constant 0.00999999977 : f32
      %754 = vector.broadcast %cst_302 : f32 to vector<2x8xf32>
      %755 = arith.mulf %754, %751 : vector<2x8xf32>
      %756 = arith.select %753, %751, %755 : vector<2x8xi1>, vector<2x8xf32>
      %c0_303 = arith.constant 0 : index
      %c0_304 = arith.constant 0 : index
      %757 = vector.load %arg15[%c0_303, %c0_304] : memref<8x4xf32, #tpu.memory_space<vmem>>, vector<8x4xf32>
      %cst_305 = arith.constant dense<0.000000e+00> : vector<2x4xf32>
      %758 = tpu.matmul %756, %757, %cst_305 {dimension_numbers = #tpu.dot_dimension_numbers<[1], [0], [0], [1], [0, 0, 1, 1], [], []>} : vector<2x8xf32>, vector<8x4xf32>, vector<2x4xf32> -> vector<2x4xf32>
      %c0_306 = arith.constant 0 : index
      %c0_307 = arith.constant 0 : index
      %759 = vector.load %arg16[%c0_306, %c0_307] : memref<1x4xf32, #tpu.memory_space<vmem>>, vector<1x4xf32>
      %760 = vector.broadcast %759 : vector<1x4xf32> to vector<2x4xf32>
      %761 = arith.addf %758, %760 : vector<2x4xf32>
      %cst_308 = arith.constant dense<0.000000e+00> : vector<4xf32>
      %762 = vector.multi_reduction <add>, %761, %cst_308 [0] : vector<2x4xf32> to vector<4xf32>
      %763 = vector.shape_cast %762 : vector<4xf32> to vector<1x4xf32>
      %cst_309 = arith.constant 2.000000e+00 : f32
      %764 = vector.broadcast %cst_309 : f32 to vector<1x4xf32>
      %765 = arith.divf %763, %764 : vector<1x4xf32>
      %766 = vector.broadcast %765 : vector<1x4xf32> to vector<2x4xf32>
      %767 = arith.subf %761, %766 : vector<2x4xf32>
      %768 = arith.mulf %767, %767 : vector<2x4xf32>
      %cst_310 = arith.constant dense<0.000000e+00> : vector<4xf32>
      %769 = vector.multi_reduction <add>, %768, %cst_310 [0] : vector<2x4xf32> to vector<4xf32>
      %770 = vector.shape_cast %769 : vector<4xf32> to vector<1x4xf32>
      %cst_311 = arith.constant 2.000000e+00 : f32
      %771 = vector.broadcast %cst_311 : f32 to vector<1x4xf32>
      %772 = arith.divf %770, %771 : vector<1x4xf32>
      %773 = vector.broadcast %765 : vector<1x4xf32> to vector<2x4xf32>
      %774 = arith.subf %761, %773 : vector<2x4xf32>
      %cst_312 = arith.constant 9.99999974E-6 : f32
      %775 = vector.broadcast %cst_312 : f32 to vector<1x4xf32>
      %776 = arith.addf %772, %775 : vector<1x4xf32>
      %777 = math.rsqrt %776 : vector<1x4xf32>
      %778 = vector.broadcast %777 : vector<1x4xf32> to vector<2x4xf32>
      %779 = arith.mulf %774, %778 : vector<2x4xf32>
      %c0_313 = arith.constant 0 : index
      %c0_314 = arith.constant 0 : index
      %780 = vector.load %arg17[%c0_313, %c0_314] : memref<1x4xf32, #tpu.memory_space<vmem>>, vector<1x4xf32>
      %781 = vector.broadcast %780 : vector<1x4xf32> to vector<2x4xf32>
      %782 = arith.mulf %779, %781 : vector<2x4xf32>
      %c0_315 = arith.constant 0 : index
      %c0_316 = arith.constant 0 : index
      %783 = vector.load %arg18[%c0_315, %c0_316] : memref<1x4xf32, #tpu.memory_space<vmem>>, vector<1x4xf32>
      %784 = vector.broadcast %783 : vector<1x4xf32> to vector<2x4xf32>
      %785 = arith.addf %782, %784 : vector<2x4xf32>
      %cst_317 = arith.constant 0.000000e+00 : f32
      %786 = vector.broadcast %cst_317 : f32 to vector<2x4xf32>
      %787 = arith.cmpf oge, %785, %786 : vector<2x4xf32>
      %cst_318 = arith.constant 0.00999999977 : f32
      %788 = vector.broadcast %cst_318 : f32 to vector<2x4xf32>
      %789 = arith.mulf %788, %785 : vector<2x4xf32>
      %790 = arith.select %787, %785, %789 : vector<2x4xi1>, vector<2x4xf32>
      %c0_319 = arith.constant 0 : index
      %c0_320 = arith.constant 0 : index
      %791 = vector.load %arg19[%c0_319, %c0_320] : memref<4x10xf32, #tpu.memory_space<vmem>>, vector<4x10xf32>
      %cst_321 = arith.constant dense<0.000000e+00> : vector<2x10xf32>
      %792 = tpu.matmul %790, %791, %cst_321 {dimension_numbers = #tpu.dot_dimension_numbers<[1], [0], [0], [1], [0, 0, 1, 1], [], []>} : vector<2x4xf32>, vector<4x10xf32>, vector<2x10xf32> -> vector<2x10xf32>
      %c0_322 = arith.constant 0 : index
      %c0_323 = arith.constant 0 : index
      %793 = vector.load %arg20[%c0_322, %c0_323] : memref<1x10xf32, #tpu.memory_space<vmem>>, vector<1x10xf32>
      %794 = vector.broadcast %793 : vector<1x10xf32> to vector<2x10xf32>
      %795 = arith.addf %792, %794 : vector<2x10xf32>
      %cst_324 = arith.constant dense<0xFF800000> : vector<2xf32>
      %796 = vector.multi_reduction <maximumf>, %795, %cst_324 [1] : vector<2x10xf32> to vector<2xf32>
      %797 = vector.shape_cast %796 : vector<2xf32> to vector<2x1xf32>
      %798 = vector.broadcast %797 : vector<2x1xf32> to vector<2x10xf32>
      %799 = arith.subf %795, %798 : vector<2x10xf32>
      %800 = math.exp %799 : vector<2x10xf32>
      %cst_325 = arith.constant dense<0.000000e+00> : vector<2xf32>
      %801 = vector.multi_reduction <add>, %800, %cst_325 [1] : vector<2x10xf32> to vector<2xf32>
      %802 = vector.shape_cast %801 : vector<2xf32> to vector<2x1xf32>
      %803 = vector.broadcast %802 : vector<2x1xf32> to vector<2x10xf32>
      %804 = arith.divf %800, %803 : vector<2x10xf32>
      %c0_326 = arith.constant 0 : index
      %c0_327 = arith.constant 0 : index
      %805 = vector.load %arg22[%c0_326, %c0_327] : memref<2x10xf32, #tpu.memory_space<vmem>>, vector<2x10xf32>
      tpu.vector_store %arg22[%c0_326, %c0_327], %804 {strides = array<i32>} : memref<2x10xf32, #tpu.memory_space<vmem>>, vector<2x10xf32>,
    } else {
    }
    return
  }
  func.func @transform_0(%arg0: i32) -> (i32, i32, i32) {
    %c0_i32 = arith.constant 0 : i32
    %c0_i32_0 = arith.constant 0 : i32
    %c0_i32_1 = arith.constant 0 : i32
    return %arg0, %c0_i32, %c0_i32_0 : i32, i32, i32
  }
  func.func @transform_1(%arg0: i32) -> (i32, i32, i32) {
    %c0_i32 = arith.constant 0 : i32
    %c0_i32_0 = arith.constant 0 : i32
    %c0_i32_1 = arith.constant 0 : i32
    %c0_i32_2 = arith.constant 0 : i32
    return %c0_i32, %c0_i32_0, %c0_i32_1 : i32, i32, i32
  }
  func.func @transform_2(%arg0: i32) -> (i32, i32, i32) {
    %c0_i32 = arith.constant 0 : i32
    %c0_i32_0 = arith.constant 0 : i32
    %c0_i32_1 = arith.constant 0 : i32
    %c0_i32_2 = arith.constant 0 : i32
    return %c0_i32, %c0_i32_0, %c0_i32_1 : i32, i32, i32
  }
  func.func @transform_3(%arg0: i32) -> (i32, i32, i32) {
    %c0_i32 = arith.constant 0 : i32
    %c0_i32_0 = arith.constant 0 : i32
    %c0_i32_1 = arith.constant 0 : i32
    %c0_i32_2 = arith.constant 0 : i32
    return %c0_i32, %c0_i32_0, %c0_i32_1 : i32, i32, i32
  }
  func.func @transform_4(%arg0: i32) -> (i32, i32, i32) {
    %c0_i32 = arith.constant 0 : i32
    %c0_i32_0 = arith.constant 0 : i32
    %c0_i32_1 = arith.constant 0 : i32
    %c0_i32_2 = arith.constant 0 : i32
    return %c0_i32, %c0_i32_0, %c0_i32_1 : i32, i32, i32
  }
  func.func @transform_5(%arg0: i32) -> (i32, i32, i32) {
    %c0_i32 = arith.constant 0 : i32
    %c0_i32_0 = arith.constant 0 : i32
    %c0_i32_1 = arith.constant 0 : i32
    %c0_i32_2 = arith.constant 0 : i32
    return %c0_i32, %c0_i32_0, %c0_i32_1 : i32, i32, i32
  }
  func.func @transform_6(%arg0: i32) -> (i32, i32) {
    %c0_i32 = arith.constant 0 : i32
    %c0_i32_0 = arith.constant 0 : i32
    %c0_i32_1 = arith.constant 0 : i32
    return %c0_i32, %c0_i32_0 : i32, i32
  }
  func.func @transform_7(%arg0: i32) -> (i32, i32) {
    %c0_i32 = arith.constant 0 : i32
    %c0_i32_0 = arith.constant 0 : i32
    %c0_i32_1 = arith.constant 0 : i32
    return %c0_i32, %c0_i32_0 : i32, i32
  }
  func.func @transform_8(%arg0: i32) -> (i32, i32) {
    %c0_i32 = arith.constant 0 : i32
    %c0_i32_0 = arith.constant 0 : i32
    %c0_i32_1 = arith.constant 0 : i32
    return %c0_i32, %c0_i32_0 : i32, i32
  }
  func.func @transform_9(%arg0: i32) -> (i32, i32) {
    %c0_i32 = arith.constant 0 : i32
    %c0_i32_0 = arith.constant 0 : i32
    %c0_i32_1 = arith.constant 0 : i32
    return %c0_i32, %c0_i32_0 : i32, i32
  }
  func.func @transform_10(%arg0: i32) -> (i32, i32) {
    %c0_i32 = arith.constant 0 : i32
    %c0_i32_0 = arith.constant 0 : i32
    %c0_i32_1 = arith.constant 0 : i32
    return %c0_i32, %c0_i32_0 : i32, i32
  }
  func.func @transform_11(%arg0: i32) -> (i32, i32) {
    %c0_i32 = arith.constant 0 : i32
    %c0_i32_0 = arith.constant 0 : i32
    %c0_i32_1 = arith.constant 0 : i32
    return %c0_i32, %c0_i32_0 : i32, i32
  }
  func.func @transform_12(%arg0: i32) -> (i32, i32) {
    %c0_i32 = arith.constant 0 : i32
    %c0_i32_0 = arith.constant 0 : i32
    %c0_i32_1 = arith.constant 0 : i32
    return %c0_i32, %c0_i32_0 : i32, i32
  }
  func.func @transform_13(%arg0: i32) -> (i32, i32) {
    %c0_i32 = arith.constant 0 : i32
    %c0_i32_0 = arith.constant 0 : i32
    %c0_i32_1 = arith.constant 0 : i32
    return %c0_i32, %c0_i32_0 : i32, i32
  }
  func.func @transform_14(%arg0: i32) -> (i32, i32) {
    %c0_i32 = arith.constant 0 : i32
    %c0_i32_0 = arith.constant 0 : i32
    %c0_i32_1 = arith.constant 0 : i32
    return %c0_i32, %c0_i32_0 : i32, i32
  }
  func.func @transform_15(%arg0: i32) -> (i32, i32) {
    %c0_i32 = arith.constant 0 : i32
    %c0_i32_0 = arith.constant 0 : i32
    %c0_i32_1 = arith.constant 0 : i32
    return %c0_i32, %c0_i32_0 : i32, i32
  }
  func.func @transform_16(%arg0: i32) -> (i32, i32) {
    %c0_i32 = arith.constant 0 : i32
    %c0_i32_0 = arith.constant 0 : i32
    %c0_i32_1 = arith.constant 0 : i32
    return %c0_i32, %c0_i32_0 : i32, i32
  }
  func.func @transform_17(%arg0: i32) -> (i32, i32) {
    %c0_i32 = arith.constant 0 : i32
    %c0_i32_0 = arith.constant 0 : i32
    %c0_i32_1 = arith.constant 0 : i32
    return %c0_i32, %c0_i32_0 : i32, i32
  }
  func.func @transform_18(%arg0: i32) -> (i32, i32) {
    %c0_i32 = arith.constant 0 : i32
    %c0_i32_0 = arith.constant 0 : i32
    %c0_i32_1 = arith.constant 0 : i32
    return %c0_i32, %c0_i32_0 : i32, i32
  }
  func.func @transform_19(%arg0: i32) -> (i32, i32) {
    %c0_i32 = arith.constant 0 : i32
    %c0_i32_0 = arith.constant 0 : i32
    %c0_i32_1 = arith.constant 0 : i32
    return %c0_i32, %c0_i32_0 : i32, i32
  }
  func.func @transform_20(%arg0: i32) -> (i32, i32, i32) {
    %c0_i32 = arith.constant 0 : i32
    %c0_i32_0 = arith.constant 0 : i32
    %c0_i32_1 = arith.constant 0 : i32
    %c0_i32_2 = arith.constant 0 : i32
    return %c0_i32, %c0_i32_0, %c0_i32_1 : i32, i32, i32
  }
  func.func @transform_21(%arg0: i32) -> (i32, i32) {
    %c0_i32 = arith.constant 0 : i32
    %c0_i32_0 = arith.constant 0 : i32
    %c0_i32_1 = arith.constant 0 : i32
    return %c0_i32, %c0_i32_0 : i32, i32
  }
}

</mosaic_0001>

<llo_original>
// kernel: rnn_forward.2
$region0: #{rnn_forward.2}
  #allocation0 [shape = 'u32[]', space=smem, size = 0x4, offset = 0x4, fixed_abs, tag = 'smem constant byte address 0x4 - core index']
  #allocation1 [shape = 'u32[144,128]{1,0:T(1,128)}', space=vmem, size = 0x12000, scoped, tag = 'internal scratch']
  %s0 = inlined_call_operand.vmem [shape: bf16[64,1024], index: 0, kind: input, shape index: {}]
  %s1 = inlined_call_operand.vmem [shape: bf16[1024,512], index: 1, kind: input, shape index: {}]
  %s2 = inlined_call_operand.vmem [shape: f32[1,512], index: 2, kind: input, shape index: {}]
  %s3 = inlined_call_operand.vmem [shape: f32[64,512], index: 3, kind: output, shape index: {}]
  %s4 = sld [smem:[#allocation0]]
  $region22: #{rnn_forward.2} parent=0
    _
  %s6 = ssub.s32 1, %s4
  %s7 = scalar_select 0, %s6, %s4
  // Predicated region
  $region2: #{rnn_forward.2} parent=0 // pred_check
    _
  $region3: #{rnn_forward.2} parent=0 // pred_check_branch
    %9 = sbr.rel (0) target = $region5
  $region4: #{rnn_forward.2} parent=0 // pred_region
    _
  $region5: #{rnn_forward.2} parent=0 // pred_fallthru
    _
  // Predicated region
  $region6: #{rnn_forward.2} parent=0 // pred_check
    _
  $region7: #{rnn_forward.2} parent=0 // pred_check_branch
    %11 = sbr.rel (0) target = $region9
  $region8: #{rnn_forward.2} parent=0 // pred_region
    _
  $region9: #{rnn_forward.2} parent=0 // pred_fallthru
    _
  // Predicated region
  $region10: #{rnn_forward.2} parent=0 // pred_check
    _
  $region11: #{rnn_forward.2} parent=0 // pred_check_branch
    %13 = sbr.rel (0) target = $region13
  $region12: #{rnn_forward.2} parent=0 // pred_region
    _
  $region13: #{rnn_forward.2} parent=0 // pred_fallthru
    _
  %v14 = vld [vmem:[%s0] sm:$0xff]
  %v15 = vld [vmem:[%s0 + $0x8] sm:$0xff]
  %v16 = vld [vmem:[%s0 + $0x10] sm:$0xff]
  %v17 = vld [vmem:[%s0 + $0x18] sm:$0xff]
  %v18 = vld [vmem:[%s0 + $0x20] sm:$0xff]
  %v19 = vld [vmem:[%s0 + $0x28] sm:$0xff]
  %v20 = vld [vmem:[%s0 + $0x30] sm:$0xff]
  %v21 = vld [vmem:[%s0 + $0x38] sm:$0xff]
  %v22 = vld [vmem:[%s0 + $0x40] sm:$0xff]
  %v23 = vld [vmem:[%s0 + $0x48] sm:$0xff]
  %v24 = vld [vmem:[%s0 + $0x50] sm:$0xff]
  %v25 = vld [vmem:[%s0 + $0x58] sm:$0xff]
  %v26 = vld [vmem:[%s0 + $0x60] sm:$0xff]
  %v27 = vld [vmem:[%s0 + $0x68] sm:$0xff]
  %v28 = vld [vmem:[%s0 + $0x70] sm:$0xff]
  %v29 = vld [vmem:[%s0 + $0x78] sm:$0xff]
  %v30 = vld [vmem:[%s0 + $0x80] sm:$0xff]
  %v31 = vld [vmem:[%s0 + $0x88] sm:$0xff]
  %v32 = vld [vmem:[%s0 + $0x90] sm:$0xff]
  %v33 = vld [vmem:[%s0 + $0x98] sm:$0xff]
  %v34 = vld [vmem:[%s0 + $0xa0] sm:$0xff]
  %v35 = vld [vmem:[%s0 + $0xa8] sm:$0xff]
  %v36 = vld [vmem:[%s0 + $0xb0] sm:$0xff]
  %v37 = vld [vmem:[%s0 + $0xb8] sm:$0xff]
  %v38 = vld [vmem:[%s0 + $0xc0] sm:$0xff]
  %v39 = vld [vmem:[%s0 + $0xc8] sm:$0xff]
  %v40 = vld [vmem:[%s0 + $0xd0] sm:$0xff]
  %v41 = vld [vmem:[%s0 + $0xd8] sm:$0xff]
  %v42 = vld [vmem:[%s0 + $0xe0] sm:$0xff]
  %v43 = vld [vmem:[%s0 + $0xe8] sm:$0xff]
  %v44 = vld [vmem:[%s0 + $0xf0] sm:$0xff]
  %v45 = vld [vmem:[%s0 + $0xf8] sm:$0xff]
  %v46 = vld [vmem:[%s1] sm:$0xff]
  %v47 = vld [vmem:[%s1 + $0x8] sm:$0xff]
  %v48 = vld [vmem:[%s1 + $0x10] sm:$0xff]
  %v49 = vld [vmem:[%s1 + $0x18] sm:$0xff]
  %v50 = vld [vmem:[%s1 + $0x20] sm:$0xff]
  %v51 = vld [vmem:[%s1 + $0x28] sm:$0xff]
  %v52 = vld [vmem:[%s1 + $0x30] sm:$0xff]
  %v53 = vld [vmem:[%s1 + $0x38] sm:$0xff]
  %v54 = vld [vmem:[%s1 + $0x40] sm:$0xff]
  %v55 = vld [vmem:[%s1 + $0x48] sm:$0xff]
  %v56 = vld [vmem:[%s1 + $0x50] sm:$0xff]
  %v57 = vld [vmem:[%s1 + $0x58] sm:$0xff]
  %v58 = vld [vmem:[%s1 + $0x60] sm:$0xff]
  %v59 = vld [vmem:[%s1 + $0x68] sm:$0xff]
  %v60 = vld [vmem:[%s1 + $0x70] sm:$0xff]
  %v61 = vld [vmem:[%s1 + $0x78] sm:$0xff]
  %v62 = vld [vmem:[%s1 + $0x80] sm:$0xff]
  %v63 = vld [vmem:[%s1 + $0x88] sm:$0xff]
  %v64 = vld [vmem:[%s1 + $0x90] sm:$0xff]
  %v65 = vld [vmem:[%s1 + $0x98] sm:$0xff]
  %v66 = vld [vmem:[%s1 + $0xa0] sm:$0xff]
  %v67 = vld [vmem:[%s1 + $0xa8] sm:$0xff]
  %v68 = vld [vmem:[%s1 + $0xb0] sm:$0xff]
  %v69 = vld [vmem:[%s1 + $0xb8] sm:$0xff]
  %v70 = vld [vmem:[%s1 + $0xc0] sm:$0xff]
  %v71 = vld [vmem:[%s1 + $0xc8] sm:$0xff]
  %v72 = vld [vmem:[%s1 + $0xd0] sm:$0xff]
  %v73 = vld [vmem:[%s1 + $0xd8] sm:$0xff]
  %v74 = vld [vmem:[%s1 + $0xe0] sm:$0xff]
  %v75 = vld [vmem:[%s1 + $0xe8] sm:$0xff]
  %v76 = vld [vmem:[%s1 + $0xf0] sm:$0xff]
  %v77 = vld [vmem:[%s1 + $0xf8] sm:$0xff]
  %v78 = vld [vmem:[%s1 + $0x100] sm:$0xff]
  %v79 = vld [vmem:[%s1 + $0x108] sm:$0xff]
  %v80 = vld [vmem:[%s1 + $0x110] sm:$0xff]
  %v81 = vld [vmem:[%s1 + $0x118] sm:$0xff]
  %v82 = vld [vmem:[%s1 + $0x120] sm:$0xff]
  %v83 = vld [vmem:[%s1 + $0x128] sm:$0xff]
  %v84 = vld [vmem:[%s1 + $0x130] sm:$0xff]
  %v85 = vld [vmem:[%s1 + $0x138] sm:$0xff]
  %v86 = vld [vmem:[%s1 + $0x140] sm:$0xff]
  %v87 = vld [vmem:[%s1 + $0x148] sm:$0xff]
  %v88 = vld [vmem:[%s1 + $0x150] sm:$0xff]
  %v89 = vld [vmem:[%s1 + $0x158] sm:$0xff]
  %v90 = vld [vmem:[%s1 + $0x160] sm:$0xff]
  %v91 = vld [vmem:[%s1 + $0x168] sm:$0xff]
  %v92 = vld [vmem:[%s1 + $0x170] sm:$0xff]
  %v93 = vld [vmem:[%s1 + $0x178] sm:$0xff]
  %v94 = vld [vmem:[%s1 + $0x180] sm:$0xff]
  %v95 = vld [vmem:[%s1 + $0x188] sm:$0xff]
  %v96 = vld [vmem:[%s1 + $0x190] sm:$0xff]
  %v97 = vld [vmem:[%s1 + $0x198] sm:$0xff]
  %v98 = vld [vmem:[%s1 + $0x1a0] sm:$0xff]
  %v99 = vld [vmem:[%s1 + $0x1a8] sm:$0xff]
  %v100 = vld [vmem:[%s1 + $0x1b0] sm:$0xff]
  %v101 = vld [vmem:[%s1 + $0x1b8] sm:$0xff]
  %v102 = vld [vmem:[%s1 + $0x1c0] sm:$0xff]
  %v103 = vld [vmem:[%s1 + $0x1c8] sm:$0xff]
  %v104 = vld [vmem:[%s1 + $0x1d0] sm:$0xff]
  %v105 = vld [vmem:[%s1 + $0x1d8] sm:$0xff]
  %v106 = vld [vmem:[%s1 + $0x1e0] sm:$0xff]
  %v107 = vld [vmem:[%s1 + $0x1e8] sm:$0xff]
  %v108 = vld [vmem:[%s1 + $0x1f0] sm:$0xff]
  %v109 = vld [vmem:[%s1 + $0x1f8] sm:$0xff]
  %v110 = vld [vmem:[%s1 + $0x200] sm:$0xff]
  %v111 = vld [vmem:[%s1 + $0x208] sm:$0xff]
  %v112 = vld [vmem:[%s1 + $0x210] sm:$0xff]
  %v113 = vld [vmem:[%s1 + $0x218] sm:$0xff]
  %v114 = vld [vmem:[%s1 + $0x220] sm:$0xff]
  %v115 = vld [vmem:[%s1 + $0x228] sm:$0xff]
  %v116 = vld [vmem:[%s1 + $0x230] sm:$0xff]
  %v117 = vld [vmem:[%s1 + $0x238] sm:$0xff]
  %v118 = vld [vmem:[%s1 + $0x240] sm:$0xff]
  %v119 = vld [vmem:[%s1 + $0x248] sm:$0xff]
  %v120 = vld [vmem:[%s1 + $0x250] sm:$0xff]
  %v121 = vld [vmem:[%s1 + $0x258] sm:$0xff]
  %v122 = vld [vmem:[%s1 + $0x260] sm:$0xff]
  %v123 = vld [vmem:[%s1 + $0x268] sm:$0xff]
  %v124 = vld [vmem:[%s1 + $0x270] sm:$0xff]
  %v125 = vld [vmem:[%s1 + $0x278] sm:$0xff]
  %v126 = vld [vmem:[%s1 + $0x280] sm:$0xff]
  %v127 = vld [vmem:[%s1 + $0x288] sm:$0xff]
  %v128 = vld [vmem:[%s1 + $0x290] sm:$0xff]
  %v129 = vld [vmem:[%s1 + $0x298] sm:$0xff]
  %v130 = vld [vmem:[%s1 + $0x2a0] sm:$0xff]
  %v131 = vld [vmem:[%s1 + $0x2a8] sm:$0xff]
  %v132 = vld [vmem:[%s1 + $0x2b0] sm:$0xff]
  %v133 = vld [vmem:[%s1 + $0x2b8] sm:$0xff]
  %v134 = vld [vmem:[%s1 + $0x2c0] sm:$0xff]
  %v135 = vld [vmem:[%s1 + $0x2c8] sm:$0xff]
  %v136 = vld [vmem:[%s1 + $0x2d0] sm:$0xff]
  %v137 = vld [vmem:[%s1 + $0x2d8] sm:$0xff]
  %v138 = vld [vmem:[%s1 + $0x2e0] sm:$0xff]
  %v139 = vld [vmem:[%s1 + $0x2e8] sm:$0xff]
  %v140 = vld [vmem:[%s1 + $0x2f0] sm:$0xff]
  %v141 = vld [vmem:[%s1 + $0x2f8] sm:$0xff]
  %v142 = vld [vmem:[%s1 + $0x300] sm:$0xff]
  %v143 = vld [vmem:[%s1 + $0x308] sm:$0xff]
  %v144 = vld [vmem:[%s1 + $0x310] sm:$0xff]
  %v145 = vld [vmem:[%s1 + $0x318] sm:$0xff]
  %v146 = vld [vmem:[%s1 + $0x320] sm:$0xff]
  %v147 = vld [vmem:[%s1 + $0x328] sm:$0xff]
  %v148 = vld [vmem:[%s1 + $0x330] sm:$0xff]
  %v149 = vld [vmem:[%s1 + $0x338] sm:$0xff]
  %v150 = vld [vmem:[%s1 + $0x340] sm:$0xff]
  %v151 = vld [vmem:[%s1 + $0x348] sm:$0xff]
  %v152 = vld [vmem:[%s1 + $0x350] sm:$0xff]
  %v153 = vld [vmem:[%s1 + $0x358] sm:$0xff]
  %v154 = vld [vmem:[%s1 + $0x360] sm:$0xff]
  %v155 = vld [vmem:[%s1 + $0x368] sm:$0xff]
  %v156 = vld [vmem:[%s1 + $0x370] sm:$0xff]
  %v157 = vld [vmem:[%s1 + $0x378] sm:$0xff]
  %v158 = vld [vmem:[%s1 + $0x380] sm:$0xff]
  %v159 = vld [vmem:[%s1 + $0x388] sm:$0xff]
  %v160 = vld [vmem:[%s1 + $0x390] sm:$0xff]
  %v161 = vld [vmem:[%s1 + $0x398] sm:$0xff]
  %v162 = vld [vmem:[%s1 + $0x3a0] sm:$0xff]
  %v163 = vld [vmem:[%s1 + $0x3a8] sm:$0xff]
  %v164 = vld [vmem:[%s1 + $0x3b0] sm:$0xff]
  %v165 = vld [vmem:[%s1 + $0x3b8] sm:$0xff]
  %v166 = vld [vmem:[%s1 + $0x3c0] sm:$0xff]
  %v167 = vld [vmem:[%s1 + $0x3c8] sm:$0xff]
  %v168 = vld [vmem:[%s1 + $0x3d0] sm:$0xff]
  %v169 = vld [vmem:[%s1 + $0x3d8] sm:$0xff]
  %v170 = vld [vmem:[%s1 + $0x3e0] sm:$0xff]
  %v171 = vld [vmem:[%s1 + $0x3e8] sm:$0xff]
  %v172 = vld [vmem:[%s1 + $0x3f0] sm:$0xff]
  %v173 = vld [vmem:[%s1 + $0x3f8] sm:$0xff]
  %v174 = vld [vmem:[%s1 + $0x400] sm:$0xff]
  %v175 = vld [vmem:[%s1 + $0x408] sm:$0xff]
  %v176 = vld [vmem:[%s1 + $0x410] sm:$0xff]
  %v177 = vld [vmem:[%s1 + $0x418] sm:$0xff]
  %v178 = vld [vmem:[%s1 + $0x420] sm:$0xff]
  %v179 = vld [vmem:[%s1 + $0x428] sm:$0xff]
  %v180 = vld [vmem:[%s1 + $0x430] sm:$0xff]
  %v181 = vld [vmem:[%s1 + $0x438] sm:$0xff]
  %v182 = vld [vmem:[%s1 + $0x440] sm:$0xff]
  %v183 = vld [vmem:[%s1 + $0x448] sm:$0xff]
  %v184 = vld [vmem:[%s1 + $0x450] sm:$0xff]
  %v185 = vld [vmem:[%s1 + $0x458] sm:$0xff]
  %v186 = vld [vmem:[%s1 + $0x460] sm:$0xff]
  %v187 = vld [vmem:[%s1 + $0x468] sm:$0xff]
  %v188 = vld [vmem:[%s1 + $0x470] sm:$0xff]
  %v189 = vld [vmem:[%s1 + $0x478] sm:$0xff]
  %v190 = vld [vmem:[%s1 + $0x480] sm:$0xff]
  %v191 = vld [vmem:[%s1 + $0x488] sm:$0xff]
  %v192 = vld [vmem:[%s1 + $0x490] sm:$0xff]
  %v193 = vld [vmem:[%s1 + $0x498] sm:$0xff]
  %v194 = vld [vmem:[%s1 + $0x4a0] sm:$0xff]
  %v195 = vld [vmem:[%s1 + $0x4a8] sm:$0xff]
  %v196 = vld [vmem:[%s1 + $0x4b0] sm:$0xff]
  %v197 = vld [vmem:[%s1 + $0x4b8] sm:$0xff]
  %v198 = vld [vmem:[%s1 + $0x4c0] sm:$0xff]
  %v199 = vld [vmem:[%s1 + $0x4c8] sm:$0xff]
  %v200 = vld [vmem:[%s1 + $0x4d0] sm:$0xff]
  %v201 = vld [vmem:[%s1 + $0x4d8] sm:$0xff]
  %v202 = vld [vmem:[%s1 + $0x4e0] sm:$0xff]
  %v203 = vld [vmem:[%s1 + $0x4e8] sm:$0xff]
  %v204 = vld [vmem:[%s1 + $0x4f0] sm:$0xff]
  %v205 = vld [vmem:[%s1 + $0x4f8] sm:$0xff]
  %v206 = vld [vmem:[%s1 + $0x500] sm:$0xff]
  %v207 = vld [vmem:[%s1 + $0x508] sm:$0xff]
  %v208 = vld [vmem:[%s1 + $0x510] sm:$0xff]
  %v209 = vld [vmem:[%s1 + $0x518] sm:$0xff]
  %v210 = vld [vmem:[%s1 + $0x520] sm:$0xff]
  %v211 = vld [vmem:[%s1 + $0x528] sm:$0xff]
  %v212 = vld [vmem:[%s1 + $0x530] sm:$0xff]
  %v213 = vld [vmem:[%s1 + $0x538] sm:$0xff]
  %v214 = vld [vmem:[%s1 + $0x540] sm:$0xff]
  %v215 = vld [vmem:[%s1 + $0x548] sm:$0xff]
  %v216 = vld [vmem:[%s1 + $0x550] sm:$0xff]
  %v217 = vld [vmem:[%s1 + $0x558] sm:$0xff]
  %v218 = vld [vmem:[%s1 + $0x560] sm:$0xff]
  %v219 = vld [vmem:[%s1 + $0x568] sm:$0xff]
  %v220 = vld [vmem:[%s1 + $0x570] sm:$0xff]
  %v221 = vld [vmem:[%s1 + $0x578] sm:$0xff]
  %v222 = vld [vmem:[%s1 + $0x580] sm:$0xff]
  %v223 = vld [vmem:[%s1 + $0x588] sm:$0xff]
  %v224 = vld [vmem:[%s1 + $0x590] sm:$0xff]
  %v225 = vld [vmem:[%s1 + $0x598] sm:$0xff]
  %v226 = vld [vmem:[%s1 + $0x5a0] sm:$0xff]
  %v227 = vld [vmem:[%s1 + $0x5a8] sm:$0xff]
  %v228 = vld [vmem:[%s1 + $0x5b0] sm:$0xff]
  %v229 = vld [vmem:[%s1 + $0x5b8] sm:$0xff]
  %v230 = vld [vmem:[%s1 + $0x5c0] sm:$0xff]
  %v231 = vld [vmem:[%s1 + $0x5c8] sm:$0xff]
  %v232 = vld [vmem:[%s1 + $0x5d0] sm:$0xff]
  %v233 = vld [vmem:[%s1 + $0x5d8] sm:$0xff]
  %v234 = vld [vmem:[%s1 + $0x5e0] sm:$0xff]
  %v235 = vld [vmem:[%s1 + $0x5e8] sm:$0xff]
  %v236 = vld [vmem:[%s1 + $0x5f0] sm:$0xff]
  %v237 = vld [vmem:[%s1 + $0x5f8] sm:$0xff]
  %v238 = vld [vmem:[%s1 + $0x600] sm:$0xff]
  %v239 = vld [vmem:[%s1 + $0x608] sm:$0xff]
  %v240 = vld [vmem:[%s1 + $0x610] sm:$0xff]
  %v241 = vld [vmem:[%s1 + $0x618] sm:$0xff]
  %v242 = vld [vmem:[%s1 + $0x620] sm:$0xff]
  %v243 = vld [vmem:[%s1 + $0x628] sm:$0xff]
  %v244 = vld [vmem:[%s1 + $0x630] sm:$0xff]
  %v245 = vld [vmem:[%s1 + $0x638] sm:$0xff]
  %v246 = vld [vmem:[%s1 + $0x640] sm:$0xff]
  %v247 = vld [vmem:[%s1 + $0x648] sm:$0xff]
  %v248 = vld [vmem:[%s1 + $0x650] sm:$0xff]
  %v249 = vld [vmem:[%s1 + $0x658] sm:$0xff]
  %v250 = vld [vmem:[%s1 + $0x660] sm:$0xff]
  %v251 = vld [vmem:[%s1 + $0x668] sm:$0xff]
  %v252 = vld [vmem:[%s1 + $0x670] sm:$0xff]
  %v253 = vld [vmem:[%s1 + $0x678] sm:$0xff]
  %v254 = vld [vmem:[%s1 + $0x680] sm:$0xff]
  %v255 = vld [vmem:[%s1 + $0x688] sm:$0xff]
  %v256 = vld [vmem:[%s1 + $0x690] sm:$0xff]
  %v257 = vld [vmem:[%s1 + $0x698] sm:$0xff]
  %v258 = vld [vmem:[%s1 + $0x6a0] sm:$0xff]
  %v259 = vld [vmem:[%s1 + $0x6a8] sm:$0xff]
  %v260 = vld [vmem:[%s1 + $0x6b0] sm:$0xff]
  %v261 = vld [vmem:[%s1 + $0x6b8] sm:$0xff]
  %v262 = vld [vmem:[%s1 + $0x6c0] sm:$0xff]
  %v263 = vld [vmem:[%s1 + $0x6c8] sm:$0xff]
  %v264 = vld [vmem:[%s1 + $0x6d0] sm:$0xff]
  %v265 = vld [vmem:[%s1 + $0x6d8] sm:$0xff]
  %v266 = vld [vmem:[%s1 + $0x6e0] sm:$0xff]
  %v267 = vld [vmem:[%s1 + $0x6e8] sm:$0xff]
  %v268 = vld [vmem:[%s1 + $0x6f0] sm:$0xff]
  %v269 = vld [vmem:[%s1 + $0x6f8] sm:$0xff]
  %v270 = vld [vmem:[%s1 + $0x700] sm:$0xff]
  %v271 = vld [vmem:[%s1 + $0x708] sm:$0xff]
  %v272 = vld [vmem:[%s1 + $0x710] sm:$0xff]
  %v273 = vld [vmem:[%s1 + $0x718] sm:$0xff]
  %v274 = vld [vmem:[%s1 + $0x720] sm:$0xff]
  %v275 = vld [vmem:[%s1 + $0x728] sm:$0xff]
  %v276 = vld [vmem:[%s1 + $0x730] sm:$0xff]
  %v277 = vld [vmem:[%s1 + $0x738] sm:$0xff]
  %v278 = vld [vmem:[%s1 + $0x740] sm:$0xff]
  %v279 = vld [vmem:[%s1 + $0x748] sm:$0xff]
  %v280 = vld [vmem:[%s1 + $0x750] sm:$0xff]
  %v281 = vld [vmem:[%s1 + $0x758] sm:$0xff]
  %v282 = vld [vmem:[%s1 + $0x760] sm:$0xff]
  %v283 = vld [vmem:[%s1 + $0x768] sm:$0xff]
  %v284 = vld [vmem:[%s1 + $0x770] sm:$0xff]
  %v285 = vld [vmem:[%s1 + $0x778] sm:$0xff]
  %v286 = vld [vmem:[%s1 + $0x780] sm:$0xff]
  %v287 = vld [vmem:[%s1 + $0x788] sm:$0xff]
  %v288 = vld [vmem:[%s1 + $0x790] sm:$0xff]
  %v289 = vld [vmem:[%s1 + $0x798] sm:$0xff]
  %v290 = vld [vmem:[%s1 + $0x7a0] sm:$0xff]
  %v291 = vld [vmem:[%s1 + $0x7a8] sm:$0xff]
  %v292 = vld [vmem:[%s1 + $0x7b0] sm:$0xff]
  %v293 = vld [vmem:[%s1 + $0x7b8] sm:$0xff]
  %v294 = vld [vmem:[%s1 + $0x7c0] sm:$0xff]
  %v295 = vld [vmem:[%s1 + $0x7c8] sm:$0xff]
  %v296 = vld [vmem:[%s1 + $0x7d0] sm:$0xff]
  %v297 = vld [vmem:[%s1 + $0x7d8] sm:$0xff]
  %v298 = vld [vmem:[%s1 + $0x7e0] sm:$0xff]
  %v299 = vld [vmem:[%s1 + $0x7e8] sm:$0xff]
  %v300 = vld [vmem:[%s1 + $0x7f0] sm:$0xff]
  %v301 = vld [vmem:[%s1 + $0x7f8] sm:$0xff]
  %v302 = vld [vmem:[%s2] sm:$0xf]
  %v304 = vlaneseq
  %v305 = vshrl.u32 %v304, 7
  %v306 = vsub.s32 0, %v305
  %v307 = vrot.slane %v302, %v306
  %v308 = vlaneseq
  %v309 = vshrl.u32 %v308, 7
  %v310 = vsub.s32 1, %v309
  %v311 = vrot.slane %v302, %v310
  %v312 = vlaneseq
  %v313 = vshrl.u32 %v312, 7
  %v314 = vsub.s32 2, %v313
  %v315 = vrot.slane %v302, %v314
  %v316 = vlaneseq
  %v317 = vshrl.u32 %v316, 7
  %v318 = vsub.s32 3, %v317
  %v319 = vrot.slane %v302, %v318
  %v356 = vunpack.c.l.b16 %v14
  %v357 = vunpack.c.h.b16 %v14
  %v358 = vunpack.c.l.b16 %v15
  %v359 = vunpack.c.h.b16 %v15
  %v360 = vunpack.c.l.b16 %v16
  %v361 = vunpack.c.h.b16 %v16
  %v362 = vunpack.c.l.b16 %v17
  %v363 = vunpack.c.h.b16 %v17
  %v364 = vunpack.c.l.b16 %v18
  %v365 = vunpack.c.h.b16 %v18
  %v366 = vunpack.c.l.b16 %v19
  %v367 = vunpack.c.h.b16 %v19
  %v368 = vunpack.c.l.b16 %v20
  %v369 = vunpack.c.h.b16 %v20
  %v370 = vunpack.c.l.b16 %v21
  %v371 = vunpack.c.h.b16 %v21
  %v372 = vunpack.c.l.b16 %v22
  %v373 = vunpack.c.h.b16 %v22
  %v374 = vunpack.c.l.b16 %v23
  %v375 = vunpack.c.h.b16 %v23
  %v376 = vunpack.c.l.b16 %v24
  %v377 = vunpack.c.h.b16 %v24
  %v378 = vunpack.c.l.b16 %v25
  %v379 = vunpack.c.h.b16 %v25
  %v380 = vunpack.c.l.b16 %v26
  %v381 = vunpack.c.h.b16 %v26
  %v382 = vunpack.c.l.b16 %v27
  %v383 = vunpack.c.h.b16 %v27
  %v384 = vunpack.c.l.b16 %v28
  %v385 = vunpack.c.h.b16 %v28
  %v386 = vunpack.c.l.b16 %v29
  %v387 = vunpack.c.h.b16 %v29
  %v388 = vunpack.c.l.b16 %v30
  %v389 = vunpack.c.h.b16 %v30
  %v390 = vunpack.c.l.b16 %v31
  %v391 = vunpack.c.h.b16 %v31
  %v392 = vunpack.c.l.b16 %v32
  %v393 = vunpack.c.h.b16 %v32
  %v394 = vunpack.c.l.b16 %v33
  %v395 = vunpack.c.h.b16 %v33
  %v396 = vunpack.c.l.b16 %v34
  %v397 = vunpack.c.h.b16 %v34
  %v398 = vunpack.c.l.b16 %v35
  %v399 = vunpack.c.h.b16 %v35
  %v400 = vunpack.c.l.b16 %v36
  %v401 = vunpack.c.h.b16 %v36
  %v402 = vunpack.c.l.b16 %v37
  %v403 = vunpack.c.h.b16 %v37
  %v404 = vunpack.c.l.b16 %v38
  %v405 = vunpack.c.h.b16 %v38
  %v406 = vunpack.c.l.b16 %v39
  %v407 = vunpack.c.h.b16 %v39
  %v408 = vunpack.c.l.b16 %v40
  %v409 = vunpack.c.h.b16 %v40
  %v410 = vunpack.c.l.b16 %v41
  %v411 = vunpack.c.h.b16 %v41
  %v412 = vunpack.c.l.b16 %v42
  %v413 = vunpack.c.h.b16 %v42
  %v414 = vunpack.c.l.b16 %v43
  %v415 = vunpack.c.h.b16 %v43
  %v416 = vunpack.c.l.b16 %v44
  %v417 = vunpack.c.h.b16 %v44
  %v418 = vunpack.c.l.b16 %v45
  %v419 = vunpack.c.h.b16 %v45
  %v420 = vpack.c.b16 %v364, %v356
  %v421 = vpack.c.b16 %v365, %v357
  %v422 = vpack.c.b16 %v366, %v358
  %v423 = vpack.c.b16 %v367, %v359
  %v424 = vpack.c.b16 %v368, %v360
  %v425 = vpack.c.b16 %v369, %v361
  %v426 = vpack.c.b16 %v370, %v362
  %v427 = vpack.c.b16 %v371, %v363
  %v428 = vpack.c.b16 %v380, %v372
  %v429 = vpack.c.b16 %v381, %v373
  %v430 = vpack.c.b16 %v382, %v374
  %v431 = vpack.c.b16 %v383, %v375
  %v432 = vpack.c.b16 %v384, %v376
  %v433 = vpack.c.b16 %v385, %v377
  %v434 = vpack.c.b16 %v386, %v378
  %v435 = vpack.c.b16 %v387, %v379
  %v436 = vpack.c.b16 %v396, %v388
  %v437 = vpack.c.b16 %v397, %v389
  %v438 = vpack.c.b16 %v398, %v390
  %v439 = vpack.c.b16 %v399, %v391
  %v440 = vpack.c.b16 %v400, %v392
  %v441 = vpack.c.b16 %v401, %v393
  %v442 = vpack.c.b16 %v402, %v394
  %v443 = vpack.c.b16 %v403, %v395
  %v444 = vpack.c.b16 %v412, %v404
  %v445 = vpack.c.b16 %v413, %v405
  %v446 = vpack.c.b16 %v414, %v406
  %v447 = vpack.c.b16 %v415, %v407
  %v448 = vpack.c.b16 %v416, %v408
  %v449 = vpack.c.b16 %v417, %v409
  %v450 = vpack.c.b16 %v418, %v410
  %v451 = vpack.c.b16 %v419, %v411
  %v740 = vunpack.c.l.b16 %v46
  %v741 = vunpack.c.h.b16 %v46
  %v742 = vunpack.c.l.b16 %v47
  %v743 = vunpack.c.h.b16 %v47
  %v744 = vunpack.c.l.b16 %v48
  %v745 = vunpack.c.h.b16 %v48
  %v746 = vunpack.c.l.b16 %v49
  %v747 = vunpack.c.h.b16 %v49
  %v748 = vunpack.c.l.b16 %v50
  %v749 = vunpack.c.h.b16 %v50
  %v750 = vunpack.c.l.b16 %v51
  %v751 = vunpack.c.h.b16 %v51
  %v752 = vunpack.c.l.b16 %v52
  %v753 = vunpack.c.h.b16 %v52
  %v754 = vunpack.c.l.b16 %v53
  %v755 = vunpack.c.h.b16 %v53
  %v756 = vunpack.c.l.b16 %v54
  %v757 = vunpack.c.h.b16 %v54
  %v758 = vunpack.c.l.b16 %v55
  %v759 = vunpack.c.h.b16 %v55
  %v760 = vunpack.c.l.b16 %v56
  %v761 = vunpack.c.h.b16 %v56
  %v762 = vunpack.c.l.b16 %v57
  %v763 = vunpack.c.h.b16 %v57
  %v764 = vunpack.c.l.b16 %v58
  %v765 = vunpack.c.h.b16 %v58
  %v766 = vunpack.c.l.b16 %v59
  %v767 = vunpack.c.h.b16 %v59
  %v768 = vunpack.c.l.b16 %v60
  %v769 = vunpack.c.h.b16 %v60
  %v770 = vunpack.c.l.b16 %v61
  %v771 = vunpack.c.h.b16 %v61
  %v772 = vunpack.c.l.b16 %v62
  %v773 = vunpack.c.h.b16 %v62
  %v774 = vunpack.c.l.b16 %v63
  %v775 = vunpack.c.h.b16 %v63
  %v776 = vunpack.c.l.b16 %v64
  %v777 = vunpack.c.h.b16 %v64
  %v778 = vunpack.c.l.b16 %v65
  %v779 = vunpack.c.h.b16 %v65
  %v780 = vunpack.c.l.b16 %v66
  %v781 = vunpack.c.h.b16 %v66
  %v782 = vunpack.c.l.b16 %v67
  %v783 = vunpack.c.h.b16 %v67
  %v784 = vunpack.c.l.b16 %v68
  %v785 = vunpack.c.h.b16 %v68
  %v786 = vunpack.c.l.b16 %v69
  %v787 = vunpack.c.h.b16 %v69
  %v788 = vunpack.c.l.b16 %v70
  %v789 = vunpack.c.h.b16 %v70
  %v790 = vunpack.c.l.b16 %v71
  %v791 = vunpack.c.h.b16 %v71
  %v792 = vunpack.c.l.b16 %v72
  %v793 = vunpack.c.h.b16 %v72
  %v794 = vunpack.c.l.b16 %v73
  %v795 = vunpack.c.h.b16 %v73
  %v796 = vunpack.c.l.b16 %v74
  %v797 = vunpack.c.h.b16 %v74
  %v798 = vunpack.c.l.b16 %v75
  %v799 = vunpack.c.h.b16 %v75
  %v800 = vunpack.c.l.b16 %v76
  %v801 = vunpack.c.h.b16 %v76
  %v802 = vunpack.c.l.b16 %v77
  %v803 = vunpack.c.h.b16 %v77
  %v804 = vunpack.c.l.b16 %v78
  %v805 = vunpack.c.h.b16 %v78
  %v806 = vunpack.c.l.b16 %v79
  %v807 = vunpack.c.h.b16 %v79
  %v808 = vunpack.c.l.b16 %v80
  %v809 = vunpack.c.h.b16 %v80
  %v810 = vunpack.c.l.b16 %v81
  %v811 = vunpack.c.h.b16 %v81
  %v812 = vunpack.c.l.b16 %v82
  %v813 = vunpack.c.h.b16 %v82
  %v814 = vunpack.c.l.b16 %v83
  %v815 = vunpack.c.h.b16 %v83
  %v816 = vunpack.c.l.b16 %v84
  %v817 = vunpack.c.h.b16 %v84
  %v818 = vunpack.c.l.b16 %v85
  %v819 = vunpack.c.h.b16 %v85
  %v820 = vunpack.c.l.b16 %v86
  %v821 = vunpack.c.h.b16 %v86
  %v822 = vunpack.c.l.b16 %v87
  %v823 = vunpack.c.h.b16 %v87
  %v824 = vunpack.c.l.b16 %v88
  %v825 = vunpack.c.h.b16 %v88
  %v826 = vunpack.c.l.b16 %v89
  %v827 = vunpack.c.h.b16 %v89
  %v828 = vunpack.c.l.b16 %v90
  %v829 = vunpack.c.h.b16 %v90
  %v830 = vunpack.c.l.b16 %v91
  %v831 = vunpack.c.h.b16 %v91
  %v832 = vunpack.c.l.b16 %v92
  %v833 = vunpack.c.h.b16 %v92
  %v834 = vunpack.c.l.b16 %v93
  %v835 = vunpack.c.h.b16 %v93
  %v836 = vunpack.c.l.b16 %v94
  %v837 = vunpack.c.h.b16 %v94
  %v838 = vunpack.c.l.b16 %v95
  %v839 = vunpack.c.h.b16 %v95
  %v840 = vunpack.c.l.b16 %v96
  %v841 = vunpack.c.h.b16 %v96
  %v842 = vunpack.c.l.b16 %v97
  %v843 = vunpack.c.h.b16 %v97
  %v844 = vunpack.c.l.b16 %v98
  %v845 = vunpack.c.h.b16 %v98
  %v846 = vunpack.c.l.b16 %v99
  %v847 = vunpack.c.h.b16 %v99
  %v848 = vunpack.c.l.b16 %v100
  %v849 = vunpack.c.h.b16 %v100
  %v850 = vunpack.c.l.b16 %v101
  %v851 = vunpack.c.h.b16 %v101
  %v852 = vunpack.c.l.b16 %v102
  %v853 = vunpack.c.h.b16 %v102
  %v854 = vunpack.c.l.b16 %v103
  %v855 = vunpack.c.h.b16 %v103
  %v856 = vunpack.c.l.b16 %v104
  %v857 = vunpack.c.h.b16 %v104
  %v858 = vunpack.c.l.b16 %v105
  %v859 = vunpack.c.h.b16 %v105
  %v860 = vunpack.c.l.b16 %v106
  %v861 = vunpack.c.h.b16 %v106
  %v862 = vunpack.c.l.b16 %v107
  %v863 = vunpack.c.h.b16 %v107
  %v864 = vunpack.c.l.b16 %v108
  %v865 = vunpack.c.h.b16 %v108
  %v866 = vunpack.c.l.b16 %v109
  %v867 = vunpack.c.h.b16 %v109
  %v868 = vunpack.c.l.b16 %v110
  %v869 = vunpack.c.h.b16 %v110
  %v870 = vunpack.c.l.b16 %v111
  %v871 = vunpack.c.h.b16 %v111
  %v872 = vunpack.c.l.b16 %v112
  %v873 = vunpack.c.h.b16 %v112
  %v874 = vunpack.c.l.b16 %v113
  %v875 = vunpack.c.h.b16 %v113
  %v876 = vunpack.c.l.b16 %v114
  %v877 = vunpack.c.h.b16 %v114
  %v878 = vunpack.c.l.b16 %v115
  %v879 = vunpack.c.h.b16 %v115
  %v880 = vunpack.c.l.b16 %v116
  %v881 = vunpack.c.h.b16 %v116
  %v882 = vunpack.c.l.b16 %v117
  %v883 = vunpack.c.h.b16 %v117
  %v884 = vunpack.c.l.b16 %v118
  %v885 = vunpack.c.h.b16 %v118
  %v886 = vunpack.c.l.b16 %v119
  %v887 = vunpack.c.h.b16 %v119
  %v888 = vunpack.c.l.b16 %v120
  %v889 = vunpack.c.h.b16 %v120
  %v890 = vunpack.c.l.b16 %v121
  %v891 = vunpack.c.h.b16 %v121
  %v892 = vunpack.c.l.b16 %v122
  %v893 = vunpack.c.h.b16 %v122
  %v894 = vunpack.c.l.b16 %v123
  %v895 = vunpack.c.h.b16 %v123
  %v896 = vunpack.c.l.b16 %v124
  %v897 = vunpack.c.h.b16 %v124
  %v898 = vunpack.c.l.b16 %v125
  %v899 = vunpack.c.h.b16 %v125
  %v900 = vunpack.c.l.b16 %v126
  %v901 = vunpack.c.h.b16 %v126
  %v902 = vunpack.c.l.b16 %v127
  %v903 = vunpack.c.h.b16 %v127
  %v904 = vunpack.c.l.b16 %v128
  %v905 = vunpack.c.h.b16 %v128
  %v906 = vunpack.c.l.b16 %v129
  %v907 = vunpack.c.h.b16 %v129
  %v908 = vunpack.c.l.b16 %v130
  %v909 = vunpack.c.h.b16 %v130
  %v910 = vunpack.c.l.b16 %v131
  %v911 = vunpack.c.h.b16 %v131
  %v912 = vunpack.c.l.b16 %v132
  %v913 = vunpack.c.h.b16 %v132
  %v914 = vunpack.c.l.b16 %v133
  %v915 = vunpack.c.h.b16 %v133
  %v916 = vunpack.c.l.b16 %v134
  %v917 = vunpack.c.h.b16 %v134
  %v918 = vunpack.c.l.b16 %v135
  %v919 = vunpack.c.h.b16 %v135
  %v920 = vunpack.c.l.b16 %v136
  %v921 = vunpack.c.h.b16 %v136
  %v922 = vunpack.c.l.b16 %v137
  %v923 = vunpack.c.h.b16 %v137
  %v924 = vunpack.c.l.b16 %v138
  %v925 = vunpack.c.h.b16 %v138
  %v926 = vunpack.c.l.b16 %v139
  %v927 = vunpack.c.h.b16 %v139
  %v928 = vunpack.c.l.b16 %v140
  %v929 = vunpack.c.h.b16 %v140
  %v930 = vunpack.c.l.b16 %v141
  %v931 = vunpack.c.h.b16 %v141
  %v932 = vunpack.c.l.b16 %v142
  %v933 = vunpack.c.h.b16 %v142
  %v934 = vunpack.c.l.b16 %v143
  %v935 = vunpack.c.h.b16 %v143
  %v936 = vunpack.c.l.b16 %v144
  %v937 = vunpack.c.h.b16 %v144
  %v938 = vunpack.c.l.b16 %v145
  %v939 = vunpack.c.h.b16 %v145
  %v940 = vunpack.c.l.b16 %v146
  %v941 = vunpack.c.h.b16 %v146
  %v942 = vunpack.c.l.b16 %v147
  %v943 = vunpack.c.h.b16 %v147
  %v944 = vunpack.c.l.b16 %v148
  %v945 = vunpack.c.h.b16 %v148
  %v946 = vunpack.c.l.b16 %v149
  %v947 = vunpack.c.h.b16 %v149
  %v948 = vunpack.c.l.b16 %v150
  %v949 = vunpack.c.h.b16 %v150
  %v950 = vunpack.c.l.b16 %v151
  %v951 = vunpack.c.h.b16 %v151
  %v952 = vunpack.c.l.b16 %v152
  %v953 = vunpack.c.h.b16 %v152
  %v954 = vunpack.c.l.b16 %v153
  %v955 = vunpack.c.h.b16 %v153
  %v956 = vunpack.c.l.b16 %v154
  %v957 = vunpack.c.h.b16 %v154
  %v958 = vunpack.c.l.b16 %v155
  %v959 = vunpack.c.h.b16 %v155
  %v960 = vunpack.c.l.b16 %v156
  %v961 = vunpack.c.h.b16 %v156
  %v962 = vunpack.c.l.b16 %v157
  %v963 = vunpack.c.h.b16 %v157
  %v964 = vunpack.c.l.b16 %v158
  %v965 = vunpack.c.h.b16 %v158
  %v966 = vunpack.c.l.b16 %v159
  %v967 = vunpack.c.h.b16 %v159
  %v968 = vunpack.c.l.b16 %v160
  %v969 = vunpack.c.h.b16 %v160
  %v970 = vunpack.c.l.b16 %v161
  %v971 = vunpack.c.h.b16 %v161
  %v972 = vunpack.c.l.b16 %v162
  %v973 = vunpack.c.h.b16 %v162
  %v974 = vunpack.c.l.b16 %v163
  %v975 = vunpack.c.h.b16 %v163
  %v976 = vunpack.c.l.b16 %v164
  %v977 = vunpack.c.h.b16 %v164
  %v978 = vunpack.c.l.b16 %v165
  %v979 = vunpack.c.h.b16 %v165
  %v980 = vunpack.c.l.b16 %v166
  %v981 = vunpack.c.h.b16 %v166
  %v982 = vunpack.c.l.b16 %v167
  %v983 = vunpack.c.h.b16 %v167
  %v984 = vunpack.c.l.b16 %v168
  %v985 = vunpack.c.h.b16 %v168
  %v986 = vunpack.c.l.b16 %v169
  %v987 = vunpack.c.h.b16 %v169
  %v988 = vunpack.c.l.b16 %v170
  %v989 = vunpack.c.h.b16 %v170
  %v990 = vunpack.c.l.b16 %v171
  %v991 = vunpack.c.h.b16 %v171
  %v992 = vunpack.c.l.b16 %v172
  %v993 = vunpack.c.h.b16 %v172
  %v994 = vunpack.c.l.b16 %v173
  %v995 = vunpack.c.h.b16 %v173
  %v996 = vunpack.c.l.b16 %v174
  %v997 = vunpack.c.h.b16 %v174
  %v998 = vunpack.c.l.b16 %v175
  %v999 = vunpack.c.h.b16 %v175
  %v1000 = vunpack.c.l.b16 %v176
  %v1001 = vunpack.c.h.b16 %v176
  %v1002 = vunpack.c.l.b16 %v177
  %v1003 = vunpack.c.h.b16 %v177
  %v1004 = vunpack.c.l.b16 %v178
  %v1005 = vunpack.c.h.b16 %v178
  %v1006 = vunpack.c.l.b16 %v179
  %v1007 = vunpack.c.h.b16 %v179
  %v1008 = vunpack.c.l.b16 %v180
  %v1009 = vunpack.c.h.b16 %v180
  %v1010 = vunpack.c.l.b16 %v181
  %v1011 = vunpack.c.h.b16 %v181
  %v1012 = vunpack.c.l.b16 %v182
  %v1013 = vunpack.c.h.b16 %v182
  %v1014 = vunpack.c.l.b16 %v183
  %v1015 = vunpack.c.h.b16 %v183
  %v1016 = vunpack.c.l.b16 %v184
  %v1017 = vunpack.c.h.b16 %v184
  %v1018 = vunpack.c.l.b16 %v185
  %v1019 = vunpack.c.h.b16 %v185
  %v1020 = vunpack.c.l.b16 %v186
  %v1021 = vunpack.c.h.b16 %v186
  %v1022 = vunpack.c.l.b16 %v187
  %v1023 = vunpack.c.h.b16 %v187
  %v1024 = vunpack.c.l.b16 %v188
  %v1025 = vunpack.c.h.b16 %v188
  %v1026 = vunpack.c.l.b16 %v189
  %v1027 = vunpack.c.h.b16 %v189
  %v1028 = vunpack.c.l.b16 %v190
  %v1029 = vunpack.c.h.b16 %v190
  %v1030 = vunpack.c.l.b16 %v191
  %v1031 = vunpack.c.h.b16 %v191
  %v1032 = vunpack.c.l.b16 %v192
  %v1033 = vunpack.c.h.b16 %v192
  %v1034 = vunpack.c.l.b16 %v193
  %v1035 = vunpack.c.h.b16 %v193
  %v1036 = vunpack.c.l.b16 %v194
  %v1037 = vunpack.c.h.b16 %v194
  %v1038 = vunpack.c.l.b16 %v195
  %v1039 = vunpack.c.h.b16 %v195
  %v1040 = vunpack.c.l.b16 %v196
  %v1041 = vunpack.c.h.b16 %v196
  %v1042 = vunpack.c.l.b16 %v197
  %v1043 = vunpack.c.h.b16 %v197
  %v1044 = vunpack.c.l.b16 %v198
  %v1045 = vunpack.c.h.b16 %v198
  %v1046 = vunpack.c.l.b16 %v199
  %v1047 = vunpack.c.h.b16 %v199
  %v1048 = vunpack.c.l.b16 %v200
  %v1049 = vunpack.c.h.b16 %v200
  %v1050 = vunpack.c.l.b16 %v201
  %v1051 = vunpack.c.h.b16 %v201
  %v1052 = vunpack.c.l.b16 %v202
  %v1053 = vunpack.c.h.b16 %v202
  %v1054 = vunpack.c.l.b16 %v203
  %v1055 = vunpack.c.h.b16 %v203
  %v1056 = vunpack.c.l.b16 %v204
  %v1057 = vunpack.c.h.b16 %v204
  %v1058 = vunpack.c.l.b16 %v205
  %v1059 = vunpack.c.h.b16 %v205
  %v1060 = vunpack.c.l.b16 %v206
  %v1061 = vunpack.c.h.b16 %v206
  %v1062 = vunpack.c.l.b16 %v207
  %v1063 = vunpack.c.h.b16 %v207
  %v1064 = vunpack.c.l.b16 %v208
  %v1065 = vunpack.c.h.b16 %v208
  %v1066 = vunpack.c.l.b16 %v209
  %v1067 = vunpack.c.h.b16 %v209
  %v1068 = vunpack.c.l.b16 %v210
  %v1069 = vunpack.c.h.b16 %v210
  %v1070 = vunpack.c.l.b16 %v211
  %v1071 = vunpack.c.h.b16 %v211
  %v1072 = vunpack.c.l.b16 %v212
  %v1073 = vunpack.c.h.b16 %v212
  %v1074 = vunpack.c.l.b16 %v213
  %v1075 = vunpack.c.h.b16 %v213
  %v1076 = vunpack.c.l.b16 %v214
  %v1077 = vunpack.c.h.b16 %v214
  %v1078 = vunpack.c.l.b16 %v215
  %v1079 = vunpack.c.h.b16 %v215
  %v1080 = vunpack.c.l.b16 %v216
  %v1081 = vunpack.c.h.b16 %v216
  %v1082 = vunpack.c.l.b16 %v217
  %v1083 = vunpack.c.h.b16 %v217
  %v1084 = vunpack.c.l.b16 %v218
  %v1085 = vunpack.c.h.b16 %v218
  %v1086 = vunpack.c.l.b16 %v219
  %v1087 = vunpack.c.h.b16 %v219
  %v1088 = vunpack.c.l.b16 %v220
  %v1089 = vunpack.c.h.b16 %v220
  %v1090 = vunpack.c.l.b16 %v221
  %v1091 = vunpack.c.h.b16 %v221
  %v1092 = vunpack.c.l.b16 %v222
  %v1093 = vunpack.c.h.b16 %v222
  %v1094 = vunpack.c.l.b16 %v223
  %v1095 = vunpack.c.h.b16 %v223
  %v1096 = vunpack.c.l.b16 %v224
  %v1097 = vunpack.c.h.b16 %v224
  %v1098 = vunpack.c.l.b16 %v225
  %v1099 = vunpack.c.h.b16 %v225
  %v1100 = vunpack.c.l.b16 %v226
  %v1101 = vunpack.c.h.b16 %v226
  %v1102 = vunpack.c.l.b16 %v227
  %v1103 = vunpack.c.h.b16 %v227
  %v1104 = vunpack.c.l.b16 %v228
  %v1105 = vunpack.c.h.b16 %v228
  %v1106 = vunpack.c.l.b16 %v229
  %v1107 = vunpack.c.h.b16 %v229
  %v1108 = vunpack.c.l.b16 %v230
  %v1109 = vunpack.c.h.b16 %v230
  %v1110 = vunpack.c.l.b16 %v231
  %v1111 = vunpack.c.h.b16 %v231
  %v1112 = vunpack.c.l.b16 %v232
  %v1113 = vunpack.c.h.b16 %v232
  %v1114 = vunpack.c.l.b16 %v233
  %v1115 = vunpack.c.h.b16 %v233
  %v1116 = vunpack.c.l.b16 %v234
  %v1117 = vunpack.c.h.b16 %v234
  %v1118 = vunpack.c.l.b16 %v235
  %v1119 = vunpack.c.h.b16 %v235
  %v1120 = vunpack.c.l.b16 %v236
  %v1121 = vunpack.c.h.b16 %v236
  %v1122 = vunpack.c.l.b16 %v237
  %v1123 = vunpack.c.h.b16 %v237
  %v1124 = vunpack.c.l.b16 %v238
  %v1125 = vunpack.c.h.b16 %v238
  %v1126 = vunpack.c.l.b16 %v239
  %v1127 = vunpack.c.h.b16 %v239
  %v1128 = vunpack.c.l.b16 %v240
  %v1129 = vunpack.c.h.b16 %v240
  %v1130 = vunpack.c.l.b16 %v241
  %v1131 = vunpack.c.h.b16 %v241
  %v1132 = vunpack.c.l.b16 %v242
  %v1133 = vunpack.c.h.b16 %v242
  %v1134 = vunpack.c.l.b16 %v243
  %v1135 = vunpack.c.h.b16 %v243
  %v1136 = vunpack.c.l.b16 %v244
  %v1137 = vunpack.c.h.b16 %v244
  %v1138 = vunpack.c.l.b16 %v245
  %v1139 = vunpack.c.h.b16 %v245
  %v1140 = vunpack.c.l.b16 %v246
  %v1141 = vunpack.c.h.b16 %v246
  %v1142 = vunpack.c.l.b16 %v247
  %v1143 = vunpack.c.h.b16 %v247
  %v1144 = vunpack.c.l.b16 %v248
  %v1145 = vunpack.c.h.b16 %v248
  %v1146 = vunpack.c.l.b16 %v249
  %v1147 = vunpack.c.h.b16 %v249
  %v1148 = vunpack.c.l.b16 %v250
  %v1149 = vunpack.c.h.b16 %v250
  %v1150 = vunpack.c.l.b16 %v251
  %v1151 = vunpack.c.h.b16 %v251
  %v1152 = vunpack.c.l.b16 %v252
  %v1153 = vunpack.c.h.b16 %v252
  %v1154 = vunpack.c.l.b16 %v253
  %v1155 = vunpack.c.h.b16 %v253
  %v1156 = vunpack.c.l.b16 %v254
  %v1157 = vunpack.c.h.b16 %v254
  %v1158 = vunpack.c.l.b16 %v255
  %v1159 = vunpack.c.h.b16 %v255
  %v1160 = vunpack.c.l.b16 %v256
  %v1161 = vunpack.c.h.b16 %v256
  %v1162 = vunpack.c.l.b16 %v257
  %v1163 = vunpack.c.h.b16 %v257
  %v1164 = vunpack.c.l.b16 %v258
  %v1165 = vunpack.c.h.b16 %v258
  %v1166 = vunpack.c.l.b16 %v259
  %v1167 = vunpack.c.h.b16 %v259
  %v1168 = vunpack.c.l.b16 %v260
  %v1169 = vunpack.c.h.b16 %v260
  %v1170 = vunpack.c.l.b16 %v261
  %v1171 = vunpack.c.h.b16 %v261
  %v1172 = vunpack.c.l.b16 %v262
  %v1173 = vunpack.c.h.b16 %v262
  %v1174 = vunpack.c.l.b16 %v263
  %v1175 = vunpack.c.h.b16 %v263
  %v1176 = vunpack.c.l.b16 %v264
  %v1177 = vunpack.c.h.b16 %v264
  %v1178 = vunpack.c.l.b16 %v265
  %v1179 = vunpack.c.h.b16 %v265
  %v1180 = vunpack.c.l.b16 %v266
  %v1181 = vunpack.c.h.b16 %v266
  %v1182 = vunpack.c.l.b16 %v267
  %v1183 = vunpack.c.h.b16 %v267
  %v1184 = vunpack.c.l.b16 %v268
  %v1185 = vunpack.c.h.b16 %v268
  %v1186 = vunpack.c.l.b16 %v269
  %v1187 = vunpack.c.h.b16 %v269
  %v1188 = vunpack.c.l.b16 %v270
  %v1189 = vunpack.c.h.b16 %v270
  %v1190 = vunpack.c.l.b16 %v271
  %v1191 = vunpack.c.h.b16 %v271
  %v1192 = vunpack.c.l.b16 %v272
  %v1193 = vunpack.c.h.b16 %v272
  %v1194 = vunpack.c.l.b16 %v273
  %v1195 = vunpack.c.h.b16 %v273
  %v1196 = vunpack.c.l.b16 %v274
  %v1197 = vunpack.c.h.b16 %v274
  %v1198 = vunpack.c.l.b16 %v275
  %v1199 = vunpack.c.h.b16 %v275
  %v1200 = vunpack.c.l.b16 %v276
  %v1201 = vunpack.c.h.b16 %v276
  %v1202 = vunpack.c.l.b16 %v277
  %v1203 = vunpack.c.h.b16 %v277
  %v1204 = vunpack.c.l.b16 %v278
  %v1205 = vunpack.c.h.b16 %v278
  %v1206 = vunpack.c.l.b16 %v279
  %v1207 = vunpack.c.h.b16 %v279
  %v1208 = vunpack.c.l.b16 %v280
  %v1209 = vunpack.c.h.b16 %v280
  %v1210 = vunpack.c.l.b16 %v281
  %v1211 = vunpack.c.h.b16 %v281
  %v1212 = vunpack.c.l.b16 %v282
  %v1213 = vunpack.c.h.b16 %v282
  %v1214 = vunpack.c.l.b16 %v283
  %v1215 = vunpack.c.h.b16 %v283
  %v1216 = vunpack.c.l.b16 %v284
  %v1217 = vunpack.c.h.b16 %v284
  %v1218 = vunpack.c.l.b16 %v285
  %v1219 = vunpack.c.h.b16 %v285
  %v1220 = vunpack.c.l.b16 %v286
  %v1221 = vunpack.c.h.b16 %v286
  %v1222 = vunpack.c.l.b16 %v287
  %v1223 = vunpack.c.h.b16 %v287
  %v1224 = vunpack.c.l.b16 %v288
  %v1225 = vunpack.c.h.b16 %v288
  %v1226 = vunpack.c.l.b16 %v289
  %v1227 = vunpack.c.h.b16 %v289
  %v1228 = vunpack.c.l.b16 %v290
  %v1229 = vunpack.c.h.b16 %v290
  %v1230 = vunpack.c.l.b16 %v291
  %v1231 = vunpack.c.h.b16 %v291
  %v1232 = vunpack.c.l.b16 %v292
  %v1233 = vunpack.c.h.b16 %v292
  %v1234 = vunpack.c.l.b16 %v293
  %v1235 = vunpack.c.h.b16 %v293
  %v1236 = vunpack.c.l.b16 %v294
  %v1237 = vunpack.c.h.b16 %v294
  %v1238 = vunpack.c.l.b16 %v295
  %v1239 = vunpack.c.h.b16 %v295
  %v1240 = vunpack.c.l.b16 %v296
  %v1241 = vunpack.c.h.b16 %v296
  %v1242 = vunpack.c.l.b16 %v297
  %v1243 = vunpack.c.h.b16 %v297
  %v1244 = vunpack.c.l.b16 %v298
  %v1245 = vunpack.c.h.b16 %v298
  %v1246 = vunpack.c.l.b16 %v299
  %v1247 = vunpack.c.h.b16 %v299
  %v1248 = vunpack.c.l.b16 %v300
  %v1249 = vunpack.c.h.b16 %v300
  %v1250 = vunpack.c.l.b16 %v301
  %v1251 = vunpack.c.h.b16 %v301
  %v1252 = vpack.c.b16 %v744, %v740
  %v1253 = vpack.c.b16 %v745, %v741
  %v1254 = vpack.c.b16 %v746, %v742
  %v1255 = vpack.c.b16 %v747, %v743
  %v1256 = vpack.c.b16 %v752, %v748
  %v1257 = vpack.c.b16 %v753, %v749
  %v1258 = vpack.c.b16 %v754, %v750
  %v1259 = vpack.c.b16 %v755, %v751
  %v1260 = vpack.c.b16 %v760, %v756
  %v1261 = vpack.c.b16 %v761, %v757
  %v1262 = vpack.c.b16 %v762, %v758
  %v1263 = vpack.c.b16 %v763, %v759
  %v1264 = vpack.c.b16 %v768, %v764
  %v1265 = vpack.c.b16 %v769, %v765
  %v1266 = vpack.c.b16 %v770, %v766
  %v1267 = vpack.c.b16 %v771, %v767
  %v1268 = vpack.c.b16 %v776, %v772
  %v1269 = vpack.c.b16 %v777, %v773
  %v1270 = vpack.c.b16 %v778, %v774
  %v1271 = vpack.c.b16 %v779, %v775
  %v1272 = vpack.c.b16 %v784, %v780
  %v1273 = vpack.c.b16 %v785, %v781
  %v1274 = vpack.c.b16 %v786, %v782
  %v1275 = vpack.c.b16 %v787, %v783
  %v1276 = vpack.c.b16 %v792, %v788
  %v1277 = vpack.c.b16 %v793, %v789
  %v1278 = vpack.c.b16 %v794, %v790
  %v1279 = vpack.c.b16 %v795, %v791
  %v1280 = vpack.c.b16 %v800, %v796
  %v1281 = vpack.c.b16 %v801, %v797
  %v1282 = vpack.c.b16 %v802, %v798
  %v1283 = vpack.c.b16 %v803, %v799
  %v1284 = vpack.c.b16 %v808, %v804
  %v1285 = vpack.c.b16 %v809, %v805
  %v1286 = vpack.c.b16 %v810, %v806
  %v1287 = vpack.c.b16 %v811, %v807
  %v1288 = vpack.c.b16 %v816, %v812
  %v1289 = vpack.c.b16 %v817, %v813
  %v1290 = vpack.c.b16 %v818, %v814
  %v1291 = vpack.c.b16 %v819, %v815
  %v1292 = vpack.c.b16 %v824, %v820
  %v1293 = vpack.c.b16 %v825, %v821
  %v1294 = vpack.c.b16 %v826, %v822
  %v1295 = vpack.c.b16 %v827, %v823
  %v1296 = vpack.c.b16 %v832, %v828
  %v1297 = vpack.c.b16 %v833, %v829
  %v1298 = vpack.c.b16 %v834, %v830
  %v1299 = vpack.c.b16 %v835, %v831
  %v1300 = vpack.c.b16 %v840, %v836
  %v1301 = vpack.c.b16 %v841, %v837
  %v1302 = vpack.c.b16 %v842, %v838
  %v1303 = vpack.c.b16 %v843, %v839
  %v1304 = vpack.c.b16 %v848, %v844
  %v1305 = vpack.c.b16 %v849, %v845
  %v1306 = vpack.c.b16 %v850, %v846
  %v1307 = vpack.c.b16 %v851, %v847
  %v1308 = vpack.c.b16 %v856, %v852
  %v1309 = vpack.c.b16 %v857, %v853
  %v1310 = vpack.c.b16 %v858, %v854
  %v1311 = vpack.c.b16 %v859, %v855
  %v1312 = vpack.c.b16 %v864, %v860
  %v1313 = vpack.c.b16 %v865, %v861
  %v1314 = vpack.c.b16 %v866, %v862
  %v1315 = vpack.c.b16 %v867, %v863
  %v1316 = vpack.c.b16 %v872, %v868
  %v1317 = vpack.c.b16 %v873, %v869
  %v1318 = vpack.c.b16 %v874, %v870
  %v1319 = vpack.c.b16 %v875, %v871
  %v1320 = vpack.c.b16 %v880, %v876
  %v1321 = vpack.c.b16 %v881, %v877
  %v1322 = vpack.c.b16 %v882, %v878
  %v1323 = vpack.c.b16 %v883, %v879
  %v1324 = vpack.c.b16 %v888, %v884
  %v1325 = vpack.c.b16 %v889, %v885
  %v1326 = vpack.c.b16 %v890, %v886
  %v1327 = vpack.c.b16 %v891, %v887
  %v1328 = vpack.c.b16 %v896, %v892
  %v1329 = vpack.c.b16 %v897, %v893
  %v1330 = vpack.c.b16 %v898, %v894
  %v1331 = vpack.c.b16 %v899, %v895
  %v1332 = vpack.c.b16 %v904, %v900
  %v1333 = vpack.c.b16 %v905, %v901
  %v1334 = vpack.c.b16 %v906, %v902
  %v1335 = vpack.c.b16 %v907, %v903
  %v1336 = vpack.c.b16 %v912, %v908
  %v1337 = vpack.c.b16 %v913, %v909
  %v1338 = vpack.c.b16 %v914, %v910
  %v1339 = vpack.c.b16 %v915, %v911
  %v1340 = vpack.c.b16 %v920, %v916
  %v1341 = vpack.c.b16 %v921, %v917
  %v1342 = vpack.c.b16 %v922, %v918
  %v1343 = vpack.c.b16 %v923, %v919
  %v1344 = vpack.c.b16 %v928, %v924
  %v1345 = vpack.c.b16 %v929, %v925
  %v1346 = vpack.c.b16 %v930, %v926
  %v1347 = vpack.c.b16 %v931, %v927
  %v1348 = vpack.c.b16 %v936, %v932
  %v1349 = vpack.c.b16 %v937, %v933
  %v1350 = vpack.c.b16 %v938, %v934
  %v1351 = vpack.c.b16 %v939, %v935
  %v1352 = vpack.c.b16 %v944, %v940
  %v1353 = vpack.c.b16 %v945, %v941
  %v1354 = vpack.c.b16 %v946, %v942
  %v1355 = vpack.c.b16 %v947, %v943
  %v1356 = vpack.c.b16 %v952, %v948
  %v1357 = vpack.c.b16 %v953, %v949
  %v1358 = vpack.c.b16 %v954, %v950
  %v1359 = vpack.c.b16 %v955, %v951
  %v1360 = vpack.c.b16 %v960, %v956
  %v1361 = vpack.c.b16 %v961, %v957
  %v1362 = vpack.c.b16 %v962, %v958
  %v1363 = vpack.c.b16 %v963, %v959
  %v1364 = vpack.c.b16 %v968, %v964
  %v1365 = vpack.c.b16 %v969, %v965
  %v1366 = vpack.c.b16 %v970, %v966
  %v1367 = vpack.c.b16 %v971, %v967
  %v1368 = vpack.c.b16 %v976, %v972
  %v1369 = vpack.c.b16 %v977, %v973
  %v1370 = vpack.c.b16 %v978, %v974
  %v1371 = vpack.c.b16 %v979, %v975
  %v1372 = vpack.c.b16 %v984, %v980
  %v1373 = vpack.c.b16 %v985, %v981
  %v1374 = vpack.c.b16 %v986, %v982
  %v1375 = vpack.c.b16 %v987, %v983
  %v1376 = vpack.c.b16 %v992, %v988
  %v1377 = vpack.c.b16 %v993, %v989
  %v1378 = vpack.c.b16 %v994, %v990
  %v1379 = vpack.c.b16 %v995, %v991
  %v1380 = vpack.c.b16 %v1000, %v996
  %v1381 = vpack.c.b16 %v1001, %v997
  %v1382 = vpack.c.b16 %v1002, %v998
  %v1383 = vpack.c.b16 %v1003, %v999
  %v1384 = vpack.c.b16 %v1008, %v1004
  %v1385 = vpack.c.b16 %v1009, %v1005
  %v1386 = vpack.c.b16 %v1010, %v1006
  %v1387 = vpack.c.b16 %v1011, %v1007
  %v1388 = vpack.c.b16 %v1016, %v1012
  %v1389 = vpack.c.b16 %v1017, %v1013
  %v1390 = vpack.c.b16 %v1018, %v1014
  %v1391 = vpack.c.b16 %v1019, %v1015
  %v1392 = vpack.c.b16 %v1024, %v1020
  %v1393 = vpack.c.b16 %v1025, %v1021
  %v1394 = vpack.c.b16 %v1026, %v1022
  %v1395 = vpack.c.b16 %v1027, %v1023
  %v1396 = vpack.c.b16 %v1032, %v1028
  %v1397 = vpack.c.b16 %v1033, %v1029
  %v1398 = vpack.c.b16 %v1034, %v1030
  %v1399 = vpack.c.b16 %v1035, %v1031
  %v1400 = vpack.c.b16 %v1040, %v1036
  %v1401 = vpack.c.b16 %v1041, %v1037
  %v1402 = vpack.c.b16 %v1042, %v1038
  %v1403 = vpack.c.b16 %v1043, %v1039
  %v1404 = vpack.c.b16 %v1048, %v1044
  %v1405 = vpack.c.b16 %v1049, %v1045
  %v1406 = vpack.c.b16 %v1050, %v1046
  %v1407 = vpack.c.b16 %v1051, %v1047
  %v1408 = vpack.c.b16 %v1056, %v1052
  %v1409 = vpack.c.b16 %v1057, %v1053
  %v1410 = vpack.c.b16 %v1058, %v1054
  %v1411 = vpack.c.b16 %v1059, %v1055
  %v1412 = vpack.c.b16 %v1064, %v1060
  %v1413 = vpack.c.b16 %v1065, %v1061
  %v1414 = vpack.c.b16 %v1066, %v1062
  %v1415 = vpack.c.b16 %v1067, %v1063
  %v1416 = vpack.c.b16 %v1072, %v1068
  %v1417 = vpack.c.b16 %v1073, %v1069
  %v1418 = vpack.c.b16 %v1074, %v1070
  %v1419 = vpack.c.b16 %v1075, %v1071
  %v1420 = vpack.c.b16 %v1080, %v1076
  %v1421 = vpack.c.b16 %v1081, %v1077
  %v1422 = vpack.c.b16 %v1082, %v1078
  %v1423 = vpack.c.b16 %v1083, %v1079
  %v1424 = vpack.c.b16 %v1088, %v1084
  %v1425 = vpack.c.b16 %v1089, %v1085
  %v1426 = vpack.c.b16 %v1090, %v1086
  %v1427 = vpack.c.b16 %v1091, %v1087
  %v1428 = vpack.c.b16 %v1096, %v1092
  %v1429 = vpack.c.b16 %v1097, %v1093
  %v1430 = vpack.c.b16 %v1098, %v1094
  %v1431 = vpack.c.b16 %v1099, %v1095
  %v1432 = vpack.c.b16 %v1104, %v1100
  %v1433 = vpack.c.b16 %v1105, %v1101
  %v1434 = vpack.c.b16 %v1106, %v1102
  %v1435 = vpack.c.b16 %v1107, %v1103
  %v1436 = vpack.c.b16 %v1112, %v1108
  %v1437 = vpack.c.b16 %v1113, %v1109
  %v1438 = vpack.c.b16 %v1114, %v1110
  %v1439 = vpack.c.b16 %v1115, %v1111
  %v1440 = vpack.c.b16 %v1120, %v1116
  %v1441 = vpack.c.b16 %v1121, %v1117
  %v1442 = vpack.c.b16 %v1122, %v1118
  %v1443 = vpack.c.b16 %v1123, %v1119
  %v1444 = vpack.c.b16 %v1128, %v1124
  %v1445 = vpack.c.b16 %v1129, %v1125
  %v1446 = vpack.c.b16 %v1130, %v1126
  %v1447 = vpack.c.b16 %v1131, %v1127
  %v1448 = vpack.c.b16 %v1136, %v1132
  %v1449 = vpack.c.b16 %v1137, %v1133
  %v1450 = vpack.c.b16 %v1138, %v1134
  %v1451 = vpack.c.b16 %v1139, %v1135
  %v1452 = vpack.c.b16 %v1144, %v1140
  %v1453 = vpack.c.b16 %v1145, %v1141
  %v1454 = vpack.c.b16 %v1146, %v1142
  %v1455 = vpack.c.b16 %v1147, %v1143
  %v1456 = vpack.c.b16 %v1152, %v1148
  %v1457 = vpack.c.b16 %v1153, %v1149
  %v1458 = vpack.c.b16 %v1154, %v1150
  %v1459 = vpack.c.b16 %v1155, %v1151
  %v1460 = vpack.c.b16 %v1160, %v1156
  %v1461 = vpack.c.b16 %v1161, %v1157
  %v1462 = vpack.c.b16 %v1162, %v1158
  %v1463 = vpack.c.b16 %v1163, %v1159
  %v1464 = vpack.c.b16 %v1168, %v1164
  %v1465 = vpack.c.b16 %v1169, %v1165
  %v1466 = vpack.c.b16 %v1170, %v1166
  %v1467 = vpack.c.b16 %v1171, %v1167
  %v1468 = vpack.c.b16 %v1176, %v1172
  %v1469 = vpack.c.b16 %v1177, %v1173
  %v1470 = vpack.c.b16 %v1178, %v1174
  %v1471 = vpack.c.b16 %v1179, %v1175
  %v1472 = vpack.c.b16 %v1184, %v1180
  %v1473 = vpack.c.b16 %v1185, %v1181
  %v1474 = vpack.c.b16 %v1186, %v1182
  %v1475 = vpack.c.b16 %v1187, %v1183
  %v1476 = vpack.c.b16 %v1192, %v1188
  %v1477 = vpack.c.b16 %v1193, %v1189
  %v1478 = vpack.c.b16 %v1194, %v1190
  %v1479 = vpack.c.b16 %v1195, %v1191
  %v1480 = vpack.c.b16 %v1200, %v1196
  %v1481 = vpack.c.b16 %v1201, %v1197
  %v1482 = vpack.c.b16 %v1202, %v1198
  %v1483 = vpack.c.b16 %v1203, %v1199
  %v1484 = vpack.c.b16 %v1208, %v1204
  %v1485 = vpack.c.b16 %v1209, %v1205
  %v1486 = vpack.c.b16 %v1210, %v1206
  %v1487 = vpack.c.b16 %v1211, %v1207
  %v1488 = vpack.c.b16 %v1216, %v1212
  %v1489 = vpack.c.b16 %v1217, %v1213
  %v1490 = vpack.c.b16 %v1218, %v1214
  %v1491 = vpack.c.b16 %v1219, %v1215
  %v1492 = vpack.c.b16 %v1224, %v1220
  %v1493 = vpack.c.b16 %v1225, %v1221
  %v1494 = vpack.c.b16 %v1226, %v1222
  %v1495 = vpack.c.b16 %v1227, %v1223
  %v1496 = vpack.c.b16 %v1232, %v1228
  %v1497 = vpack.c.b16 %v1233, %v1229
  %v1498 = vpack.c.b16 %v1234, %v1230
  %v1499 = vpack.c.b16 %v1235, %v1231
  %v1500 = vpack.c.b16 %v1240, %v1236
  %v1501 = vpack.c.b16 %v1241, %v1237
  %v1502 = vpack.c.b16 %v1242, %v1238
  %v1503 = vpack.c.b16 %v1243, %v1239
  %v1504 = vpack.c.b16 %v1248, %v1244
  %v1505 = vpack.c.b16 %v1249, %v1245
  %v1506 = vpack.c.b16 %v1250, %v1246
  %v1507 = vpack.c.b16 %v1251, %v1247
  %1764 = vmatprep.subr.bf16.mxu0 %v1253
  %1765 = vmatpush1.bf16.msra.mxu0 %v1252
  %1766 = vmatprep.subr.bf16.mxu0 %v1257
  %1767 = vmatpush1.bf16.msra.mxu0 %v1256
  %1768 = vmatprep.subr.bf16.mxu0 %v1261
  %1769 = vmatpush1.bf16.msra.mxu0 %v1260
  %1770 = vmatprep.subr.bf16.mxu0 %v1265
  %1771 = vmatpush1.bf16.msra.mxu0 %v1264
  %1772 = vmatprep.subr.bf16.mxu0 %v1269
  %1773 = vmatpush1.bf16.msra.mxu0 %v1268
  %1774 = vmatprep.subr.bf16.mxu0 %v1273
  %1775 = vmatpush1.bf16.msra.mxu0 %v1272
  %1776 = vmatprep.subr.bf16.mxu0 %v1277
  %1777 = vmatpush1.bf16.msra.mxu0 %v1276
  %1778 = vmatprep.subr.bf16.mxu0 %v1281
  %1779 = vmatpush1.bf16.msra.mxu0 %v1280
  %1780 = vmatprep.subr.bf16.mxu0 %v1285
  %1781 = vmatpush1.bf16.msra.mxu0 %v1284
  %1782 = vmatprep.subr.bf16.mxu0 %v1289
  %1783 = vmatpush1.bf16.msra.mxu0 %v1288
  %1784 = vmatprep.subr.bf16.mxu0 %v1293
  %1785 = vmatpush1.bf16.msra.mxu0 %v1292
  %1786 = vmatprep.subr.bf16.mxu0 %v1297
  %1787 = vmatpush1.bf16.msra.mxu0 %v1296
  %1788 = vmatprep.subr.bf16.mxu0 %v1301
  %1789 = vmatpush1.bf16.msra.mxu0 %v1300
  %1790 = vmatprep.subr.bf16.mxu0 %v1305
  %1791 = vmatpush1.bf16.msra.mxu0 %v1304
  %1792 = vmatprep.subr.bf16.mxu0 %v1309
  %1793 = vmatpush1.bf16.msra.mxu0 %v1308
  %1794 = vmatprep.subr.bf16.mxu0 %v1313
  %1795 = vmatpush1.bf16.msra.mxu0 %v1312
  %1796 = vmatprep.mubr.bf16.mxu0 %v421
  %1797 = vmatmul.mubr.bf16.gmra.mrb[0].mxu0 %v420
  %v1798 = vpop.f32.mrb[0].mxu0
  %v1799 = vadd.f32 %v307, %v1798
  %v1800 = vpop.f32.mrb[0].mxu0
  %v1801 = vadd.f32 %v311, %v1800
  %v1802 = vpop.f32.mrb[0].mxu0
  %v1803 = vadd.f32 %v307, %v1802
  %v1804 = vpop.f32.mrb[0].mxu0
  %v1805 = vadd.f32 %v311, %v1804
  %1806 = vmatprep.mubr.bf16.mxu0 %v429
  %1807 = vmatmul.mubr.bf16.gmra.mrb[0].mxu0 %v428
  %v1808 = vpop.f32.mrb[0].mxu0
  %v1809 = vadd.f32 %v307, %v1808
  %v1810 = vpop.f32.mrb[0].mxu0
  %v1811 = vadd.f32 %v311, %v1810
  %v1812 = vpop.f32.mrb[0].mxu0
  %v1813 = vadd.f32 %v307, %v1812
  %v1814 = vpop.f32.mrb[0].mxu0
  %v1815 = vadd.f32 %v311, %v1814
  %1816 = vmatprep.mubr.bf16.mxu0 %v437
  %1817 = vmatmul.mubr.bf16.gmra.mrb[0].mxu0 %v436
  %v1818 = vpop.f32.mrb[0].mxu0
  %v1819 = vadd.f32 %v307, %v1818
  %v1820 = vpop.f32.mrb[0].mxu0
  %v1821 = vadd.f32 %v311, %v1820
  %v1822 = vpop.f32.mrb[0].mxu0
  %v1823 = vadd.f32 %v307, %v1822
  %v1824 = vpop.f32.mrb[0].mxu0
  %v1825 = vadd.f32 %v311, %v1824
  %1826 = vmatprep.mubr.bf16.mxu0 %v445
  %1827 = vmatmul.mubr.bf16.gmra.mrb[0].mxu0 %v444
  %v1828 = vpop.f32.mrb[0].mxu0
  %v1829 = vadd.f32 %v307, %v1828
  %v1830 = vpop.f32.mrb[0].mxu0
  %v1831 = vadd.f32 %v311, %v1830
  %v1832 = vpop.f32.mrb[0].mxu0
  %v1833 = vadd.f32 %v307, %v1832
  %v1834 = vpop.f32.mrb[0].mxu0
  %v1835 = vadd.f32 %v311, %v1834
  %1836 = vdwg.mxu0
  %1837 = vmatprep.subr.bf16.mxu0 %v1317
  %1838 = vmatpush1.bf16.msra.mxu0 %v1316
  %1839 = vmatprep.subr.bf16.mxu0 %v1321
  %1840 = vmatpush1.bf16.msra.mxu0 %v1320
  %1841 = vmatprep.subr.bf16.mxu0 %v1325
  %1842 = vmatpush1.bf16.msra.mxu0 %v1324
  %1843 = vmatprep.subr.bf16.mxu0 %v1329
  %1844 = vmatpush1.bf16.msra.mxu0 %v1328
  %1845 = vmatprep.subr.bf16.mxu0 %v1333
  %1846 = vmatpush1.bf16.msra.mxu0 %v1332
  %1847 = vmatprep.subr.bf16.mxu0 %v1337
  %1848 = vmatpush1.bf16.msra.mxu0 %v1336
  %1849 = vmatprep.subr.bf16.mxu0 %v1341
  %1850 = vmatpush1.bf16.msra.mxu0 %v1340
  %1851 = vmatprep.subr.bf16.mxu0 %v1345
  %1852 = vmatpush1.bf16.msra.mxu0 %v1344
  %1853 = vmatprep.subr.bf16.mxu0 %v1349
  %1854 = vmatpush1.bf16.msra.mxu0 %v1348
  %1855 = vmatprep.subr.bf16.mxu0 %v1353
  %1856 = vmatpush1.bf16.msra.mxu0 %v1352
  %1857 = vmatprep.subr.bf16.mxu0 %v1357
  %1858 = vmatpush1.bf16.msra.mxu0 %v1356
  %1859 = vmatprep.subr.bf16.mxu0 %v1361
  %1860 = vmatpush1.bf16.msra.mxu0 %v1360
  %1861 = vmatprep.subr.bf16.mxu0 %v1365
  %1862 = vmatpush1.bf16.msra.mxu0 %v1364
  %1863 = vmatprep.subr.bf16.mxu0 %v1369
  %1864 = vmatpush1.bf16.msra.mxu0 %v1368
  %1865 = vmatprep.subr.bf16.mxu0 %v1373
  %1866 = vmatpush1.bf16.msra.mxu0 %v1372
  %1867 = vmatprep.subr.bf16.mxu0 %v1377
  %1868 = vmatpush1.bf16.msra.mxu0 %v1376
  %1869 = vmatprep.mubr.bf16.mxu0 %v423
  %1870 = vmatmul.mubr.bf16.gmra.mrb[0].mxu0 %v422
  %v1871 = vpop.f32.mrb[0].mxu0
  %v1872 = vadd.f32 %v1799, %v1871
  %v1873 = vpop.f32.mrb[0].mxu0
  %v1874 = vadd.f32 %v1801, %v1873
  %v1875 = vpop.f32.mrb[0].mxu0
  %v1876 = vadd.f32 %v1803, %v1875
  %v1877 = vpop.f32.mrb[0].mxu0
  %v1878 = vadd.f32 %v1805, %v1877
  %1879 = vmatprep.mubr.bf16.mxu0 %v431
  %1880 = vmatmul.mubr.bf16.gmra.mrb[0].mxu0 %v430
  %v1881 = vpop.f32.mrb[0].mxu0
  %v1882 = vadd.f32 %v1809, %v1881
  %v1883 = vpop.f32.mrb[0].mxu0
  %v1884 = vadd.f32 %v1811, %v1883
  %v1885 = vpop.f32.mrb[0].mxu0
  %v1886 = vadd.f32 %v1813, %v1885
  %v1887 = vpop.f32.mrb[0].mxu0
  %v1888 = vadd.f32 %v1815, %v1887
  %1889 = vmatprep.mubr.bf16.mxu0 %v439
  %1890 = vmatmul.mubr.bf16.gmra.mrb[0].mxu0 %v438
  %v1891 = vpop.f32.mrb[0].mxu0
  %v1892 = vadd.f32 %v1819, %v1891
  %v1893 = vpop.f32.mrb[0].mxu0
  %v1894 = vadd.f32 %v1821, %v1893
  %v1895 = vpop.f32.mrb[0].mxu0
  %v1896 = vadd.f32 %v1823, %v1895
  %v1897 = vpop.f32.mrb[0].mxu0
  %v1898 = vadd.f32 %v1825, %v1897
  %1899 = vmatprep.mubr.bf16.mxu0 %v447
  %1900 = vmatmul.mubr.bf16.gmra.mrb[0].mxu0 %v446
  %v1901 = vpop.f32.mrb[0].mxu0
  %v1902 = vadd.f32 %v1829, %v1901
  %v1903 = vpop.f32.mrb[0].mxu0
  %v1904 = vadd.f32 %v1831, %v1903
  %v1905 = vpop.f32.mrb[0].mxu0
  %v1906 = vadd.f32 %v1833, %v1905
  %v1907 = vpop.f32.mrb[0].mxu0
  %v1908 = vadd.f32 %v1835, %v1907
  %1909 = vdwg.mxu0
  %1910 = vmatprep.subr.bf16.mxu0 %v1381
  %1911 = vmatpush1.bf16.msra.mxu0 %v1380
  %1912 = vmatprep.subr.bf16.mxu0 %v1385
  %1913 = vmatpush1.bf16.msra.mxu0 %v1384
  %1914 = vmatprep.subr.bf16.mxu0 %v1389
  %1915 = vmatpush1.bf16.msra.mxu0 %v1388
  %1916 = vmatprep.subr.bf16.mxu0 %v1393
  %1917 = vmatpush1.bf16.msra.mxu0 %v1392
  %1918 = vmatprep.subr.bf16.mxu0 %v1397
  %1919 = vmatpush1.bf16.msra.mxu0 %v1396
  %1920 = vmatprep.subr.bf16.mxu0 %v1401
  %1921 = vmatpush1.bf16.msra.mxu0 %v1400
  %1922 = vmatprep.subr.bf16.mxu0 %v1405
  %1923 = vmatpush1.bf16.msra.mxu0 %v1404
  %1924 = vmatprep.subr.bf16.mxu0 %v1409
  %1925 = vmatpush1.bf16.msra.mxu0 %v1408
  %1926 = vmatprep.subr.bf16.mxu0 %v1413
  %1927 = vmatpush1.bf16.msra.mxu0 %v1412
  %1928 = vmatprep.subr.bf16.mxu0 %v1417
  %1929 = vmatpush1.bf16.msra.mxu0 %v1416
  %1930 = vmatprep.subr.bf16.mxu0 %v1421
  %1931 = vmatpush1.bf16.msra.mxu0 %v1420
  %1932 = vmatprep.subr.bf16.mxu0 %v1425
  %1933 = vmatpush1.bf16.msra.mxu0 %v1424
  %1934 = vmatprep.subr.bf16.mxu0 %v1429
  %1935 = vmatpush1.bf16.msra.mxu0 %v1428
  %1936 = vmatprep.subr.bf16.mxu0 %v1433
  %1937 = vmatpush1.bf16.msra.mxu0 %v1432
  %1938 = vmatprep.subr.bf16.mxu0 %v1437
  %1939 = vmatpush1.bf16.msra.mxu0 %v1436
  %1940 = vmatprep.subr.bf16.mxu0 %v1441
  %1941 = vmatpush1.bf16.msra.mxu0 %v1440
  %1942 = vmatprep.mubr.bf16.mxu0 %v425
  %1943 = vmatmul.mubr.bf16.gmra.mrb[0].mxu0 %v424
  %v1944 = vpop.f32.mrb[0].mxu0
  %v1945 = vadd.f32 %v1872, %v1944
  %v1946 = vpop.f32.mrb[0].mxu0
  %v1947 = vadd.f32 %v1874, %v1946
  %v1948 = vpop.f32.mrb[0].mxu0
  %v1949 = vadd.f32 %v1876, %v1948
  %v1950 = vpop.f32.mrb[0].mxu0
  %v1951 = vadd.f32 %v1878, %v1950
  %1952 = vmatprep.mubr.bf16.mxu0 %v433
  %1953 = vmatmul.mubr.bf16.gmra.mrb[0].mxu0 %v432
  %v1954 = vpop.f32.mrb[0].mxu0
  %v1955 = vadd.f32 %v1882, %v1954
  %v1956 = vpop.f32.mrb[0].mxu0
  %v1957 = vadd.f32 %v1884, %v1956
  %v1958 = vpop.f32.mrb[0].mxu0
  %v1959 = vadd.f32 %v1886, %v1958
  %v1960 = vpop.f32.mrb[0].mxu0
  %v1961 = vadd.f32 %v1888, %v1960
  %1962 = vmatprep.mubr.bf16.mxu0 %v441
  %1963 = vmatmul.mubr.bf16.gmra.mrb[0].mxu0 %v440
  %v1964 = vpop.f32.mrb[0].mxu0
  %v1965 = vadd.f32 %v1892, %v1964
  %v1966 = vpop.f32.mrb[0].mxu0
  %v1967 = vadd.f32 %v1894, %v1966
  %v1968 = vpop.f32.mrb[0].mxu0
  %v1969 = vadd.f32 %v1896, %v1968
  %v1970 = vpop.f32.mrb[0].mxu0
  %v1971 = vadd.f32 %v1898, %v1970
  %1972 = vmatprep.mubr.bf16.mxu0 %v449
  %1973 = vmatmul.mubr.bf16.gmra.mrb[0].mxu0 %v448
  %v1974 = vpop.f32.mrb[0].mxu0
  %v1975 = vadd.f32 %v1902, %v1974
  %v1976 = vpop.f32.mrb[0].mxu0
  %v1977 = vadd.f32 %v1904, %v1976
  %v1978 = vpop.f32.mrb[0].mxu0
  %v1979 = vadd.f32 %v1906, %v1978
  %v1980 = vpop.f32.mrb[0].mxu0
  %v1981 = vadd.f32 %v1908, %v1980
  %1982 = vdwg.mxu0
  %1983 = vmatprep.subr.bf16.mxu0 %v1445
  %1984 = vmatpush1.bf16.msra.mxu0 %v1444
  %1985 = vmatprep.subr.bf16.mxu0 %v1449
  %1986 = vmatpush1.bf16.msra.mxu0 %v1448
  %1987 = vmatprep.subr.bf16.mxu0 %v1453
  %1988 = vmatpush1.bf16.msra.mxu0 %v1452
  %1989 = vmatprep.subr.bf16.mxu0 %v1457
  %1990 = vmatpush1.bf16.msra.mxu0 %v1456
  %1991 = vmatprep.subr.bf16.mxu0 %v1461
  %1992 = vmatpush1.bf16.msra.mxu0 %v1460
  %1993 = vmatprep.subr.bf16.mxu0 %v1465
  %1994 = vmatpush1.bf16.msra.mxu0 %v1464
  %1995 = vmatprep.subr.bf16.mxu0 %v1469
  %1996 = vmatpush1.bf16.msra.mxu0 %v1468
  %1997 = vmatprep.subr.bf16.mxu0 %v1473
  %1998 = vmatpush1.bf16.msra.mxu0 %v1472
  %1999 = vmatprep.subr.bf16.mxu0 %v1477
  %2000 = vmatpush1.bf16.msra.mxu0 %v1476
  %2001 = vmatprep.subr.bf16.mxu0 %v1481
  %2002 = vmatpush1.bf16.msra.mxu0 %v1480
  %2003 = vmatprep.subr.bf16.mxu0 %v1485
  %2004 = vmatpush1.bf16.msra.mxu0 %v1484
  %2005 = vmatprep.subr.bf16.mxu0 %v1489
  %2006 = vmatpush1.bf16.msra.mxu0 %v1488
  %2007 = vmatprep.subr.bf16.mxu0 %v1493
  %2008 = vmatpush1.bf16.msra.mxu0 %v1492
  %2009 = vmatprep.subr.bf16.mxu0 %v1497
  %2010 = vmatpush1.bf16.msra.mxu0 %v1496
  %2011 = vmatprep.subr.bf16.mxu0 %v1501
  %2012 = vmatpush1.bf16.msra.mxu0 %v1500
  %2013 = vmatprep.subr.bf16.mxu0 %v1505
  %2014 = vmatpush1.bf16.msra.mxu0 %v1504
  %2015 = vmatprep.mubr.bf16.mxu0 %v427
  %2016 = vmatmul.mubr.bf16.gmra.mrb[0].mxu0 %v426
  %v2017 = vpop.f32.mrb[0].mxu0
  %v2018 = vadd.f32 %v1945, %v2017
  %v2019 = vpop.f32.mrb[0].mxu0
  %v2020 = vadd.f32 %v1947, %v2019
  %v2021 = vpop.f32.mrb[0].mxu0
  %v2022 = vadd.f32 %v1949, %v2021
  %v2023 = vpop.f32.mrb[0].mxu0
  %v2024 = vadd.f32 %v1951, %v2023
  %2025 = vmatprep.mubr.bf16.mxu0 %v435
  %2026 = vmatmul.mubr.bf16.gmra.mrb[0].mxu0 %v434
  %v2027 = vpop.f32.mrb[0].mxu0
  %v2028 = vadd.f32 %v1955, %v2027
  %v2029 = vpop.f32.mrb[0].mxu0
  %v2030 = vadd.f32 %v1957, %v2029
  %v2031 = vpop.f32.mrb[0].mxu0
  %v2032 = vadd.f32 %v1959, %v2031
  %v2033 = vpop.f32.mrb[0].mxu0
  %v2034 = vadd.f32 %v1961, %v2033
  %2035 = vmatprep.mubr.bf16.mxu0 %v443
  %2036 = vmatmul.mubr.bf16.gmra.mrb[0].mxu0 %v442
  %v2037 = vpop.f32.mrb[0].mxu0
  %v2038 = vadd.f32 %v1965, %v2037
  %v2039 = vpop.f32.mrb[0].mxu0
  %v2040 = vadd.f32 %v1967, %v2039
  %v2041 = vpop.f32.mrb[0].mxu0
  %v2042 = vadd.f32 %v1969, %v2041
  %v2043 = vpop.f32.mrb[0].mxu0
  %v2044 = vadd.f32 %v1971, %v2043
  %2045 = vmatprep.mubr.bf16.mxu0 %v451
  %2046 = vmatmul.mubr.bf16.gmra.mrb[0].mxu0 %v450
  %v2047 = vpop.f32.mrb[0].mxu0
  %v2048 = vadd.f32 %v1975, %v2047
  %v2049 = vpop.f32.mrb[0].mxu0
  %v2050 = vadd.f32 %v1977, %v2049
  %v2051 = vpop.f32.mrb[0].mxu0
  %v2052 = vadd.f32 %v1979, %v2051
  %v2053 = vpop.f32.mrb[0].mxu0
  %v2054 = vadd.f32 %v1981, %v2053
  %2055 = vdwg.mxu0
  %2056 = vmatprep.subr.bf16.mxu0 %v1255
  %2057 = vmatpush1.bf16.msra.mxu0 %v1254
  %2058 = vmatprep.subr.bf16.mxu0 %v1259
  %2059 = vmatpush1.bf16.msra.mxu0 %v1258
  %2060 = vmatprep.subr.bf16.mxu0 %v1263
  %2061 = vmatpush1.bf16.msra.mxu0 %v1262
  %2062 = vmatprep.subr.bf16.mxu0 %v1267
  %2063 = vmatpush1.bf16.msra.mxu0 %v1266
  %2064 = vmatprep.subr.bf16.mxu0 %v1271
  %2065 = vmatpush1.bf16.msra.mxu0 %v1270
  %2066 = vmatprep.subr.bf16.mxu0 %v1275
  %2067 = vmatpush1.bf16.msra.mxu0 %v1274
  %2068 = vmatprep.subr.bf16.mxu0 %v1279
  %2069 = vmatpush1.bf16.msra.mxu0 %v1278
  %2070 = vmatprep.subr.bf16.mxu0 %v1283
  %2071 = vmatpush1.bf16.msra.mxu0 %v1282
  %2072 = vmatprep.subr.bf16.mxu0 %v1287
  %2073 = vmatpush1.bf16.msra.mxu0 %v1286
  %2074 = vmatprep.subr.bf16.mxu0 %v1291
  %2075 = vmatpush1.bf16.msra.mxu0 %v1290
  %2076 = vmatprep.subr.bf16.mxu0 %v1295
  %2077 = vmatpush1.bf16.msra.mxu0 %v1294
  %2078 = vmatprep.subr.bf16.mxu0 %v1299
  %2079 = vmatpush1.bf16.msra.mxu0 %v1298
  %2080 = vmatprep.subr.bf16.mxu0 %v1303
  %2081 = vmatpush1.bf16.msra.mxu0 %v1302
  %2082 = vmatprep.subr.bf16.mxu0 %v1307
  %2083 = vmatpush1.bf16.msra.mxu0 %v1306
  %2084 = vmatprep.subr.bf16.mxu0 %v1311
  %2085 = vmatpush1.bf16.msra.mxu0 %v1310
  %2086 = vmatprep.subr.bf16.mxu0 %v1315
  %2087 = vmatpush1.bf16.msra.mxu0 %v1314
  %2088 = vmatprep.mubr.bf16.mxu0 %v421
  %2089 = vmatmul.mubr.bf16.gmra.mrb[0].mxu0 %v420
  %v2090 = vpop.f32.mrb[0].mxu0
  %v2091 = vadd.f32 %v315, %v2090
  %v2092 = vpop.f32.mrb[0].mxu0
  %v2093 = vadd.f32 %v319, %v2092
  %v2094 = vpop.f32.mrb[0].mxu0
  %v2095 = vadd.f32 %v315, %v2094
  %v2096 = vpop.f32.mrb[0].mxu0
  %v2097 = vadd.f32 %v319, %v2096
  %2098 = vmatprep.mubr.bf16.mxu0 %v429
  %2099 = vmatmul.mubr.bf16.gmra.mrb[0].mxu0 %v428
  %v2100 = vpop.f32.mrb[0].mxu0
  %v2101 = vadd.f32 %v315, %v2100
  %v2102 = vpop.f32.mrb[0].mxu0
  %v2103 = vadd.f32 %v319, %v2102
  %v2104 = vpop.f32.mrb[0].mxu0
  %v2105 = vadd.f32 %v315, %v2104
  %v2106 = vpop.f32.mrb[0].mxu0
  %v2107 = vadd.f32 %v319, %v2106
  %2108 = vmatprep.mubr.bf16.mxu0 %v437
  %2109 = vmatmul.mubr.bf16.gmra.mrb[0].mxu0 %v436
  %v2110 = vpop.f32.mrb[0].mxu0
  %v2111 = vadd.f32 %v315, %v2110
  %v2112 = vpop.f32.mrb[0].mxu0
  %v2113 = vadd.f32 %v319, %v2112
  %v2114 = vpop.f32.mrb[0].mxu0
  %v2115 = vadd.f32 %v315, %v2114
  %v2116 = vpop.f32.mrb[0].mxu0
  %v2117 = vadd.f32 %v319, %v2116
  %2118 = vmatprep.mubr.bf16.mxu0 %v445
  %2119 = vmatmul.mubr.bf16.gmra.mrb[0].mxu0 %v444
  %v2120 = vpop.f32.mrb[0].mxu0
  %v2121 = vadd.f32 %v315, %v2120
  %v2122 = vpop.f32.mrb[0].mxu0
  %v2123 = vadd.f32 %v319, %v2122
  %v2124 = vpop.f32.mrb[0].mxu0
  %v2125 = vadd.f32 %v315, %v2124
  %v2126 = vpop.f32.mrb[0].mxu0
  %v2127 = vadd.f32 %v319, %v2126
  %2128 = vdwg.mxu0
  %2129 = vmatprep.subr.bf16.mxu0 %v1319
  %2130 = vmatpush1.bf16.msra.mxu0 %v1318
  %2131 = vmatprep.subr.bf16.mxu0 %v1323
  %2132 = vmatpush1.bf16.msra.mxu0 %v1322
  %2133 = vmatprep.subr.bf16.mxu0 %v1327
  %2134 = vmatpush1.bf16.msra.mxu0 %v1326
  %2135 = vmatprep.subr.bf16.mxu0 %v1331
  %2136 = vmatpush1.bf16.msra.mxu0 %v1330
  %2137 = vmatprep.subr.bf16.mxu0 %v1335
  %2138 = vmatpush1.bf16.msra.mxu0 %v1334
  %2139 = vmatprep.subr.bf16.mxu0 %v1339
  %2140 = vmatpush1.bf16.msra.mxu0 %v1338
  %2141 = vmatprep.subr.bf16.mxu0 %v1343
  %2142 = vmatpush1.bf16.msra.mxu0 %v1342
  %2143 = vmatprep.subr.bf16.mxu0 %v1347
  %2144 = vmatpush1.bf16.msra.mxu0 %v1346
  %2145 = vmatprep.subr.bf16.mxu0 %v1351
  %2146 = vmatpush1.bf16.msra.mxu0 %v1350
  %2147 = vmatprep.subr.bf16.mxu0 %v1355
  %2148 = vmatpush1.bf16.msra.mxu0 %v1354
  %2149 = vmatprep.subr.bf16.mxu0 %v1359
  %2150 = vmatpush1.bf16.msra.mxu0 %v1358
  %2151 = vmatprep.subr.bf16.mxu0 %v1363
  %2152 = vmatpush1.bf16.msra.mxu0 %v1362
  %2153 = vmatprep.subr.bf16.mxu0 %v1367
  %2154 = vmatpush1.bf16.msra.mxu0 %v1366
  %2155 = vmatprep.subr.bf16.mxu0 %v1371
  %2156 = vmatpush1.bf16.msra.mxu0 %v1370
  %2157 = vmatprep.subr.bf16.mxu0 %v1375
  %2158 = vmatpush1.bf16.msra.mxu0 %v1374
  %2159 = vmatprep.subr.bf16.mxu0 %v1379
  %2160 = vmatpush1.bf16.msra.mxu0 %v1378
  %2161 = vmatprep.mubr.bf16.mxu0 %v423
  %2162 = vmatmul.mubr.bf16.gmra.mrb[0].mxu0 %v422
  %v2163 = vpop.f32.mrb[0].mxu0
  %v2164 = vadd.f32 %v2091, %v2163
  %v2165 = vpop.f32.mrb[0].mxu0
  %v2166 = vadd.f32 %v2093, %v2165
  %v2167 = vpop.f32.mrb[0].mxu0
  %v2168 = vadd.f32 %v2095, %v2167
  %v2169 = vpop.f32.mrb[0].mxu0
  %v2170 = vadd.f32 %v2097, %v2169
  %2171 = vmatprep.mubr.bf16.mxu0 %v431
  %2172 = vmatmul.mubr.bf16.gmra.mrb[0].mxu0 %v430
  %v2173 = vpop.f32.mrb[0].mxu0
  %v2174 = vadd.f32 %v2101, %v2173
  %v2175 = vpop.f32.mrb[0].mxu0
  %v2176 = vadd.f32 %v2103, %v2175
  %v2177 = vpop.f32.mrb[0].mxu0
  %v2178 = vadd.f32 %v2105, %v2177
  %v2179 = vpop.f32.mrb[0].mxu0
  %v2180 = vadd.f32 %v2107, %v2179
  %2181 = vmatprep.mubr.bf16.mxu0 %v439
  %2182 = vmatmul.mubr.bf16.gmra.mrb[0].mxu0 %v438
  %v2183 = vpop.f32.mrb[0].mxu0
  %v2184 = vadd.f32 %v2111, %v2183
  %v2185 = vpop.f32.mrb[0].mxu0
  %v2186 = vadd.f32 %v2113, %v2185
  %v2187 = vpop.f32.mrb[0].mxu0
  %v2188 = vadd.f32 %v2115, %v2187
  %v2189 = vpop.f32.mrb[0].mxu0
  %v2190 = vadd.f32 %v2117, %v2189
  %2191 = vmatprep.mubr.bf16.mxu0 %v447
  %2192 = vmatmul.mubr.bf16.gmra.mrb[0].mxu0 %v446
  %v2193 = vpop.f32.mrb[0].mxu0
  %v2194 = vadd.f32 %v2121, %v2193
  %v2195 = vpop.f32.mrb[0].mxu0
  %v2196 = vadd.f32 %v2123, %v2195
  %v2197 = vpop.f32.mrb[0].mxu0
  %v2198 = vadd.f32 %v2125, %v2197
  %v2199 = vpop.f32.mrb[0].mxu0
  %v2200 = vadd.f32 %v2127, %v2199
  %2201 = vdwg.mxu0
  %2202 = vmatprep.subr.bf16.mxu0 %v1383
  %2203 = vmatpush1.bf16.msra.mxu0 %v1382
  %2204 = vmatprep.subr.bf16.mxu0 %v1387
  %2205 = vmatpush1.bf16.msra.mxu0 %v1386
  %2206 = vmatprep.subr.bf16.mxu0 %v1391
  %2207 = vmatpush1.bf16.msra.mxu0 %v1390
  %2208 = vmatprep.subr.bf16.mxu0 %v1395
  %2209 = vmatpush1.bf16.msra.mxu0 %v1394
  %2210 = vmatprep.subr.bf16.mxu0 %v1399
  %2211 = vmatpush1.bf16.msra.mxu0 %v1398
  %2212 = vmatprep.subr.bf16.mxu0 %v1403
  %2213 = vmatpush1.bf16.msra.mxu0 %v1402
  %2214 = vmatprep.subr.bf16.mxu0 %v1407
  %2215 = vmatpush1.bf16.msra.mxu0 %v1406
  %2216 = vmatprep.subr.bf16.mxu0 %v1411
  %2217 = vmatpush1.bf16.msra.mxu0 %v1410
  %2218 = vmatprep.subr.bf16.mxu0 %v1415
  %2219 = vmatpush1.bf16.msra.mxu0 %v1414
  %2220 = vmatprep.subr.bf16.mxu0 %v1419
  %2221 = vmatpush1.bf16.msra.mxu0 %v1418
  %2222 = vmatprep.subr.bf16.mxu0 %v1423
  %2223 = vmatpush1.bf16.msra.mxu0 %v1422
  %2224 = vmatprep.subr.bf16.mxu0 %v1427
  %2225 = vmatpush1.bf16.msra.mxu0 %v1426
  %2226 = vmatprep.subr.bf16.mxu0 %v1431
  %2227 = vmatpush1.bf16.msra.mxu0 %v1430
  %2228 = vmatprep.subr.bf16.mxu0 %v1435
  %2229 = vmatpush1.bf16.msra.mxu0 %v1434
  %2230 = vmatprep.subr.bf16.mxu0 %v1439
  %2231 = vmatpush1.bf16.msra.mxu0 %v1438
  %2232 = vmatprep.subr.bf16.mxu0 %v1443
  %2233 = vmatpush1.bf16.msra.mxu0 %v1442
  %2234 = vmatprep.mubr.bf16.mxu0 %v425
  %2235 = vmatmul.mubr.bf16.gmra.mrb[0].mxu0 %v424
  %v2236 = vpop.f32.mrb[0].mxu0
  %v2237 = vadd.f32 %v2164, %v2236
  %v2238 = vpop.f32.mrb[0].mxu0
  %v2239 = vadd.f32 %v2166, %v2238
  %v2240 = vpop.f32.mrb[0].mxu0
  %v2241 = vadd.f32 %v2168, %v2240
  %v2242 = vpop.f32.mrb[0].mxu0
  %v2243 = vadd.f32 %v2170, %v2242
  %2244 = vmatprep.mubr.bf16.mxu0 %v433
  %2245 = vmatmul.mubr.bf16.gmra.mrb[0].mxu0 %v432
  %v2246 = vpop.f32.mrb[0].mxu0
  %v2247 = vadd.f32 %v2174, %v2246
  %v2248 = vpop.f32.mrb[0].mxu0
  %v2249 = vadd.f32 %v2176, %v2248
  %v2250 = vpop.f32.mrb[0].mxu0
  %v2251 = vadd.f32 %v2178, %v2250
  %v2252 = vpop.f32.mrb[0].mxu0
  %v2253 = vadd.f32 %v2180, %v2252
  %2254 = vmatprep.mubr.bf16.mxu0 %v441
  %2255 = vmatmul.mubr.bf16.gmra.mrb[0].mxu0 %v440
  %v2256 = vpop.f32.mrb[0].mxu0
  %v2257 = vadd.f32 %v2184, %v2256
  %v2258 = vpop.f32.mrb[0].mxu0
  %v2259 = vadd.f32 %v2186, %v2258
  %v2260 = vpop.f32.mrb[0].mxu0
  %v2261 = vadd.f32 %v2188, %v2260
  %v2262 = vpop.f32.mrb[0].mxu0
  %v2263 = vadd.f32 %v2190, %v2262
  %2264 = vmatprep.mubr.bf16.mxu0 %v449
  %2265 = vmatmul.mubr.bf16.gmra.mrb[0].mxu0 %v448
  %v2266 = vpop.f32.mrb[0].mxu0
  %v2267 = vadd.f32 %v2194, %v2266
  %v2268 = vpop.f32.mrb[0].mxu0
  %v2269 = vadd.f32 %v2196, %v2268
  %v2270 = vpop.f32.mrb[0].mxu0
  %v2271 = vadd.f32 %v2198, %v2270
  %v2272 = vpop.f32.mrb[0].mxu0
  %v2273 = vadd.f32 %v2200, %v2272
  %2274 = vdwg.mxu0
  %2275 = vmatprep.subr.bf16.mxu0 %v1447
  %2276 = vmatpush1.bf16.msra.mxu0 %v1446
  %2277 = vmatprep.subr.bf16.mxu0 %v1451
  %2278 = vmatpush1.bf16.msra.mxu0 %v1450
  %2279 = vmatprep.subr.bf16.mxu0 %v1455
  %2280 = vmatpush1.bf16.msra.mxu0 %v1454
  %2281 = vmatprep.subr.bf16.mxu0 %v1459
  %2282 = vmatpush1.bf16.msra.mxu0 %v1458
  %2283 = vmatprep.subr.bf16.mxu0 %v1463
  %2284 = vmatpush1.bf16.msra.mxu0 %v1462
  %2285 = vmatprep.subr.bf16.mxu0 %v1467
  %2286 = vmatpush1.bf16.msra.mxu0 %v1466
  %2287 = vmatprep.subr.bf16.mxu0 %v1471
  %2288 = vmatpush1.bf16.msra.mxu0 %v1470
  %2289 = vmatprep.subr.bf16.mxu0 %v1475
  %2290 = vmatpush1.bf16.msra.mxu0 %v1474
  %2291 = vmatprep.subr.bf16.mxu0 %v1479
  %2292 = vmatpush1.bf16.msra.mxu0 %v1478
  %2293 = vmatprep.subr.bf16.mxu0 %v1483
  %2294 = vmatpush1.bf16.msra.mxu0 %v1482
  %2295 = vmatprep.subr.bf16.mxu0 %v1487
  %2296 = vmatpush1.bf16.msra.mxu0 %v1486
  %2297 = vmatprep.subr.bf16.mxu0 %v1491
  %2298 = vmatpush1.bf16.msra.mxu0 %v1490
  %2299 = vmatprep.subr.bf16.mxu0 %v1495
  %2300 = vmatpush1.bf16.msra.mxu0 %v1494
  %2301 = vmatprep.subr.bf16.mxu0 %v1499
  %2302 = vmatpush1.bf16.msra.mxu0 %v1498
  %2303 = vmatprep.subr.bf16.mxu0 %v1503
  %2304 = vmatpush1.bf16.msra.mxu0 %v1502
  %2305 = vmatprep.subr.bf16.mxu0 %v1507
  %2306 = vmatpush1.bf16.msra.mxu0 %v1506
  %2307 = vmatprep.mubr.bf16.mxu0 %v427
  %2308 = vmatmul.mubr.bf16.gmra.mrb[0].mxu0 %v426
  %v2309 = vpop.f32.mrb[0].mxu0
  %v2310 = vadd.f32 %v2237, %v2309
  %v2311 = vpop.f32.mrb[0].mxu0
  %v2312 = vadd.f32 %v2239, %v2311
  %v2313 = vpop.f32.mrb[0].mxu0
  %v2314 = vadd.f32 %v2241, %v2313
  %v2315 = vpop.f32.mrb[0].mxu0
  %v2316 = vadd.f32 %v2243, %v2315
  %2317 = vmatprep.mubr.bf16.mxu0 %v435
  %2318 = vmatmul.mubr.bf16.gmra.mrb[0].mxu0 %v434
  %v2319 = vpop.f32.mrb[0].mxu0
  %v2320 = vadd.f32 %v2247, %v2319
  %v2321 = vpop.f32.mrb[0].mxu0
  %v2322 = vadd.f32 %v2249, %v2321
  %v2323 = vpop.f32.mrb[0].mxu0
  %v2324 = vadd.f32 %v2251, %v2323
  %v2325 = vpop.f32.mrb[0].mxu0
  %v2326 = vadd.f32 %v2253, %v2325
  %2327 = vmatprep.mubr.bf16.mxu0 %v443
  %2328 = vmatmul.mubr.bf16.gmra.mrb[0].mxu0 %v442
  %v2329 = vpop.f32.mrb[0].mxu0
  %v2330 = vadd.f32 %v2257, %v2329
  %v2331 = vpop.f32.mrb[0].mxu0
  %v2332 = vadd.f32 %v2259, %v2331
  %v2333 = vpop.f32.mrb[0].mxu0
  %v2334 = vadd.f32 %v2261, %v2333
  %v2335 = vpop.f32.mrb[0].mxu0
  %v2336 = vadd.f32 %v2263, %v2335
  %2337 = vmatprep.mubr.bf16.mxu0 %v451
  %2338 = vmatmul.mubr.bf16.gmra.mrb[0].mxu0 %v450
  %v2339 = vpop.f32.mrb[0].mxu0
  %v2340 = vadd.f32 %v2267, %v2339
  %v2341 = vpop.f32.mrb[0].mxu0
  %v2342 = vadd.f32 %v2269, %v2341
  %v2343 = vpop.f32.mrb[0].mxu0
  %v2344 = vadd.f32 %v2271, %v2343
  %v2345 = vpop.f32.mrb[0].mxu0
  %v2346 = vadd.f32 %v2273, %v2345
  %2347 = vdwg.mxu0
  %2348 = vst [vmem:[%s3] sm:$0xff] %v2018
  %2349 = vst [vmem:[%s3 + $0x8] sm:$0xff] %v2020
  %2350 = vst [vmem:[%s3 + $0x10] sm:$0xff] %v2310
  %2351 = vst [vmem:[%s3 + $0x18] sm:$0xff] %v2312
  %2352 = vst [vmem:[%s3 + $0x20] sm:$0xff] %v2022
  %2353 = vst [vmem:[%s3 + $0x28] sm:$0xff] %v2024
  %2354 = vst [vmem:[%s3 + $0x30] sm:$0xff] %v2314
  %2355 = vst [vmem:[%s3 + $0x38] sm:$0xff] %v2316
  %2356 = vst [vmem:[%s3 + $0x40] sm:$0xff] %v2028
  %2357 = vst [vmem:[%s3 + $0x48] sm:$0xff] %v2030
  %2358 = vst [vmem:[%s3 + $0x50] sm:$0xff] %v2320
  %2359 = vst [vmem:[%s3 + $0x58] sm:$0xff] %v2322
  %2360 = vst [vmem:[%s3 + $0x60] sm:$0xff] %v2032
  %2361 = vst [vmem:[%s3 + $0x68] sm:$0xff] %v2034
  %2362 = vst [vmem:[%s3 + $0x70] sm:$0xff] %v2324
  %2363 = vst [vmem:[%s3 + $0x78] sm:$0xff] %v2326
  %2364 = vst [vmem:[%s3 + $0x80] sm:$0xff] %v2038
  %2365 = vst [vmem:[%s3 + $0x88] sm:$0xff] %v2040
  %2366 = vst [vmem:[%s3 + $0x90] sm:$0xff] %v2330
  %2367 = vst [vmem:[%s3 + $0x98] sm:$0xff] %v2332
  %2368 = vst [vmem:[%s3 + $0xa0] sm:$0xff] %v2042
  %2369 = vst [vmem:[%s3 + $0xa8] sm:$0xff] %v2044
  %2370 = vst [vmem:[%s3 + $0xb0] sm:$0xff] %v2334
  %2371 = vst [vmem:[%s3 + $0xb8] sm:$0xff] %v2336
  %2372 = vst [vmem:[%s3 + $0xc0] sm:$0xff] %v2048
  %2373 = vst [vmem:[%s3 + $0xc8] sm:$0xff] %v2050
  %2374 = vst [vmem:[%s3 + $0xd0] sm:$0xff] %v2340
  %2375 = vst [vmem:[%s3 + $0xd8] sm:$0xff] %v2342
  %2376 = vst [vmem:[%s3 + $0xe0] sm:$0xff] %v2052
  %2377 = vst [vmem:[%s3 + $0xe8] sm:$0xff] %v2054
  %2378 = vst [vmem:[%s3 + $0xf0] sm:$0xff] %v2344
  %2379 = vst [vmem:[%s3 + $0xf8] sm:$0xff] %v2346
  // Predicated region
  $region14: #{rnn_forward.2} parent=0 // pred_check
    _
  $region15: #{rnn_forward.2} parent=0 // pred_check_branch
    %2381 = sbr.rel (0) target = $region17
  $region16: #{rnn_forward.2} parent=0 // pred_region
    _
  $region17: #{rnn_forward.2} parent=0 // pred_fallthru
    _
  // Predicated region
  $region18: #{rnn_forward.2} parent=0 // pred_check
    _
  $region19: #{rnn_forward.2} parent=0 // pred_check_branch
    %2383 = sbr.rel (0) target = $region21
  $region20: #{rnn_forward.2} parent=0 // pred_region
    _
  $region21: #{rnn_forward.2} parent=0 // pred_fallthru
    _

// kernel: rnn_forward.3
$region0: #{rnn_forward.3}
  #allocation0 [shape = 'u32[]', space=smem, size = 0x4, offset = 0x4, fixed_abs, tag = 'smem constant byte address 0x4 - core index']
  #allocation1 [shape = 'u32[144,128]{1,0:T(1,128)}', space=vmem, size = 0x12000, scoped, tag = 'internal scratch']
  #allocation2 [shape = 'f32[2,8,128]{2,1,0:T(8,128)}', space=vmem, size = 0x2000, scoped, tag = 'scratch operand']
  #allocation3 [shape = 'f32[2,8,128]{2,1,0:T(8,128)}', space=vmem, size = 0x2000, scoped, tag = 'scratch operand']
  #allocation4 [shape = 'f32[8,8,128]{2,1,0:T(8,128)}', space=vmem, size = 0x8000, scoped, tag = 'scratch operand']
  %s0 = inlined_call_operand.vmem [shape: f32[8,8,512], index: 0, kind: input, shape index: {}]
  %s1 = inlined_call_operand.vmem [shape: bf16[2,128,512], index: 1, kind: input, shape index: {}]
  %s2 = inlined_call_operand.vmem [shape: bf16[2,128,512], index: 2, kind: input, shape index: {}]
  %s3 = inlined_call_operand.vmem [shape: f32[2,1,512], index: 3, kind: input, shape index: {}]
  %s4 = inlined_call_operand.vmem [shape: f32[2,8,128], index: 4, kind: input, shape index: {}]
  %s5 = inlined_call_operand.vmem [shape: f32[2,8,128], index: 5, kind: input, shape index: {}]
  %s6 = inlined_call_operand.vmem [shape: f32[32,16], index: 6, kind: input, shape index: {}]
  %s7 = inlined_call_operand.vmem [shape: f32[1,16], index: 7, kind: input, shape index: {}]
  %s8 = inlined_call_operand.vmem [shape: f32[1,16], index: 8, kind: input, shape index: {}]
  %s9 = inlined_call_operand.vmem [shape: f32[1,16], index: 9, kind: input, shape index: {}]
  %s10 = inlined_call_operand.vmem [shape: f32[16,8], index: 10, kind: input, shape index: {}]
  %s11 = inlined_call_operand.vmem [shape: f32[1,8], index: 11, kind: input, shape index: {}]
  %s12 = inlined_call_operand.vmem [shape: f32[1,8], index: 12, kind: input, shape index: {}]
  %s13 = inlined_call_operand.vmem [shape: f32[1,8], index: 13, kind: input, shape index: {}]
  %s14 = inlined_call_operand.vmem [shape: f32[8,4], index: 14, kind: input, shape index: {}]
  %s15 = inlined_call_operand.vmem [shape: f32[1,4], index: 15, kind: input, shape index: {}]
  %s16 = inlined_call_operand.vmem [shape: f32[1,4], index: 16, kind: input, shape index: {}]
  %s17 = inlined_call_operand.vmem [shape: f32[1,4], index: 17, kind: input, shape index: {}]
  %s18 = inlined_call_operand.vmem [shape: f32[4,10], index: 18, kind: input, shape index: {}]
  %s19 = inlined_call_operand.vmem [shape: f32[1,10], index: 19, kind: input, shape index: {}]
  %s20 = inlined_call_operand.vmem [shape: f32[2,8,128], index: 20, kind: output, shape index: {0}]
  %s21 = inlined_call_operand.hbm [shape: f32[2,10], index: 21, kind: output, shape index: {1}]
  %22 = xla_tuple %s20, %s21
  %s23 = sld [smem:[#allocation0]]
  $region106: #{rnn_forward.3} parent=0
    _
  %s25 = ssub.s32 1, %s23
  %s26 = scalar_select 0, %s25, %s23
  $region1: #{rnn_forward.3} parent=0
    #allocation5 [shape = 'u8[1024]{0}', space=vmem, size = 0x400, scoped, tag = 'output window, operand 1, single buffered']
    #allocation6 [shape = 's32[1]{0}', space=sflag, size = 0x4, scoped, tag = 'scoped memory for rnn_forward.3']
    %27 = vsyncpa [#allocation6], 0
    // Predicated region
    $region2: #{rnn_forward.3} parent=1 // pred_check
      _
    $region3: #{rnn_forward.3} parent=1 // pred_check_branch
      %29 = sbr.rel (0) target = $region5
    $region4: #{rnn_forward.3} parent=1 // pred_region
      _
    $region5: #{rnn_forward.3} parent=1 // pred_fallthru
      _
    // Predicated region
    $region6: #{rnn_forward.3} parent=1 // pred_check
      _
    $region7: #{rnn_forward.3} parent=1 // pred_check_branch
      %31 = sbr.rel (0) target = $region9
    $region8: #{rnn_forward.3} parent=1 // pred_region
      _
    $region9: #{rnn_forward.3} parent=1 // pred_fallthru
      _
    // Predicated region
    $region10: #{rnn_forward.3} parent=1 // pred_check
      _
    $region11: #{rnn_forward.3} parent=1 // pred_check_branch
      %33 = sbr.rel (0) target = $region13
    $region12: #{rnn_forward.3} parent=1 // pred_region
      _
    $region13: #{rnn_forward.3} parent=1 // pred_fallthru
      _
    // Predicated region
    $region14: #{rnn_forward.3} parent=1 // pred_check
      _
    $region15: #{rnn_forward.3} parent=1 // pred_check_branch
      %35 = sbr.rel (0) target = $region17
    $region16: #{rnn_forward.3} parent=1 // pred_region
      _
    $region17: #{rnn_forward.3} parent=1 // pred_fallthru
      _
    // Predicated region
    $region18: #{rnn_forward.3} parent=1 // pred_check
      _
    $region19: #{rnn_forward.3} parent=1 // pred_check_branch
      %37 = sbr.rel (0) target = $region21
    $region20: #{rnn_forward.3} parent=1 // pred_region
      _
    $region21: #{rnn_forward.3} parent=1 // pred_fallthru
      _
    // Predicated region
    $region22: #{rnn_forward.3} parent=1 // pred_check
      _
    $region23: #{rnn_forward.3} parent=1 // pred_check_branch
      %39 = sbr.rel (0) target = $region25
    $region24: #{rnn_forward.3} parent=1 // pred_region
      _
    $region25: #{rnn_forward.3} parent=1 // pred_fallthru
      _
    // Predicated region
    $region26: #{rnn_forward.3} parent=1 // pred_check
      _
    $region27: #{rnn_forward.3} parent=1 // pred_check_branch
      %41 = sbr.rel (0) target = $region29
    $region28: #{rnn_forward.3} parent=1 // pred_region
      _
    $region29: #{rnn_forward.3} parent=1 // pred_fallthru
      _
    // Predicated region
    $region30: #{rnn_forward.3} parent=1 // pred_check
      _
    $region31: #{rnn_forward.3} parent=1 // pred_check_branch
      %43 = sbr.rel (0) target = $region33
    $region32: #{rnn_forward.3} parent=1 // pred_region
      _
    $region33: #{rnn_forward.3} parent=1 // pred_fallthru
      _
    // Predicated region
    $region34: #{rnn_forward.3} parent=1 // pred_check
      _
    $region35: #{rnn_forward.3} parent=1 // pred_check_branch
      %45 = sbr.rel (0) target = $region37
    $region36: #{rnn_forward.3} parent=1 // pred_region
      _
    $region37: #{rnn_forward.3} parent=1 // pred_fallthru
      _
    // Predicated region
    $region38: #{rnn_forward.3} parent=1 // pred_check
      _
    $region39: #{rnn_forward.3} parent=1 // pred_check_branch
      %47 = sbr.rel (0) target = $region41
    $region40: #{rnn_forward.3} parent=1 // pred_region
      _
    $region41: #{rnn_forward.3} parent=1 // pred_fallthru
      _
    // Predicated region
    $region42: #{rnn_forward.3} parent=1 // pred_check
      _
    $region43: #{rnn_forward.3} parent=1 // pred_check_branch
      %49 = sbr.rel (0) target = $region45
    $region44: #{rnn_forward.3} parent=1 // pred_region
      _
    $region45: #{rnn_forward.3} parent=1 // pred_fallthru
      _
    // Predicated region
    $region46: #{rnn_forward.3} parent=1 // pred_check
      _
    $region47: #{rnn_forward.3} parent=1 // pred_check_branch
      %51 = sbr.rel (0) target = $region49
    $region48: #{rnn_forward.3} parent=1 // pred_region
      _
    $region49: #{rnn_forward.3} parent=1 // pred_fallthru
      _
    // Predicated region
    $region50: #{rnn_forward.3} parent=1 // pred_check
      _
    $region51: #{rnn_forward.3} parent=1 // pred_check_branch
      %53 = sbr.rel (0) target = $region53
    $region52: #{rnn_forward.3} parent=1 // pred_region
      _
    $region53: #{rnn_forward.3} parent=1 // pred_fallthru
      _
    // Predicated region
    $region54: #{rnn_forward.3} parent=1 // pred_check
      _
    $region55: #{rnn_forward.3} parent=1 // pred_check_branch
      %55 = sbr.rel (0) target = $region57
    $region56: #{rnn_forward.3} parent=1 // pred_region
      _
    $region57: #{rnn_forward.3} parent=1 // pred_fallthru
      _
    // Predicated region
    $region58: #{rnn_forward.3} parent=1 // pred_check
      _
    $region59: #{rnn_forward.3} parent=1 // pred_check_branch
      %57 = sbr.rel (0) target = $region61
    $region60: #{rnn_forward.3} parent=1 // pred_region
      _
    $region61: #{rnn_forward.3} parent=1 // pred_fallthru
      _
    // Predicated region
    $region62: #{rnn_forward.3} parent=1 // pred_check
      _
    $region63: #{rnn_forward.3} parent=1 // pred_check_branch
      %59 = sbr.rel (0) target = $region65
    $region64: #{rnn_forward.3} parent=1 // pred_region
      _
    $region65: #{rnn_forward.3} parent=1 // pred_fallthru
      _
    // Predicated region
    $region66: #{rnn_forward.3} parent=1 // pred_check
      _
    $region67: #{rnn_forward.3} parent=1 // pred_check_branch
      %61 = sbr.rel (0) target = $region69
    $region68: #{rnn_forward.3} parent=1 // pred_region
      _
    $region69: #{rnn_forward.3} parent=1 // pred_fallthru
      _
    // Predicated region
    $region70: #{rnn_forward.3} parent=1 // pred_check
      _
    $region71: #{rnn_forward.3} parent=1 // pred_check_branch
      %63 = sbr.rel (0) target = $region73
    $region72: #{rnn_forward.3} parent=1 // pred_region
      _
    $region73: #{rnn_forward.3} parent=1 // pred_fallthru
      _
    // Predicated region
    $region74: #{rnn_forward.3} parent=1 // pred_check
      _
    $region75: #{rnn_forward.3} parent=1 // pred_check_branch
      %65 = sbr.rel (0) target = $region77
    $region76: #{rnn_forward.3} parent=1 // pred_region
      _
    $region77: #{rnn_forward.3} parent=1 // pred_fallthru
      _
    // Predicated region
    $region78: #{rnn_forward.3} parent=1 // pred_check
      _
    $region79: #{rnn_forward.3} parent=1 // pred_check_branch
      %67 = sbr.rel (0) target = $region81
    $region80: #{rnn_forward.3} parent=1 // pred_region
      _
    $region81: #{rnn_forward.3} parent=1 // pred_fallthru
      _
    %p69 = scmp.eq.s32.totalorder 0, 0
    // Predicated region
    $region82: #{rnn_forward.3} parent=1 // pred_check
      %p70 = pneg %p69
    $region83: #{rnn_forward.3} parent=1 // pred_check_branch
      %72 = sbr.rel (%p70) target = $region85
    $region84: #{rnn_forward.3} parent=1 // pred_region
      %v73 = vld [vmem:[%s4] sm:$0xff]
      %v74 = vld [vmem:[%s4 + $0x8] sm:$0xff]
      %75 = vst [vmem:[#allocation2] sm:$0xff] %v73
      %76 = vst [vmem:[#allocation2 + $0x8] sm:$0xff] %v74
      %v77 = vld [vmem:[%s5] sm:$0xff]
      %v78 = vld [vmem:[%s5 + $0x8] sm:$0xff]
      %79 = vst [vmem:[#allocation3] sm:$0xff] %v77
      %80 = vst [vmem:[#allocation3 + $0x8] sm:$0xff] %v78
    $region85: #{rnn_forward.3} parent=1 // pred_fallthru
      _
    %v81 = vld [vmem:[%s2] sm:$0xff]
    %v82 = vld [vmem:[%s2 + $0x8] sm:$0xff]
    %v83 = vld [vmem:[%s2 + $0x10] sm:$0xff]
    %v84 = vld [vmem:[%s2 + $0x18] sm:$0xff]
    %v85 = vld [vmem:[%s2 + $0x20] sm:$0xff]
    %v86 = vld [vmem:[%s2 + $0x28] sm:$0xff]
    %v87 = vld [vmem:[%s2 + $0x30] sm:$0xff]
    %v88 = vld [vmem:[%s2 + $0x38] sm:$0xff]
    %v89 = vld [vmem:[%s2 + $0x40] sm:$0xff]
    %v90 = vld [vmem:[%s2 + $0x48] sm:$0xff]
    %v91 = vld [vmem:[%s2 + $0x50] sm:$0xff]
    %v92 = vld [vmem:[%s2 + $0x58] sm:$0xff]
    %v93 = vld [vmem:[%s2 + $0x60] sm:$0xff]
    %v94 = vld [vmem:[%s2 + $0x68] sm:$0xff]
    %v95 = vld [vmem:[%s2 + $0x70] sm:$0xff]
    %v96 = vld [vmem:[%s2 + $0x78] sm:$0xff]
    %v97 = vld [vmem:[%s2 + $0x80] sm:$0xff]
    %v98 = vld [vmem:[%s2 + $0x88] sm:$0xff]
    %v99 = vld [vmem:[%s2 + $0x90] sm:$0xff]
    %v100 = vld [vmem:[%s2 + $0x98] sm:$0xff]
    %v101 = vld [vmem:[%s2 + $0xa0] sm:$0xff]
    %v102 = vld [vmem:[%s2 + $0xa8] sm:$0xff]
    %v103 = vld [vmem:[%s2 + $0xb0] sm:$0xff]
    %v104 = vld [vmem:[%s2 + $0xb8] sm:$0xff]
    %v105 = vld [vmem:[%s2 + $0xc0] sm:$0xff]
    %v106 = vld [vmem:[%s2 + $0xc8] sm:$0xff]
    %v107 = vld [vmem:[%s2 + $0xd0] sm:$0xff]
    %v108 = vld [vmem:[%s2 + $0xd8] sm:$0xff]
    %v109 = vld [vmem:[%s2 + $0xe0] sm:$0xff]
    %v110 = vld [vmem:[%s2 + $0xe8] sm:$0xff]
    %v111 = vld [vmem:[%s2 + $0xf0] sm:$0xff]
    %v112 = vld [vmem:[%s2 + $0xf8] sm:$0xff]
    %v113 = vld [vmem:[#allocation2] sm:$0xff]
    %v114 = vld [vmem:[#allocation3] sm:$0xff]
    %v115 = vpack.c.bf16 %v113, %v113
    %v148 = vunpack.c.l.b16 %v81
    %v149 = vunpack.c.h.b16 %v81
    %v150 = vunpack.c.l.b16 %v82
    %v151 = vunpack.c.h.b16 %v82
    %v152 = vunpack.c.l.b16 %v83
    %v153 = vunpack.c.h.b16 %v83
    %v154 = vunpack.c.l.b16 %v84
    %v155 = vunpack.c.h.b16 %v84
    %v156 = vunpack.c.l.b16 %v85
    %v157 = vunpack.c.h.b16 %v85
    %v158 = vunpack.c.l.b16 %v86
    %v159 = vunpack.c.h.b16 %v86
    %v160 = vunpack.c.l.b16 %v87
    %v161 = vunpack.c.h.b16 %v87
    %v162 = vunpack.c.l.b16 %v88
    %v163 = vunpack.c.h.b16 %v88
    %v164 = vunpack.c.l.b16 %v89
    %v165 = vunpack.c.h.b16 %v89
    %v166 = vunpack.c.l.b16 %v90
    %v167 = vunpack.c.h.b16 %v90
    %v168 = vunpack.c.l.b16 %v91
    %v169 = vunpack.c.h.b16 %v91
    %v170 = vunpack.c.l.b16 %v92
    %v171 = vunpack.c.h.b16 %v92
    %v172 = vunpack.c.l.b16 %v93
    %v173 = vunpack.c.h.b16 %v93
    %v174 = vunpack.c.l.b16 %v94
    %v175 = vunpack.c.h.b16 %v94
    %v176 = vunpack.c.l.b16 %v95
    %v177 = vunpack.c.h.b16 %v95
    %v178 = vunpack.c.l.b16 %v96
    %v179 = vunpack.c.h.b16 %v96
    %v180 = vunpack.c.l.b16 %v97
    %v181 = vunpack.c.h.b16 %v97
    %v182 = vunpack.c.l.b16 %v98
    %v183 = vunpack.c.h.b16 %v98
    %v184 = vunpack.c.l.b16 %v99
    %v185 = vunpack.c.h.b16 %v99
    %v186 = vunpack.c.l.b16 %v100
    %v187 = vunpack.c.h.b16 %v100
    %v188 = vunpack.c.l.b16 %v101
    %v189 = vunpack.c.h.b16 %v101
    %v190 = vunpack.c.l.b16 %v102
    %v191 = vunpack.c.h.b16 %v102
    %v192 = vunpack.c.l.b16 %v103
    %v193 = vunpack.c.h.b16 %v103
    %v194 = vunpack.c.l.b16 %v104
    %v195 = vunpack.c.h.b16 %v104
    %v196 = vunpack.c.l.b16 %v105
    %v197 = vunpack.c.h.b16 %v105
    %v198 = vunpack.c.l.b16 %v106
    %v199 = vunpack.c.h.b16 %v106
    %v200 = vunpack.c.l.b16 %v107
    %v201 = vunpack.c.h.b16 %v107
    %v202 = vunpack.c.l.b16 %v108
    %v203 = vunpack.c.h.b16 %v108
    %v204 = vunpack.c.l.b16 %v109
    %v205 = vunpack.c.h.b16 %v109
    %v206 = vunpack.c.l.b16 %v110
    %v207 = vunpack.c.h.b16 %v110
    %v208 = vunpack.c.l.b16 %v111
    %v209 = vunpack.c.h.b16 %v111
    %v210 = vunpack.c.l.b16 %v112
    %v211 = vunpack.c.h.b16 %v112
    %v212 = vpack.c.b16 %v152, %v148
    %v213 = vpack.c.b16 %v153, %v149
    %v214 = vpack.c.b16 %v154, %v150
    %v215 = vpack.c.b16 %v155, %v151
    %v216 = vpack.c.b16 %v160, %v156
    %v217 = vpack.c.b16 %v161, %v157
    %v218 = vpack.c.b16 %v162, %v158
    %v219 = vpack.c.b16 %v163, %v159
    %v220 = vpack.c.b16 %v168, %v164
    %v221 = vpack.c.b16 %v169, %v165
    %v222 = vpack.c.b16 %v170, %v166
    %v223 = vpack.c.b16 %v171, %v167
    %v224 = vpack.c.b16 %v176, %v172
    %v225 = vpack.c.b16 %v177, %v173
    %v226 = vpack.c.b16 %v178, %v174
    %v227 = vpack.c.b16 %v179, %v175
    %v228 = vpack.c.b16 %v184, %v180
    %v229 = vpack.c.b16 %v185, %v181
    %v230 = vpack.c.b16 %v186, %v182
    %v231 = vpack.c.b16 %v187, %v183
    %v232 = vpack.c.b16 %v192, %v188
    %v233 = vpack.c.b16 %v193, %v189
    %v234 = vpack.c.b16 %v194, %v190
    %v235 = vpack.c.b16 %v195, %v191
    %v236 = vpack.c.b16 %v200, %v196
    %v237 = vpack.c.b16 %v201, %v197
    %v238 = vpack.c.b16 %v202, %v198
    %v239 = vpack.c.b16 %v203, %v199
    %v240 = vpack.c.b16 %v208, %v204
    %v241 = vpack.c.b16 %v209, %v205
    %v242 = vpack.c.b16 %v210, %v206
    %v243 = vpack.c.b16 %v211, %v207
    %276 = vmatprep.subr.bf16.mxu0 %v213
    %277 = vmatpush1.bf16.msra.mxu0 %v212
    %278 = vmatprep.subr.bf16.mxu0 %v217
    %279 = vmatpush1.bf16.msra.mxu0 %v216
    %280 = vmatprep.subr.bf16.mxu0 %v221
    %281 = vmatpush1.bf16.msra.mxu0 %v220
    %282 = vmatprep.subr.bf16.mxu0 %v225
    %283 = vmatpush1.bf16.msra.mxu0 %v224
    %284 = vmatprep.subr.bf16.mxu0 %v229
    %285 = vmatpush1.bf16.msra.mxu0 %v228
    %286 = vmatprep.subr.bf16.mxu0 %v233
    %287 = vmatpush1.bf16.msra.mxu0 %v232
    %288 = vmatprep.subr.bf16.mxu0 %v237
    %289 = vmatpush1.bf16.msra.mxu0 %v236
    %290 = vmatprep.subr.bf16.mxu0 %v241
    %291 = vmatpush1.bf16.msra.mxu0 %v240
    %292 = vmatprep.subr.bf16.mxu0 0
    %293 = vmatpush1.bf16.msra.mxu0 0
    %294 = vmatprep.subr.bf16.mxu0 0
    %295 = vmatpush1.bf16.msra.mxu0 0
    %296 = vmatprep.subr.bf16.mxu0 0
    %297 = vmatpush1.bf16.msra.mxu0 0
    %298 = vmatprep.subr.bf16.mxu0 0
    %299 = vmatpush1.bf16.msra.mxu0 0
    %300 = vmatprep.subr.bf16.mxu0 0
    %301 = vmatpush1.bf16.msra.mxu0 0
    %302 = vmatprep.subr.bf16.mxu0 0
    %303 = vmatpush1.bf16.msra.mxu0 0
    %304 = vmatprep.subr.bf16.mxu0 0
    %305 = vmatpush1.bf16.msra.mxu0 0
    %306 = vmatprep.subr.bf16.mxu0 0
    %307 = vmatpush1.bf16.msra.mxu0 0
    %308 = vmatprep.mubr.bf16.mxu0 0
    %309 = vmatmul.mubr.bf16.gmra.mrb[0].mxu0 %v115
    %v310 = vpop.f32.mrb[0].mxu0
    %v311 = vadd.f32 0.0, %v310
    %v312 = vpop.f32.mrb[0].mxu0
    %v313 = vadd.f32 0.0, %v312
    %v314 = vpop.f32.mrb[0].mxu0
    %v315 = vpop.f32.mrb[0].mxu0
    %316 = vdwg.mxu0
    %317 = vmatprep.subr.bf16.mxu0 %v215
    %318 = vmatpush1.bf16.msra.mxu0 %v214
    %319 = vmatprep.subr.bf16.mxu0 %v219
    %320 = vmatpush1.bf16.msra.mxu0 %v218
    %321 = vmatprep.subr.bf16.mxu0 %v223
    %322 = vmatpush1.bf16.msra.mxu0 %v222
    %323 = vmatprep.subr.bf16.mxu0 %v227
    %324 = vmatpush1.bf16.msra.mxu0 %v226
    %325 = vmatprep.subr.bf16.mxu0 %v231
    %326 = vmatpush1.bf16.msra.mxu0 %v230
    %327 = vmatprep.subr.bf16.mxu0 %v235
    %328 = vmatpush1.bf16.msra.mxu0 %v234
    %329 = vmatprep.subr.bf16.mxu0 %v239
    %330 = vmatpush1.bf16.msra.mxu0 %v238
    %331 = vmatprep.subr.bf16.mxu0 %v243
    %332 = vmatpush1.bf16.msra.mxu0 %v242
    %333 = vmatprep.subr.bf16.mxu0 0
    %334 = vmatpush1.bf16.msra.mxu0 0
    %335 = vmatprep.subr.bf16.mxu0 0
    %336 = vmatpush1.bf16.msra.mxu0 0
    %337 = vmatprep.subr.bf16.mxu0 0
    %338 = vmatpush1.bf16.msra.mxu0 0
    %339 = vmatprep.subr.bf16.mxu0 0
    %340 = vmatpush1.bf16.msra.mxu0 0
    %341 = vmatprep.subr.bf16.mxu0 0
    %342 = vmatpush1.bf16.msra.mxu0 0
    %343 = vmatprep.subr.bf16.mxu0 0
    %344 = vmatpush1.bf16.msra.mxu0 0
    %345 = vmatprep.subr.bf16.mxu0 0
    %346 = vmatpush1.bf16.msra.mxu0 0
    %347 = vmatprep.subr.bf16.mxu0 0
    %348 = vmatpush1.bf16.msra.mxu0 0
    %349 = vmatprep.mubr.bf16.mxu0 0
    %350 = vmatmul.mubr.bf16.gmra.mrb[0].mxu0 %v115
    %v351 = vpop.f32.mrb[0].mxu0
    %v352 = vadd.f32 0.0, %v351
    %v353 = vpop.f32.mrb[0].mxu0
    %v354 = vadd.f32 0.0, %v353
    %v355 = vpop.f32.mrb[0].mxu0
    %v356 = vpop.f32.mrb[0].mxu0
    %357 = vdwg.mxu0
    %v358 = vld [vmem:[%s0] sm:$0xff]
    %v359 = vld [vmem:[%s0 + $0x8] sm:$0xff]
    %v360 = vld [vmem:[%s0 + $0x10] sm:$0xff]
    %v361 = vld [vmem:[%s0 + $0x18] sm:$0xff]
    %v362 = vadd.f32 %v358, %v311
    %v363 = vadd.f32 %v359, %v313
    %v364 = vadd.f32 %v360, %v352
    %v365 = vadd.f32 %v361, %v354
    %v366 = vmul.f32 %v362, 0.5
    %v367 = vtanh.pop %v366
    %v368 = vadd.f32 %v367, 1.0
    %v369 = vmul.f32 %v368, 0.5
    %v370 = vmul.f32 %v363, 0.5
    %v371 = vtanh.pop %v370
    %v372 = vadd.f32 %v371, 1.0
    %v373 = vmul.f32 %v372, 0.5
    %v374 = vtanh.pop %v364
    %v375 = vmul.f32 %v365, 0.5
    %v376 = vtanh.pop %v375
    %v377 = vadd.f32 %v376, 1.0
    %v378 = vmul.f32 %v377, 0.5
    %v379 = vmul.f32 %v373, %v114
    %v380 = vmul.f32 %v369, %v374
    %v381 = vadd.f32 %v379, %v380
    %v382 = vtanh.pop %v381
    %v383 = vmul.f32 %v378, %v382
    %384 = vst [vmem:[#allocation4] sm:$0xff] %v383
    %v385 = vpack.c.bf16 %v383, %v383
    %386 = vmatprep.subr.bf16.mxu0 %v213
    %387 = vmatpush1.bf16.msra.mxu0 %v212
    %388 = vmatprep.subr.bf16.mxu0 %v217
    %389 = vmatpush1.bf16.msra.mxu0 %v216
    %390 = vmatprep.subr.bf16.mxu0 %v221
    %391 = vmatpush1.bf16.msra.mxu0 %v220
    %392 = vmatprep.subr.bf16.mxu0 %v225
    %393 = vmatpush1.bf16.msra.mxu0 %v224
    %394 = vmatprep.subr.bf16.mxu0 %v229
    %395 = vmatpush1.bf16.msra.mxu0 %v228
    %396 = vmatprep.subr.bf16.mxu0 %v233
    %397 = vmatpush1.bf16.msra.mxu0 %v232
    %398 = vmatprep.subr.bf16.mxu0 %v237
    %399 = vmatpush1.bf16.msra.mxu0 %v236
    %400 = vmatprep.subr.bf16.mxu0 %v241
    %401 = vmatpush1.bf16.msra.mxu0 %v240
    %402 = vmatprep.subr.bf16.mxu0 0
    %403 = vmatpush1.bf16.msra.mxu0 0
    %404 = vmatprep.subr.bf16.mxu0 0
    %405 = vmatpush1.bf16.msra.mxu0 0
    %406 = vmatprep.subr.bf16.mxu0 0
    %407 = vmatpush1.bf16.msra.mxu0 0
    %408 = vmatprep.subr.bf16.mxu0 0
    %409 = vmatpush1.bf16.msra.mxu0 0
    %410 = vmatprep.subr.bf16.mxu0 0
    %411 = vmatpush1.bf16.msra.mxu0 0
    %412 = vmatprep.subr.bf16.mxu0 0
    %413 = vmatpush1.bf16.msra.mxu0 0
    %414 = vmatprep.subr.bf16.mxu0 0
    %415 = vmatpush1.bf16.msra.mxu0 0
    %416 = vmatprep.subr.bf16.mxu0 0
    %417 = vmatpush1.bf16.msra.mxu0 0
    %418 = vmatprep.mubr.bf16.mxu0 0
    %419 = vmatmul.mubr.bf16.gmra.mrb[0].mxu0 %v385
    %v420 = vpop.f32.mrb[0].mxu0
    %v421 = vadd.f32 0.0, %v420
    %v422 = vpop.f32.mrb[0].mxu0
    %v423 = vadd.f32 0.0, %v422
    %v424 = vpop.f32.mrb[0].mxu0
    %v425 = vpop.f32.mrb[0].mxu0
    %426 = vdwg.mxu0
    %427 = vmatprep.subr.bf16.mxu0 %v215
    %428 = vmatpush1.bf16.msra.mxu0 %v214
    %429 = vmatprep.subr.bf16.mxu0 %v219
    %430 = vmatpush1.bf16.msra.mxu0 %v218
    %431 = vmatprep.subr.bf16.mxu0 %v223
    %432 = vmatpush1.bf16.msra.mxu0 %v222
    %433 = vmatprep.subr.bf16.mxu0 %v227
    %434 = vmatpush1.bf16.msra.mxu0 %v226
    %435 = vmatprep.subr.bf16.mxu0 %v231
    %436 = vmatpush1.bf16.msra.mxu0 %v230
    %437 = vmatprep.subr.bf16.mxu0 %v235
    %438 = vmatpush1.bf16.msra.mxu0 %v234
    %439 = vmatprep.subr.bf16.mxu0 %v239
    %440 = vmatpush1.bf16.msra.mxu0 %v238
    %441 = vmatprep.subr.bf16.mxu0 %v243
    %442 = vmatpush1.bf16.msra.mxu0 %v242
    %443 = vmatprep.subr.bf16.mxu0 0
    %444 = vmatpush1.bf16.msra.mxu0 0
    %445 = vmatprep.subr.bf16.mxu0 0
    %446 = vmatpush1.bf16.msra.mxu0 0
    %447 = vmatprep.subr.bf16.mxu0 0
    %448 = vmatpush1.bf16.msra.mxu0 0
    %449 = vmatprep.subr.bf16.mxu0 0
    %450 = vmatpush1.bf16.msra.mxu0 0
    %451 = vmatprep.subr.bf16.mxu0 0
    %452 = vmatpush1.bf16.msra.mxu0 0
    %453 = vmatprep.subr.bf16.mxu0 0
    %454 = vmatpush1.bf16.msra.mxu0 0
    %455 = vmatprep.subr.bf16.mxu0 0
    %456 = vmatpush1.bf16.msra.mxu0 0
    %457 = vmatprep.subr.bf16.mxu0 0
    %458 = vmatpush1.bf16.msra.mxu0 0
    %459 = vmatprep.mubr.bf16.mxu0 0
    %460 = vmatmul.mubr.bf16.gmra.mrb[0].mxu0 %v385
    %v461 = vpop.f32.mrb[0].mxu0
    %v462 = vadd.f32 0.0, %v461
    %v463 = vpop.f32.mrb[0].mxu0
    %v464 = vadd.f32 0.0, %v463
    %v465 = vpop.f32.mrb[0].mxu0
    %v466 = vpop.f32.mrb[0].mxu0
    %467 = vdwg.mxu0
    %s468 = scalar_lea.vmem %s0, 32
    %v469 = vld [vmem:[%s468] sm:$0xff]
    %v470 = vld [vmem:[%s468 + $0x8] sm:$0xff]
    %v471 = vld [vmem:[%s468 + $0x10] sm:$0xff]
    %v472 = vld [vmem:[%s468 + $0x18] sm:$0xff]
    %v473 = vadd.f32 %v469, %v421
    %v474 = vadd.f32 %v470, %v423
    %v475 = vadd.f32 %v471, %v462
    %v476 = vadd.f32 %v472, %v464
    %v477 = vmul.f32 %v473, 0.5
    %v478 = vtanh.pop %v477
    %v479 = vadd.f32 %v478, 1.0
    %v480 = vmul.f32 %v479, 0.5
    %v481 = vmul.f32 %v474, 0.5
    %v482 = vtanh.pop %v481
    %v483 = vadd.f32 %v482, 1.0
    %v484 = vmul.f32 %v483, 0.5
    %v485 = vtanh.pop %v475
    %v486 = vmul.f32 %v476, 0.5
    %v487 = vtanh.pop %v486
    %v488 = vadd.f32 %v487, 1.0
    %v489 = vmul.f32 %v488, 0.5
    %v490 = vmul.f32 %v484, %v381
    %v491 = vmul.f32 %v480, %v485
    %v492 = vadd.f32 %v490, %v491
    %v493 = vtanh.pop %v492
    %v494 = vmul.f32 %v489, %v493
    %s495 = scalar_lea.vmem [#allocation4], 8
    %496 = vst [vmem:[%s495] sm:$0xff] %v494
    %v497 = vpack.c.bf16 %v494, %v494
    %498 = vmatprep.subr.bf16.mxu0 %v213
    %499 = vmatpush1.bf16.msra.mxu0 %v212
    %500 = vmatprep.subr.bf16.mxu0 %v217
    %501 = vmatpush1.bf16.msra.mxu0 %v216
    %502 = vmatprep.subr.bf16.mxu0 %v221
    %503 = vmatpush1.bf16.msra.mxu0 %v220
    %504 = vmatprep.subr.bf16.mxu0 %v225
    %505 = vmatpush1.bf16.msra.mxu0 %v224
    %506 = vmatprep.subr.bf16.mxu0 %v229
    %507 = vmatpush1.bf16.msra.mxu0 %v228
    %508 = vmatprep.subr.bf16.mxu0 %v233
    %509 = vmatpush1.bf16.msra.mxu0 %v232
    %510 = vmatprep.subr.bf16.mxu0 %v237
    %511 = vmatpush1.bf16.msra.mxu0 %v236
    %512 = vmatprep.subr.bf16.mxu0 %v241
    %513 = vmatpush1.bf16.msra.mxu0 %v240
    %514 = vmatprep.subr.bf16.mxu0 0
    %515 = vmatpush1.bf16.msra.mxu0 0
    %516 = vmatprep.subr.bf16.mxu0 0
    %517 = vmatpush1.bf16.msra.mxu0 0
    %518 = vmatprep.subr.bf16.mxu0 0
    %519 = vmatpush1.bf16.msra.mxu0 0
    %520 = vmatprep.subr.bf16.mxu0 0
    %521 = vmatpush1.bf16.msra.mxu0 0
    %522 = vmatprep.subr.bf16.mxu0 0
    %523 = vmatpush1.bf16.msra.mxu0 0
    %524 = vmatprep.subr.bf16.mxu0 0
    %525 = vmatpush1.bf16.msra.mxu0 0
    %526 = vmatprep.subr.bf16.mxu0 0
    %527 = vmatpush1.bf16.msra.mxu0 0
    %528 = vmatprep.subr.bf16.mxu0 0
    %529 = vmatpush1.bf16.msra.mxu0 0
    %530 = vmatprep.mubr.bf16.mxu0 0
    %531 = vmatmul.mubr.bf16.gmra.mrb[0].mxu0 %v497
    %v532 = vpop.f32.mrb[0].mxu0
    %v533 = vadd.f32 0.0, %v532
    %v534 = vpop.f32.mrb[0].mxu0
    %v535 = vadd.f32 0.0, %v534
    %v536 = vpop.f32.mrb[0].mxu0
    %v537 = vpop.f32.mrb[0].mxu0
    %538 = vdwg.mxu0
    %539 = vmatprep.subr.bf16.mxu0 %v215
    %540 = vmatpush1.bf16.msra.mxu0 %v214
    %541 = vmatprep.subr.bf16.mxu0 %v219
    %542 = vmatpush1.bf16.msra.mxu0 %v218
    %543 = vmatprep.subr.bf16.mxu0 %v223
    %544 = vmatpush1.bf16.msra.mxu0 %v222
    %545 = vmatprep.subr.bf16.mxu0 %v227
    %546 = vmatpush1.bf16.msra.mxu0 %v226
    %547 = vmatprep.subr.bf16.mxu0 %v231
    %548 = vmatpush1.bf16.msra.mxu0 %v230
    %549 = vmatprep.subr.bf16.mxu0 %v235
    %550 = vmatpush1.bf16.msra.mxu0 %v234
    %551 = vmatprep.subr.bf16.mxu0 %v239
    %552 = vmatpush1.bf16.msra.mxu0 %v238
    %553 = vmatprep.subr.bf16.mxu0 %v243
    %554 = vmatpush1.bf16.msra.mxu0 %v242
    %555 = vmatprep.subr.bf16.mxu0 0
    %556 = vmatpush1.bf16.msra.mxu0 0
    %557 = vmatprep.subr.bf16.mxu0 0
    %558 = vmatpush1.bf16.msra.mxu0 0
    %559 = vmatprep.subr.bf16.mxu0 0
    %560 = vmatpush1.bf16.msra.mxu0 0
    %561 = vmatprep.subr.bf16.mxu0 0
    %562 = vmatpush1.bf16.msra.mxu0 0
    %563 = vmatprep.subr.bf16.mxu0 0
    %564 = vmatpush1.bf16.msra.mxu0 0
    %565 = vmatprep.subr.bf16.mxu0 0
    %566 = vmatpush1.bf16.msra.mxu0 0
    %567 = vmatprep.subr.bf16.mxu0 0
    %568 = vmatpush1.bf16.msra.mxu0 0
    %569 = vmatprep.subr.bf16.mxu0 0
    %570 = vmatpush1.bf16.msra.mxu0 0
    %571 = vmatprep.mubr.bf16.mxu0 0
    %572 = vmatmul.mubr.bf16.gmra.mrb[0].mxu0 %v497
    %v573 = vpop.f32.mrb[0].mxu0
    %v574 = vadd.f32 0.0, %v573
    %v575 = vpop.f32.mrb[0].mxu0
    %v576 = vadd.f32 0.0, %v575
    %v577 = vpop.f32.mrb[0].mxu0
    %v578 = vpop.f32.mrb[0].mxu0
    %579 = vdwg.mxu0
    %s580 = scalar_lea.vmem %s0, 64
    %v581 = vld [vmem:[%s580] sm:$0xff]
    %v582 = vld [vmem:[%s580 + $0x8] sm:$0xff]
    %v583 = vld [vmem:[%s580 + $0x10] sm:$0xff]
    %v584 = vld [vmem:[%s580 + $0x18] sm:$0xff]
    %v585 = vadd.f32 %v581, %v533
    %v586 = vadd.f32 %v582, %v535
    %v587 = vadd.f32 %v583, %v574
    %v588 = vadd.f32 %v584, %v576
    %v589 = vmul.f32 %v585, 0.5
    %v590 = vtanh.pop %v589
    %v591 = vadd.f32 %v590, 1.0
    %v592 = vmul.f32 %v591, 0.5
    %v593 = vmul.f32 %v586, 0.5
    %v594 = vtanh.pop %v593
    %v595 = vadd.f32 %v594, 1.0
    %v596 = vmul.f32 %v595, 0.5
    %v597 = vtanh.pop %v587
    %v598 = vmul.f32 %v588, 0.5
    %v599 = vtanh.pop %v598
    %v600 = vadd.f32 %v599, 1.0
    %v601 = vmul.f32 %v600, 0.5
    %v602 = vmul.f32 %v596, %v492
    %v603 = vmul.f32 %v592, %v597
    %v604 = vadd.f32 %v602, %v603
    %v605 = vtanh.pop %v604
    %v606 = vmul.f32 %v601, %v605
    %s607 = scalar_lea.vmem [#allocation4], 16
    %608 = vst [vmem:[%s607] sm:$0xff] %v606
    %v609 = vpack.c.bf16 %v606, %v606
    %610 = vmatprep.subr.bf16.mxu0 %v213
    %611 = vmatpush1.bf16.msra.mxu0 %v212
    %612 = vmatprep.subr.bf16.mxu0 %v217
    %613 = vmatpush1.bf16.msra.mxu0 %v216
    %614 = vmatprep.subr.bf16.mxu0 %v221
    %615 = vmatpush1.bf16.msra.mxu0 %v220
    %616 = vmatprep.subr.bf16.mxu0 %v225
    %617 = vmatpush1.bf16.msra.mxu0 %v224
    %618 = vmatprep.subr.bf16.mxu0 %v229
    %619 = vmatpush1.bf16.msra.mxu0 %v228
    %620 = vmatprep.subr.bf16.mxu0 %v233
    %621 = vmatpush1.bf16.msra.mxu0 %v232
    %622 = vmatprep.subr.bf16.mxu0 %v237
    %623 = vmatpush1.bf16.msra.mxu0 %v236
    %624 = vmatprep.subr.bf16.mxu0 %v241
    %625 = vmatpush1.bf16.msra.mxu0 %v240
    %626 = vmatprep.subr.bf16.mxu0 0
    %627 = vmatpush1.bf16.msra.mxu0 0
    %628 = vmatprep.subr.bf16.mxu0 0
    %629 = vmatpush1.bf16.msra.mxu0 0
    %630 = vmatprep.subr.bf16.mxu0 0
    %631 = vmatpush1.bf16.msra.mxu0 0
    %632 = vmatprep.subr.bf16.mxu0 0
    %633 = vmatpush1.bf16.msra.mxu0 0
    %634 = vmatprep.subr.bf16.mxu0 0
    %635 = vmatpush1.bf16.msra.mxu0 0
    %636 = vmatprep.subr.bf16.mxu0 0
    %637 = vmatpush1.bf16.msra.mxu0 0
    %638 = vmatprep.subr.bf16.mxu0 0
    %639 = vmatpush1.bf16.msra.mxu0 0
    %640 = vmatprep.subr.bf16.mxu0 0
    %641 = vmatpush1.bf16.msra.mxu0 0
    %642 = vmatprep.mubr.bf16.mxu0 0
    %643 = vmatmul.mubr.bf16.gmra.mrb[0].mxu0 %v609
    %v644 = vpop.f32.mrb[0].mxu0
    %v645 = vadd.f32 0.0, %v644
    %v646 = vpop.f32.mrb[0].mxu0
    %v647 = vadd.f32 0.0, %v646
    %v648 = vpop.f32.mrb[0].mxu0
    %v649 = vpop.f32.mrb[0].mxu0
    %650 = vdwg.mxu0
    %651 = vmatprep.subr.bf16.mxu0 %v215
    %652 = vmatpush1.bf16.msra.mxu0 %v214
    %653 = vmatprep.subr.bf16.mxu0 %v219
    %654 = vmatpush1.bf16.msra.mxu0 %v218
    %655 = vmatprep.subr.bf16.mxu0 %v223
    %656 = vmatpush1.bf16.msra.mxu0 %v222
    %657 = vmatprep.subr.bf16.mxu0 %v227
    %658 = vmatpush1.bf16.msra.mxu0 %v226
    %659 = vmatprep.subr.bf16.mxu0 %v231
    %660 = vmatpush1.bf16.msra.mxu0 %v230
    %661 = vmatprep.subr.bf16.mxu0 %v235
    %662 = vmatpush1.bf16.msra.mxu0 %v234
    %663 = vmatprep.subr.bf16.mxu0 %v239
    %664 = vmatpush1.bf16.msra.mxu0 %v238
    %665 = vmatprep.subr.bf16.mxu0 %v243
    %666 = vmatpush1.bf16.msra.mxu0 %v242
    %667 = vmatprep.subr.bf16.mxu0 0
    %668 = vmatpush1.bf16.msra.mxu0 0
    %669 = vmatprep.subr.bf16.mxu0 0
    %670 = vmatpush1.bf16.msra.mxu0 0
    %671 = vmatprep.subr.bf16.mxu0 0
    %672 = vmatpush1.bf16.msra.mxu0 0
    %673 = vmatprep.subr.bf16.mxu0 0
    %674 = vmatpush1.bf16.msra.mxu0 0
    %675 = vmatprep.subr.bf16.mxu0 0
    %676 = vmatpush1.bf16.msra.mxu0 0
    %677 = vmatprep.subr.bf16.mxu0 0
    %678 = vmatpush1.bf16.msra.mxu0 0
    %679 = vmatprep.subr.bf16.mxu0 0
    %680 = vmatpush1.bf16.msra.mxu0 0
    %681 = vmatprep.subr.bf16.mxu0 0
    %682 = vmatpush1.bf16.msra.mxu0 0
    %683 = vmatprep.mubr.bf16.mxu0 0
    %684 = vmatmul.mubr.bf16.gmra.mrb[0].mxu0 %v609
    %v685 = vpop.f32.mrb[0].mxu0
    %v686 = vadd.f32 0.0, %v685
    %v687 = vpop.f32.mrb[0].mxu0
    %v688 = vadd.f32 0.0, %v687
    %v689 = vpop.f32.mrb[0].mxu0
    %v690 = vpop.f32.mrb[0].mxu0
    %691 = vdwg.mxu0
    %s692 = scalar_lea.vmem %s0, 96
    %v693 = vld [vmem:[%s692] sm:$0xff]
    %v694 = vld [vmem:[%s692 + $0x8] sm:$0xff]
    %v695 = vld [vmem:[%s692 + $0x10] sm:$0xff]
    %v696 = vld [vmem:[%s692 + $0x18] sm:$0xff]
    %v697 = vadd.f32 %v693, %v645
    %v698 = vadd.f32 %v694, %v647
    %v699 = vadd.f32 %v695, %v686
    %v700 = vadd.f32 %v696, %v688
    %v701 = vmul.f32 %v697, 0.5
    %v702 = vtanh.pop %v701
    %v703 = vadd.f32 %v702, 1.0
    %v704 = vmul.f32 %v703, 0.5
    %v705 = vmul.f32 %v698, 0.5
    %v706 = vtanh.pop %v705
    %v707 = vadd.f32 %v706, 1.0
    %v708 = vmul.f32 %v707, 0.5
    %v709 = vtanh.pop %v699
    %v710 = vmul.f32 %v700, 0.5
    %v711 = vtanh.pop %v710
    %v712 = vadd.f32 %v711, 1.0
    %v713 = vmul.f32 %v712, 0.5
    %v714 = vmul.f32 %v708, %v604
    %v715 = vmul.f32 %v704, %v709
    %v716 = vadd.f32 %v714, %v715
    %v717 = vtanh.pop %v716
    %v718 = vmul.f32 %v713, %v717
    %s719 = scalar_lea.vmem [#allocation4], 24
    %720 = vst [vmem:[%s719] sm:$0xff] %v718
    %v721 = vpack.c.bf16 %v718, %v718
    %722 = vmatprep.subr.bf16.mxu0 %v213
    %723 = vmatpush1.bf16.msra.mxu0 %v212
    %724 = vmatprep.subr.bf16.mxu0 %v217
    %725 = vmatpush1.bf16.msra.mxu0 %v216
    %726 = vmatprep.subr.bf16.mxu0 %v221
    %727 = vmatpush1.bf16.msra.mxu0 %v220
    %728 = vmatprep.subr.bf16.mxu0 %v225
    %729 = vmatpush1.bf16.msra.mxu0 %v224
    %730 = vmatprep.subr.bf16.mxu0 %v229
    %731 = vmatpush1.bf16.msra.mxu0 %v228
    %732 = vmatprep.subr.bf16.mxu0 %v233
    %733 = vmatpush1.bf16.msra.mxu0 %v232
    %734 = vmatprep.subr.bf16.mxu0 %v237
    %735 = vmatpush1.bf16.msra.mxu0 %v236
    %736 = vmatprep.subr.bf16.mxu0 %v241
    %737 = vmatpush1.bf16.msra.mxu0 %v240
    %738 = vmatprep.subr.bf16.mxu0 0
    %739 = vmatpush1.bf16.msra.mxu0 0
    %740 = vmatprep.subr.bf16.mxu0 0
    %741 = vmatpush1.bf16.msra.mxu0 0
    %742 = vmatprep.subr.bf16.mxu0 0
    %743 = vmatpush1.bf16.msra.mxu0 0
    %744 = vmatprep.subr.bf16.mxu0 0
    %745 = vmatpush1.bf16.msra.mxu0 0
    %746 = vmatprep.subr.bf16.mxu0 0
    %747 = vmatpush1.bf16.msra.mxu0 0
    %748 = vmatprep.subr.bf16.mxu0 0
    %749 = vmatpush1.bf16.msra.mxu0 0
    %750 = vmatprep.subr.bf16.mxu0 0
    %751 = vmatpush1.bf16.msra.mxu0 0
    %752 = vmatprep.subr.bf16.mxu0 0
    %753 = vmatpush1.bf16.msra.mxu0 0
    %754 = vmatprep.mubr.bf16.mxu0 0
    %755 = vmatmul.mubr.bf16.gmra.mrb[0].mxu0 %v721
    %v756 = vpop.f32.mrb[0].mxu0
    %v757 = vadd.f32 0.0, %v756
    %v758 = vpop.f32.mrb[0].mxu0
    %v759 = vadd.f32 0.0, %v758
    %v760 = vpop.f32.mrb[0].mxu0
    %v761 = vpop.f32.mrb[0].mxu0
    %762 = vdwg.mxu0
    %763 = vmatprep.subr.bf16.mxu0 %v215
    %764 = vmatpush1.bf16.msra.mxu0 %v214
    %765 = vmatprep.subr.bf16.mxu0 %v219
    %766 = vmatpush1.bf16.msra.mxu0 %v218
    %767 = vmatprep.subr.bf16.mxu0 %v223
    %768 = vmatpush1.bf16.msra.mxu0 %v222
    %769 = vmatprep.subr.bf16.mxu0 %v227
    %770 = vmatpush1.bf16.msra.mxu0 %v226
    %771 = vmatprep.subr.bf16.mxu0 %v231
    %772 = vmatpush1.bf16.msra.mxu0 %v230
    %773 = vmatprep.subr.bf16.mxu0 %v235
    %774 = vmatpush1.bf16.msra.mxu0 %v234
    %775 = vmatprep.subr.bf16.mxu0 %v239
    %776 = vmatpush1.bf16.msra.mxu0 %v238
    %777 = vmatprep.subr.bf16.mxu0 %v243
    %778 = vmatpush1.bf16.msra.mxu0 %v242
    %779 = vmatprep.subr.bf16.mxu0 0
    %780 = vmatpush1.bf16.msra.mxu0 0
    %781 = vmatprep.subr.bf16.mxu0 0
    %782 = vmatpush1.bf16.msra.mxu0 0
    %783 = vmatprep.subr.bf16.mxu0 0
    %784 = vmatpush1.bf16.msra.mxu0 0
    %785 = vmatprep.subr.bf16.mxu0 0
    %786 = vmatpush1.bf16.msra.mxu0 0
    %787 = vmatprep.subr.bf16.mxu0 0
    %788 = vmatpush1.bf16.msra.mxu0 0
    %789 = vmatprep.subr.bf16.mxu0 0
    %790 = vmatpush1.bf16.msra.mxu0 0
    %791 = vmatprep.subr.bf16.mxu0 0
    %792 = vmatpush1.bf16.msra.mxu0 0
    %793 = vmatprep.subr.bf16.mxu0 0
    %794 = vmatpush1.bf16.msra.mxu0 0
    %795 = vmatprep.mubr.bf16.mxu0 0
    %796 = vmatmul.mubr.bf16.gmra.mrb[0].mxu0 %v721
    %v797 = vpop.f32.mrb[0].mxu0
    %v798 = vadd.f32 0.0, %v797
    %v799 = vpop.f32.mrb[0].mxu0
    %v800 = vadd.f32 0.0, %v799
    %v801 = vpop.f32.mrb[0].mxu0
    %v802 = vpop.f32.mrb[0].mxu0
    %803 = vdwg.mxu0
    %s804 = scalar_lea.vmem %s0, 128
    %v805 = vld [vmem:[%s804] sm:$0xff]
    %v806 = vld [vmem:[%s804 + $0x8] sm:$0xff]
    %v807 = vld [vmem:[%s804 + $0x10] sm:$0xff]
    %v808 = vld [vmem:[%s804 + $0x18] sm:$0xff]
    %v809 = vadd.f32 %v805, %v757
    %v810 = vadd.f32 %v806, %v759
    %v811 = vadd.f32 %v807, %v798
    %v812 = vadd.f32 %v808, %v800
    %v813 = vmul.f32 %v809, 0.5
    %v814 = vtanh.pop %v813
    %v815 = vadd.f32 %v814, 1.0
    %v816 = vmul.f32 %v815, 0.5
    %v817 = vmul.f32 %v810, 0.5
    %v818 = vtanh.pop %v817
    %v819 = vadd.f32 %v818, 1.0
    %v820 = vmul.f32 %v819, 0.5
    %v821 = vtanh.pop %v811
    %v822 = vmul.f32 %v812, 0.5
    %v823 = vtanh.pop %v822
    %v824 = vadd.f32 %v823, 1.0
    %v825 = vmul.f32 %v824, 0.5
    %v826 = vmul.f32 %v820, %v716
    %v827 = vmul.f32 %v816, %v821
    %v828 = vadd.f32 %v826, %v827
    %v829 = vtanh.pop %v828
    %v830 = vmul.f32 %v825, %v829
    %s831 = scalar_lea.vmem [#allocation4], 32
    %832 = vst [vmem:[%s831] sm:$0xff] %v830
    %v833 = vpack.c.bf16 %v830, %v830
    %834 = vmatprep.subr.bf16.mxu0 %v213
    %835 = vmatpush1.bf16.msra.mxu0 %v212
    %836 = vmatprep.subr.bf16.mxu0 %v217
    %837 = vmatpush1.bf16.msra.mxu0 %v216
    %838 = vmatprep.subr.bf16.mxu0 %v221
    %839 = vmatpush1.bf16.msra.mxu0 %v220
    %840 = vmatprep.subr.bf16.mxu0 %v225
    %841 = vmatpush1.bf16.msra.mxu0 %v224
    %842 = vmatprep.subr.bf16.mxu0 %v229
    %843 = vmatpush1.bf16.msra.mxu0 %v228
    %844 = vmatprep.subr.bf16.mxu0 %v233
    %845 = vmatpush1.bf16.msra.mxu0 %v232
    %846 = vmatprep.subr.bf16.mxu0 %v237
    %847 = vmatpush1.bf16.msra.mxu0 %v236
    %848 = vmatprep.subr.bf16.mxu0 %v241
    %849 = vmatpush1.bf16.msra.mxu0 %v240
    %850 = vmatprep.subr.bf16.mxu0 0
    %851 = vmatpush1.bf16.msra.mxu0 0
    %852 = vmatprep.subr.bf16.mxu0 0
    %853 = vmatpush1.bf16.msra.mxu0 0
    %854 = vmatprep.subr.bf16.mxu0 0
    %855 = vmatpush1.bf16.msra.mxu0 0
    %856 = vmatprep.subr.bf16.mxu0 0
    %857 = vmatpush1.bf16.msra.mxu0 0
    %858 = vmatprep.subr.bf16.mxu0 0
    %859 = vmatpush1.bf16.msra.mxu0 0
    %860 = vmatprep.subr.bf16.mxu0 0
    %861 = vmatpush1.bf16.msra.mxu0 0
    %862 = vmatprep.subr.bf16.mxu0 0
    %863 = vmatpush1.bf16.msra.mxu0 0
    %864 = vmatprep.subr.bf16.mxu0 0
    %865 = vmatpush1.bf16.msra.mxu0 0
    %866 = vmatprep.mubr.bf16.mxu0 0
    %867 = vmatmul.mubr.bf16.gmra.mrb[0].mxu0 %v833
    %v868 = vpop.f32.mrb[0].mxu0
    %v869 = vadd.f32 0.0, %v868
    %v870 = vpop.f32.mrb[0].mxu0
    %v871 = vadd.f32 0.0, %v870
    %v872 = vpop.f32.mrb[0].mxu0
    %v873 = vpop.f32.mrb[0].mxu0
    %874 = vdwg.mxu0
    %875 = vmatprep.subr.bf16.mxu0 %v215
    %876 = vmatpush1.bf16.msra.mxu0 %v214
    %877 = vmatprep.subr.bf16.mxu0 %v219
    %878 = vmatpush1.bf16.msra.mxu0 %v218
    %879 = vmatprep.subr.bf16.mxu0 %v223
    %880 = vmatpush1.bf16.msra.mxu0 %v222
    %881 = vmatprep.subr.bf16.mxu0 %v227
    %882 = vmatpush1.bf16.msra.mxu0 %v226
    %883 = vmatprep.subr.bf16.mxu0 %v231
    %884 = vmatpush1.bf16.msra.mxu0 %v230
    %885 = vmatprep.subr.bf16.mxu0 %v235
    %886 = vmatpush1.bf16.msra.mxu0 %v234
    %887 = vmatprep.subr.bf16.mxu0 %v239
    %888 = vmatpush1.bf16.msra.mxu0 %v238
    %889 = vmatprep.subr.bf16.mxu0 %v243
    %890 = vmatpush1.bf16.msra.mxu0 %v242
    %891 = vmatprep.subr.bf16.mxu0 0
    %892 = vmatpush1.bf16.msra.mxu0 0
    %893 = vmatprep.subr.bf16.mxu0 0
    %894 = vmatpush1.bf16.msra.mxu0 0
    %895 = vmatprep.subr.bf16.mxu0 0
    %896 = vmatpush1.bf16.msra.mxu0 0
    %897 = vmatprep.subr.bf16.mxu0 0
    %898 = vmatpush1.bf16.msra.mxu0 0
    %899 = vmatprep.subr.bf16.mxu0 0
    %900 = vmatpush1.bf16.msra.mxu0 0
    %901 = vmatprep.subr.bf16.mxu0 0
    %902 = vmatpush1.bf16.msra.mxu0 0
    %903 = vmatprep.subr.bf16.mxu0 0
    %904 = vmatpush1.bf16.msra.mxu0 0
    %905 = vmatprep.subr.bf16.mxu0 0
    %906 = vmatpush1.bf16.msra.mxu0 0
    %907 = vmatprep.mubr.bf16.mxu0 0
    %908 = vmatmul.mubr.bf16.gmra.mrb[0].mxu0 %v833
    %v909 = vpop.f32.mrb[0].mxu0
    %v910 = vadd.f32 0.0, %v909
    %v911 = vpop.f32.mrb[0].mxu0
    %v912 = vadd.f32 0.0, %v911
    %v913 = vpop.f32.mrb[0].mxu0
    %v914 = vpop.f32.mrb[0].mxu0
    %915 = vdwg.mxu0
    %s916 = scalar_lea.vmem %s0, 160
    %v917 = vld [vmem:[%s916] sm:$0xff]
    %v918 = vld [vmem:[%s916 + $0x8] sm:$0xff]
    %v919 = vld [vmem:[%s916 + $0x10] sm:$0xff]
    %v920 = vld [vmem:[%s916 + $0x18] sm:$0xff]
    %v921 = vadd.f32 %v917, %v869
    %v922 = vadd.f32 %v918, %v871
    %v923 = vadd.f32 %v919, %v910
    %v924 = vadd.f32 %v920, %v912
    %v925 = vmul.f32 %v921, 0.5
    %v926 = vtanh.pop %v925
    %v927 = vadd.f32 %v926, 1.0
    %v928 = vmul.f32 %v927, 0.5
    %v929 = vmul.f32 %v922, 0.5
    %v930 = vtanh.pop %v929
    %v931 = vadd.f32 %v930, 1.0
    %v932 = vmul.f32 %v931, 0.5
    %v933 = vtanh.pop %v923
    %v934 = vmul.f32 %v924, 0.5
    %v935 = vtanh.pop %v934
    %v936 = vadd.f32 %v935, 1.0
    %v937 = vmul.f32 %v936, 0.5
    %v938 = vmul.f32 %v932, %v828
    %v939 = vmul.f32 %v928, %v933
    %v940 = vadd.f32 %v938, %v939
    %v941 = vtanh.pop %v940
    %v942 = vmul.f32 %v937, %v941
    %s943 = scalar_lea.vmem [#allocation4], 40
    %944 = vst [vmem:[%s943] sm:$0xff] %v942
    %v945 = vpack.c.bf16 %v942, %v942
    %946 = vmatprep.subr.bf16.mxu0 %v213
    %947 = vmatpush1.bf16.msra.mxu0 %v212
    %948 = vmatprep.subr.bf16.mxu0 %v217
    %949 = vmatpush1.bf16.msra.mxu0 %v216
    %950 = vmatprep.subr.bf16.mxu0 %v221
    %951 = vmatpush1.bf16.msra.mxu0 %v220
    %952 = vmatprep.subr.bf16.mxu0 %v225
    %953 = vmatpush1.bf16.msra.mxu0 %v224
    %954 = vmatprep.subr.bf16.mxu0 %v229
    %955 = vmatpush1.bf16.msra.mxu0 %v228
    %956 = vmatprep.subr.bf16.mxu0 %v233
    %957 = vmatpush1.bf16.msra.mxu0 %v232
    %958 = vmatprep.subr.bf16.mxu0 %v237
    %959 = vmatpush1.bf16.msra.mxu0 %v236
    %960 = vmatprep.subr.bf16.mxu0 %v241
    %961 = vmatpush1.bf16.msra.mxu0 %v240
    %962 = vmatprep.subr.bf16.mxu0 0
    %963 = vmatpush1.bf16.msra.mxu0 0
    %964 = vmatprep.subr.bf16.mxu0 0
    %965 = vmatpush1.bf16.msra.mxu0 0
    %966 = vmatprep.subr.bf16.mxu0 0
    %967 = vmatpush1.bf16.msra.mxu0 0
    %968 = vmatprep.subr.bf16.mxu0 0
    %969 = vmatpush1.bf16.msra.mxu0 0
    %970 = vmatprep.subr.bf16.mxu0 0
    %971 = vmatpush1.bf16.msra.mxu0 0
    %972 = vmatprep.subr.bf16.mxu0 0
    %973 = vmatpush1.bf16.msra.mxu0 0
    %974 = vmatprep.subr.bf16.mxu0 0
    %975 = vmatpush1.bf16.msra.mxu0 0
    %976 = vmatprep.subr.bf16.mxu0 0
    %977 = vmatpush1.bf16.msra.mxu0 0
    %978 = vmatprep.mubr.bf16.mxu0 0
    %979 = vmatmul.mubr.bf16.gmra.mrb[0].mxu0 %v945
    %v980 = vpop.f32.mrb[0].mxu0
    %v981 = vadd.f32 0.0, %v980
    %v982 = vpop.f32.mrb[0].mxu0
    %v983 = vadd.f32 0.0, %v982
    %v984 = vpop.f32.mrb[0].mxu0
    %v985 = vpop.f32.mrb[0].mxu0
    %986 = vdwg.mxu0
    %987 = vmatprep.subr.bf16.mxu0 %v215
    %988 = vmatpush1.bf16.msra.mxu0 %v214
    %989 = vmatprep.subr.bf16.mxu0 %v219
    %990 = vmatpush1.bf16.msra.mxu0 %v218
    %991 = vmatprep.subr.bf16.mxu0 %v223
    %992 = vmatpush1.bf16.msra.mxu0 %v222
    %993 = vmatprep.subr.bf16.mxu0 %v227
    %994 = vmatpush1.bf16.msra.mxu0 %v226
    %995 = vmatprep.subr.bf16.mxu0 %v231
    %996 = vmatpush1.bf16.msra.mxu0 %v230
    %997 = vmatprep.subr.bf16.mxu0 %v235
    %998 = vmatpush1.bf16.msra.mxu0 %v234
    %999 = vmatprep.subr.bf16.mxu0 %v239
    %1000 = vmatpush1.bf16.msra.mxu0 %v238
    %1001 = vmatprep.subr.bf16.mxu0 %v243
    %1002 = vmatpush1.bf16.msra.mxu0 %v242
    %1003 = vmatprep.subr.bf16.mxu0 0
    %1004 = vmatpush1.bf16.msra.mxu0 0
    %1005 = vmatprep.subr.bf16.mxu0 0
    %1006 = vmatpush1.bf16.msra.mxu0 0
    %1007 = vmatprep.subr.bf16.mxu0 0
    %1008 = vmatpush1.bf16.msra.mxu0 0
    %1009 = vmatprep.subr.bf16.mxu0 0
    %1010 = vmatpush1.bf16.msra.mxu0 0
    %1011 = vmatprep.subr.bf16.mxu0 0
    %1012 = vmatpush1.bf16.msra.mxu0 0
    %1013 = vmatprep.subr.bf16.mxu0 0
    %1014 = vmatpush1.bf16.msra.mxu0 0
    %1015 = vmatprep.subr.bf16.mxu0 0
    %1016 = vmatpush1.bf16.msra.mxu0 0
    %1017 = vmatprep.subr.bf16.mxu0 0
    %1018 = vmatpush1.bf16.msra.mxu0 0
    %1019 = vmatprep.mubr.bf16.mxu0 0
    %1020 = vmatmul.mubr.bf16.gmra.mrb[0].mxu0 %v945
    %v1021 = vpop.f32.mrb[0].mxu0
    %v1022 = vadd.f32 0.0, %v1021
    %v1023 = vpop.f32.mrb[0].mxu0
    %v1024 = vadd.f32 0.0, %v1023
    %v1025 = vpop.f32.mrb[0].mxu0
    %v1026 = vpop.f32.mrb[0].mxu0
    %1027 = vdwg.mxu0
    %s1028 = scalar_lea.vmem %s0, 192
    %v1029 = vld [vmem:[%s1028] sm:$0xff]
    %v1030 = vld [vmem:[%s1028 + $0x8] sm:$0xff]
    %v1031 = vld [vmem:[%s1028 + $0x10] sm:$0xff]
    %v1032 = vld [vmem:[%s1028 + $0x18] sm:$0xff]
    %v1033 = vadd.f32 %v1029, %v981
    %v1034 = vadd.f32 %v1030, %v983
    %v1035 = vadd.f32 %v1031, %v1022
    %v1036 = vadd.f32 %v1032, %v1024
    %v1037 = vmul.f32 %v1033, 0.5
    %v1038 = vtanh.pop %v1037
    %v1039 = vadd.f32 %v1038, 1.0
    %v1040 = vmul.f32 %v1039, 0.5
    %v1041 = vmul.f32 %v1034, 0.5
    %v1042 = vtanh.pop %v1041
    %v1043 = vadd.f32 %v1042, 1.0
    %v1044 = vmul.f32 %v1043, 0.5
    %v1045 = vtanh.pop %v1035
    %v1046 = vmul.f32 %v1036, 0.5
    %v1047 = vtanh.pop %v1046
    %v1048 = vadd.f32 %v1047, 1.0
    %v1049 = vmul.f32 %v1048, 0.5
    %v1050 = vmul.f32 %v1044, %v940
    %v1051 = vmul.f32 %v1040, %v1045
    %v1052 = vadd.f32 %v1050, %v1051
    %v1053 = vtanh.pop %v1052
    %v1054 = vmul.f32 %v1049, %v1053
    %s1055 = scalar_lea.vmem [#allocation4], 48
    %1056 = vst [vmem:[%s1055] sm:$0xff] %v1054
    %v1057 = vpack.c.bf16 %v1054, %v1054
    %1058 = vmatprep.subr.bf16.mxu0 %v213
    %1059 = vmatpush1.bf16.msra.mxu0 %v212
    %1060 = vmatprep.subr.bf16.mxu0 %v217
    %1061 = vmatpush1.bf16.msra.mxu0 %v216
    %1062 = vmatprep.subr.bf16.mxu0 %v221
    %1063 = vmatpush1.bf16.msra.mxu0 %v220
    %1064 = vmatprep.subr.bf16.mxu0 %v225
    %1065 = vmatpush1.bf16.msra.mxu0 %v224
    %1066 = vmatprep.subr.bf16.mxu0 %v229
    %1067 = vmatpush1.bf16.msra.mxu0 %v228
    %1068 = vmatprep.subr.bf16.mxu0 %v233
    %1069 = vmatpush1.bf16.msra.mxu0 %v232
    %1070 = vmatprep.subr.bf16.mxu0 %v237
    %1071 = vmatpush1.bf16.msra.mxu0 %v236
    %1072 = vmatprep.subr.bf16.mxu0 %v241
    %1073 = vmatpush1.bf16.msra.mxu0 %v240
    %1074 = vmatprep.subr.bf16.mxu0 0
    %1075 = vmatpush1.bf16.msra.mxu0 0
    %1076 = vmatprep.subr.bf16.mxu0 0
    %1077 = vmatpush1.bf16.msra.mxu0 0
    %1078 = vmatprep.subr.bf16.mxu0 0
    %1079 = vmatpush1.bf16.msra.mxu0 0
    %1080 = vmatprep.subr.bf16.mxu0 0
    %1081 = vmatpush1.bf16.msra.mxu0 0
    %1082 = vmatprep.subr.bf16.mxu0 0
    %1083 = vmatpush1.bf16.msra.mxu0 0
    %1084 = vmatprep.subr.bf16.mxu0 0
    %1085 = vmatpush1.bf16.msra.mxu0 0
    %1086 = vmatprep.subr.bf16.mxu0 0
    %1087 = vmatpush1.bf16.msra.mxu0 0
    %1088 = vmatprep.subr.bf16.mxu0 0
    %1089 = vmatpush1.bf16.msra.mxu0 0
    %1090 = vmatprep.mubr.bf16.mxu0 0
    %1091 = vmatmul.mubr.bf16.gmra.mrb[0].mxu0 %v1057
    %v1092 = vpop.f32.mrb[0].mxu0
    %v1093 = vadd.f32 0.0, %v1092
    %v1094 = vpop.f32.mrb[0].mxu0
    %v1095 = vadd.f32 0.0, %v1094
    %v1096 = vpop.f32.mrb[0].mxu0
    %v1097 = vpop.f32.mrb[0].mxu0
    %1098 = vdwg.mxu0
    %1099 = vmatprep.subr.bf16.mxu0 %v215
    %1100 = vmatpush1.bf16.msra.mxu0 %v214
    %1101 = vmatprep.subr.bf16.mxu0 %v219
    %1102 = vmatpush1.bf16.msra.mxu0 %v218
    %1103 = vmatprep.subr.bf16.mxu0 %v223
    %1104 = vmatpush1.bf16.msra.mxu0 %v222
    %1105 = vmatprep.subr.bf16.mxu0 %v227
    %1106 = vmatpush1.bf16.msra.mxu0 %v226
    %1107 = vmatprep.subr.bf16.mxu0 %v231
    %1108 = vmatpush1.bf16.msra.mxu0 %v230
    %1109 = vmatprep.subr.bf16.mxu0 %v235
    %1110 = vmatpush1.bf16.msra.mxu0 %v234
    %1111 = vmatprep.subr.bf16.mxu0 %v239
    %1112 = vmatpush1.bf16.msra.mxu0 %v238
    %1113 = vmatprep.subr.bf16.mxu0 %v243
    %1114 = vmatpush1.bf16.msra.mxu0 %v242
    %1115 = vmatprep.subr.bf16.mxu0 0
    %1116 = vmatpush1.bf16.msra.mxu0 0
    %1117 = vmatprep.subr.bf16.mxu0 0
    %1118 = vmatpush1.bf16.msra.mxu0 0
    %1119 = vmatprep.subr.bf16.mxu0 0
    %1120 = vmatpush1.bf16.msra.mxu0 0
    %1121 = vmatprep.subr.bf16.mxu0 0
    %1122 = vmatpush1.bf16.msra.mxu0 0
    %1123 = vmatprep.subr.bf16.mxu0 0
    %1124 = vmatpush1.bf16.msra.mxu0 0
    %1125 = vmatprep.subr.bf16.mxu0 0
    %1126 = vmatpush1.bf16.msra.mxu0 0
    %1127 = vmatprep.subr.bf16.mxu0 0
    %1128 = vmatpush1.bf16.msra.mxu0 0
    %1129 = vmatprep.subr.bf16.mxu0 0
    %1130 = vmatpush1.bf16.msra.mxu0 0
    %1131 = vmatprep.mubr.bf16.mxu0 0
    %1132 = vmatmul.mubr.bf16.gmra.mrb[0].mxu0 %v1057
    %v1133 = vpop.f32.mrb[0].mxu0
    %v1134 = vadd.f32 0.0, %v1133
    %v1135 = vpop.f32.mrb[0].mxu0
    %v1136 = vadd.f32 0.0, %v1135
    %v1137 = vpop.f32.mrb[0].mxu0
    %v1138 = vpop.f32.mrb[0].mxu0
    %1139 = vdwg.mxu0
    %s1140 = scalar_lea.vmem %s0, 224
    %v1141 = vld [vmem:[%s1140] sm:$0xff]
    %v1142 = vld [vmem:[%s1140 + $0x8] sm:$0xff]
    %v1143 = vld [vmem:[%s1140 + $0x10] sm:$0xff]
    %v1144 = vld [vmem:[%s1140 + $0x18] sm:$0xff]
    %v1145 = vadd.f32 %v1141, %v1093
    %v1146 = vadd.f32 %v1142, %v1095
    %v1147 = vadd.f32 %v1143, %v1134
    %v1148 = vadd.f32 %v1144, %v1136
    %v1149 = vmul.f32 %v1145, 0.5
    %v1150 = vtanh.pop %v1149
    %v1151 = vadd.f32 %v1150, 1.0
    %v1152 = vmul.f32 %v1151, 0.5
    %v1153 = vmul.f32 %v1146, 0.5
    %v1154 = vtanh.pop %v1153
    %v1155 = vadd.f32 %v1154, 1.0
    %v1156 = vmul.f32 %v1155, 0.5
    %v1157 = vtanh.pop %v1147
    %v1158 = vmul.f32 %v1148, 0.5
    %v1159 = vtanh.pop %v1158
    %v1160 = vadd.f32 %v1159, 1.0
    %v1161 = vmul.f32 %v1160, 0.5
    %v1162 = vmul.f32 %v1156, %v1052
    %v1163 = vmul.f32 %v1152, %v1157
    %v1164 = vadd.f32 %v1162, %v1163
    %v1165 = vtanh.pop %v1164
    %v1166 = vmul.f32 %v1161, %v1165
    %s1167 = scalar_lea.vmem [#allocation4], 56
    %1168 = vst [vmem:[%s1167] sm:$0xff] %v1166
    %1169 = vst [vmem:[#allocation2] sm:$0xff] %v1166
    %1170 = vst [vmem:[#allocation3] sm:$0xff] %v1164
    %s1171 = scalar_lea.vmem %s2, 256
    %v1172 = vld [vmem:[%s1171] sm:$0xff]
    %v1173 = vld [vmem:[%s1171 + $0x8] sm:$0xff]
    %v1174 = vld [vmem:[%s1171 + $0x10] sm:$0xff]
    %v1175 = vld [vmem:[%s1171 + $0x18] sm:$0xff]
    %v1176 = vld [vmem:[%s1171 + $0x20] sm:$0xff]
    %v1177 = vld [vmem:[%s1171 + $0x28] sm:$0xff]
    %v1178 = vld [vmem:[%s1171 + $0x30] sm:$0xff]
    %v1179 = vld [vmem:[%s1171 + $0x38] sm:$0xff]
    %v1180 = vld [vmem:[%s1171 + $0x40] sm:$0xff]
    %v1181 = vld [vmem:[%s1171 + $0x48] sm:$0xff]
    %v1182 = vld [vmem:[%s1171 + $0x50] sm:$0xff]
    %v1183 = vld [vmem:[%s1171 + $0x58] sm:$0xff]
    %v1184 = vld [vmem:[%s1171 + $0x60] sm:$0xff]
    %v1185 = vld [vmem:[%s1171 + $0x68] sm:$0xff]
    %v1186 = vld [vmem:[%s1171 + $0x70] sm:$0xff]
    %v1187 = vld [vmem:[%s1171 + $0x78] sm:$0xff]
    %v1188 = vld [vmem:[%s1171 + $0x80] sm:$0xff]
    %v1189 = vld [vmem:[%s1171 + $0x88] sm:$0xff]
    %v1190 = vld [vmem:[%s1171 + $0x90] sm:$0xff]
    %v1191 = vld [vmem:[%s1171 + $0x98] sm:$0xff]
    %v1192 = vld [vmem:[%s1171 + $0xa0] sm:$0xff]
    %v1193 = vld [vmem:[%s1171 + $0xa8] sm:$0xff]
    %v1194 = vld [vmem:[%s1171 + $0xb0] sm:$0xff]
    %v1195 = vld [vmem:[%s1171 + $0xb8] sm:$0xff]
    %v1196 = vld [vmem:[%s1171 + $0xc0] sm:$0xff]
    %v1197 = vld [vmem:[%s1171 + $0xc8] sm:$0xff]
    %v1198 = vld [vmem:[%s1171 + $0xd0] sm:$0xff]
    %v1199 = vld [vmem:[%s1171 + $0xd8] sm:$0xff]
    %v1200 = vld [vmem:[%s1171 + $0xe0] sm:$0xff]
    %v1201 = vld [vmem:[%s1171 + $0xe8] sm:$0xff]
    %v1202 = vld [vmem:[%s1171 + $0xf0] sm:$0xff]
    %v1203 = vld [vmem:[%s1171 + $0xf8] sm:$0xff]
    %s1204 = scalar_lea.vmem %s1, 256
    %v1205 = vld [vmem:[%s1204] sm:$0xff]
    %v1206 = vld [vmem:[%s1204 + $0x8] sm:$0xff]
    %v1207 = vld [vmem:[%s1204 + $0x10] sm:$0xff]
    %v1208 = vld [vmem:[%s1204 + $0x18] sm:$0xff]
    %v1209 = vld [vmem:[%s1204 + $0x20] sm:$0xff]
    %v1210 = vld [vmem:[%s1204 + $0x28] sm:$0xff]
    %v1211 = vld [vmem:[%s1204 + $0x30] sm:$0xff]
    %v1212 = vld [vmem:[%s1204 + $0x38] sm:$0xff]
    %v1213 = vld [vmem:[%s1204 + $0x40] sm:$0xff]
    %v1214 = vld [vmem:[%s1204 + $0x48] sm:$0xff]
    %v1215 = vld [vmem:[%s1204 + $0x50] sm:$0xff]
    %v1216 = vld [vmem:[%s1204 + $0x58] sm:$0xff]
    %v1217 = vld [vmem:[%s1204 + $0x60] sm:$0xff]
    %v1218 = vld [vmem:[%s1204 + $0x68] sm:$0xff]
    %v1219 = vld [vmem:[%s1204 + $0x70] sm:$0xff]
    %v1220 = vld [vmem:[%s1204 + $0x78] sm:$0xff]
    %v1221 = vld [vmem:[%s1204 + $0x80] sm:$0xff]
    %v1222 = vld [vmem:[%s1204 + $0x88] sm:$0xff]
    %v1223 = vld [vmem:[%s1204 + $0x90] sm:$0xff]
    %v1224 = vld [vmem:[%s1204 + $0x98] sm:$0xff]
    %v1225 = vld [vmem:[%s1204 + $0xa0] sm:$0xff]
    %v1226 = vld [vmem:[%s1204 + $0xa8] sm:$0xff]
    %v1227 = vld [vmem:[%s1204 + $0xb0] sm:$0xff]
    %v1228 = vld [vmem:[%s1204 + $0xb8] sm:$0xff]
    %v1229 = vld [vmem:[%s1204 + $0xc0] sm:$0xff]
    %v1230 = vld [vmem:[%s1204 + $0xc8] sm:$0xff]
    %v1231 = vld [vmem:[%s1204 + $0xd0] sm:$0xff]
    %v1232 = vld [vmem:[%s1204 + $0xd8] sm:$0xff]
    %v1233 = vld [vmem:[%s1204 + $0xe0] sm:$0xff]
    %v1234 = vld [vmem:[%s1204 + $0xe8] sm:$0xff]
    %v1235 = vld [vmem:[%s1204 + $0xf0] sm:$0xff]
    %v1236 = vld [vmem:[%s1204 + $0xf8] sm:$0xff]
    %s1237 = scalar_lea.vmem %s3, 4
    %v1238 = vld [vmem:[%s1237] sm:$0xf]
    %v1240 = vlaneseq
    %v1241 = vshrl.u32 %v1240, 7
    %v1242 = vsub.s32 0, %v1241
    %v1243 = vrot.slane %v1238, %v1242
    %v1244 = vlaneseq
    %v1245 = vshrl.u32 %v1244, 7
    %v1246 = vsub.s32 1, %v1245
    %v1247 = vrot.slane %v1238, %v1246
    %v1248 = vlaneseq
    %v1249 = vshrl.u32 %v1248, 7
    %v1250 = vsub.s32 2, %v1249
    %v1251 = vrot.slane %v1238, %v1250
    %v1252 = vlaneseq
    %v1253 = vshrl.u32 %v1252, 7
    %v1254 = vsub.s32 3, %v1253
    %v1255 = vrot.slane %v1238, %v1254
    %s1260 = scalar_lea.vmem [#allocation2], 8
    %v1261 = vld [vmem:[%s1260] sm:$0xff]
    %s1262 = scalar_lea.vmem [#allocation3], 8
    %v1263 = vld [vmem:[%s1262] sm:$0xff]
    %v1264 = vpack.c.bf16 %v1261, %v1261
    %v1297 = vunpack.c.l.b16 %v1172
    %v1298 = vunpack.c.h.b16 %v1172
    %v1299 = vunpack.c.l.b16 %v1173
    %v1300 = vunpack.c.h.b16 %v1173
    %v1301 = vunpack.c.l.b16 %v1174
    %v1302 = vunpack.c.h.b16 %v1174
    %v1303 = vunpack.c.l.b16 %v1175
    %v1304 = vunpack.c.h.b16 %v1175
    %v1305 = vunpack.c.l.b16 %v1176
    %v1306 = vunpack.c.h.b16 %v1176
    %v1307 = vunpack.c.l.b16 %v1177
    %v1308 = vunpack.c.h.b16 %v1177
    %v1309 = vunpack.c.l.b16 %v1178
    %v1310 = vunpack.c.h.b16 %v1178
    %v1311 = vunpack.c.l.b16 %v1179
    %v1312 = vunpack.c.h.b16 %v1179
    %v1313 = vunpack.c.l.b16 %v1180
    %v1314 = vunpack.c.h.b16 %v1180
    %v1315 = vunpack.c.l.b16 %v1181
    %v1316 = vunpack.c.h.b16 %v1181
    %v1317 = vunpack.c.l.b16 %v1182
    %v1318 = vunpack.c.h.b16 %v1182
    %v1319 = vunpack.c.l.b16 %v1183
    %v1320 = vunpack.c.h.b16 %v1183
    %v1321 = vunpack.c.l.b16 %v1184
    %v1322 = vunpack.c.h.b16 %v1184
    %v1323 = vunpack.c.l.b16 %v1185
    %v1324 = vunpack.c.h.b16 %v1185
    %v1325 = vunpack.c.l.b16 %v1186
    %v1326 = vunpack.c.h.b16 %v1186
    %v1327 = vunpack.c.l.b16 %v1187
    %v1328 = vunpack.c.h.b16 %v1187
    %v1329 = vunpack.c.l.b16 %v1188
    %v1330 = vunpack.c.h.b16 %v1188
    %v1331 = vunpack.c.l.b16 %v1189
    %v1332 = vunpack.c.h.b16 %v1189
    %v1333 = vunpack.c.l.b16 %v1190
    %v1334 = vunpack.c.h.b16 %v1190
    %v1335 = vunpack.c.l.b16 %v1191
    %v1336 = vunpack.c.h.b16 %v1191
    %v1337 = vunpack.c.l.b16 %v1192
    %v1338 = vunpack.c.h.b16 %v1192
    %v1339 = vunpack.c.l.b16 %v1193
    %v1340 = vunpack.c.h.b16 %v1193
    %v1341 = vunpack.c.l.b16 %v1194
    %v1342 = vunpack.c.h.b16 %v1194
    %v1343 = vunpack.c.l.b16 %v1195
    %v1344 = vunpack.c.h.b16 %v1195
    %v1345 = vunpack.c.l.b16 %v1196
    %v1346 = vunpack.c.h.b16 %v1196
    %v1347 = vunpack.c.l.b16 %v1197
    %v1348 = vunpack.c.h.b16 %v1197
    %v1349 = vunpack.c.l.b16 %v1198
    %v1350 = vunpack.c.h.b16 %v1198
    %v1351 = vunpack.c.l.b16 %v1199
    %v1352 = vunpack.c.h.b16 %v1199
    %v1353 = vunpack.c.l.b16 %v1200
    %v1354 = vunpack.c.h.b16 %v1200
    %v1355 = vunpack.c.l.b16 %v1201
    %v1356 = vunpack.c.h.b16 %v1201
    %v1357 = vunpack.c.l.b16 %v1202
    %v1358 = vunpack.c.h.b16 %v1202
    %v1359 = vunpack.c.l.b16 %v1203
    %v1360 = vunpack.c.h.b16 %v1203
    %v1361 = vpack.c.b16 %v1301, %v1297
    %v1362 = vpack.c.b16 %v1302, %v1298
    %v1363 = vpack.c.b16 %v1303, %v1299
    %v1364 = vpack.c.b16 %v1304, %v1300
    %v1365 = vpack.c.b16 %v1309, %v1305
    %v1366 = vpack.c.b16 %v1310, %v1306
    %v1367 = vpack.c.b16 %v1311, %v1307
    %v1368 = vpack.c.b16 %v1312, %v1308
    %v1369 = vpack.c.b16 %v1317, %v1313
    %v1370 = vpack.c.b16 %v1318, %v1314
    %v1371 = vpack.c.b16 %v1319, %v1315
    %v1372 = vpack.c.b16 %v1320, %v1316
    %v1373 = vpack.c.b16 %v1325, %v1321
    %v1374 = vpack.c.b16 %v1326, %v1322
    %v1375 = vpack.c.b16 %v1327, %v1323
    %v1376 = vpack.c.b16 %v1328, %v1324
    %v1377 = vpack.c.b16 %v1333, %v1329
    %v1378 = vpack.c.b16 %v1334, %v1330
    %v1379 = vpack.c.b16 %v1335, %v1331
    %v1380 = vpack.c.b16 %v1336, %v1332
    %v1381 = vpack.c.b16 %v1341, %v1337
    %v1382 = vpack.c.b16 %v1342, %v1338
    %v1383 = vpack.c.b16 %v1343, %v1339
    %v1384 = vpack.c.b16 %v1344, %v1340
    %v1385 = vpack.c.b16 %v1349, %v1345
    %v1386 = vpack.c.b16 %v1350, %v1346
    %v1387 = vpack.c.b16 %v1351, %v1347
    %v1388 = vpack.c.b16 %v1352, %v1348
    %v1389 = vpack.c.b16 %v1357, %v1353
    %v1390 = vpack.c.b16 %v1358, %v1354
    %v1391 = vpack.c.b16 %v1359, %v1355
    %v1392 = vpack.c.b16 %v1360, %v1356
    %1425 = vmatprep.subr.bf16.mxu0 %v1362
    %1426 = vmatpush1.bf16.msra.mxu0 %v1361
    %1427 = vmatprep.subr.bf16.mxu0 %v1366
    %1428 = vmatpush1.bf16.msra.mxu0 %v1365
    %1429 = vmatprep.subr.bf16.mxu0 %v1370
    %1430 = vmatpush1.bf16.msra.mxu0 %v1369
    %1431 = vmatprep.subr.bf16.mxu0 %v1374
    %1432 = vmatpush1.bf16.msra.mxu0 %v1373
    %1433 = vmatprep.subr.bf16.mxu0 %v1378
    %1434 = vmatpush1.bf16.msra.mxu0 %v1377
    %1435 = vmatprep.subr.bf16.mxu0 %v1382
    %1436 = vmatpush1.bf16.msra.mxu0 %v1381
    %1437 = vmatprep.subr.bf16.mxu0 %v1386
    %1438 = vmatpush1.bf16.msra.mxu0 %v1385
    %1439 = vmatprep.subr.bf16.mxu0 %v1390
    %1440 = vmatpush1.bf16.msra.mxu0 %v1389
    %1441 = vmatprep.subr.bf16.mxu0 0
    %1442 = vmatpush1.bf16.msra.mxu0 0
    %1443 = vmatprep.subr.bf16.mxu0 0
    %1444 = vmatpush1.bf16.msra.mxu0 0
    %1445 = vmatprep.subr.bf16.mxu0 0
    %1446 = vmatpush1.bf16.msra.mxu0 0
    %1447 = vmatprep.subr.bf16.mxu0 0
    %1448 = vmatpush1.bf16.msra.mxu0 0
    %1449 = vmatprep.subr.bf16.mxu0 0
    %1450 = vmatpush1.bf16.msra.mxu0 0
    %1451 = vmatprep.subr.bf16.mxu0 0
    %1452 = vmatpush1.bf16.msra.mxu0 0
    %1453 = vmatprep.subr.bf16.mxu0 0
    %1454 = vmatpush1.bf16.msra.mxu0 0
    %1455 = vmatprep.subr.bf16.mxu0 0
    %1456 = vmatpush1.bf16.msra.mxu0 0
    %1457 = vmatprep.mubr.bf16.mxu0 0
    %1458 = vmatmul.mubr.bf16.gmra.mrb[0].mxu0 %v1264
    %v1459 = vpop.f32.mrb[0].mxu0
    %v1460 = vadd.f32 0.0, %v1459
    %v1461 = vpop.f32.mrb[0].mxu0
    %v1462 = vadd.f32 0.0, %v1461
    %v1463 = vpop.f32.mrb[0].mxu0
    %v1464 = vpop.f32.mrb[0].mxu0
    %1465 = vdwg.mxu0
    %1466 = vmatprep.subr.bf16.mxu0 %v1364
    %1467 = vmatpush1.bf16.msra.mxu0 %v1363
    %1468 = vmatprep.subr.bf16.mxu0 %v1368
    %1469 = vmatpush1.bf16.msra.mxu0 %v1367
    %1470 = vmatprep.subr.bf16.mxu0 %v1372
    %1471 = vmatpush1.bf16.msra.mxu0 %v1371
    %1472 = vmatprep.subr.bf16.mxu0 %v1376
    %1473 = vmatpush1.bf16.msra.mxu0 %v1375
    %1474 = vmatprep.subr.bf16.mxu0 %v1380
    %1475 = vmatpush1.bf16.msra.mxu0 %v1379
    %1476 = vmatprep.subr.bf16.mxu0 %v1384
    %1477 = vmatpush1.bf16.msra.mxu0 %v1383
    %1478 = vmatprep.subr.bf16.mxu0 %v1388
    %1479 = vmatpush1.bf16.msra.mxu0 %v1387
    %1480 = vmatprep.subr.bf16.mxu0 %v1392
    %1481 = vmatpush1.bf16.msra.mxu0 %v1391
    %1482 = vmatprep.subr.bf16.mxu0 0
    %1483 = vmatpush1.bf16.msra.mxu0 0
    %1484 = vmatprep.subr.bf16.mxu0 0
    %1485 = vmatpush1.bf16.msra.mxu0 0
    %1486 = vmatprep.subr.bf16.mxu0 0
    %1487 = vmatpush1.bf16.msra.mxu0 0
    %1488 = vmatprep.subr.bf16.mxu0 0
    %1489 = vmatpush1.bf16.msra.mxu0 0
    %1490 = vmatprep.subr.bf16.mxu0 0
    %1491 = vmatpush1.bf16.msra.mxu0 0
    %1492 = vmatprep.subr.bf16.mxu0 0
    %1493 = vmatpush1.bf16.msra.mxu0 0
    %1494 = vmatprep.subr.bf16.mxu0 0
    %1495 = vmatpush1.bf16.msra.mxu0 0
    %1496 = vmatprep.subr.bf16.mxu0 0
    %1497 = vmatpush1.bf16.msra.mxu0 0
    %1498 = vmatprep.mubr.bf16.mxu0 0
    %1499 = vmatmul.mubr.bf16.gmra.mrb[0].mxu0 %v1264
    %v1500 = vpop.f32.mrb[0].mxu0
    %v1501 = vadd.f32 0.0, %v1500
    %v1502 = vpop.f32.mrb[0].mxu0
    %v1503 = vadd.f32 0.0, %v1502
    %v1504 = vpop.f32.mrb[0].mxu0
    %v1505 = vpop.f32.mrb[0].mxu0
    %1506 = vdwg.mxu0
    %v1507 = vld [vmem:[#allocation4] sm:$0xff]
    %v1508 = vpack.c.bf16 %v1507, %v1507
    %v1541 = vunpack.c.l.b16 %v1205
    %v1542 = vunpack.c.h.b16 %v1205
    %v1543 = vunpack.c.l.b16 %v1206
    %v1544 = vunpack.c.h.b16 %v1206
    %v1545 = vunpack.c.l.b16 %v1207
    %v1546 = vunpack.c.h.b16 %v1207
    %v1547 = vunpack.c.l.b16 %v1208
    %v1548 = vunpack.c.h.b16 %v1208
    %v1549 = vunpack.c.l.b16 %v1209
    %v1550 = vunpack.c.h.b16 %v1209
    %v1551 = vunpack.c.l.b16 %v1210
    %v1552 = vunpack.c.h.b16 %v1210
    %v1553 = vunpack.c.l.b16 %v1211
    %v1554 = vunpack.c.h.b16 %v1211
    %v1555 = vunpack.c.l.b16 %v1212
    %v1556 = vunpack.c.h.b16 %v1212
    %v1557 = vunpack.c.l.b16 %v1213
    %v1558 = vunpack.c.h.b16 %v1213
    %v1559 = vunpack.c.l.b16 %v1214
    %v1560 = vunpack.c.h.b16 %v1214
    %v1561 = vunpack.c.l.b16 %v1215
    %v1562 = vunpack.c.h.b16 %v1215
    %v1563 = vunpack.c.l.b16 %v1216
    %v1564 = vunpack.c.h.b16 %v1216
    %v1565 = vunpack.c.l.b16 %v1217
    %v1566 = vunpack.c.h.b16 %v1217
    %v1567 = vunpack.c.l.b16 %v1218
    %v1568 = vunpack.c.h.b16 %v1218
    %v1569 = vunpack.c.l.b16 %v1219
    %v1570 = vunpack.c.h.b16 %v1219
    %v1571 = vunpack.c.l.b16 %v1220
    %v1572 = vunpack.c.h.b16 %v1220
    %v1573 = vunpack.c.l.b16 %v1221
    %v1574 = vunpack.c.h.b16 %v1221
    %v1575 = vunpack.c.l.b16 %v1222
    %v1576 = vunpack.c.h.b16 %v1222
    %v1577 = vunpack.c.l.b16 %v1223
    %v1578 = vunpack.c.h.b16 %v1223
    %v1579 = vunpack.c.l.b16 %v1224
    %v1580 = vunpack.c.h.b16 %v1224
    %v1581 = vunpack.c.l.b16 %v1225
    %v1582 = vunpack.c.h.b16 %v1225
    %v1583 = vunpack.c.l.b16 %v1226
    %v1584 = vunpack.c.h.b16 %v1226
    %v1585 = vunpack.c.l.b16 %v1227
    %v1586 = vunpack.c.h.b16 %v1227
    %v1587 = vunpack.c.l.b16 %v1228
    %v1588 = vunpack.c.h.b16 %v1228
    %v1589 = vunpack.c.l.b16 %v1229
    %v1590 = vunpack.c.h.b16 %v1229
    %v1591 = vunpack.c.l.b16 %v1230
    %v1592 = vunpack.c.h.b16 %v1230
    %v1593 = vunpack.c.l.b16 %v1231
    %v1594 = vunpack.c.h.b16 %v1231
    %v1595 = vunpack.c.l.b16 %v1232
    %v1596 = vunpack.c.h.b16 %v1232
    %v1597 = vunpack.c.l.b16 %v1233
    %v1598 = vunpack.c.h.b16 %v1233
    %v1599 = vunpack.c.l.b16 %v1234
    %v1600 = vunpack.c.h.b16 %v1234
    %v1601 = vunpack.c.l.b16 %v1235
    %v1602 = vunpack.c.h.b16 %v1235
    %v1603 = vunpack.c.l.b16 %v1236
    %v1604 = vunpack.c.h.b16 %v1236
    %v1605 = vpack.c.b16 %v1545, %v1541
    %v1606 = vpack.c.b16 %v1546, %v1542
    %v1607 = vpack.c.b16 %v1547, %v1543
    %v1608 = vpack.c.b16 %v1548, %v1544
    %v1609 = vpack.c.b16 %v1553, %v1549
    %v1610 = vpack.c.b16 %v1554, %v1550
    %v1611 = vpack.c.b16 %v1555, %v1551
    %v1612 = vpack.c.b16 %v1556, %v1552
    %v1613 = vpack.c.b16 %v1561, %v1557
    %v1614 = vpack.c.b16 %v1562, %v1558
    %v1615 = vpack.c.b16 %v1563, %v1559
    %v1616 = vpack.c.b16 %v1564, %v1560
    %v1617 = vpack.c.b16 %v1569, %v1565
    %v1618 = vpack.c.b16 %v1570, %v1566
    %v1619 = vpack.c.b16 %v1571, %v1567
    %v1620 = vpack.c.b16 %v1572, %v1568
    %v1621 = vpack.c.b16 %v1577, %v1573
    %v1622 = vpack.c.b16 %v1578, %v1574
    %v1623 = vpack.c.b16 %v1579, %v1575
    %v1624 = vpack.c.b16 %v1580, %v1576
    %v1625 = vpack.c.b16 %v1585, %v1581
    %v1626 = vpack.c.b16 %v1586, %v1582
    %v1627 = vpack.c.b16 %v1587, %v1583
    %v1628 = vpack.c.b16 %v1588, %v1584
    %v1629 = vpack.c.b16 %v1593, %v1589
    %v1630 = vpack.c.b16 %v1594, %v1590
    %v1631 = vpack.c.b16 %v1595, %v1591
    %v1632 = vpack.c.b16 %v1596, %v1592
    %v1633 = vpack.c.b16 %v1601, %v1597
    %v1634 = vpack.c.b16 %v1602, %v1598
    %v1635 = vpack.c.b16 %v1603, %v1599
    %v1636 = vpack.c.b16 %v1604, %v1600
    %1669 = vmatprep.subr.bf16.mxu0 %v1606
    %1670 = vmatpush1.bf16.msra.mxu0 %v1605
    %1671 = vmatprep.subr.bf16.mxu0 %v1610
    %1672 = vmatpush1.bf16.msra.mxu0 %v1609
    %1673 = vmatprep.subr.bf16.mxu0 %v1614
    %1674 = vmatpush1.bf16.msra.mxu0 %v1613
    %1675 = vmatprep.subr.bf16.mxu0 %v1618
    %1676 = vmatpush1.bf16.msra.mxu0 %v1617
    %1677 = vmatprep.subr.bf16.mxu0 %v1622
    %1678 = vmatpush1.bf16.msra.mxu0 %v1621
    %1679 = vmatprep.subr.bf16.mxu0 %v1626
    %1680 = vmatpush1.bf16.msra.mxu0 %v1625
    %1681 = vmatprep.subr.bf16.mxu0 %v1630
    %1682 = vmatpush1.bf16.msra.mxu0 %v1629
    %1683 = vmatprep.subr.bf16.mxu0 %v1634
    %1684 = vmatpush1.bf16.msra.mxu0 %v1633
    %1685 = vmatprep.subr.bf16.mxu0 0
    %1686 = vmatpush1.bf16.msra.mxu0 0
    %1687 = vmatprep.subr.bf16.mxu0 0
    %1688 = vmatpush1.bf16.msra.mxu0 0
    %1689 = vmatprep.subr.bf16.mxu0 0
    %1690 = vmatpush1.bf16.msra.mxu0 0
    %1691 = vmatprep.subr.bf16.mxu0 0
    %1692 = vmatpush1.bf16.msra.mxu0 0
    %1693 = vmatprep.subr.bf16.mxu0 0
    %1694 = vmatpush1.bf16.msra.mxu0 0
    %1695 = vmatprep.subr.bf16.mxu0 0
    %1696 = vmatpush1.bf16.msra.mxu0 0
    %1697 = vmatprep.subr.bf16.mxu0 0
    %1698 = vmatpush1.bf16.msra.mxu0 0
    %1699 = vmatprep.subr.bf16.mxu0 0
    %1700 = vmatpush1.bf16.msra.mxu0 0
    %1701 = vmatprep.mubr.bf16.mxu0 0
    %1702 = vmatmul.mubr.bf16.gmra.mrb[0].mxu0 %v1508
    %v1703 = vpop.f32.mrb[0].mxu0
    %v1704 = vadd.f32 %v1460, %v1703
    %v1705 = vpop.f32.mrb[0].mxu0
    %v1706 = vadd.f32 %v1462, %v1705
    %v1707 = vpop.f32.mrb[0].mxu0
    %v1708 = vpop.f32.mrb[0].mxu0
    %1709 = vdwg.mxu0
    %1710 = vmatprep.subr.bf16.mxu0 %v1608
    %1711 = vmatpush1.bf16.msra.mxu0 %v1607
    %1712 = vmatprep.subr.bf16.mxu0 %v1612
    %1713 = vmatpush1.bf16.msra.mxu0 %v1611
    %1714 = vmatprep.subr.bf16.mxu0 %v1616
    %1715 = vmatpush1.bf16.msra.mxu0 %v1615
    %1716 = vmatprep.subr.bf16.mxu0 %v1620
    %1717 = vmatpush1.bf16.msra.mxu0 %v1619
    %1718 = vmatprep.subr.bf16.mxu0 %v1624
    %1719 = vmatpush1.bf16.msra.mxu0 %v1623
    %1720 = vmatprep.subr.bf16.mxu0 %v1628
    %1721 = vmatpush1.bf16.msra.mxu0 %v1627
    %1722 = vmatprep.subr.bf16.mxu0 %v1632
    %1723 = vmatpush1.bf16.msra.mxu0 %v1631
    %1724 = vmatprep.subr.bf16.mxu0 %v1636
    %1725 = vmatpush1.bf16.msra.mxu0 %v1635
    %1726 = vmatprep.subr.bf16.mxu0 0
    %1727 = vmatpush1.bf16.msra.mxu0 0
    %1728 = vmatprep.subr.bf16.mxu0 0
    %1729 = vmatpush1.bf16.msra.mxu0 0
    %1730 = vmatprep.subr.bf16.mxu0 0
    %1731 = vmatpush1.bf16.msra.mxu0 0
    %1732 = vmatprep.subr.bf16.mxu0 0
    %1733 = vmatpush1.bf16.msra.mxu0 0
    %1734 = vmatprep.subr.bf16.mxu0 0
    %1735 = vmatpush1.bf16.msra.mxu0 0
    %1736 = vmatprep.subr.bf16.mxu0 0
    %1737 = vmatpush1.bf16.msra.mxu0 0
    %1738 = vmatprep.subr.bf16.mxu0 0
    %1739 = vmatpush1.bf16.msra.mxu0 0
    %1740 = vmatprep.subr.bf16.mxu0 0
    %1741 = vmatpush1.bf16.msra.mxu0 0
    %1742 = vmatprep.mubr.bf16.mxu0 0
    %1743 = vmatmul.mubr.bf16.gmra.mrb[0].mxu0 %v1508
    %v1744 = vpop.f32.mrb[0].mxu0
    %v1745 = vadd.f32 %v1501, %v1744
    %v1746 = vpop.f32.mrb[0].mxu0
    %v1747 = vadd.f32 %v1503, %v1746
    %v1748 = vpop.f32.mrb[0].mxu0
    %v1749 = vpop.f32.mrb[0].mxu0
    %1750 = vdwg.mxu0
    %v1751 = vadd.f32 %v1704, %v1243
    %v1752 = vadd.f32 %v1706, %v1247
    %v1753 = vadd.f32 %v1745, %v1251
    %v1754 = vadd.f32 %v1747, %v1255
    %v1755 = vmul.f32 %v1751, 0.5
    %v1756 = vtanh.pop %v1755
    %v1757 = vadd.f32 %v1756, 1.0
    %v1758 = vmul.f32 %v1757, 0.5
    %v1759 = vmul.f32 %v1752, 0.5
    %v1760 = vtanh.pop %v1759
    %v1761 = vadd.f32 %v1760, 1.0
    %v1762 = vmul.f32 %v1761, 0.5
    %v1763 = vtanh.pop %v1753
    %v1764 = vmul.f32 %v1754, 0.5
    %v1765 = vtanh.pop %v1764
    %v1766 = vadd.f32 %v1765, 1.0
    %v1767 = vmul.f32 %v1766, 0.5
    %v1768 = vmul.f32 %v1762, %v1263
    %v1769 = vmul.f32 %v1758, %v1763
    %v1770 = vadd.f32 %v1768, %v1769
    %v1771 = vtanh.pop %v1770
    %v1772 = vmul.f32 %v1767, %v1771
    %v1773 = vpack.c.bf16 %v1772, %v1772
    %1774 = vmatprep.subr.bf16.mxu0 %v1362
    %1775 = vmatpush1.bf16.msra.mxu0 %v1361
    %1776 = vmatprep.subr.bf16.mxu0 %v1366
    %1777 = vmatpush1.bf16.msra.mxu0 %v1365
    %1778 = vmatprep.subr.bf16.mxu0 %v1370
    %1779 = vmatpush1.bf16.msra.mxu0 %v1369
    %1780 = vmatprep.subr.bf16.mxu0 %v1374
    %1781 = vmatpush1.bf16.msra.mxu0 %v1373
    %1782 = vmatprep.subr.bf16.mxu0 %v1378
    %1783 = vmatpush1.bf16.msra.mxu0 %v1377
    %1784 = vmatprep.subr.bf16.mxu0 %v1382
    %1785 = vmatpush1.bf16.msra.mxu0 %v1381
    %1786 = vmatprep.subr.bf16.mxu0 %v1386
    %1787 = vmatpush1.bf16.msra.mxu0 %v1385
    %1788 = vmatprep.subr.bf16.mxu0 %v1390
    %1789 = vmatpush1.bf16.msra.mxu0 %v1389
    %1790 = vmatprep.subr.bf16.mxu0 0
    %1791 = vmatpush1.bf16.msra.mxu0 0
    %1792 = vmatprep.subr.bf16.mxu0 0
    %1793 = vmatpush1.bf16.msra.mxu0 0
    %1794 = vmatprep.subr.bf16.mxu0 0
    %1795 = vmatpush1.bf16.msra.mxu0 0
    %1796 = vmatprep.subr.bf16.mxu0 0
    %1797 = vmatpush1.bf16.msra.mxu0 0
    %1798 = vmatprep.subr.bf16.mxu0 0
    %1799 = vmatpush1.bf16.msra.mxu0 0
    %1800 = vmatprep.subr.bf16.mxu0 0
    %1801 = vmatpush1.bf16.msra.mxu0 0
    %1802 = vmatprep.subr.bf16.mxu0 0
    %1803 = vmatpush1.bf16.msra.mxu0 0
    %1804 = vmatprep.subr.bf16.mxu0 0
    %1805 = vmatpush1.bf16.msra.mxu0 0
    %1806 = vmatprep.mubr.bf16.mxu0 0
    %1807 = vmatmul.mubr.bf16.gmra.mrb[0].mxu0 %v1773
    %v1808 = vpop.f32.mrb[0].mxu0
    %v1809 = vadd.f32 0.0, %v1808
    %v1810 = vpop.f32.mrb[0].mxu0
    %v1811 = vadd.f32 0.0, %v1810
    %v1812 = vpop.f32.mrb[0].mxu0
    %v1813 = vpop.f32.mrb[0].mxu0
    %1814 = vdwg.mxu0
    %1815 = vmatprep.subr.bf16.mxu0 %v1364
    %1816 = vmatpush1.bf16.msra.mxu0 %v1363
    %1817 = vmatprep.subr.bf16.mxu0 %v1368
    %1818 = vmatpush1.bf16.msra.mxu0 %v1367
    %1819 = vmatprep.subr.bf16.mxu0 %v1372
    %1820 = vmatpush1.bf16.msra.mxu0 %v1371
    %1821 = vmatprep.subr.bf16.mxu0 %v1376
    %1822 = vmatpush1.bf16.msra.mxu0 %v1375
    %1823 = vmatprep.subr.bf16.mxu0 %v1380
    %1824 = vmatpush1.bf16.msra.mxu0 %v1379
    %1825 = vmatprep.subr.bf16.mxu0 %v1384
    %1826 = vmatpush1.bf16.msra.mxu0 %v1383
    %1827 = vmatprep.subr.bf16.mxu0 %v1388
    %1828 = vmatpush1.bf16.msra.mxu0 %v1387
    %1829 = vmatprep.subr.bf16.mxu0 %v1392
    %1830 = vmatpush1.bf16.msra.mxu0 %v1391
    %1831 = vmatprep.subr.bf16.mxu0 0
    %1832 = vmatpush1.bf16.msra.mxu0 0
    %1833 = vmatprep.subr.bf16.mxu0 0
    %1834 = vmatpush1.bf16.msra.mxu0 0
    %1835 = vmatprep.subr.bf16.mxu0 0
    %1836 = vmatpush1.bf16.msra.mxu0 0
    %1837 = vmatprep.subr.bf16.mxu0 0
    %1838 = vmatpush1.bf16.msra.mxu0 0
    %1839 = vmatprep.subr.bf16.mxu0 0
    %1840 = vmatpush1.bf16.msra.mxu0 0
    %1841 = vmatprep.subr.bf16.mxu0 0
    %1842 = vmatpush1.bf16.msra.mxu0 0
    %1843 = vmatprep.subr.bf16.mxu0 0
    %1844 = vmatpush1.bf16.msra.mxu0 0
    %1845 = vmatprep.subr.bf16.mxu0 0
    %1846 = vmatpush1.bf16.msra.mxu0 0
    %1847 = vmatprep.mubr.bf16.mxu0 0
    %1848 = vmatmul.mubr.bf16.gmra.mrb[0].mxu0 %v1773
    %v1849 = vpop.f32.mrb[0].mxu0
    %v1850 = vadd.f32 0.0, %v1849
    %v1851 = vpop.f32.mrb[0].mxu0
    %v1852 = vadd.f32 0.0, %v1851
    %v1853 = vpop.f32.mrb[0].mxu0
    %v1854 = vpop.f32.mrb[0].mxu0
    %1855 = vdwg.mxu0
    %v1856 = vld [vmem:[%s495] sm:$0xff]
    %v1857 = vpack.c.bf16 %v1856, %v1856
    %1858 = vmatprep.subr.bf16.mxu0 %v1606
    %1859 = vmatpush1.bf16.msra.mxu0 %v1605
    %1860 = vmatprep.subr.bf16.mxu0 %v1610
    %1861 = vmatpush1.bf16.msra.mxu0 %v1609
    %1862 = vmatprep.subr.bf16.mxu0 %v1614
    %1863 = vmatpush1.bf16.msra.mxu0 %v1613
    %1864 = vmatprep.subr.bf16.mxu0 %v1618
    %1865 = vmatpush1.bf16.msra.mxu0 %v1617
    %1866 = vmatprep.subr.bf16.mxu0 %v1622
    %1867 = vmatpush1.bf16.msra.mxu0 %v1621
    %1868 = vmatprep.subr.bf16.mxu0 %v1626
    %1869 = vmatpush1.bf16.msra.mxu0 %v1625
    %1870 = vmatprep.subr.bf16.mxu0 %v1630
    %1871 = vmatpush1.bf16.msra.mxu0 %v1629
    %1872 = vmatprep.subr.bf16.mxu0 %v1634
    %1873 = vmatpush1.bf16.msra.mxu0 %v1633
    %1874 = vmatprep.subr.bf16.mxu0 0
    %1875 = vmatpush1.bf16.msra.mxu0 0
    %1876 = vmatprep.subr.bf16.mxu0 0
    %1877 = vmatpush1.bf16.msra.mxu0 0
    %1878 = vmatprep.subr.bf16.mxu0 0
    %1879 = vmatpush1.bf16.msra.mxu0 0
    %1880 = vmatprep.subr.bf16.mxu0 0
    %1881 = vmatpush1.bf16.msra.mxu0 0
    %1882 = vmatprep.subr.bf16.mxu0 0
    %1883 = vmatpush1.bf16.msra.mxu0 0
    %1884 = vmatprep.subr.bf16.mxu0 0
    %1885 = vmatpush1.bf16.msra.mxu0 0
    %1886 = vmatprep.subr.bf16.mxu0 0
    %1887 = vmatpush1.bf16.msra.mxu0 0
    %1888 = vmatprep.subr.bf16.mxu0 0
    %1889 = vmatpush1.bf16.msra.mxu0 0
    %1890 = vmatprep.mubr.bf16.mxu0 0
    %1891 = vmatmul.mubr.bf16.gmra.mrb[0].mxu0 %v1857
    %v1892 = vpop.f32.mrb[0].mxu0
    %v1893 = vadd.f32 %v1809, %v1892
    %v1894 = vpop.f32.mrb[0].mxu0
    %v1895 = vadd.f32 %v1811, %v1894
    %v1896 = vpop.f32.mrb[0].mxu0
    %v1897 = vpop.f32.mrb[0].mxu0
    %1898 = vdwg.mxu0
    %1899 = vmatprep.subr.bf16.mxu0 %v1608
    %1900 = vmatpush1.bf16.msra.mxu0 %v1607
    %1901 = vmatprep.subr.bf16.mxu0 %v1612
    %1902 = vmatpush1.bf16.msra.mxu0 %v1611
    %1903 = vmatprep.subr.bf16.mxu0 %v1616
    %1904 = vmatpush1.bf16.msra.mxu0 %v1615
    %1905 = vmatprep.subr.bf16.mxu0 %v1620
    %1906 = vmatpush1.bf16.msra.mxu0 %v1619
    %1907 = vmatprep.subr.bf16.mxu0 %v1624
    %1908 = vmatpush1.bf16.msra.mxu0 %v1623
    %1909 = vmatprep.subr.bf16.mxu0 %v1628
    %1910 = vmatpush1.bf16.msra.mxu0 %v1627
    %1911 = vmatprep.subr.bf16.mxu0 %v1632
    %1912 = vmatpush1.bf16.msra.mxu0 %v1631
    %1913 = vmatprep.subr.bf16.mxu0 %v1636
    %1914 = vmatpush1.bf16.msra.mxu0 %v1635
    %1915 = vmatprep.subr.bf16.mxu0 0
    %1916 = vmatpush1.bf16.msra.mxu0 0
    %1917 = vmatprep.subr.bf16.mxu0 0
    %1918 = vmatpush1.bf16.msra.mxu0 0
    %1919 = vmatprep.subr.bf16.mxu0 0
    %1920 = vmatpush1.bf16.msra.mxu0 0
    %1921 = vmatprep.subr.bf16.mxu0 0
    %1922 = vmatpush1.bf16.msra.mxu0 0
    %1923 = vmatprep.subr.bf16.mxu0 0
    %1924 = vmatpush1.bf16.msra.mxu0 0
    %1925 = vmatprep.subr.bf16.mxu0 0
    %1926 = vmatpush1.bf16.msra.mxu0 0
    %1927 = vmatprep.subr.bf16.mxu0 0
    %1928 = vmatpush1.bf16.msra.mxu0 0
    %1929 = vmatprep.subr.bf16.mxu0 0
    %1930 = vmatpush1.bf16.msra.mxu0 0
    %1931 = vmatprep.mubr.bf16.mxu0 0
    %1932 = vmatmul.mubr.bf16.gmra.mrb[0].mxu0 %v1857
    %v1933 = vpop.f32.mrb[0].mxu0
    %v1934 = vadd.f32 %v1850, %v1933
    %v1935 = vpop.f32.mrb[0].mxu0
    %v1936 = vadd.f32 %v1852, %v1935
    %v1937 = vpop.f32.mrb[0].mxu0
    %v1938 = vpop.f32.mrb[0].mxu0
    %1939 = vdwg.mxu0
    %v1940 = vadd.f32 %v1893, %v1243
    %v1941 = vadd.f32 %v1895, %v1247
    %v1942 = vadd.f32 %v1934, %v1251
    %v1943 = vadd.f32 %v1936, %v1255
    %v1944 = vmul.f32 %v1940, 0.5
    %v1945 = vtanh.pop %v1944
    %v1946 = vadd.f32 %v1945, 1.0
    %v1947 = vmul.f32 %v1946, 0.5
    %v1948 = vmul.f32 %v1941, 0.5
    %v1949 = vtanh.pop %v1948
    %v1950 = vadd.f32 %v1949, 1.0
    %v1951 = vmul.f32 %v1950, 0.5
    %v1952 = vtanh.pop %v1942
    %v1953 = vmul.f32 %v1943, 0.5
    %v1954 = vtanh.pop %v1953
    %v1955 = vadd.f32 %v1954, 1.0
    %v1956 = vmul.f32 %v1955, 0.5
    %v1957 = vmul.f32 %v1951, %v1770
    %v1958 = vmul.f32 %v1947, %v1952
    %v1959 = vadd.f32 %v1957, %v1958
    %v1960 = vtanh.pop %v1959
    %v1961 = vmul.f32 %v1956, %v1960
    %v1962 = vpack.c.bf16 %v1961, %v1961
    %1963 = vmatprep.subr.bf16.mxu0 %v1362
    %1964 = vmatpush1.bf16.msra.mxu0 %v1361
    %1965 = vmatprep.subr.bf16.mxu0 %v1366
    %1966 = vmatpush1.bf16.msra.mxu0 %v1365
    %1967 = vmatprep.subr.bf16.mxu0 %v1370
    %1968 = vmatpush1.bf16.msra.mxu0 %v1369
    %1969 = vmatprep.subr.bf16.mxu0 %v1374
    %1970 = vmatpush1.bf16.msra.mxu0 %v1373
    %1971 = vmatprep.subr.bf16.mxu0 %v1378
    %1972 = vmatpush1.bf16.msra.mxu0 %v1377
    %1973 = vmatprep.subr.bf16.mxu0 %v1382
    %1974 = vmatpush1.bf16.msra.mxu0 %v1381
    %1975 = vmatprep.subr.bf16.mxu0 %v1386
    %1976 = vmatpush1.bf16.msra.mxu0 %v1385
    %1977 = vmatprep.subr.bf16.mxu0 %v1390
    %1978 = vmatpush1.bf16.msra.mxu0 %v1389
    %1979 = vmatprep.subr.bf16.mxu0 0
    %1980 = vmatpush1.bf16.msra.mxu0 0
    %1981 = vmatprep.subr.bf16.mxu0 0
    %1982 = vmatpush1.bf16.msra.mxu0 0
    %1983 = vmatprep.subr.bf16.mxu0 0
    %1984 = vmatpush1.bf16.msra.mxu0 0
    %1985 = vmatprep.subr.bf16.mxu0 0
    %1986 = vmatpush1.bf16.msra.mxu0 0
    %1987 = vmatprep.subr.bf16.mxu0 0
    %1988 = vmatpush1.bf16.msra.mxu0 0
    %1989 = vmatprep.subr.bf16.mxu0 0
    %1990 = vmatpush1.bf16.msra.mxu0 0
    %1991 = vmatprep.subr.bf16.mxu0 0
    %1992 = vmatpush1.bf16.msra.mxu0 0
    %1993 = vmatprep.subr.bf16.mxu0 0
    %1994 = vmatpush1.bf16.msra.mxu0 0
    %1995 = vmatprep.mubr.bf16.mxu0 0
    %1996 = vmatmul.mubr.bf16.gmra.mrb[0].mxu0 %v1962
    %v1997 = vpop.f32.mrb[0].mxu0
    %v1998 = vadd.f32 0.0, %v1997
    %v1999 = vpop.f32.mrb[0].mxu0
    %v2000 = vadd.f32 0.0, %v1999
    %v2001 = vpop.f32.mrb[0].mxu0
    %v2002 = vpop.f32.mrb[0].mxu0
    %2003 = vdwg.mxu0
    %2004 = vmatprep.subr.bf16.mxu0 %v1364
    %2005 = vmatpush1.bf16.msra.mxu0 %v1363
    %2006 = vmatprep.subr.bf16.mxu0 %v1368
    %2007 = vmatpush1.bf16.msra.mxu0 %v1367
    %2008 = vmatprep.subr.bf16.mxu0 %v1372
    %2009 = vmatpush1.bf16.msra.mxu0 %v1371
    %2010 = vmatprep.subr.bf16.mxu0 %v1376
    %2011 = vmatpush1.bf16.msra.mxu0 %v1375
    %2012 = vmatprep.subr.bf16.mxu0 %v1380
    %2013 = vmatpush1.bf16.msra.mxu0 %v1379
    %2014 = vmatprep.subr.bf16.mxu0 %v1384
    %2015 = vmatpush1.bf16.msra.mxu0 %v1383
    %2016 = vmatprep.subr.bf16.mxu0 %v1388
    %2017 = vmatpush1.bf16.msra.mxu0 %v1387
    %2018 = vmatprep.subr.bf16.mxu0 %v1392
    %2019 = vmatpush1.bf16.msra.mxu0 %v1391
    %2020 = vmatprep.subr.bf16.mxu0 0
    %2021 = vmatpush1.bf16.msra.mxu0 0
    %2022 = vmatprep.subr.bf16.mxu0 0
    %2023 = vmatpush1.bf16.msra.mxu0 0
    %2024 = vmatprep.subr.bf16.mxu0 0
    %2025 = vmatpush1.bf16.msra.mxu0 0
    %2026 = vmatprep.subr.bf16.mxu0 0
    %2027 = vmatpush1.bf16.msra.mxu0 0
    %2028 = vmatprep.subr.bf16.mxu0 0
    %2029 = vmatpush1.bf16.msra.mxu0 0
    %2030 = vmatprep.subr.bf16.mxu0 0
    %2031 = vmatpush1.bf16.msra.mxu0 0
    %2032 = vmatprep.subr.bf16.mxu0 0
    %2033 = vmatpush1.bf16.msra.mxu0 0
    %2034 = vmatprep.subr.bf16.mxu0 0
    %2035 = vmatpush1.bf16.msra.mxu0 0
    %2036 = vmatprep.mubr.bf16.mxu0 0
    %2037 = vmatmul.mubr.bf16.gmra.mrb[0].mxu0 %v1962
    %v2038 = vpop.f32.mrb[0].mxu0
    %v2039 = vadd.f32 0.0, %v2038
    %v2040 = vpop.f32.mrb[0].mxu0
    %v2041 = vadd.f32 0.0, %v2040
    %v2042 = vpop.f32.mrb[0].mxu0
    %v2043 = vpop.f32.mrb[0].mxu0
    %2044 = vdwg.mxu0
    %v2045 = vld [vmem:[%s607] sm:$0xff]
    %v2046 = vpack.c.bf16 %v2045, %v2045
    %2047 = vmatprep.subr.bf16.mxu0 %v1606
    %2048 = vmatpush1.bf16.msra.mxu0 %v1605
    %2049 = vmatprep.subr.bf16.mxu0 %v1610
    %2050 = vmatpush1.bf16.msra.mxu0 %v1609
    %2051 = vmatprep.subr.bf16.mxu0 %v1614
    %2052 = vmatpush1.bf16.msra.mxu0 %v1613
    %2053 = vmatprep.subr.bf16.mxu0 %v1618
    %2054 = vmatpush1.bf16.msra.mxu0 %v1617
    %2055 = vmatprep.subr.bf16.mxu0 %v1622
    %2056 = vmatpush1.bf16.msra.mxu0 %v1621
    %2057 = vmatprep.subr.bf16.mxu0 %v1626
    %2058 = vmatpush1.bf16.msra.mxu0 %v1625
    %2059 = vmatprep.subr.bf16.mxu0 %v1630
    %2060 = vmatpush1.bf16.msra.mxu0 %v1629
    %2061 = vmatprep.subr.bf16.mxu0 %v1634
    %2062 = vmatpush1.bf16.msra.mxu0 %v1633
    %2063 = vmatprep.subr.bf16.mxu0 0
    %2064 = vmatpush1.bf16.msra.mxu0 0
    %2065 = vmatprep.subr.bf16.mxu0 0
    %2066 = vmatpush1.bf16.msra.mxu0 0
    %2067 = vmatprep.subr.bf16.mxu0 0
    %2068 = vmatpush1.bf16.msra.mxu0 0
    %2069 = vmatprep.subr.bf16.mxu0 0
    %2070 = vmatpush1.bf16.msra.mxu0 0
    %2071 = vmatprep.subr.bf16.mxu0 0
    %2072 = vmatpush1.bf16.msra.mxu0 0
    %2073 = vmatprep.subr.bf16.mxu0 0
    %2074 = vmatpush1.bf16.msra.mxu0 0
    %2075 = vmatprep.subr.bf16.mxu0 0
    %2076 = vmatpush1.bf16.msra.mxu0 0
    %2077 = vmatprep.subr.bf16.mxu0 0
    %2078 = vmatpush1.bf16.msra.mxu0 0
    %2079 = vmatprep.mubr.bf16.mxu0 0
    %2080 = vmatmul.mubr.bf16.gmra.mrb[0].mxu0 %v2046
    %v2081 = vpop.f32.mrb[0].mxu0
    %v2082 = vadd.f32 %v1998, %v2081
    %v2083 = vpop.f32.mrb[0].mxu0
    %v2084 = vadd.f32 %v2000, %v2083
    %v2085 = vpop.f32.mrb[0].mxu0
    %v2086 = vpop.f32.mrb[0].mxu0
    %2087 = vdwg.mxu0
    %2088 = vmatprep.subr.bf16.mxu0 %v1608
    %2089 = vmatpush1.bf16.msra.mxu0 %v1607
    %2090 = vmatprep.subr.bf16.mxu0 %v1612
    %2091 = vmatpush1.bf16.msra.mxu0 %v1611
    %2092 = vmatprep.subr.bf16.mxu0 %v1616
    %2093 = vmatpush1.bf16.msra.mxu0 %v1615
    %2094 = vmatprep.subr.bf16.mxu0 %v1620
    %2095 = vmatpush1.bf16.msra.mxu0 %v1619
    %2096 = vmatprep.subr.bf16.mxu0 %v1624
    %2097 = vmatpush1.bf16.msra.mxu0 %v1623
    %2098 = vmatprep.subr.bf16.mxu0 %v1628
    %2099 = vmatpush1.bf16.msra.mxu0 %v1627
    %2100 = vmatprep.subr.bf16.mxu0 %v1632
    %2101 = vmatpush1.bf16.msra.mxu0 %v1631
    %2102 = vmatprep.subr.bf16.mxu0 %v1636
    %2103 = vmatpush1.bf16.msra.mxu0 %v1635
    %2104 = vmatprep.subr.bf16.mxu0 0
    %2105 = vmatpush1.bf16.msra.mxu0 0
    %2106 = vmatprep.subr.bf16.mxu0 0
    %2107 = vmatpush1.bf16.msra.mxu0 0
    %2108 = vmatprep.subr.bf16.mxu0 0
    %2109 = vmatpush1.bf16.msra.mxu0 0
    %2110 = vmatprep.subr.bf16.mxu0 0
    %2111 = vmatpush1.bf16.msra.mxu0 0
    %2112 = vmatprep.subr.bf16.mxu0 0
    %2113 = vmatpush1.bf16.msra.mxu0 0
    %2114 = vmatprep.subr.bf16.mxu0 0
    %2115 = vmatpush1.bf16.msra.mxu0 0
    %2116 = vmatprep.subr.bf16.mxu0 0
    %2117 = vmatpush1.bf16.msra.mxu0 0
    %2118 = vmatprep.subr.bf16.mxu0 0
    %2119 = vmatpush1.bf16.msra.mxu0 0
    %2120 = vmatprep.mubr.bf16.mxu0 0
    %2121 = vmatmul.mubr.bf16.gmra.mrb[0].mxu0 %v2046
    %v2122 = vpop.f32.mrb[0].mxu0
    %v2123 = vadd.f32 %v2039, %v2122
    %v2124 = vpop.f32.mrb[0].mxu0
    %v2125 = vadd.f32 %v2041, %v2124
    %v2126 = vpop.f32.mrb[0].mxu0
    %v2127 = vpop.f32.mrb[0].mxu0
    %2128 = vdwg.mxu0
    %v2129 = vadd.f32 %v2082, %v1243
    %v2130 = vadd.f32 %v2084, %v1247
    %v2131 = vadd.f32 %v2123, %v1251
    %v2132 = vadd.f32 %v2125, %v1255
    %v2133 = vmul.f32 %v2129, 0.5
    %v2134 = vtanh.pop %v2133
    %v2135 = vadd.f32 %v2134, 1.0
    %v2136 = vmul.f32 %v2135, 0.5
    %v2137 = vmul.f32 %v2130, 0.5
    %v2138 = vtanh.pop %v2137
    %v2139 = vadd.f32 %v2138, 1.0
    %v2140 = vmul.f32 %v2139, 0.5
    %v2141 = vtanh.pop %v2131
    %v2142 = vmul.f32 %v2132, 0.5
    %v2143 = vtanh.pop %v2142
    %v2144 = vadd.f32 %v2143, 1.0
    %v2145 = vmul.f32 %v2144, 0.5
    %v2146 = vmul.f32 %v2140, %v1959
    %v2147 = vmul.f32 %v2136, %v2141
    %v2148 = vadd.f32 %v2146, %v2147
    %v2149 = vtanh.pop %v2148
    %v2150 = vmul.f32 %v2145, %v2149
    %v2151 = vpack.c.bf16 %v2150, %v2150
    %2152 = vmatprep.subr.bf16.mxu0 %v1362
    %2153 = vmatpush1.bf16.msra.mxu0 %v1361
    %2154 = vmatprep.subr.bf16.mxu0 %v1366
    %2155 = vmatpush1.bf16.msra.mxu0 %v1365
    %2156 = vmatprep.subr.bf16.mxu0 %v1370
    %2157 = vmatpush1.bf16.msra.mxu0 %v1369
    %2158 = vmatprep.subr.bf16.mxu0 %v1374
    %2159 = vmatpush1.bf16.msra.mxu0 %v1373
    %2160 = vmatprep.subr.bf16.mxu0 %v1378
    %2161 = vmatpush1.bf16.msra.mxu0 %v1377
    %2162 = vmatprep.subr.bf16.mxu0 %v1382
    %2163 = vmatpush1.bf16.msra.mxu0 %v1381
    %2164 = vmatprep.subr.bf16.mxu0 %v1386
    %2165 = vmatpush1.bf16.msra.mxu0 %v1385
    %2166 = vmatprep.subr.bf16.mxu0 %v1390
    %2167 = vmatpush1.bf16.msra.mxu0 %v1389
    %2168 = vmatprep.subr.bf16.mxu0 0
    %2169 = vmatpush1.bf16.msra.mxu0 0
    %2170 = vmatprep.subr.bf16.mxu0 0
    %2171 = vmatpush1.bf16.msra.mxu0 0
    %2172 = vmatprep.subr.bf16.mxu0 0
    %2173 = vmatpush1.bf16.msra.mxu0 0
    %2174 = vmatprep.subr.bf16.mxu0 0
    %2175 = vmatpush1.bf16.msra.mxu0 0
    %2176 = vmatprep.subr.bf16.mxu0 0
    %2177 = vmatpush1.bf16.msra.mxu0 0
    %2178 = vmatprep.subr.bf16.mxu0 0
    %2179 = vmatpush1.bf16.msra.mxu0 0
    %2180 = vmatprep.subr.bf16.mxu0 0
    %2181 = vmatpush1.bf16.msra.mxu0 0
    %2182 = vmatprep.subr.bf16.mxu0 0
    %2183 = vmatpush1.bf16.msra.mxu0 0
    %2184 = vmatprep.mubr.bf16.mxu0 0
    %2185 = vmatmul.mubr.bf16.gmra.mrb[0].mxu0 %v2151
    %v2186 = vpop.f32.mrb[0].mxu0
    %v2187 = vadd.f32 0.0, %v2186
    %v2188 = vpop.f32.mrb[0].mxu0
    %v2189 = vadd.f32 0.0, %v2188
    %v2190 = vpop.f32.mrb[0].mxu0
    %v2191 = vpop.f32.mrb[0].mxu0
    %2192 = vdwg.mxu0
    %2193 = vmatprep.subr.bf16.mxu0 %v1364
    %2194 = vmatpush1.bf16.msra.mxu0 %v1363
    %2195 = vmatprep.subr.bf16.mxu0 %v1368
    %2196 = vmatpush1.bf16.msra.mxu0 %v1367
    %2197 = vmatprep.subr.bf16.mxu0 %v1372
    %2198 = vmatpush1.bf16.msra.mxu0 %v1371
    %2199 = vmatprep.subr.bf16.mxu0 %v1376
    %2200 = vmatpush1.bf16.msra.mxu0 %v1375
    %2201 = vmatprep.subr.bf16.mxu0 %v1380
    %2202 = vmatpush1.bf16.msra.mxu0 %v1379
    %2203 = vmatprep.subr.bf16.mxu0 %v1384
    %2204 = vmatpush1.bf16.msra.mxu0 %v1383
    %2205 = vmatprep.subr.bf16.mxu0 %v1388
    %2206 = vmatpush1.bf16.msra.mxu0 %v1387
    %2207 = vmatprep.subr.bf16.mxu0 %v1392
    %2208 = vmatpush1.bf16.msra.mxu0 %v1391
    %2209 = vmatprep.subr.bf16.mxu0 0
    %2210 = vmatpush1.bf16.msra.mxu0 0
    %2211 = vmatprep.subr.bf16.mxu0 0
    %2212 = vmatpush1.bf16.msra.mxu0 0
    %2213 = vmatprep.subr.bf16.mxu0 0
    %2214 = vmatpush1.bf16.msra.mxu0 0
    %2215 = vmatprep.subr.bf16.mxu0 0
    %2216 = vmatpush1.bf16.msra.mxu0 0
    %2217 = vmatprep.subr.bf16.mxu0 0
    %2218 = vmatpush1.bf16.msra.mxu0 0
    %2219 = vmatprep.subr.bf16.mxu0 0
    %2220 = vmatpush1.bf16.msra.mxu0 0
    %2221 = vmatprep.subr.bf16.mxu0 0
    %2222 = vmatpush1.bf16.msra.mxu0 0
    %2223 = vmatprep.subr.bf16.mxu0 0
    %2224 = vmatpush1.bf16.msra.mxu0 0
    %2225 = vmatprep.mubr.bf16.mxu0 0
    %2226 = vmatmul.mubr.bf16.gmra.mrb[0].mxu0 %v2151
    %v2227 = vpop.f32.mrb[0].mxu0
    %v2228 = vadd.f32 0.0, %v2227
    %v2229 = vpop.f32.mrb[0].mxu0
    %v2230 = vadd.f32 0.0, %v2229
    %v2231 = vpop.f32.mrb[0].mxu0
    %v2232 = vpop.f32.mrb[0].mxu0
    %2233 = vdwg.mxu0
    %v2234 = vld [vmem:[%s719] sm:$0xff]
    %v2235 = vpack.c.bf16 %v2234, %v2234
    %2236 = vmatprep.subr.bf16.mxu0 %v1606
    %2237 = vmatpush1.bf16.msra.mxu0 %v1605
    %2238 = vmatprep.subr.bf16.mxu0 %v1610
    %2239 = vmatpush1.bf16.msra.mxu0 %v1609
    %2240 = vmatprep.subr.bf16.mxu0 %v1614
    %2241 = vmatpush1.bf16.msra.mxu0 %v1613
    %2242 = vmatprep.subr.bf16.mxu0 %v1618
    %2243 = vmatpush1.bf16.msra.mxu0 %v1617
    %2244 = vmatprep.subr.bf16.mxu0 %v1622
    %2245 = vmatpush1.bf16.msra.mxu0 %v1621
    %2246 = vmatprep.subr.bf16.mxu0 %v1626
    %2247 = vmatpush1.bf16.msra.mxu0 %v1625
    %2248 = vmatprep.subr.bf16.mxu0 %v1630
    %2249 = vmatpush1.bf16.msra.mxu0 %v1629
    %2250 = vmatprep.subr.bf16.mxu0 %v1634
    %2251 = vmatpush1.bf16.msra.mxu0 %v1633
    %2252 = vmatprep.subr.bf16.mxu0 0
    %2253 = vmatpush1.bf16.msra.mxu0 0
    %2254 = vmatprep.subr.bf16.mxu0 0
    %2255 = vmatpush1.bf16.msra.mxu0 0
    %2256 = vmatprep.subr.bf16.mxu0 0
    %2257 = vmatpush1.bf16.msra.mxu0 0
    %2258 = vmatprep.subr.bf16.mxu0 0
    %2259 = vmatpush1.bf16.msra.mxu0 0
    %2260 = vmatprep.subr.bf16.mxu0 0
    %2261 = vmatpush1.bf16.msra.mxu0 0
    %2262 = vmatprep.subr.bf16.mxu0 0
    %2263 = vmatpush1.bf16.msra.mxu0 0
    %2264 = vmatprep.subr.bf16.mxu0 0
    %2265 = vmatpush1.bf16.msra.mxu0 0
    %2266 = vmatprep.subr.bf16.mxu0 0
    %2267 = vmatpush1.bf16.msra.mxu0 0
    %2268 = vmatprep.mubr.bf16.mxu0 0
    %2269 = vmatmul.mubr.bf16.gmra.mrb[0].mxu0 %v2235
    %v2270 = vpop.f32.mrb[0].mxu0
    %v2271 = vadd.f32 %v2187, %v2270
    %v2272 = vpop.f32.mrb[0].mxu0
    %v2273 = vadd.f32 %v2189, %v2272
    %v2274 = vpop.f32.mrb[0].mxu0
    %v2275 = vpop.f32.mrb[0].mxu0
    %2276 = vdwg.mxu0
    %2277 = vmatprep.subr.bf16.mxu0 %v1608
    %2278 = vmatpush1.bf16.msra.mxu0 %v1607
    %2279 = vmatprep.subr.bf16.mxu0 %v1612
    %2280 = vmatpush1.bf16.msra.mxu0 %v1611
    %2281 = vmatprep.subr.bf16.mxu0 %v1616
    %2282 = vmatpush1.bf16.msra.mxu0 %v1615
    %2283 = vmatprep.subr.bf16.mxu0 %v1620
    %2284 = vmatpush1.bf16.msra.mxu0 %v1619
    %2285 = vmatprep.subr.bf16.mxu0 %v1624
    %2286 = vmatpush1.bf16.msra.mxu0 %v1623
    %2287 = vmatprep.subr.bf16.mxu0 %v1628
    %2288 = vmatpush1.bf16.msra.mxu0 %v1627
    %2289 = vmatprep.subr.bf16.mxu0 %v1632
    %2290 = vmatpush1.bf16.msra.mxu0 %v1631
    %2291 = vmatprep.subr.bf16.mxu0 %v1636
    %2292 = vmatpush1.bf16.msra.mxu0 %v1635
    %2293 = vmatprep.subr.bf16.mxu0 0
    %2294 = vmatpush1.bf16.msra.mxu0 0
    %2295 = vmatprep.subr.bf16.mxu0 0
    %2296 = vmatpush1.bf16.msra.mxu0 0
    %2297 = vmatprep.subr.bf16.mxu0 0
    %2298 = vmatpush1.bf16.msra.mxu0 0
    %2299 = vmatprep.subr.bf16.mxu0 0
    %2300 = vmatpush1.bf16.msra.mxu0 0
    %2301 = vmatprep.subr.bf16.mxu0 0
    %2302 = vmatpush1.bf16.msra.mxu0 0
    %2303 = vmatprep.subr.bf16.mxu0 0
    %2304 = vmatpush1.bf16.msra.mxu0 0
    %2305 = vmatprep.subr.bf16.mxu0 0
    %2306 = vmatpush1.bf16.msra.mxu0 0
    %2307 = vmatprep.subr.bf16.mxu0 0
    %2308 = vmatpush1.bf16.msra.mxu0 0
    %2309 = vmatprep.mubr.bf16.mxu0 0
    %2310 = vmatmul.mubr.bf16.gmra.mrb[0].mxu0 %v2235
    %v2311 = vpop.f32.mrb[0].mxu0
    %v2312 = vadd.f32 %v2228, %v2311
    %v2313 = vpop.f32.mrb[0].mxu0
    %v2314 = vadd.f32 %v2230, %v2313
    %v2315 = vpop.f32.mrb[0].mxu0
    %v2316 = vpop.f32.mrb[0].mxu0
    %2317 = vdwg.mxu0
    %v2318 = vadd.f32 %v2271, %v1243
    %v2319 = vadd.f32 %v2273, %v1247
    %v2320 = vadd.f32 %v2312, %v1251
    %v2321 = vadd.f32 %v2314, %v1255
    %v2322 = vmul.f32 %v2318, 0.5
    %v2323 = vtanh.pop %v2322
    %v2324 = vadd.f32 %v2323, 1.0
    %v2325 = vmul.f32 %v2324, 0.5
    %v2326 = vmul.f32 %v2319, 0.5
    %v2327 = vtanh.pop %v2326
    %v2328 = vadd.f32 %v2327, 1.0
    %v2329 = vmul.f32 %v2328, 0.5
    %v2330 = vtanh.pop %v2320
    %v2331 = vmul.f32 %v2321, 0.5
    %v2332 = vtanh.pop %v2331
    %v2333 = vadd.f32 %v2332, 1.0
    %v2334 = vmul.f32 %v2333, 0.5
    %v2335 = vmul.f32 %v2329, %v2148
    %v2336 = vmul.f32 %v2325, %v2330
    %v2337 = vadd.f32 %v2335, %v2336
    %v2338 = vtanh.pop %v2337
    %v2339 = vmul.f32 %v2334, %v2338
    %v2340 = vpack.c.bf16 %v2339, %v2339
    %2341 = vmatprep.subr.bf16.mxu0 %v1362
    %2342 = vmatpush1.bf16.msra.mxu0 %v1361
    %2343 = vmatprep.subr.bf16.mxu0 %v1366
    %2344 = vmatpush1.bf16.msra.mxu0 %v1365
    %2345 = vmatprep.subr.bf16.mxu0 %v1370
    %2346 = vmatpush1.bf16.msra.mxu0 %v1369
    %2347 = vmatprep.subr.bf16.mxu0 %v1374
    %2348 = vmatpush1.bf16.msra.mxu0 %v1373
    %2349 = vmatprep.subr.bf16.mxu0 %v1378
    %2350 = vmatpush1.bf16.msra.mxu0 %v1377
    %2351 = vmatprep.subr.bf16.mxu0 %v1382
    %2352 = vmatpush1.bf16.msra.mxu0 %v1381
    %2353 = vmatprep.subr.bf16.mxu0 %v1386
    %2354 = vmatpush1.bf16.msra.mxu0 %v1385
    %2355 = vmatprep.subr.bf16.mxu0 %v1390
    %2356 = vmatpush1.bf16.msra.mxu0 %v1389
    %2357 = vmatprep.subr.bf16.mxu0 0
    %2358 = vmatpush1.bf16.msra.mxu0 0
    %2359 = vmatprep.subr.bf16.mxu0 0
    %2360 = vmatpush1.bf16.msra.mxu0 0
    %2361 = vmatprep.subr.bf16.mxu0 0
    %2362 = vmatpush1.bf16.msra.mxu0 0
    %2363 = vmatprep.subr.bf16.mxu0 0
    %2364 = vmatpush1.bf16.msra.mxu0 0
    %2365 = vmatprep.subr.bf16.mxu0 0
    %2366 = vmatpush1.bf16.msra.mxu0 0
    %2367 = vmatprep.subr.bf16.mxu0 0
    %2368 = vmatpush1.bf16.msra.mxu0 0
    %2369 = vmatprep.subr.bf16.mxu0 0
    %2370 = vmatpush1.bf16.msra.mxu0 0
    %2371 = vmatprep.subr.bf16.mxu0 0
    %2372 = vmatpush1.bf16.msra.mxu0 0
    %2373 = vmatprep.mubr.bf16.mxu0 0
    %2374 = vmatmul.mubr.bf16.gmra.mrb[0].mxu0 %v2340
    %v2375 = vpop.f32.mrb[0].mxu0
    %v2376 = vadd.f32 0.0, %v2375
    %v2377 = vpop.f32.mrb[0].mxu0
    %v2378 = vadd.f32 0.0, %v2377
    %v2379 = vpop.f32.mrb[0].mxu0
    %v2380 = vpop.f32.mrb[0].mxu0
    %2381 = vdwg.mxu0
    %2382 = vmatprep.subr.bf16.mxu0 %v1364
    %2383 = vmatpush1.bf16.msra.mxu0 %v1363
    %2384 = vmatprep.subr.bf16.mxu0 %v1368
    %2385 = vmatpush1.bf16.msra.mxu0 %v1367
    %2386 = vmatprep.subr.bf16.mxu0 %v1372
    %2387 = vmatpush1.bf16.msra.mxu0 %v1371
    %2388 = vmatprep.subr.bf16.mxu0 %v1376
    %2389 = vmatpush1.bf16.msra.mxu0 %v1375
    %2390 = vmatprep.subr.bf16.mxu0 %v1380
    %2391 = vmatpush1.bf16.msra.mxu0 %v1379
    %2392 = vmatprep.subr.bf16.mxu0 %v1384
    %2393 = vmatpush1.bf16.msra.mxu0 %v1383
    %2394 = vmatprep.subr.bf16.mxu0 %v1388
    %2395 = vmatpush1.bf16.msra.mxu0 %v1387
    %2396 = vmatprep.subr.bf16.mxu0 %v1392
    %2397 = vmatpush1.bf16.msra.mxu0 %v1391
    %2398 = vmatprep.subr.bf16.mxu0 0
    %2399 = vmatpush1.bf16.msra.mxu0 0
    %2400 = vmatprep.subr.bf16.mxu0 0
    %2401 = vmatpush1.bf16.msra.mxu0 0
    %2402 = vmatprep.subr.bf16.mxu0 0
    %2403 = vmatpush1.bf16.msra.mxu0 0
    %2404 = vmatprep.subr.bf16.mxu0 0
    %2405 = vmatpush1.bf16.msra.mxu0 0
    %2406 = vmatprep.subr.bf16.mxu0 0
    %2407 = vmatpush1.bf16.msra.mxu0 0
    %2408 = vmatprep.subr.bf16.mxu0 0
    %2409 = vmatpush1.bf16.msra.mxu0 0
    %2410 = vmatprep.subr.bf16.mxu0 0
    %2411 = vmatpush1.bf16.msra.mxu0 0
    %2412 = vmatprep.subr.bf16.mxu0 0
    %2413 = vmatpush1.bf16.msra.mxu0 0
    %2414 = vmatprep.mubr.bf16.mxu0 0
    %2415 = vmatmul.mubr.bf16.gmra.mrb[0].mxu0 %v2340
    %v2416 = vpop.f32.mrb[0].mxu0
    %v2417 = vadd.f32 0.0, %v2416
    %v2418 = vpop.f32.mrb[0].mxu0
    %v2419 = vadd.f32 0.0, %v2418
    %v2420 = vpop.f32.mrb[0].mxu0
    %v2421 = vpop.f32.mrb[0].mxu0
    %2422 = vdwg.mxu0
    %v2423 = vld [vmem:[%s831] sm:$0xff]
    %v2424 = vpack.c.bf16 %v2423, %v2423
    %2425 = vmatprep.subr.bf16.mxu0 %v1606
    %2426 = vmatpush1.bf16.msra.mxu0 %v1605
    %2427 = vmatprep.subr.bf16.mxu0 %v1610
    %2428 = vmatpush1.bf16.msra.mxu0 %v1609
    %2429 = vmatprep.subr.bf16.mxu0 %v1614
    %2430 = vmatpush1.bf16.msra.mxu0 %v1613
    %2431 = vmatprep.subr.bf16.mxu0 %v1618
    %2432 = vmatpush1.bf16.msra.mxu0 %v1617
    %2433 = vmatprep.subr.bf16.mxu0 %v1622
    %2434 = vmatpush1.bf16.msra.mxu0 %v1621
    %2435 = vmatprep.subr.bf16.mxu0 %v1626
    %2436 = vmatpush1.bf16.msra.mxu0 %v1625
    %2437 = vmatprep.subr.bf16.mxu0 %v1630
    %2438 = vmatpush1.bf16.msra.mxu0 %v1629
    %2439 = vmatprep.subr.bf16.mxu0 %v1634
    %2440 = vmatpush1.bf16.msra.mxu0 %v1633
    %2441 = vmatprep.subr.bf16.mxu0 0
    %2442 = vmatpush1.bf16.msra.mxu0 0
    %2443 = vmatprep.subr.bf16.mxu0 0
    %2444 = vmatpush1.bf16.msra.mxu0 0
    %2445 = vmatprep.subr.bf16.mxu0 0
    %2446 = vmatpush1.bf16.msra.mxu0 0
    %2447 = vmatprep.subr.bf16.mxu0 0
    %2448 = vmatpush1.bf16.msra.mxu0 0
    %2449 = vmatprep.subr.bf16.mxu0 0
    %2450 = vmatpush1.bf16.msra.mxu0 0
    %2451 = vmatprep.subr.bf16.mxu0 0
    %2452 = vmatpush1.bf16.msra.mxu0 0
    %2453 = vmatprep.subr.bf16.mxu0 0
    %2454 = vmatpush1.bf16.msra.mxu0 0
    %2455 = vmatprep.subr.bf16.mxu0 0
    %2456 = vmatpush1.bf16.msra.mxu0 0
    %2457 = vmatprep.mubr.bf16.mxu0 0
    %2458 = vmatmul.mubr.bf16.gmra.mrb[0].mxu0 %v2424
    %v2459 = vpop.f32.mrb[0].mxu0
    %v2460 = vadd.f32 %v2376, %v2459
    %v2461 = vpop.f32.mrb[0].mxu0
    %v2462 = vadd.f32 %v2378, %v2461
    %v2463 = vpop.f32.mrb[0].mxu0
    %v2464 = vpop.f32.mrb[0].mxu0
    %2465 = vdwg.mxu0
    %2466 = vmatprep.subr.bf16.mxu0 %v1608
    %2467 = vmatpush1.bf16.msra.mxu0 %v1607
    %2468 = vmatprep.subr.bf16.mxu0 %v1612
    %2469 = vmatpush1.bf16.msra.mxu0 %v1611
    %2470 = vmatprep.subr.bf16.mxu0 %v1616
    %2471 = vmatpush1.bf16.msra.mxu0 %v1615
    %2472 = vmatprep.subr.bf16.mxu0 %v1620
    %2473 = vmatpush1.bf16.msra.mxu0 %v1619
    %2474 = vmatprep.subr.bf16.mxu0 %v1624
    %2475 = vmatpush1.bf16.msra.mxu0 %v1623
    %2476 = vmatprep.subr.bf16.mxu0 %v1628
    %2477 = vmatpush1.bf16.msra.mxu0 %v1627
    %2478 = vmatprep.subr.bf16.mxu0 %v1632
    %2479 = vmatpush1.bf16.msra.mxu0 %v1631
    %2480 = vmatprep.subr.bf16.mxu0 %v1636
    %2481 = vmatpush1.bf16.msra.mxu0 %v1635
    %2482 = vmatprep.subr.bf16.mxu0 0
    %2483 = vmatpush1.bf16.msra.mxu0 0
    %2484 = vmatprep.subr.bf16.mxu0 0
    %2485 = vmatpush1.bf16.msra.mxu0 0
    %2486 = vmatprep.subr.bf16.mxu0 0
    %2487 = vmatpush1.bf16.msra.mxu0 0
    %2488 = vmatprep.subr.bf16.mxu0 0
    %2489 = vmatpush1.bf16.msra.mxu0 0
    %2490 = vmatprep.subr.bf16.mxu0 0
    %2491 = vmatpush1.bf16.msra.mxu0 0
    %2492 = vmatprep.subr.bf16.mxu0 0
    %2493 = vmatpush1.bf16.msra.mxu0 0
    %2494 = vmatprep.subr.bf16.mxu0 0
    %2495 = vmatpush1.bf16.msra.mxu0 0
    %2496 = vmatprep.subr.bf16.mxu0 0
    %2497 = vmatpush1.bf16.msra.mxu0 0
    %2498 = vmatprep.mubr.bf16.mxu0 0
    %2499 = vmatmul.mubr.bf16.gmra.mrb[0].mxu0 %v2424
    %v2500 = vpop.f32.mrb[0].mxu0
    %v2501 = vadd.f32 %v2417, %v2500
    %v2502 = vpop.f32.mrb[0].mxu0
    %v2503 = vadd.f32 %v2419, %v2502
    %v2504 = vpop.f32.mrb[0].mxu0
    %v2505 = vpop.f32.mrb[0].mxu0
    %2506 = vdwg.mxu0
    %v2507 = vadd.f32 %v2460, %v1243
    %v2508 = vadd.f32 %v2462, %v1247
    %v2509 = vadd.f32 %v2501, %v1251
    %v2510 = vadd.f32 %v2503, %v1255
    %v2511 = vmul.f32 %v2507, 0.5
    %v2512 = vtanh.pop %v2511
    %v2513 = vadd.f32 %v2512, 1.0
    %v2514 = vmul.f32 %v2513, 0.5
    %v2515 = vmul.f32 %v2508, 0.5
    %v2516 = vtanh.pop %v2515
    %v2517 = vadd.f32 %v2516, 1.0
    %v2518 = vmul.f32 %v2517, 0.5
    %v2519 = vtanh.pop %v2509
    %v2520 = vmul.f32 %v2510, 0.5
    %v2521 = vtanh.pop %v2520
    %v2522 = vadd.f32 %v2521, 1.0
    %v2523 = vmul.f32 %v2522, 0.5
    %v2524 = vmul.f32 %v2518, %v2337
    %v2525 = vmul.f32 %v2514, %v2519
    %v2526 = vadd.f32 %v2524, %v2525
    %v2527 = vtanh.pop %v2526
    %v2528 = vmul.f32 %v2523, %v2527
    %v2529 = vpack.c.bf16 %v2528, %v2528
    %2530 = vmatprep.subr.bf16.mxu0 %v1362
    %2531 = vmatpush1.bf16.msra.mxu0 %v1361
    %2532 = vmatprep.subr.bf16.mxu0 %v1366
    %2533 = vmatpush1.bf16.msra.mxu0 %v1365
    %2534 = vmatprep.subr.bf16.mxu0 %v1370
    %2535 = vmatpush1.bf16.msra.mxu0 %v1369
    %2536 = vmatprep.subr.bf16.mxu0 %v1374
    %2537 = vmatpush1.bf16.msra.mxu0 %v1373
    %2538 = vmatprep.subr.bf16.mxu0 %v1378
    %2539 = vmatpush1.bf16.msra.mxu0 %v1377
    %2540 = vmatprep.subr.bf16.mxu0 %v1382
    %2541 = vmatpush1.bf16.msra.mxu0 %v1381
    %2542 = vmatprep.subr.bf16.mxu0 %v1386
    %2543 = vmatpush1.bf16.msra.mxu0 %v1385
    %2544 = vmatprep.subr.bf16.mxu0 %v1390
    %2545 = vmatpush1.bf16.msra.mxu0 %v1389
    %2546 = vmatprep.subr.bf16.mxu0 0
    %2547 = vmatpush1.bf16.msra.mxu0 0
    %2548 = vmatprep.subr.bf16.mxu0 0
    %2549 = vmatpush1.bf16.msra.mxu0 0
    %2550 = vmatprep.subr.bf16.mxu0 0
    %2551 = vmatpush1.bf16.msra.mxu0 0
    %2552 = vmatprep.subr.bf16.mxu0 0
    %2553 = vmatpush1.bf16.msra.mxu0 0
    %2554 = vmatprep.subr.bf16.mxu0 0
    %2555 = vmatpush1.bf16.msra.mxu0 0
    %2556 = vmatprep.subr.bf16.mxu0 0
    %2557 = vmatpush1.bf16.msra.mxu0 0
    %2558 = vmatprep.subr.bf16.mxu0 0
    %2559 = vmatpush1.bf16.msra.mxu0 0
    %2560 = vmatprep.subr.bf16.mxu0 0
    %2561 = vmatpush1.bf16.msra.mxu0 0
    %2562 = vmatprep.mubr.bf16.mxu0 0
    %2563 = vmatmul.mubr.bf16.gmra.mrb[0].mxu0 %v2529
    %v2564 = vpop.f32.mrb[0].mxu0
    %v2565 = vadd.f32 0.0, %v2564
    %v2566 = vpop.f32.mrb[0].mxu0
    %v2567 = vadd.f32 0.0, %v2566
    %v2568 = vpop.f32.mrb[0].mxu0
    %v2569 = vpop.f32.mrb[0].mxu0
    %2570 = vdwg.mxu0
    %2571 = vmatprep.subr.bf16.mxu0 %v1364
    %2572 = vmatpush1.bf16.msra.mxu0 %v1363
    %2573 = vmatprep.subr.bf16.mxu0 %v1368
    %2574 = vmatpush1.bf16.msra.mxu0 %v1367
    %2575 = vmatprep.subr.bf16.mxu0 %v1372
    %2576 = vmatpush1.bf16.msra.mxu0 %v1371
    %2577 = vmatprep.subr.bf16.mxu0 %v1376
    %2578 = vmatpush1.bf16.msra.mxu0 %v1375
    %2579 = vmatprep.subr.bf16.mxu0 %v1380
    %2580 = vmatpush1.bf16.msra.mxu0 %v1379
    %2581 = vmatprep.subr.bf16.mxu0 %v1384
    %2582 = vmatpush1.bf16.msra.mxu0 %v1383
    %2583 = vmatprep.subr.bf16.mxu0 %v1388
    %2584 = vmatpush1.bf16.msra.mxu0 %v1387
    %2585 = vmatprep.subr.bf16.mxu0 %v1392
    %2586 = vmatpush1.bf16.msra.mxu0 %v1391
    %2587 = vmatprep.subr.bf16.mxu0 0
    %2588 = vmatpush1.bf16.msra.mxu0 0
    %2589 = vmatprep.subr.bf16.mxu0 0
    %2590 = vmatpush1.bf16.msra.mxu0 0
    %2591 = vmatprep.subr.bf16.mxu0 0
    %2592 = vmatpush1.bf16.msra.mxu0 0
    %2593 = vmatprep.subr.bf16.mxu0 0
    %2594 = vmatpush1.bf16.msra.mxu0 0
    %2595 = vmatprep.subr.bf16.mxu0 0
    %2596 = vmatpush1.bf16.msra.mxu0 0
    %2597 = vmatprep.subr.bf16.mxu0 0
    %2598 = vmatpush1.bf16.msra.mxu0 0
    %2599 = vmatprep.subr.bf16.mxu0 0
    %2600 = vmatpush1.bf16.msra.mxu0 0
    %2601 = vmatprep.subr.bf16.mxu0 0
    %2602 = vmatpush1.bf16.msra.mxu0 0
    %2603 = vmatprep.mubr.bf16.mxu0 0
    %2604 = vmatmul.mubr.bf16.gmra.mrb[0].mxu0 %v2529
    %v2605 = vpop.f32.mrb[0].mxu0
    %v2606 = vadd.f32 0.0, %v2605
    %v2607 = vpop.f32.mrb[0].mxu0
    %v2608 = vadd.f32 0.0, %v2607
    %v2609 = vpop.f32.mrb[0].mxu0
    %v2610 = vpop.f32.mrb[0].mxu0
    %2611 = vdwg.mxu0
    %v2612 = vld [vmem:[%s943] sm:$0xff]
    %v2613 = vpack.c.bf16 %v2612, %v2612
    %2614 = vmatprep.subr.bf16.mxu0 %v1606
    %2615 = vmatpush1.bf16.msra.mxu0 %v1605
    %2616 = vmatprep.subr.bf16.mxu0 %v1610
    %2617 = vmatpush1.bf16.msra.mxu0 %v1609
    %2618 = vmatprep.subr.bf16.mxu0 %v1614
    %2619 = vmatpush1.bf16.msra.mxu0 %v1613
    %2620 = vmatprep.subr.bf16.mxu0 %v1618
    %2621 = vmatpush1.bf16.msra.mxu0 %v1617
    %2622 = vmatprep.subr.bf16.mxu0 %v1622
    %2623 = vmatpush1.bf16.msra.mxu0 %v1621
    %2624 = vmatprep.subr.bf16.mxu0 %v1626
    %2625 = vmatpush1.bf16.msra.mxu0 %v1625
    %2626 = vmatprep.subr.bf16.mxu0 %v1630
    %2627 = vmatpush1.bf16.msra.mxu0 %v1629
    %2628 = vmatprep.subr.bf16.mxu0 %v1634
    %2629 = vmatpush1.bf16.msra.mxu0 %v1633
    %2630 = vmatprep.subr.bf16.mxu0 0
    %2631 = vmatpush1.bf16.msra.mxu0 0
    %2632 = vmatprep.subr.bf16.mxu0 0
    %2633 = vmatpush1.bf16.msra.mxu0 0
    %2634 = vmatprep.subr.bf16.mxu0 0
    %2635 = vmatpush1.bf16.msra.mxu0 0
    %2636 = vmatprep.subr.bf16.mxu0 0
    %2637 = vmatpush1.bf16.msra.mxu0 0
    %2638 = vmatprep.subr.bf16.mxu0 0
    %2639 = vmatpush1.bf16.msra.mxu0 0
    %2640 = vmatprep.subr.bf16.mxu0 0
    %2641 = vmatpush1.bf16.msra.mxu0 0
    %2642 = vmatprep.subr.bf16.mxu0 0
    %2643 = vmatpush1.bf16.msra.mxu0 0
    %2644 = vmatprep.subr.bf16.mxu0 0
    %2645 = vmatpush1.bf16.msra.mxu0 0
    %2646 = vmatprep.mubr.bf16.mxu0 0
    %2647 = vmatmul.mubr.bf16.gmra.mrb[0].mxu0 %v2613
    %v2648 = vpop.f32.mrb[0].mxu0
    %v2649 = vadd.f32 %v2565, %v2648
    %v2650 = vpop.f32.mrb[0].mxu0
    %v2651 = vadd.f32 %v2567, %v2650
    %v2652 = vpop.f32.mrb[0].mxu0
    %v2653 = vpop.f32.mrb[0].mxu0
    %2654 = vdwg.mxu0
    %2655 = vmatprep.subr.bf16.mxu0 %v1608
    %2656 = vmatpush1.bf16.msra.mxu0 %v1607
    %2657 = vmatprep.subr.bf16.mxu0 %v1612
    %2658 = vmatpush1.bf16.msra.mxu0 %v1611
    %2659 = vmatprep.subr.bf16.mxu0 %v1616
    %2660 = vmatpush1.bf16.msra.mxu0 %v1615
    %2661 = vmatprep.subr.bf16.mxu0 %v1620
    %2662 = vmatpush1.bf16.msra.mxu0 %v1619
    %2663 = vmatprep.subr.bf16.mxu0 %v1624
    %2664 = vmatpush1.bf16.msra.mxu0 %v1623
    %2665 = vmatprep.subr.bf16.mxu0 %v1628
    %2666 = vmatpush1.bf16.msra.mxu0 %v1627
    %2667 = vmatprep.subr.bf16.mxu0 %v1632
    %2668 = vmatpush1.bf16.msra.mxu0 %v1631
    %2669 = vmatprep.subr.bf16.mxu0 %v1636
    %2670 = vmatpush1.bf16.msra.mxu0 %v1635
    %2671 = vmatprep.subr.bf16.mxu0 0
    %2672 = vmatpush1.bf16.msra.mxu0 0
    %2673 = vmatprep.subr.bf16.mxu0 0
    %2674 = vmatpush1.bf16.msra.mxu0 0
    %2675 = vmatprep.subr.bf16.mxu0 0
    %2676 = vmatpush1.bf16.msra.mxu0 0
    %2677 = vmatprep.subr.bf16.mxu0 0
    %2678 = vmatpush1.bf16.msra.mxu0 0
    %2679 = vmatprep.subr.bf16.mxu0 0
    %2680 = vmatpush1.bf16.msra.mxu0 0
    %2681 = vmatprep.subr.bf16.mxu0 0
    %2682 = vmatpush1.bf16.msra.mxu0 0
    %2683 = vmatprep.subr.bf16.mxu0 0
    %2684 = vmatpush1.bf16.msra.mxu0 0
    %2685 = vmatprep.subr.bf16.mxu0 0
    %2686 = vmatpush1.bf16.msra.mxu0 0
    %2687 = vmatprep.mubr.bf16.mxu0 0
    %2688 = vmatmul.mubr.bf16.gmra.mrb[0].mxu0 %v2613
    %v2689 = vpop.f32.mrb[0].mxu0
    %v2690 = vadd.f32 %v2606, %v2689
    %v2691 = vpop.f32.mrb[0].mxu0
    %v2692 = vadd.f32 %v2608, %v2691
    %v2693 = vpop.f32.mrb[0].mxu0
    %v2694 = vpop.f32.mrb[0].mxu0
    %2695 = vdwg.mxu0
    %v2696 = vadd.f32 %v2649, %v1243
    %v2697 = vadd.f32 %v2651, %v1247
    %v2698 = vadd.f32 %v2690, %v1251
    %v2699 = vadd.f32 %v2692, %v1255
    %v2700 = vmul.f32 %v2696, 0.5
    %v2701 = vtanh.pop %v2700
    %v2702 = vadd.f32 %v2701, 1.0
    %v2703 = vmul.f32 %v2702, 0.5
    %v2704 = vmul.f32 %v2697, 0.5
    %v2705 = vtanh.pop %v2704
    %v2706 = vadd.f32 %v2705, 1.0
    %v2707 = vmul.f32 %v2706, 0.5
    %v2708 = vtanh.pop %v2698
    %v2709 = vmul.f32 %v2699, 0.5
    %v2710 = vtanh.pop %v2709
    %v2711 = vadd.f32 %v2710, 1.0
    %v2712 = vmul.f32 %v2711, 0.5
    %v2713 = vmul.f32 %v2707, %v2526
    %v2714 = vmul.f32 %v2703, %v2708
    %v2715 = vadd.f32 %v2713, %v2714
    %v2716 = vtanh.pop %v2715
    %v2717 = vmul.f32 %v2712, %v2716
    %v2718 = vpack.c.bf16 %v2717, %v2717
    %2719 = vmatprep.subr.bf16.mxu0 %v1362
    %2720 = vmatpush1.bf16.msra.mxu0 %v1361
    %2721 = vmatprep.subr.bf16.mxu0 %v1366
    %2722 = vmatpush1.bf16.msra.mxu0 %v1365
    %2723 = vmatprep.subr.bf16.mxu0 %v1370
    %2724 = vmatpush1.bf16.msra.mxu0 %v1369
    %2725 = vmatprep.subr.bf16.mxu0 %v1374
    %2726 = vmatpush1.bf16.msra.mxu0 %v1373
    %2727 = vmatprep.subr.bf16.mxu0 %v1378
    %2728 = vmatpush1.bf16.msra.mxu0 %v1377
    %2729 = vmatprep.subr.bf16.mxu0 %v1382
    %2730 = vmatpush1.bf16.msra.mxu0 %v1381
    %2731 = vmatprep.subr.bf16.mxu0 %v1386
    %2732 = vmatpush1.bf16.msra.mxu0 %v1385
    %2733 = vmatprep.subr.bf16.mxu0 %v1390
    %2734 = vmatpush1.bf16.msra.mxu0 %v1389
    %2735 = vmatprep.subr.bf16.mxu0 0
    %2736 = vmatpush1.bf16.msra.mxu0 0
    %2737 = vmatprep.subr.bf16.mxu0 0
    %2738 = vmatpush1.bf16.msra.mxu0 0
    %2739 = vmatprep.subr.bf16.mxu0 0
    %2740 = vmatpush1.bf16.msra.mxu0 0
    %2741 = vmatprep.subr.bf16.mxu0 0
    %2742 = vmatpush1.bf16.msra.mxu0 0
    %2743 = vmatprep.subr.bf16.mxu0 0
    %2744 = vmatpush1.bf16.msra.mxu0 0
    %2745 = vmatprep.subr.bf16.mxu0 0
    %2746 = vmatpush1.bf16.msra.mxu0 0
    %2747 = vmatprep.subr.bf16.mxu0 0
    %2748 = vmatpush1.bf16.msra.mxu0 0
    %2749 = vmatprep.subr.bf16.mxu0 0
    %2750 = vmatpush1.bf16.msra.mxu0 0
    %2751 = vmatprep.mubr.bf16.mxu0 0
    %2752 = vmatmul.mubr.bf16.gmra.mrb[0].mxu0 %v2718
    %v2753 = vpop.f32.mrb[0].mxu0
    %v2754 = vadd.f32 0.0, %v2753
    %v2755 = vpop.f32.mrb[0].mxu0
    %v2756 = vadd.f32 0.0, %v2755
    %v2757 = vpop.f32.mrb[0].mxu0
    %v2758 = vpop.f32.mrb[0].mxu0
    %2759 = vdwg.mxu0
    %2760 = vmatprep.subr.bf16.mxu0 %v1364
    %2761 = vmatpush1.bf16.msra.mxu0 %v1363
    %2762 = vmatprep.subr.bf16.mxu0 %v1368
    %2763 = vmatpush1.bf16.msra.mxu0 %v1367
    %2764 = vmatprep.subr.bf16.mxu0 %v1372
    %2765 = vmatpush1.bf16.msra.mxu0 %v1371
    %2766 = vmatprep.subr.bf16.mxu0 %v1376
    %2767 = vmatpush1.bf16.msra.mxu0 %v1375
    %2768 = vmatprep.subr.bf16.mxu0 %v1380
    %2769 = vmatpush1.bf16.msra.mxu0 %v1379
    %2770 = vmatprep.subr.bf16.mxu0 %v1384
    %2771 = vmatpush1.bf16.msra.mxu0 %v1383
    %2772 = vmatprep.subr.bf16.mxu0 %v1388
    %2773 = vmatpush1.bf16.msra.mxu0 %v1387
    %2774 = vmatprep.subr.bf16.mxu0 %v1392
    %2775 = vmatpush1.bf16.msra.mxu0 %v1391
    %2776 = vmatprep.subr.bf16.mxu0 0
    %2777 = vmatpush1.bf16.msra.mxu0 0
    %2778 = vmatprep.subr.bf16.mxu0 0
    %2779 = vmatpush1.bf16.msra.mxu0 0
    %2780 = vmatprep.subr.bf16.mxu0 0
    %2781 = vmatpush1.bf16.msra.mxu0 0
    %2782 = vmatprep.subr.bf16.mxu0 0
    %2783 = vmatpush1.bf16.msra.mxu0 0
    %2784 = vmatprep.subr.bf16.mxu0 0
    %2785 = vmatpush1.bf16.msra.mxu0 0
    %2786 = vmatprep.subr.bf16.mxu0 0
    %2787 = vmatpush1.bf16.msra.mxu0 0
    %2788 = vmatprep.subr.bf16.mxu0 0
    %2789 = vmatpush1.bf16.msra.mxu0 0
    %2790 = vmatprep.subr.bf16.mxu0 0
    %2791 = vmatpush1.bf16.msra.mxu0 0
    %2792 = vmatprep.mubr.bf16.mxu0 0
    %2793 = vmatmul.mubr.bf16.gmra.mrb[0].mxu0 %v2718
    %v2794 = vpop.f32.mrb[0].mxu0
    %v2795 = vadd.f32 0.0, %v2794
    %v2796 = vpop.f32.mrb[0].mxu0
    %v2797 = vadd.f32 0.0, %v2796
    %v2798 = vpop.f32.mrb[0].mxu0
    %v2799 = vpop.f32.mrb[0].mxu0
    %2800 = vdwg.mxu0
    %v2801 = vld [vmem:[%s1055] sm:$0xff]
    %v2802 = vpack.c.bf16 %v2801, %v2801
    %2803 = vmatprep.subr.bf16.mxu0 %v1606
    %2804 = vmatpush1.bf16.msra.mxu0 %v1605
    %2805 = vmatprep.subr.bf16.mxu0 %v1610
    %2806 = vmatpush1.bf16.msra.mxu0 %v1609
    %2807 = vmatprep.subr.bf16.mxu0 %v1614
    %2808 = vmatpush1.bf16.msra.mxu0 %v1613
    %2809 = vmatprep.subr.bf16.mxu0 %v1618
    %2810 = vmatpush1.bf16.msra.mxu0 %v1617
    %2811 = vmatprep.subr.bf16.mxu0 %v1622
    %2812 = vmatpush1.bf16.msra.mxu0 %v1621
    %2813 = vmatprep.subr.bf16.mxu0 %v1626
    %2814 = vmatpush1.bf16.msra.mxu0 %v1625
    %2815 = vmatprep.subr.bf16.mxu0 %v1630
    %2816 = vmatpush1.bf16.msra.mxu0 %v1629
    %2817 = vmatprep.subr.bf16.mxu0 %v1634
    %2818 = vmatpush1.bf16.msra.mxu0 %v1633
    %2819 = vmatprep.subr.bf16.mxu0 0
    %2820 = vmatpush1.bf16.msra.mxu0 0
    %2821 = vmatprep.subr.bf16.mxu0 0
    %2822 = vmatpush1.bf16.msra.mxu0 0
    %2823 = vmatprep.subr.bf16.mxu0 0
    %2824 = vmatpush1.bf16.msra.mxu0 0
    %2825 = vmatprep.subr.bf16.mxu0 0
    %2826 = vmatpush1.bf16.msra.mxu0 0
    %2827 = vmatprep.subr.bf16.mxu0 0
    %2828 = vmatpush1.bf16.msra.mxu0 0
    %2829 = vmatprep.subr.bf16.mxu0 0
    %2830 = vmatpush1.bf16.msra.mxu0 0
    %2831 = vmatprep.subr.bf16.mxu0 0
    %2832 = vmatpush1.bf16.msra.mxu0 0
    %2833 = vmatprep.subr.bf16.mxu0 0
    %2834 = vmatpush1.bf16.msra.mxu0 0
    %2835 = vmatprep.mubr.bf16.mxu0 0
    %2836 = vmatmul.mubr.bf16.gmra.mrb[0].mxu0 %v2802
    %v2837 = vpop.f32.mrb[0].mxu0
    %v2838 = vadd.f32 %v2754, %v2837
    %v2839 = vpop.f32.mrb[0].mxu0
    %v2840 = vadd.f32 %v2756, %v2839
    %v2841 = vpop.f32.mrb[0].mxu0
    %v2842 = vpop.f32.mrb[0].mxu0
    %2843 = vdwg.mxu0
    %2844 = vmatprep.subr.bf16.mxu0 %v1608
    %2845 = vmatpush1.bf16.msra.mxu0 %v1607
    %2846 = vmatprep.subr.bf16.mxu0 %v1612
    %2847 = vmatpush1.bf16.msra.mxu0 %v1611
    %2848 = vmatprep.subr.bf16.mxu0 %v1616
    %2849 = vmatpush1.bf16.msra.mxu0 %v1615
    %2850 = vmatprep.subr.bf16.mxu0 %v1620
    %2851 = vmatpush1.bf16.msra.mxu0 %v1619
    %2852 = vmatprep.subr.bf16.mxu0 %v1624
    %2853 = vmatpush1.bf16.msra.mxu0 %v1623
    %2854 = vmatprep.subr.bf16.mxu0 %v1628
    %2855 = vmatpush1.bf16.msra.mxu0 %v1627
    %2856 = vmatprep.subr.bf16.mxu0 %v1632
    %2857 = vmatpush1.bf16.msra.mxu0 %v1631
    %2858 = vmatprep.subr.bf16.mxu0 %v1636
    %2859 = vmatpush1.bf16.msra.mxu0 %v1635
    %2860 = vmatprep.subr.bf16.mxu0 0
    %2861 = vmatpush1.bf16.msra.mxu0 0
    %2862 = vmatprep.subr.bf16.mxu0 0
    %2863 = vmatpush1.bf16.msra.mxu0 0
    %2864 = vmatprep.subr.bf16.mxu0 0
    %2865 = vmatpush1.bf16.msra.mxu0 0
    %2866 = vmatprep.subr.bf16.mxu0 0
    %2867 = vmatpush1.bf16.msra.mxu0 0
    %2868 = vmatprep.subr.bf16.mxu0 0
    %2869 = vmatpush1.bf16.msra.mxu0 0
    %2870 = vmatprep.subr.bf16.mxu0 0
    %2871 = vmatpush1.bf16.msra.mxu0 0
    %2872 = vmatprep.subr.bf16.mxu0 0
    %2873 = vmatpush1.bf16.msra.mxu0 0
    %2874 = vmatprep.subr.bf16.mxu0 0
    %2875 = vmatpush1.bf16.msra.mxu0 0
    %2876 = vmatprep.mubr.bf16.mxu0 0
    %2877 = vmatmul.mubr.bf16.gmra.mrb[0].mxu0 %v2802
    %v2878 = vpop.f32.mrb[0].mxu0
    %v2879 = vadd.f32 %v2795, %v2878
    %v2880 = vpop.f32.mrb[0].mxu0
    %v2881 = vadd.f32 %v2797, %v2880
    %v2882 = vpop.f32.mrb[0].mxu0
    %v2883 = vpop.f32.mrb[0].mxu0
    %2884 = vdwg.mxu0
    %v2885 = vadd.f32 %v2838, %v1243
    %v2886 = vadd.f32 %v2840, %v1247
    %v2887 = vadd.f32 %v2879, %v1251
    %v2888 = vadd.f32 %v2881, %v1255
    %v2889 = vmul.f32 %v2885, 0.5
    %v2890 = vtanh.pop %v2889
    %v2891 = vadd.f32 %v2890, 1.0
    %v2892 = vmul.f32 %v2891, 0.5
    %v2893 = vmul.f32 %v2886, 0.5
    %v2894 = vtanh.pop %v2893
    %v2895 = vadd.f32 %v2894, 1.0
    %v2896 = vmul.f32 %v2895, 0.5
    %v2897 = vtanh.pop %v2887
    %v2898 = vmul.f32 %v2888, 0.5
    %v2899 = vtanh.pop %v2898
    %v2900 = vadd.f32 %v2899, 1.0
    %v2901 = vmul.f32 %v2900, 0.5
    %v2902 = vmul.f32 %v2896, %v2715
    %v2903 = vmul.f32 %v2892, %v2897
    %v2904 = vadd.f32 %v2902, %v2903
    %v2905 = vtanh.pop %v2904
    %v2906 = vmul.f32 %v2901, %v2905
    %v2907 = vpack.c.bf16 %v2906, %v2906
    %2908 = vmatprep.subr.bf16.mxu0 %v1362
    %2909 = vmatpush1.bf16.msra.mxu0 %v1361
    %2910 = vmatprep.subr.bf16.mxu0 %v1366
    %2911 = vmatpush1.bf16.msra.mxu0 %v1365
    %2912 = vmatprep.subr.bf16.mxu0 %v1370
    %2913 = vmatpush1.bf16.msra.mxu0 %v1369
    %2914 = vmatprep.subr.bf16.mxu0 %v1374
    %2915 = vmatpush1.bf16.msra.mxu0 %v1373
    %2916 = vmatprep.subr.bf16.mxu0 %v1378
    %2917 = vmatpush1.bf16.msra.mxu0 %v1377
    %2918 = vmatprep.subr.bf16.mxu0 %v1382
    %2919 = vmatpush1.bf16.msra.mxu0 %v1381
    %2920 = vmatprep.subr.bf16.mxu0 %v1386
    %2921 = vmatpush1.bf16.msra.mxu0 %v1385
    %2922 = vmatprep.subr.bf16.mxu0 %v1390
    %2923 = vmatpush1.bf16.msra.mxu0 %v1389
    %2924 = vmatprep.subr.bf16.mxu0 0
    %2925 = vmatpush1.bf16.msra.mxu0 0
    %2926 = vmatprep.subr.bf16.mxu0 0
    %2927 = vmatpush1.bf16.msra.mxu0 0
    %2928 = vmatprep.subr.bf16.mxu0 0
    %2929 = vmatpush1.bf16.msra.mxu0 0
    %2930 = vmatprep.subr.bf16.mxu0 0
    %2931 = vmatpush1.bf16.msra.mxu0 0
    %2932 = vmatprep.subr.bf16.mxu0 0
    %2933 = vmatpush1.bf16.msra.mxu0 0
    %2934 = vmatprep.subr.bf16.mxu0 0
    %2935 = vmatpush1.bf16.msra.mxu0 0
    %2936 = vmatprep.subr.bf16.mxu0 0
    %2937 = vmatpush1.bf16.msra.mxu0 0
    %2938 = vmatprep.subr.bf16.mxu0 0
    %2939 = vmatpush1.bf16.msra.mxu0 0
    %2940 = vmatprep.mubr.bf16.mxu0 0
    %2941 = vmatmul.mubr.bf16.gmra.mrb[0].mxu0 %v2907
    %v2942 = vpop.f32.mrb[0].mxu0
    %v2943 = vadd.f32 0.0, %v2942
    %v2944 = vpop.f32.mrb[0].mxu0
    %v2945 = vadd.f32 0.0, %v2944
    %v2946 = vpop.f32.mrb[0].mxu0
    %v2947 = vpop.f32.mrb[0].mxu0
    %2948 = vdwg.mxu0
    %2949 = vmatprep.subr.bf16.mxu0 %v1364
    %2950 = vmatpush1.bf16.msra.mxu0 %v1363
    %2951 = vmatprep.subr.bf16.mxu0 %v1368
    %2952 = vmatpush1.bf16.msra.mxu0 %v1367
    %2953 = vmatprep.subr.bf16.mxu0 %v1372
    %2954 = vmatpush1.bf16.msra.mxu0 %v1371
    %2955 = vmatprep.subr.bf16.mxu0 %v1376
    %2956 = vmatpush1.bf16.msra.mxu0 %v1375
    %2957 = vmatprep.subr.bf16.mxu0 %v1380
    %2958 = vmatpush1.bf16.msra.mxu0 %v1379
    %2959 = vmatprep.subr.bf16.mxu0 %v1384
    %2960 = vmatpush1.bf16.msra.mxu0 %v1383
    %2961 = vmatprep.subr.bf16.mxu0 %v1388
    %2962 = vmatpush1.bf16.msra.mxu0 %v1387
    %2963 = vmatprep.subr.bf16.mxu0 %v1392
    %2964 = vmatpush1.bf16.msra.mxu0 %v1391
    %2965 = vmatprep.subr.bf16.mxu0 0
    %2966 = vmatpush1.bf16.msra.mxu0 0
    %2967 = vmatprep.subr.bf16.mxu0 0
    %2968 = vmatpush1.bf16.msra.mxu0 0
    %2969 = vmatprep.subr.bf16.mxu0 0
    %2970 = vmatpush1.bf16.msra.mxu0 0
    %2971 = vmatprep.subr.bf16.mxu0 0
    %2972 = vmatpush1.bf16.msra.mxu0 0
    %2973 = vmatprep.subr.bf16.mxu0 0
    %2974 = vmatpush1.bf16.msra.mxu0 0
    %2975 = vmatprep.subr.bf16.mxu0 0
    %2976 = vmatpush1.bf16.msra.mxu0 0
    %2977 = vmatprep.subr.bf16.mxu0 0
    %2978 = vmatpush1.bf16.msra.mxu0 0
    %2979 = vmatprep.subr.bf16.mxu0 0
    %2980 = vmatpush1.bf16.msra.mxu0 0
    %2981 = vmatprep.mubr.bf16.mxu0 0
    %2982 = vmatmul.mubr.bf16.gmra.mrb[0].mxu0 %v2907
    %v2983 = vpop.f32.mrb[0].mxu0
    %v2984 = vadd.f32 0.0, %v2983
    %v2985 = vpop.f32.mrb[0].mxu0
    %v2986 = vadd.f32 0.0, %v2985
    %v2987 = vpop.f32.mrb[0].mxu0
    %v2988 = vpop.f32.mrb[0].mxu0
    %2989 = vdwg.mxu0
    %v2990 = vld [vmem:[%s1167] sm:$0xff]
    %v2991 = vpack.c.bf16 %v2990, %v2990
    %2992 = vmatprep.subr.bf16.mxu0 %v1606
    %2993 = vmatpush1.bf16.msra.mxu0 %v1605
    %2994 = vmatprep.subr.bf16.mxu0 %v1610
    %2995 = vmatpush1.bf16.msra.mxu0 %v1609
    %2996 = vmatprep.subr.bf16.mxu0 %v1614
    %2997 = vmatpush1.bf16.msra.mxu0 %v1613
    %2998 = vmatprep.subr.bf16.mxu0 %v1618
    %2999 = vmatpush1.bf16.msra.mxu0 %v1617
    %3000 = vmatprep.subr.bf16.mxu0 %v1622
    %3001 = vmatpush1.bf16.msra.mxu0 %v1621
    %3002 = vmatprep.subr.bf16.mxu0 %v1626
    %3003 = vmatpush1.bf16.msra.mxu0 %v1625
    %3004 = vmatprep.subr.bf16.mxu0 %v1630
    %3005 = vmatpush1.bf16.msra.mxu0 %v1629
    %3006 = vmatprep.subr.bf16.mxu0 %v1634
    %3007 = vmatpush1.bf16.msra.mxu0 %v1633
    %3008 = vmatprep.subr.bf16.mxu0 0
    %3009 = vmatpush1.bf16.msra.mxu0 0
    %3010 = vmatprep.subr.bf16.mxu0 0
    %3011 = vmatpush1.bf16.msra.mxu0 0
    %3012 = vmatprep.subr.bf16.mxu0 0
    %3013 = vmatpush1.bf16.msra.mxu0 0
    %3014 = vmatprep.subr.bf16.mxu0 0
    %3015 = vmatpush1.bf16.msra.mxu0 0
    %3016 = vmatprep.subr.bf16.mxu0 0
    %3017 = vmatpush1.bf16.msra.mxu0 0
    %3018 = vmatprep.subr.bf16.mxu0 0
    %3019 = vmatpush1.bf16.msra.mxu0 0
    %3020 = vmatprep.subr.bf16.mxu0 0
    %3021 = vmatpush1.bf16.msra.mxu0 0
    %3022 = vmatprep.subr.bf16.mxu0 0
    %3023 = vmatpush1.bf16.msra.mxu0 0
    %3024 = vmatprep.mubr.bf16.mxu0 0
    %3025 = vmatmul.mubr.bf16.gmra.mrb[0].mxu0 %v2991
    %v3026 = vpop.f32.mrb[0].mxu0
    %v3027 = vadd.f32 %v2943, %v3026
    %v3028 = vpop.f32.mrb[0].mxu0
    %v3029 = vadd.f32 %v2945, %v3028
    %v3030 = vpop.f32.mrb[0].mxu0
    %v3031 = vpop.f32.mrb[0].mxu0
    %3032 = vdwg.mxu0
    %3033 = vmatprep.subr.bf16.mxu0 %v1608
    %3034 = vmatpush1.bf16.msra.mxu0 %v1607
    %3035 = vmatprep.subr.bf16.mxu0 %v1612
    %3036 = vmatpush1.bf16.msra.mxu0 %v1611
    %3037 = vmatprep.subr.bf16.mxu0 %v1616
    %3038 = vmatpush1.bf16.msra.mxu0 %v1615
    %3039 = vmatprep.subr.bf16.mxu0 %v1620
    %3040 = vmatpush1.bf16.msra.mxu0 %v1619
    %3041 = vmatprep.subr.bf16.mxu0 %v1624
    %3042 = vmatpush1.bf16.msra.mxu0 %v1623
    %3043 = vmatprep.subr.bf16.mxu0 %v1628
    %3044 = vmatpush1.bf16.msra.mxu0 %v1627
    %3045 = vmatprep.subr.bf16.mxu0 %v1632
    %3046 = vmatpush1.bf16.msra.mxu0 %v1631
    %3047 = vmatprep.subr.bf16.mxu0 %v1636
    %3048 = vmatpush1.bf16.msra.mxu0 %v1635
    %3049 = vmatprep.subr.bf16.mxu0 0
    %3050 = vmatpush1.bf16.msra.mxu0 0
    %3051 = vmatprep.subr.bf16.mxu0 0
    %3052 = vmatpush1.bf16.msra.mxu0 0
    %3053 = vmatprep.subr.bf16.mxu0 0
    %3054 = vmatpush1.bf16.msra.mxu0 0
    %3055 = vmatprep.subr.bf16.mxu0 0
    %3056 = vmatpush1.bf16.msra.mxu0 0
    %3057 = vmatprep.subr.bf16.mxu0 0
    %3058 = vmatpush1.bf16.msra.mxu0 0
    %3059 = vmatprep.subr.bf16.mxu0 0
    %3060 = vmatpush1.bf16.msra.mxu0 0
    %3061 = vmatprep.subr.bf16.mxu0 0
    %3062 = vmatpush1.bf16.msra.mxu0 0
    %3063 = vmatprep.subr.bf16.mxu0 0
    %3064 = vmatpush1.bf16.msra.mxu0 0
    %3065 = vmatprep.mubr.bf16.mxu0 0
    %3066 = vmatmul.mubr.bf16.gmra.mrb[0].mxu0 %v2991
    %v3067 = vpop.f32.mrb[0].mxu0
    %v3068 = vadd.f32 %v2984, %v3067
    %v3069 = vpop.f32.mrb[0].mxu0
    %v3070 = vadd.f32 %v2986, %v3069
    %v3071 = vpop.f32.mrb[0].mxu0
    %v3072 = vpop.f32.mrb[0].mxu0
    %3073 = vdwg.mxu0
    %v3074 = vadd.f32 %v3027, %v1243
    %v3075 = vadd.f32 %v3029, %v1247
    %v3076 = vadd.f32 %v3068, %v1251
    %v3077 = vadd.f32 %v3070, %v1255
    %v3078 = vmul.f32 %v3074, 0.5
    %v3079 = vtanh.pop %v3078
    %v3080 = vadd.f32 %v3079, 1.0
    %v3081 = vmul.f32 %v3080, 0.5
    %v3082 = vmul.f32 %v3075, 0.5
    %v3083 = vtanh.pop %v3082
    %v3084 = vadd.f32 %v3083, 1.0
    %v3085 = vmul.f32 %v3084, 0.5
    %v3086 = vtanh.pop %v3076
    %v3087 = vmul.f32 %v3077, 0.5
    %v3088 = vtanh.pop %v3087
    %v3089 = vadd.f32 %v3088, 1.0
    %v3090 = vmul.f32 %v3089, 0.5
    %v3091 = vmul.f32 %v3085, %v2904
    %v3092 = vmul.f32 %v3081, %v3086
    %v3093 = vadd.f32 %v3091, %v3092
    %v3094 = vtanh.pop %v3093
    %v3095 = vmul.f32 %v3090, %v3094
    %3096 = vst [vmem:[%s1260] sm:$0xff] %v3095
    %3097 = vst [vmem:[%s1262] sm:$0xff] %v3093
    // Predicated region
    $region86: #{rnn_forward.3} parent=1 // pred_check
      %p3098 = pneg %p69
    $region87: #{rnn_forward.3} parent=1 // pred_check_branch
      %3100 = sbr.rel (%p3098) target = $region89
    $region88: #{rnn_forward.3} parent=1 // pred_region
      %v3101 = vld [vmem:[#allocation2] sm:$0xff]
      %v3102 = vld [vmem:[#allocation2 + $0x8] sm:$0xff]
      %3103 = vst [vmem:[%s20] sm:$0xff] %v3101
      %3104 = vst [vmem:[%s20 + $0x8] sm:$0xff] %v3102
      %v3105 = vld [vmem:[#allocation2] sm:$0xff]
      %v3106 = vld [vmem:[%s6] sm:$0xff]
      %v3107 = vld [vmem:[%s6 + $0x8] sm:$0xff]
      %v3108 = vld [vmem:[%s6 + $0x10] sm:$0xff]
      %v3109 = vld [vmem:[%s6 + $0x18] sm:$0xff]
      %v3110 = vld [vmem:[%s7] sm:$0x1]
      %v3112 = vlaneseq
      %v3113 = vshrl.u32 %v3112, 7
      %v3114 = vsub.s32 0, %v3113
      %v3115 = vrot.slane %v3110, %v3114
      %vm3117 = vcmask 261120
      %v3119 = vsel %vm3117, %v3105, 0
      %3121 = vmatprep.subr.mxu0 0.0
      %3122 = vmatpush1.msra.mxu0 %v3106
      %3123 = vmatprep.subr.mxu0 0.0
      %3124 = vmatpush1.msra.mxu0 %v3107
      %3125 = vmatprep.subr.mxu0 0.0
      %3126 = vmatpush1.msra.mxu0 %v3108
      %3127 = vmatprep.subr.mxu0 0.0
      %3128 = vmatpush1.msra.mxu0 %v3109
      %3129 = vmatprep.subr.mxu0 0.0
      %3130 = vmatpush1.msra.mxu0 0.0
      %3131 = vmatprep.subr.mxu0 0.0
      %3132 = vmatpush1.msra.mxu0 0.0
      %3133 = vmatprep.subr.mxu0 0.0
      %3134 = vmatpush1.msra.mxu0 0.0
      %3135 = vmatprep.subr.mxu0 0.0
      %3136 = vmatpush1.msra.mxu0 0.0
      %3137 = vmatprep.subr.mxu0 0.0
      %3138 = vmatpush1.msra.mxu0 0.0
      %3139 = vmatprep.subr.mxu0 0.0
      %3140 = vmatpush1.msra.mxu0 0.0
      %3141 = vmatprep.subr.mxu0 0.0
      %3142 = vmatpush1.msra.mxu0 0.0
      %3143 = vmatprep.subr.mxu0 0.0
      %3144 = vmatpush1.msra.mxu0 0.0
      %3145 = vmatprep.subr.mxu0 0.0
      %3146 = vmatpush1.msra.mxu0 0.0
      %3147 = vmatprep.subr.mxu0 0.0
      %3148 = vmatpush1.msra.mxu0 0.0
      %3149 = vmatprep.subr.mxu0 0.0
      %3150 = vmatpush1.msra.mxu0 0.0
      %3151 = vmatprep.subr.mxu0 0.0
      %3152 = vmatpush1.msra.mxu0 0.0
      %3153 = vmatprep.subr.mxu0 0.0
      %3154 = vmatpush1.msra.mxu0 0.0
      %3155 = vmatprep.subr.mxu0 0.0
      %3156 = vmatpush1.msra.mxu0 0.0
      %3157 = vmatprep.subr.mxu0 0.0
      %3158 = vmatpush1.msra.mxu0 0.0
      %3159 = vmatprep.subr.mxu0 0.0
      %3160 = vmatpush1.msra.mxu0 0.0
      %3161 = vmatprep.subr.mxu0 0.0
      %3162 = vmatpush1.msra.mxu0 0.0
      %3163 = vmatprep.subr.mxu0 0.0
      %3164 = vmatpush1.msra.mxu0 0.0
      %3165 = vmatprep.subr.mxu0 0.0
      %3166 = vmatpush1.msra.mxu0 0.0
      %3167 = vmatprep.subr.mxu0 0.0
      %3168 = vmatpush1.msra.mxu0 0.0
      %3169 = vmatprep.subr.mxu0 0.0
      %3170 = vmatpush1.msra.mxu0 0.0
      %3171 = vmatprep.subr.mxu0 0.0
      %3172 = vmatpush1.msra.mxu0 0.0
      %3173 = vmatprep.subr.mxu0 0.0
      %3174 = vmatpush1.msra.mxu0 0.0
      %3175 = vmatprep.subr.mxu0 0.0
      %3176 = vmatpush1.msra.mxu0 0.0
      %3177 = vmatprep.subr.mxu0 0.0
      %3178 = vmatpush1.msra.mxu0 0.0
      %3179 = vmatprep.subr.mxu0 0.0
      %3180 = vmatpush1.msra.mxu0 0.0
      %3181 = vmatprep.subr.mxu0 0.0
      %3182 = vmatpush1.msra.mxu0 0.0
      %3183 = vmatprep.subr.mxu0 0.0
      %3184 = vmatpush1.msra.mxu0 0.0
      %3185 = vmatprep.mubr.f32.mxu0 0.0
      %3186 = vmatmul.mubr.f32.gmra.mrb[0].mxu0 %v3119
      %v3187 = vpop.f32.mrb[0].mxu0
      %v3188 = vadd.f32 %v3115, %v3187
      %v3189 = vpop.f32.mrb[0].mxu0
      %3190 = vdwg.mxu0
      %vm3191 = vcmask 123904
      %v3192 = vsel %vm3191, %v3188, 0.0
      %v3193 = vrot.slane %v3192, 4
      %v3194 = vadd.f32 %v3192, %v3193
      %v3195 = vrot.slane %v3194, 2
      %v3196 = vadd.f32 %v3194, %v3195
      %v3197 = vrot.slane %v3196, 1
      %v3198 = vadd.f32 %v3196, %v3197
      %v3199 = vrcp.pop 2.0
      %v3200 = vmul.f32 %v3198, %v3199
      %v3201 = vsub.f32 %v3188, %v3200
      %v3202 = vmul.f32 %v3201, %v3201
      %v3203 = vsel %vm3191, %v3202, 0.0
      %v3204 = vrot.slane %v3203, 4
      %v3205 = vadd.f32 %v3203, %v3204
      %v3206 = vrot.slane %v3205, 2
      %v3207 = vadd.f32 %v3205, %v3206
      %v3208 = vrot.slane %v3207, 1
      %v3209 = vadd.f32 %v3207, %v3208
      %v3210 = vmul.f32 %v3209, %v3199
      %v3211 = vadd.f32 %v3210, 1e-05
      %v3212 = vrsqrt.pop %v3211
      %v3213 = vmul.f32 %v3201, %v3212
      %v3214 = vld [vmem:[%s8] sm:$0x1]
      %v3216 = vlaneseq
      %v3217 = vshrl.u32 %v3216, 7
      %v3218 = vsub.s32 0, %v3217
      %v3219 = vrot.slane %v3214, %v3218
      %v3221 = vmul.f32 %v3213, %v3219
      %v3222 = vld [vmem:[%s9] sm:$0x1]
      %v3224 = vlaneseq
      %v3225 = vshrl.u32 %v3224, 7
      %v3226 = vsub.s32 0, %v3225
      %v3227 = vrot.slane %v3222, %v3226
      %v3229 = vadd.f32 %v3221, %v3227
      %vm3230 = vcmp.ge.f32.partialorder %v3229, 0.0
      %v3231 = vmul.f32 %v3229, 0.01
      %v3232 = vsel %vm3230, %v3229, %v3231
      %v3233 = vld [vmem:[%s10] sm:$0xff]
      %v3234 = vld [vmem:[%s10 + $0x8] sm:$0xff]
      %v3235 = vld [vmem:[%s11] sm:$0x1]
      %v3237 = vlaneseq
      %v3238 = vshrl.u32 %v3237, 7
      %v3239 = vsub.s32 0, %v3238
      %v3240 = vrot.slane %v3235, %v3239
      %vm3242 = vcmask 130048
      %v3244 = vsel %vm3242, %v3232, 0
      %3246 = vmatprep.subr.mxu0 0.0
      %3247 = vmatpush1.msra.mxu0 %v3233
      %3248 = vmatprep.subr.mxu0 0.0
      %3249 = vmatpush1.msra.mxu0 %v3234
      %3250 = vmatprep.subr.mxu0 0.0
      %3251 = vmatpush1.msra.mxu0 0.0
      %3252 = vmatprep.subr.mxu0 0.0
      %3253 = vmatpush1.msra.mxu0 0.0
      %3254 = vmatprep.subr.mxu0 0.0
      %3255 = vmatpush1.msra.mxu0 0.0
      %3256 = vmatprep.subr.mxu0 0.0
      %3257 = vmatpush1.msra.mxu0 0.0
      %3258 = vmatprep.subr.mxu0 0.0
      %3259 = vmatpush1.msra.mxu0 0.0
      %3260 = vmatprep.subr.mxu0 0.0
      %3261 = vmatpush1.msra.mxu0 0.0
      %3262 = vmatprep.subr.mxu0 0.0
      %3263 = vmatpush1.msra.mxu0 0.0
      %3264 = vmatprep.subr.mxu0 0.0
      %3265 = vmatpush1.msra.mxu0 0.0
      %3266 = vmatprep.subr.mxu0 0.0
      %3267 = vmatpush1.msra.mxu0 0.0
      %3268 = vmatprep.subr.mxu0 0.0
      %3269 = vmatpush1.msra.mxu0 0.0
      %3270 = vmatprep.subr.mxu0 0.0
      %3271 = vmatpush1.msra.mxu0 0.0
      %3272 = vmatprep.subr.mxu0 0.0
      %3273 = vmatpush1.msra.mxu0 0.0
      %3274 = vmatprep.subr.mxu0 0.0
      %3275 = vmatpush1.msra.mxu0 0.0
      %3276 = vmatprep.subr.mxu0 0.0
      %3277 = vmatpush1.msra.mxu0 0.0
      %3278 = vmatprep.subr.mxu0 0.0
      %3279 = vmatpush1.msra.mxu0 0.0
      %3280 = vmatprep.subr.mxu0 0.0
      %3281 = vmatpush1.msra.mxu0 0.0
      %3282 = vmatprep.subr.mxu0 0.0
      %3283 = vmatpush1.msra.mxu0 0.0
      %3284 = vmatprep.subr.mxu0 0.0
      %3285 = vmatpush1.msra.mxu0 0.0
      %3286 = vmatprep.subr.mxu0 0.0
      %3287 = vmatpush1.msra.mxu0 0.0
      %3288 = vmatprep.subr.mxu0 0.0
      %3289 = vmatpush1.msra.mxu0 0.0
      %3290 = vmatprep.subr.mxu0 0.0
      %3291 = vmatpush1.msra.mxu0 0.0
      %3292 = vmatprep.subr.mxu0 0.0
      %3293 = vmatpush1.msra.mxu0 0.0
      %3294 = vmatprep.subr.mxu0 0.0
      %3295 = vmatpush1.msra.mxu0 0.0
      %3296 = vmatprep.subr.mxu0 0.0
      %3297 = vmatpush1.msra.mxu0 0.0
      %3298 = vmatprep.subr.mxu0 0.0
      %3299 = vmatpush1.msra.mxu0 0.0
      %3300 = vmatprep.subr.mxu0 0.0
      %3301 = vmatpush1.msra.mxu0 0.0
      %3302 = vmatprep.subr.mxu0 0.0
      %3303 = vmatpush1.msra.mxu0 0.0
      %3304 = vmatprep.subr.mxu0 0.0
      %3305 = vmatpush1.msra.mxu0 0.0
      %3306 = vmatprep.subr.mxu0 0.0
      %3307 = vmatpush1.msra.mxu0 0.0
      %3308 = vmatprep.subr.mxu0 0.0
      %3309 = vmatpush1.msra.mxu0 0.0
      %3310 = vmatprep.mubr.f32.mxu0 0.0
      %3311 = vmatmul.mubr.f32.gmra.mrb[0].mxu0 %v3244
      %v3312 = vpop.f32.mrb[0].mxu0
      %v3313 = vadd.f32 %v3240, %v3312
      %v3314 = vpop.f32.mrb[0].mxu0
      %3315 = vdwg.mxu0
      %vm3316 = vcmask 58368
      %v3317 = vsel %vm3316, %v3313, 0.0
      %v3318 = vrot.slane %v3317, 4
      %v3319 = vadd.f32 %v3317, %v3318
      %v3320 = vrot.slane %v3319, 2
      %v3321 = vadd.f32 %v3319, %v3320
      %v3322 = vrot.slane %v3321, 1
      %v3323 = vadd.f32 %v3321, %v3322
      %v3324 = vmul.f32 %v3323, %v3199
      %v3325 = vsub.f32 %v3313, %v3324
      %v3326 = vmul.f32 %v3325, %v3325
      %v3327 = vsel %vm3316, %v3326, 0.0
      %v3328 = vrot.slane %v3327, 4
      %v3329 = vadd.f32 %v3327, %v3328
      %v3330 = vrot.slane %v3329, 2
      %v3331 = vadd.f32 %v3329, %v3330
      %v3332 = vrot.slane %v3331, 1
      %v3333 = vadd.f32 %v3331, %v3332
      %v3334 = vmul.f32 %v3333, %v3199
      %v3335 = vadd.f32 %v3334, 1e-05
      %v3336 = vrsqrt.pop %v3335
      %v3337 = vmul.f32 %v3325, %v3336
      %v3338 = vld [vmem:[%s12] sm:$0x1]
      %v3340 = vlaneseq
      %v3341 = vshrl.u32 %v3340, 7
      %v3342 = vsub.s32 0, %v3341
      %v3343 = vrot.slane %v3338, %v3342
      %v3345 = vmul.f32 %v3337, %v3343
      %v3346 = vld [vmem:[%s13] sm:$0x1]
      %v3348 = vlaneseq
      %v3349 = vshrl.u32 %v3348, 7
      %v3350 = vsub.s32 0, %v3349
      %v3351 = vrot.slane %v3346, %v3350
      %v3353 = vadd.f32 %v3345, %v3351
      %vm3354 = vcmp.ge.f32.partialorder %v3353, 0.0
      %v3355 = vmul.f32 %v3353, 0.01
      %v3356 = vsel %vm3354, %v3353, %v3355
      %v3357 = vld [vmem:[%s14] sm:$0xff]
      %v3358 = vld [vmem:[%s15] sm:$0x1]
      %v3360 = vlaneseq
      %v3361 = vshrl.u32 %v3360, 7
      %v3362 = vsub.s32 0, %v3361
      %v3363 = vrot.slane %v3358, %v3362
      %vm3365 = vcmask 64512
      %v3367 = vsel %vm3365, %v3356, 0
      %3369 = vmatprep.subr.mxu0 0.0
      %3370 = vmatpush1.msra.mxu0 %v3357
      %3371 = vmatprep.subr.mxu0 0.0
      %3372 = vmatpush1.msra.mxu0 0.0
      %3373 = vmatprep.subr.mxu0 0.0
      %3374 = vmatpush1.msra.mxu0 0.0
      %3375 = vmatprep.subr.mxu0 0.0
      %3376 = vmatpush1.msra.mxu0 0.0
      %3377 = vmatprep.subr.mxu0 0.0
      %3378 = vmatpush1.msra.mxu0 0.0
      %3379 = vmatprep.subr.mxu0 0.0
      %3380 = vmatpush1.msra.mxu0 0.0
      %3381 = vmatprep.subr.mxu0 0.0
      %3382 = vmatpush1.msra.mxu0 0.0
      %3383 = vmatprep.subr.mxu0 0.0
      %3384 = vmatpush1.msra.mxu0 0.0
      %3385 = vmatprep.subr.mxu0 0.0
      %3386 = vmatpush1.msra.mxu0 0.0
      %3387 = vmatprep.subr.mxu0 0.0
      %3388 = vmatpush1.msra.mxu0 0.0
      %3389 = vmatprep.subr.mxu0 0.0
      %3390 = vmatpush1.msra.mxu0 0.0
      %3391 = vmatprep.subr.mxu0 0.0
      %3392 = vmatpush1.msra.mxu0 0.0
      %3393 = vmatprep.subr.mxu0 0.0
      %3394 = vmatpush1.msra.mxu0 0.0
      %3395 = vmatprep.subr.mxu0 0.0
      %3396 = vmatpush1.msra.mxu0 0.0
      %3397 = vmatprep.subr.mxu0 0.0
      %3398 = vmatpush1.msra.mxu0 0.0
      %3399 = vmatprep.subr.mxu0 0.0
      %3400 = vmatpush1.msra.mxu0 0.0
      %3401 = vmatprep.subr.mxu0 0.0
      %3402 = vmatpush1.msra.mxu0 0.0
      %3403 = vmatprep.subr.mxu0 0.0
      %3404 = vmatpush1.msra.mxu0 0.0
      %3405 = vmatprep.subr.mxu0 0.0
      %3406 = vmatpush1.msra.mxu0 0.0
      %3407 = vmatprep.subr.mxu0 0.0
      %3408 = vmatpush1.msra.mxu0 0.0
      %3409 = vmatprep.subr.mxu0 0.0
      %3410 = vmatpush1.msra.mxu0 0.0
      %3411 = vmatprep.subr.mxu0 0.0
      %3412 = vmatpush1.msra.mxu0 0.0
      %3413 = vmatprep.subr.mxu0 0.0
      %3414 = vmatpush1.msra.mxu0 0.0
      %3415 = vmatprep.subr.mxu0 0.0
      %3416 = vmatpush1.msra.mxu0 0.0
      %3417 = vmatprep.subr.mxu0 0.0
      %3418 = vmatpush1.msra.mxu0 0.0
      %3419 = vmatprep.subr.mxu0 0.0
      %3420 = vmatpush1.msra.mxu0 0.0
      %3421 = vmatprep.subr.mxu0 0.0
      %3422 = vmatpush1.msra.mxu0 0.0
      %3423 = vmatprep.subr.mxu0 0.0
      %3424 = vmatpush1.msra.mxu0 0.0
      %3425 = vmatprep.subr.mxu0 0.0
      %3426 = vmatpush1.msra.mxu0 0.0
      %3427 = vmatprep.subr.mxu0 0.0
      %3428 = vmatpush1.msra.mxu0 0.0
      %3429 = vmatprep.subr.mxu0 0.0
      %3430 = vmatpush1.msra.mxu0 0.0
      %3431 = vmatprep.subr.mxu0 0.0
      %3432 = vmatpush1.msra.mxu0 0.0
      %3433 = vmatprep.mubr.f32.mxu0 0.0
      %3434 = vmatmul.mubr.f32.gmra.mrb[0].mxu0 %v3367
      %v3435 = vpop.f32.mrb[0].mxu0
      %v3436 = vadd.f32 %v3363, %v3435
      %v3437 = vpop.f32.mrb[0].mxu0
      %3438 = vdwg.mxu0
      %vm3439 = vcmask 25600
      %v3440 = vsel %vm3439, %v3436, 0.0
      %v3441 = vrot.slane %v3440, 4
      %v3442 = vadd.f32 %v3440, %v3441
      %v3443 = vrot.slane %v3442, 2
      %v3444 = vadd.f32 %v3442, %v3443
      %v3445 = vrot.slane %v3444, 1
      %v3446 = vadd.f32 %v3444, %v3445
      %v3447 = vmul.f32 %v3446, %v3199
      %v3448 = vsub.f32 %v3436, %v3447
      %v3449 = vmul.f32 %v3448, %v3448
      %v3450 = vsel %vm3439, %v3449, 0.0
      %v3451 = vrot.slane %v3450, 4
      %v3452 = vadd.f32 %v3450, %v3451
      %v3453 = vrot.slane %v3452, 2
      %v3454 = vadd.f32 %v3452, %v3453
      %v3455 = vrot.slane %v3454, 1
      %v3456 = vadd.f32 %v3454, %v3455
      %v3457 = vmul.f32 %v3456, %v3199
      %v3458 = vadd.f32 %v3457, 1e-05
      %v3459 = vrsqrt.pop %v3458
      %v3460 = vmul.f32 %v3448, %v3459
      %v3461 = vld [vmem:[%s16] sm:$0x1]
      %v3463 = vlaneseq
      %v3464 = vshrl.u32 %v3463, 7
      %v3465 = vsub.s32 0, %v3464
      %v3466 = vrot.slane %v3461, %v3465
      %v3468 = vmul.f32 %v3460, %v3466
      %v3469 = vld [vmem:[%s17] sm:$0x1]
      %v3471 = vlaneseq
      %v3472 = vshrl.u32 %v3471, 7
      %v3473 = vsub.s32 0, %v3472
      %v3474 = vrot.slane %v3469, %v3473
      %v3476 = vadd.f32 %v3468, %v3474
      %vm3477 = vcmp.ge.f32.partialorder %v3476, 0.0
      %v3478 = vmul.f32 %v3476, 0.01
      %v3479 = vsel %vm3477, %v3476, %v3478
      %v3480 = vld [vmem:[%s18] sm:$0xf]
      %v3481 = vld [vmem:[%s19] sm:$0x1]
      %v3483 = vlaneseq
      %v3484 = vshrl.u32 %v3483, 7
      %v3485 = vsub.s32 0, %v3484
      %v3486 = vrot.slane %v3481, %v3485
      %vm3488 = vcmask 31744
      %v3490 = vsel %vm3488, %v3479, 0
      %vm3492 = vcmask 1043456
      %v3494 = vsel %vm3492, %v3480, 0
      %3496 = vmatprep.subr.mxu0 0.0
      %3497 = vmatpush1.msra.mxu0 %v3494
      %3498 = vmatprep.subr.mxu0 0.0
      %3499 = vmatpush1.msra.mxu0 0.0
      %3500 = vmatprep.subr.mxu0 0.0
      %3501 = vmatpush1.msra.mxu0 0.0
      %3502 = vmatprep.subr.mxu0 0.0
      %3503 = vmatpush1.msra.mxu0 0.0
      %3504 = vmatprep.subr.mxu0 0.0
      %3505 = vmatpush1.msra.mxu0 0.0
      %3506 = vmatprep.subr.mxu0 0.0
      %3507 = vmatpush1.msra.mxu0 0.0
      %3508 = vmatprep.subr.mxu0 0.0
      %3509 = vmatpush1.msra.mxu0 0.0
      %3510 = vmatprep.subr.mxu0 0.0
      %3511 = vmatpush1.msra.mxu0 0.0
      %3512 = vmatprep.subr.mxu0 0.0
      %3513 = vmatpush1.msra.mxu0 0.0
      %3514 = vmatprep.subr.mxu0 0.0
      %3515 = vmatpush1.msra.mxu0 0.0
      %3516 = vmatprep.subr.mxu0 0.0
      %3517 = vmatpush1.msra.mxu0 0.0
      %3518 = vmatprep.subr.mxu0 0.0
      %3519 = vmatpush1.msra.mxu0 0.0
      %3520 = vmatprep.subr.mxu0 0.0
      %3521 = vmatpush1.msra.mxu0 0.0
      %3522 = vmatprep.subr.mxu0 0.0
      %3523 = vmatpush1.msra.mxu0 0.0
      %3524 = vmatprep.subr.mxu0 0.0
      %3525 = vmatpush1.msra.mxu0 0.0
      %3526 = vmatprep.subr.mxu0 0.0
      %3527 = vmatpush1.msra.mxu0 0.0
      %3528 = vmatprep.subr.mxu0 0.0
      %3529 = vmatpush1.msra.mxu0 0.0
      %3530 = vmatprep.subr.mxu0 0.0
      %3531 = vmatpush1.msra.mxu0 0.0
      %3532 = vmatprep.subr.mxu0 0.0
      %3533 = vmatpush1.msra.mxu0 0.0
      %3534 = vmatprep.subr.mxu0 0.0
      %3535 = vmatpush1.msra.mxu0 0.0
      %3536 = vmatprep.subr.mxu0 0.0
      %3537 = vmatpush1.msra.mxu0 0.0
      %3538 = vmatprep.subr.mxu0 0.0
      %3539 = vmatpush1.msra.mxu0 0.0
      %3540 = vmatprep.subr.mxu0 0.0
      %3541 = vmatpush1.msra.mxu0 0.0
      %3542 = vmatprep.subr.mxu0 0.0
      %3543 = vmatpush1.msra.mxu0 0.0
      %3544 = vmatprep.subr.mxu0 0.0
      %3545 = vmatpush1.msra.mxu0 0.0
      %3546 = vmatprep.subr.mxu0 0.0
      %3547 = vmatpush1.msra.mxu0 0.0
      %3548 = vmatprep.subr.mxu0 0.0
      %3549 = vmatpush1.msra.mxu0 0.0
      %3550 = vmatprep.subr.mxu0 0.0
      %3551 = vmatpush1.msra.mxu0 0.0
      %3552 = vmatprep.subr.mxu0 0.0
      %3553 = vmatpush1.msra.mxu0 0.0
      %3554 = vmatprep.subr.mxu0 0.0
      %3555 = vmatpush1.msra.mxu0 0.0
      %3556 = vmatprep.subr.mxu0 0.0
      %3557 = vmatpush1.msra.mxu0 0.0
      %3558 = vmatprep.subr.mxu0 0.0
      %3559 = vmatpush1.msra.mxu0 0.0
      %3560 = vmatprep.mubr.f32.mxu0 0.0
      %3561 = vmatmul.mubr.f32.gmra.mrb[0].mxu0 %v3490
      %v3562 = vpop.f32.mrb[0].mxu0
      %v3563 = vadd.f32 %v3486, %v3562
      %v3564 = vpop.f32.mrb[0].mxu0
      %3565 = vdwg.mxu0
      %vm3566 = vcmask 74752
      %v3567 = vsel %vm3566, %v3563, -inf
      %3568 = vmax.xlane.f32.xlu0 %v3567
      %v3569 = vpop.xlane.xlu0 %3568
      %v3570 = vsub.f32 %v3563, %v3569
      %v3571 = vmul.f32 %v3570, 1.442695
      %v3572 = vpow.pop %v3571
      %v3573 = vsel %vm3566, %v3572, 0.0
      %3574 = vadd.xlane.f32.xlu0 %v3573
      %v3575 = vpop.xlane.xlu0 %3574
      %v3576 = vrcp.pop %v3575
      %v3577 = vmul.f32 %v3572, %v3576
      %3578 = vst.msk [vmem:[#allocation5] sm:$0x3] %vm3566, %v3577
    $region89: #{rnn_forward.3} parent=1 // pred_fallthru
      _
    // Predicated region
    $region90: #{rnn_forward.3} parent=1 // pred_check
      _
    $region91: #{rnn_forward.3} parent=1 // pred_check_branch
      %3580 = sbr.rel (0) target = $region93
    $region92: #{rnn_forward.3} parent=1 // pred_region
      _
    $region93: #{rnn_forward.3} parent=1 // pred_fallthru
      _
    // Predicated region
    $region94: #{rnn_forward.3} parent=1 // pred_check
      _
    $region95: #{rnn_forward.3} parent=1 // pred_check_branch
      %3582 = sbr.rel (0) target = $region97
    $region96: #{rnn_forward.3} parent=1 // pred_region
      %s3584 = ssub.s32 32, 32
      %3585 = vsyncadd [#allocation6], %s3584
      %s3587 = sshll.u32 [#allocation5], 4
      %s3588 = int_to_ptr.vmem [resolvable:$true] %s3587
      %3590 = dma.vmem_to_hbm [thread:$0]  %s3588, 32, %s21, [#allocation6]
    $region97: #{rnn_forward.3} parent=1 // pred_fallthru
      _
    // Predicated region
    $region98: #{rnn_forward.3} parent=1 // pred_check
      _
    $region99: #{rnn_forward.3} parent=1 // pred_check_branch
      %3592 = sbr.rel (0) target = $region101
    $region100: #{rnn_forward.3} parent=1 // pred_region
      _
    $region101: #{rnn_forward.3} parent=1 // pred_fallthru
      _
    // Predicated region
    $region102: #{rnn_forward.3} parent=1 // pred_check
      _
    $region103: #{rnn_forward.3} parent=1 // pred_check_branch
      %3594 = sbr.rel (0) target = $region105
    $region104: #{rnn_forward.3} parent=1 // pred_region
      %3595 = dma.done [#allocation6], 32
    $region105: #{rnn_forward.3} parent=1 // pred_fallthru
      _
    %3596 = vsyncpa [#allocation6], 1

</llo_original>
